<compile_context>
chip_gen: v6e
topology: v6e:2x2x1
jax: 0.10.0
libtpu: 0.0.40
codegen_flags: <defaults>
</compile_context>

<pallas_src>
import functools

import jax
import jax.numpy as jnp
from jax import lax
from jax.experimental import pallas as pl
from jax.experimental.pallas import tpu as pltpu


# ---------------------------------------------------------------------------
# Fused activation (PyTorch act_layer equivalents).
# `channel_axis` selects the channel dimension of `y` (Softmax is dim=1 in
# the PyTorch NCDHW layout, i.e. the channel axis).
# ---------------------------------------------------------------------------
def _apply_activation(y, activation, channel_axis):
    if activation == "":
        return y
    if activation == "relu":
        return jnp.maximum(y, 0.0)
    if activation == "leakyrelu":
        return jnp.where(y > 0.0, y, 0.2 * y)
    if activation == "tanh":
        return jnp.tanh(y)
    if activation == "sigmoid":
        return jax.nn.sigmoid(y)
    if activation == "softmax":
        return jax.nn.softmax(y, axis=channel_axis)
    # TODO(synk): 'prelu' needs a learned per-channel slope parameter; not wired here.
    raise NotImplementedError(f"activation layer {activation} is not implemented")


# ---------------------------------------------------------------------------
# Kernel: one (batch, output-depth) slice of a 3x3x3 conv, stride 1, padding 1.
# ---------------------------------------------------------------------------
def _conv3d_k3_kernel(x0_ref, x1_ref, x2_ref, w_ref, b_ref, o_ref, *,
                      H, W, activation):
    """
    x{0,1,2}_ref : (1, 1, H+2, W+2, Cin)  zero-padded input slices at depth d, d+1, d+2
    w_ref        : (3, 3, 3, Cin, Cout)   conv taps (kd, kh, kw, Cin, Cout)
    b_ref        : (Cout, 1)
    o_ref        : (1, Cout, H*W)         lane-dense output slab for this (b, d)
    """
    cin = x0_ref.shape[-1]
    cout = o_ref.shape[1]
    slabs = (x0_ref[0, 0], x1_ref[0, 0], x2_ref[0, 0])   # each (H+2, W+2, Cin)

    acc = jnp.zeros((H * W, cout), jnp.float32)
    # 27 taps, fully unrolled: each is a (H*W, Cin) x (Cin, Cout) MXU matmul,
    # accumulated in f32.
    for kd in range(3):
        slab = slabs[kd]
        for kh in range(3):
            rows = slab[kh:kh + H, :, :]                 # (H, W+2, Cin)
            for kw in range(3):
                patch = rows[:, kw:kw + W, :].reshape(H * W, cin)
                acc = acc + jnp.dot(patch, w_ref[kd, kh, kw],
                                    preferred_element_type=jnp.float32)

    # Single transpose -> (Cout, H*W): bias/activation and the store all run
    # lane-dense (H*W lanes) instead of on 4/128-lane masked vregs.
    y = acc.T + b_ref[...].astype(jnp.float32)           # (Cout, H*W)
    y = _apply_activation(y, activation, channel_axis=0)
    o_ref[0] = y.astype(o_ref.dtype)


# ---------------------------------------------------------------------------
# OutConv forward: NCDHW in / NCDHW out (PyTorch layout at the boundary).
# ---------------------------------------------------------------------------
@functools.partial(jax.jit, static_argnames="activation_func1")
def out_conv(x, weight, bias, activation_func1=""):
    """x: (B, Cin, D, H, W); weight: (Cout, Cin, 3, 3, 3); bias: (Cout,)."""
    B, Cin, D, H, W = x.shape
    Cout = weight.shape[0]
    act = activation_func1.lower()

    # channels-last + zero padding of the three spatial dims (padding=1)
    x_cl = jnp.transpose(x, (0, 2, 3, 4, 1))                       # (B, D, H, W, Cin)
    x_pad = jnp.pad(x_cl, ((0, 0), (1, 1), (1, 1), (1, 1), (0, 0)))
    Hp, Wp = H + 2, W + 2
    w_taps = jnp.transpose(weight, (2, 3, 4, 1, 0))                # (3,3,3,Cin,Cout)
    b2 = bias.reshape(Cout, 1)

    # Three depth-shifted views of the same padded input: step (b, d) gets the
    # slices at padded depth d, d+1, d+2 -> the full 3-deep conv window.
    def slab_spec(kd):
        return pl.BlockSpec((1, 1, Hp, Wp, Cin),
                            lambda b, d, kd=kd: (b, d + kd, 0, 0, 0))

    kern = functools.partial(_conv3d_k3_kernel, H=H, W=W, activation=act)
    out_flat = pl.pallas_call(
        kern,
        # (B, Cout, D*H*W): kernel stores lane-dense (Cout, H*W) slabs; the
        # NCDHW result is a free reshape (no output transpose pass in HBM).
        out_shape=jax.ShapeDtypeStruct((B, Cout, D * H * W), x.dtype),
        grid=(B, D),
        in_specs=[
            slab_spec(0), slab_spec(1), slab_spec(2),
            pl.BlockSpec((3, 3, 3, Cin, Cout), lambda b, d: (0, 0, 0, 0, 0)),
            pl.BlockSpec((Cout, 1), lambda b, d: (0, 0)),
        ],
        out_specs=pl.BlockSpec((1, Cout, H * W), lambda b, d: (b, 0, d)),
        compiler_params=pltpu.CompilerParams(
            dimension_semantics=("parallel", "parallel")),
    )(x_pad, x_pad, x_pad, w_taps, b2)

    return out_flat.reshape(B, Cout, D, H, W)                      # (B, Cout, D, H, W)


# ---------------------------------------------------------------------------
# Pure-JAX reference (XLA conv) for correctness check.
# ---------------------------------------------------------------------------
def out_conv_ref(x, weight, bias, activation_func1=""):
    y = lax.conv_general_dilated(
        x, weight, window_strides=(1, 1, 1), padding=((1, 1), (1, 1), (1, 1)),
        dimension_numbers=("NCDHW", "OIDHW", "NCDHW"))
    y = y + bias.reshape(1, -1, 1, 1, 1)
    act = activation_func1.lower()
    if act == "":
        return y
    if act == "relu":
        return jnp.maximum(y, 0.0)
    if act == "leakyrelu":
        return jnp.where(y > 0.0, y, 0.2 * y)
    if act == "tanh":
        return jnp.tanh(y)
    if act == "sigmoid":
        return jax.nn.sigmoid(y)
    if act == "softmax":
        return jax.nn.softmax(y, axis=1)
    raise NotImplementedError(act)


if __name__ == "__main__":
    key = jax.random.PRNGKey(0)
    B, Cin, Cout, D, H, W = 2, 8, 4, 8, 16, 16

    kx, kw, kb = jax.random.split(key, 3)
    x = jax.random.normal(kx, (B, Cin, D, H, W), jnp.float32)
    weight = jax.random.normal(kw, (Cout, Cin, 3, 3, 3), jnp.float32) / jnp.sqrt(Cin * 27.0)
    bias = 0.1 * jax.random.normal(kb, (Cout,), jnp.float32)

    # OutConv default has no activation (''); also exercise fused elementwise
    # ('relu') and channel-reduction ('softmax', nn.Softmax(dim=1)) paths.
    for act in ("", "relu", "softmax"):
        y = out_conv(x, weight, bias, activation_func1=act)
        jax.block_until_ready(y)
        assert y.shape == (B, Cout, D, H, W)
        y_ref = out_conv_ref(x, weight, bias, activation_func1=act)
        err = float(jnp.max(jnp.abs(y - y_ref)))
        assert jnp.allclose(y, y_ref, rtol=1e-4, atol=1e-4), f"max abs err {err} (act={act!r})"

    print("KERNEL_OK")
</pallas_src>

<mosaic_0001>
module attributes {stable_mosaic.version = 11 : i64} {
  func.func @_conv3d_k3_kernel(%arg0: i32, %arg1: i32, %arg2: memref<1x1x18x18x8xf32, #tpu.memory_space<vmem>>, %arg3: memref<1x1x18x18x8xf32, #tpu.memory_space<vmem>>, %arg4: memref<1x1x18x18x8xf32, #tpu.memory_space<vmem>>, %arg5: memref<3x3x3x8x4xf32, #tpu.memory_space<vmem>>, %arg6: memref<4x1xf32, #tpu.memory_space<vmem>>, %arg7: memref<1x4x256xf32, #tpu.memory_space<vmem>>) attributes {dimension_semantics = [#tpu.dimension_semantics<parallel>, #tpu.dimension_semantics<parallel>], iteration_bounds = array<i64: 2, 8>, scalar_prefetch = 0 : i64, scratch_operands = 0 : i64, tpu.core_type = #tpu.core_type<tc>, window_params = [{transform_indices = @transform_0, window_bounds = array<i64: 1, 1, 18, 18, 8>}, {transform_indices = @transform_1, window_bounds = array<i64: 1, 1, 18, 18, 8>}, {transform_indices = @transform_2, window_bounds = array<i64: 1, 1, 18, 18, 8>}, {pipeline_mode = #tpu.pipeline_mode<synchronous>, transform_indices = @transform_3, window_bounds = array<i64: 3, 3, 3, 8, 4>}, {pipeline_mode = #tpu.pipeline_mode<synchronous>, transform_indices = @transform_4, window_bounds = array<i64: 4, 1>}, {transform_indices = @transform_5, window_bounds = array<i64: 1, 4, 256>}]} {
    %c0 = arith.constant 0 : index
    %c0_0 = arith.constant 0 : index
    %c0_1 = arith.constant 0 : index
    %c0_2 = arith.constant 0 : index
    %c0_3 = arith.constant 0 : index
    %0 = vector.load %arg2[%c0, %c0_0, %c0_1, %c0_2, %c0_3] : memref<1x1x18x18x8xf32, #tpu.memory_space<vmem>>, vector<1x1x18x18x8xf32>
    %1 = vector.shape_cast %0 : vector<1x1x18x18x8xf32> to vector<18x18x8xf32>
    %c0_4 = arith.constant 0 : index
    %c0_5 = arith.constant 0 : index
    %c0_6 = arith.constant 0 : index
    %c0_7 = arith.constant 0 : index
    %c0_8 = arith.constant 0 : index
    %2 = vector.load %arg3[%c0_4, %c0_5, %c0_6, %c0_7, %c0_8] : memref<1x1x18x18x8xf32, #tpu.memory_space<vmem>>, vector<1x1x18x18x8xf32>
    %3 = vector.shape_cast %2 : vector<1x1x18x18x8xf32> to vector<18x18x8xf32>
    %c0_9 = arith.constant 0 : index
    %c0_10 = arith.constant 0 : index
    %c0_11 = arith.constant 0 : index
    %c0_12 = arith.constant 0 : index
    %c0_13 = arith.constant 0 : index
    %4 = vector.load %arg4[%c0_9, %c0_10, %c0_11, %c0_12, %c0_13] : memref<1x1x18x18x8xf32, #tpu.memory_space<vmem>>, vector<1x1x18x18x8xf32>
    %5 = vector.shape_cast %4 : vector<1x1x18x18x8xf32> to vector<18x18x8xf32>
    %cst = arith.constant 0.000000e+00 : f32
    %6 = vector.broadcast %cst : f32 to vector<256x4xf32>
    %7 = vector.extract_strided_slice %1 {offsets = [0, 0, 0], sizes = [16, 18, 8], strides = [1, 1, 1]} : vector<18x18x8xf32> to vector<16x18x8xf32>
    %8 = vector.extract_strided_slice %7 {offsets = [0, 0, 0], sizes = [16, 16, 8], strides = [1, 1, 1]} : vector<16x18x8xf32> to vector<16x16x8xf32>
    %9 = vector.shape_cast %8 : vector<16x16x8xf32> to vector<256x8xf32>
    %c0_14 = arith.constant 0 : index
    %c0_15 = arith.constant 0 : index
    %c0_16 = arith.constant 0 : index
    %c0_17 = arith.constant 0 : index
    %c0_18 = arith.constant 0 : index
    %10 = vector.load %arg5[%c0_14, %c0_15, %c0_16, %c0_17, %c0_18] : memref<3x3x3x8x4xf32, #tpu.memory_space<vmem>>, vector<1x1x1x8x4xf32>
    %11 = vector.shape_cast %10 : vector<1x1x1x8x4xf32> to vector<8x4xf32>
    %cst_19 = arith.constant dense<0.000000e+00> : vector<256x4xf32>
    %12 = tpu.matmul %9, %11, %cst_19 {dimension_numbers = #tpu.dot_dimension_numbers<[1], [0], [0], [1], [0, 0, 1, 1], [], []>} : vector<256x8xf32>, vector<8x4xf32>, vector<256x4xf32> -> vector<256x4xf32>
    %13 = arith.addf %6, %12 : vector<256x4xf32>
    %14 = vector.extract_strided_slice %7 {offsets = [0, 1, 0], sizes = [16, 16, 8], strides = [1, 1, 1]} : vector<16x18x8xf32> to vector<16x16x8xf32>
    %15 = vector.shape_cast %14 : vector<16x16x8xf32> to vector<256x8xf32>
    %c0_20 = arith.constant 0 : index
    %c0_21 = arith.constant 0 : index
    %c1 = arith.constant 1 : index
    %c0_22 = arith.constant 0 : index
    %c0_23 = arith.constant 0 : index
    %16 = vector.load %arg5[%c0_20, %c0_21, %c1, %c0_22, %c0_23] : memref<3x3x3x8x4xf32, #tpu.memory_space<vmem>>, vector<1x1x1x8x4xf32>
    %17 = vector.shape_cast %16 : vector<1x1x1x8x4xf32> to vector<8x4xf32>
    %cst_24 = arith.constant dense<0.000000e+00> : vector<256x4xf32>
    %18 = tpu.matmul %15, %17, %cst_24 {dimension_numbers = #tpu.dot_dimension_numbers<[1], [0], [0], [1], [0, 0, 1, 1], [], []>} : vector<256x8xf32>, vector<8x4xf32>, vector<256x4xf32> -> vector<256x4xf32>
    %19 = arith.addf %13, %18 : vector<256x4xf32>
    %20 = vector.extract_strided_slice %7 {offsets = [0, 2, 0], sizes = [16, 16, 8], strides = [1, 1, 1]} : vector<16x18x8xf32> to vector<16x16x8xf32>
    %21 = vector.shape_cast %20 : vector<16x16x8xf32> to vector<256x8xf32>
    %c0_25 = arith.constant 0 : index
    %c0_26 = arith.constant 0 : index
    %c2 = arith.constant 2 : index
    %c0_27 = arith.constant 0 : index
    %c0_28 = arith.constant 0 : index
    %22 = vector.load %arg5[%c0_25, %c0_26, %c2, %c0_27, %c0_28] : memref<3x3x3x8x4xf32, #tpu.memory_space<vmem>>, vector<1x1x1x8x4xf32>
    %23 = vector.shape_cast %22 : vector<1x1x1x8x4xf32> to vector<8x4xf32>
    %cst_29 = arith.constant dense<0.000000e+00> : vector<256x4xf32>
    %24 = tpu.matmul %21, %23, %cst_29 {dimension_numbers = #tpu.dot_dimension_numbers<[1], [0], [0], [1], [0, 0, 1, 1], [], []>} : vector<256x8xf32>, vector<8x4xf32>, vector<256x4xf32> -> vector<256x4xf32>
    %25 = arith.addf %19, %24 : vector<256x4xf32>
    %26 = vector.extract_strided_slice %1 {offsets = [1, 0, 0], sizes = [16, 18, 8], strides = [1, 1, 1]} : vector<18x18x8xf32> to vector<16x18x8xf32>
    %27 = vector.extract_strided_slice %26 {offsets = [0, 0, 0], sizes = [16, 16, 8], strides = [1, 1, 1]} : vector<16x18x8xf32> to vector<16x16x8xf32>
    %28 = vector.shape_cast %27 : vector<16x16x8xf32> to vector<256x8xf32>
    %c0_30 = arith.constant 0 : index
    %c1_31 = arith.constant 1 : index
    %c0_32 = arith.constant 0 : index
    %c0_33 = arith.constant 0 : index
    %c0_34 = arith.constant 0 : index
    %29 = vector.load %arg5[%c0_30, %c1_31, %c0_32, %c0_33, %c0_34] : memref<3x3x3x8x4xf32, #tpu.memory_space<vmem>>, vector<1x1x1x8x4xf32>
    %30 = vector.shape_cast %29 : vector<1x1x1x8x4xf32> to vector<8x4xf32>
    %cst_35 = arith.constant dense<0.000000e+00> : vector<256x4xf32>
    %31 = tpu.matmul %28, %30, %cst_35 {dimension_numbers = #tpu.dot_dimension_numbers<[1], [0], [0], [1], [0, 0, 1, 1], [], []>} : vector<256x8xf32>, vector<8x4xf32>, vector<256x4xf32> -> vector<256x4xf32>
    %32 = arith.addf %25, %31 : vector<256x4xf32>
    %33 = vector.extract_strided_slice %26 {offsets = [0, 1, 0], sizes = [16, 16, 8], strides = [1, 1, 1]} : vector<16x18x8xf32> to vector<16x16x8xf32>
    %34 = vector.shape_cast %33 : vector<16x16x8xf32> to vector<256x8xf32>
    %c0_36 = arith.constant 0 : index
    %c1_37 = arith.constant 1 : index
    %c1_38 = arith.constant 1 : index
    %c0_39 = arith.constant 0 : index
    %c0_40 = arith.constant 0 : index
    %35 = vector.load %arg5[%c0_36, %c1_37, %c1_38, %c0_39, %c0_40] : memref<3x3x3x8x4xf32, #tpu.memory_space<vmem>>, vector<1x1x1x8x4xf32>
    %36 = vector.shape_cast %35 : vector<1x1x1x8x4xf32> to vector<8x4xf32>
    %cst_41 = arith.constant dense<0.000000e+00> : vector<256x4xf32>
    %37 = tpu.matmul %34, %36, %cst_41 {dimension_numbers = #tpu.dot_dimension_numbers<[1], [0], [0], [1], [0, 0, 1, 1], [], []>} : vector<256x8xf32>, vector<8x4xf32>, vector<256x4xf32> -> vector<256x4xf32>
    %38 = arith.addf %32, %37 : vector<256x4xf32>
    %39 = vector.extract_strided_slice %26 {offsets = [0, 2, 0], sizes = [16, 16, 8], strides = [1, 1, 1]} : vector<16x18x8xf32> to vector<16x16x8xf32>
    %40 = vector.shape_cast %39 : vector<16x16x8xf32> to vector<256x8xf32>
    %c0_42 = arith.constant 0 : index
    %c1_43 = arith.constant 1 : index
    %c2_44 = arith.constant 2 : index
    %c0_45 = arith.constant 0 : index
    %c0_46 = arith.constant 0 : index
    %41 = vector.load %arg5[%c0_42, %c1_43, %c2_44, %c0_45, %c0_46] : memref<3x3x3x8x4xf32, #tpu.memory_space<vmem>>, vector<1x1x1x8x4xf32>
    %42 = vector.shape_cast %41 : vector<1x1x1x8x4xf32> to vector<8x4xf32>
    %cst_47 = arith.constant dense<0.000000e+00> : vector<256x4xf32>
    %43 = tpu.matmul %40, %42, %cst_47 {dimension_numbers = #tpu.dot_dimension_numbers<[1], [0], [0], [1], [0, 0, 1, 1], [], []>} : vector<256x8xf32>, vector<8x4xf32>, vector<256x4xf32> -> vector<256x4xf32>
    %44 = arith.addf %38, %43 : vector<256x4xf32>
    %45 = vector.extract_strided_slice %1 {offsets = [2, 0, 0], sizes = [16, 18, 8], strides = [1, 1, 1]} : vector<18x18x8xf32> to vector<16x18x8xf32>
    %46 = vector.extract_strided_slice %45 {offsets = [0, 0, 0], sizes = [16, 16, 8], strides = [1, 1, 1]} : vector<16x18x8xf32> to vector<16x16x8xf32>
    %47 = vector.shape_cast %46 : vector<16x16x8xf32> to vector<256x8xf32>
    %c0_48 = arith.constant 0 : index
    %c2_49 = arith.constant 2 : index
    %c0_50 = arith.constant 0 : index
    %c0_51 = arith.constant 0 : index
    %c0_52 = arith.constant 0 : index
    %48 = vector.load %arg5[%c0_48, %c2_49, %c0_50, %c0_51, %c0_52] : memref<3x3x3x8x4xf32, #tpu.memory_space<vmem>>, vector<1x1x1x8x4xf32>
    %49 = vector.shape_cast %48 : vector<1x1x1x8x4xf32> to vector<8x4xf32>
    %cst_53 = arith.constant dense<0.000000e+00> : vector<256x4xf32>
    %50 = tpu.matmul %47, %49, %cst_53 {dimension_numbers = #tpu.dot_dimension_numbers<[1], [0], [0], [1], [0, 0, 1, 1], [], []>} : vector<256x8xf32>, vector<8x4xf32>, vector<256x4xf32> -> vector<256x4xf32>
    %51 = arith.addf %44, %50 : vector<256x4xf32>
    %52 = vector.extract_strided_slice %45 {offsets = [0, 1, 0], sizes = [16, 16, 8], strides = [1, 1, 1]} : vector<16x18x8xf32> to vector<16x16x8xf32>
    %53 = vector.shape_cast %52 : vector<16x16x8xf32> to vector<256x8xf32>
    %c0_54 = arith.constant 0 : index
    %c2_55 = arith.constant 2 : index
    %c1_56 = arith.constant 1 : index
    %c0_57 = arith.constant 0 : index
    %c0_58 = arith.constant 0 : index
    %54 = vector.load %arg5[%c0_54, %c2_55, %c1_56, %c0_57, %c0_58] : memref<3x3x3x8x4xf32, #tpu.memory_space<vmem>>, vector<1x1x1x8x4xf32>
    %55 = vector.shape_cast %54 : vector<1x1x1x8x4xf32> to vector<8x4xf32>
    %cst_59 = arith.constant dense<0.000000e+00> : vector<256x4xf32>
    %56 = tpu.matmul %53, %55, %cst_59 {dimension_numbers = #tpu.dot_dimension_numbers<[1], [0], [0], [1], [0, 0, 1, 1], [], []>} : vector<256x8xf32>, vector<8x4xf32>, vector<256x4xf32> -> vector<256x4xf32>
    %57 = arith.addf %51, %56 : vector<256x4xf32>
    %58 = vector.extract_strided_slice %45 {offsets = [0, 2, 0], sizes = [16, 16, 8], strides = [1, 1, 1]} : vector<16x18x8xf32> to vector<16x16x8xf32>
    %59 = vector.shape_cast %58 : vector<16x16x8xf32> to vector<256x8xf32>
    %c0_60 = arith.constant 0 : index
    %c2_61 = arith.constant 2 : index
    %c2_62 = arith.constant 2 : index
    %c0_63 = arith.constant 0 : index
    %c0_64 = arith.constant 0 : index
    %60 = vector.load %arg5[%c0_60, %c2_61, %c2_62, %c0_63, %c0_64] : memref<3x3x3x8x4xf32, #tpu.memory_space<vmem>>, vector<1x1x1x8x4xf32>
    %61 = vector.shape_cast %60 : vector<1x1x1x8x4xf32> to vector<8x4xf32>
    %cst_65 = arith.constant dense<0.000000e+00> : vector<256x4xf32>
    %62 = tpu.matmul %59, %61, %cst_65 {dimension_numbers = #tpu.dot_dimension_numbers<[1], [0], [0], [1], [0, 0, 1, 1], [], []>} : vector<256x8xf32>, vector<8x4xf32>, vector<256x4xf32> -> vector<256x4xf32>
    %63 = arith.addf %57, %62 : vector<256x4xf32>
    %64 = vector.extract_strided_slice %3 {offsets = [0, 0, 0], sizes = [16, 18, 8], strides = [1, 1, 1]} : vector<18x18x8xf32> to vector<16x18x8xf32>
    %65 = vector.extract_strided_slice %64 {offsets = [0, 0, 0], sizes = [16, 16, 8], strides = [1, 1, 1]} : vector<16x18x8xf32> to vector<16x16x8xf32>
    %66 = vector.shape_cast %65 : vector<16x16x8xf32> to vector<256x8xf32>
    %c1_66 = arith.constant 1 : index
    %c0_67 = arith.constant 0 : index
    %c0_68 = arith.constant 0 : index
    %c0_69 = arith.constant 0 : index
    %c0_70 = arith.constant 0 : index
    %67 = vector.load %arg5[%c1_66, %c0_67, %c0_68, %c0_69, %c0_70] : memref<3x3x3x8x4xf32, #tpu.memory_space<vmem>>, vector<1x1x1x8x4xf32>
    %68 = vector.shape_cast %67 : vector<1x1x1x8x4xf32> to vector<8x4xf32>
    %cst_71 = arith.constant dense<0.000000e+00> : vector<256x4xf32>
    %69 = tpu.matmul %66, %68, %cst_71 {dimension_numbers = #tpu.dot_dimension_numbers<[1], [0], [0], [1], [0, 0, 1, 1], [], []>} : vector<256x8xf32>, vector<8x4xf32>, vector<256x4xf32> -> vector<256x4xf32>
    %70 = arith.addf %63, %69 : vector<256x4xf32>
    %71 = vector.extract_strided_slice %64 {offsets = [0, 1, 0], sizes = [16, 16, 8], strides = [1, 1, 1]} : vector<16x18x8xf32> to vector<16x16x8xf32>
    %72 = vector.shape_cast %71 : vector<16x16x8xf32> to vector<256x8xf32>
    %c1_72 = arith.constant 1 : index
    %c0_73 = arith.constant 0 : index
    %c1_74 = arith.constant 1 : index
    %c0_75 = arith.constant 0 : index
    %c0_76 = arith.constant 0 : index
    %73 = vector.load %arg5[%c1_72, %c0_73, %c1_74, %c0_75, %c0_76] : memref<3x3x3x8x4xf32, #tpu.memory_space<vmem>>, vector<1x1x1x8x4xf32>
    %74 = vector.shape_cast %73 : vector<1x1x1x8x4xf32> to vector<8x4xf32>
    %cst_77 = arith.constant dense<0.000000e+00> : vector<256x4xf32>
    %75 = tpu.matmul %72, %74, %cst_77 {dimension_numbers = #tpu.dot_dimension_numbers<[1], [0], [0], [1], [0, 0, 1, 1], [], []>} : vector<256x8xf32>, vector<8x4xf32>, vector<256x4xf32> -> vector<256x4xf32>
    %76 = arith.addf %70, %75 : vector<256x4xf32>
    %77 = vector.extract_strided_slice %64 {offsets = [0, 2, 0], sizes = [16, 16, 8], strides = [1, 1, 1]} : vector<16x18x8xf32> to vector<16x16x8xf32>
    %78 = vector.shape_cast %77 : vector<16x16x8xf32> to vector<256x8xf32>
    %c1_78 = arith.constant 1 : index
    %c0_79 = arith.constant 0 : index
    %c2_80 = arith.constant 2 : index
    %c0_81 = arith.constant 0 : index
    %c0_82 = arith.constant 0 : index
    %79 = vector.load %arg5[%c1_78, %c0_79, %c2_80, %c0_81, %c0_82] : memref<3x3x3x8x4xf32, #tpu.memory_space<vmem>>, vector<1x1x1x8x4xf32>
    %80 = vector.shape_cast %79 : vector<1x1x1x8x4xf32> to vector<8x4xf32>
    %cst_83 = arith.constant dense<0.000000e+00> : vector<256x4xf32>
    %81 = tpu.matmul %78, %80, %cst_83 {dimension_numbers = #tpu.dot_dimension_numbers<[1], [0], [0], [1], [0, 0, 1, 1], [], []>} : vector<256x8xf32>, vector<8x4xf32>, vector<256x4xf32> -> vector<256x4xf32>
    %82 = arith.addf %76, %81 : vector<256x4xf32>
    %83 = vector.extract_strided_slice %3 {offsets = [1, 0, 0], sizes = [16, 18, 8], strides = [1, 1, 1]} : vector<18x18x8xf32> to vector<16x18x8xf32>
    %84 = vector.extract_strided_slice %83 {offsets = [0, 0, 0], sizes = [16, 16, 8], strides = [1, 1, 1]} : vector<16x18x8xf32> to vector<16x16x8xf32>
    %85 = vector.shape_cast %84 : vector<16x16x8xf32> to vector<256x8xf32>
    %c1_84 = arith.constant 1 : index
    %c1_85 = arith.constant 1 : index
    %c0_86 = arith.constant 0 : index
    %c0_87 = arith.constant 0 : index
    %c0_88 = arith.constant 0 : index
    %86 = vector.load %arg5[%c1_84, %c1_85, %c0_86, %c0_87, %c0_88] : memref<3x3x3x8x4xf32, #tpu.memory_space<vmem>>, vector<1x1x1x8x4xf32>
    %87 = vector.shape_cast %86 : vector<1x1x1x8x4xf32> to vector<8x4xf32>
    %cst_89 = arith.constant dense<0.000000e+00> : vector<256x4xf32>
    %88 = tpu.matmul %85, %87, %cst_89 {dimension_numbers = #tpu.dot_dimension_numbers<[1], [0], [0], [1], [0, 0, 1, 1], [], []>} : vector<256x8xf32>, vector<8x4xf32>, vector<256x4xf32> -> vector<256x4xf32>
    %89 = arith.addf %82, %88 : vector<256x4xf32>
    %90 = vector.extract_strided_slice %83 {offsets = [0, 1, 0], sizes = [16, 16, 8], strides = [1, 1, 1]} : vector<16x18x8xf32> to vector<16x16x8xf32>
    %91 = vector.shape_cast %90 : vector<16x16x8xf32> to vector<256x8xf32>
    %c1_90 = arith.constant 1 : index
    %c1_91 = arith.constant 1 : index
    %c1_92 = arith.constant 1 : index
    %c0_93 = arith.constant 0 : index
    %c0_94 = arith.constant 0 : index
    %92 = vector.load %arg5[%c1_90, %c1_91, %c1_92, %c0_93, %c0_94] : memref<3x3x3x8x4xf32, #tpu.memory_space<vmem>>, vector<1x1x1x8x4xf32>
    %93 = vector.shape_cast %92 : vector<1x1x1x8x4xf32> to vector<8x4xf32>
    %cst_95 = arith.constant dense<0.000000e+00> : vector<256x4xf32>
    %94 = tpu.matmul %91, %93, %cst_95 {dimension_numbers = #tpu.dot_dimension_numbers<[1], [0], [0], [1], [0, 0, 1, 1], [], []>} : vector<256x8xf32>, vector<8x4xf32>, vector<256x4xf32> -> vector<256x4xf32>
    %95 = arith.addf %89, %94 : vector<256x4xf32>
    %96 = vector.extract_strided_slice %83 {offsets = [0, 2, 0], sizes = [16, 16, 8], strides = [1, 1, 1]} : vector<16x18x8xf32> to vector<16x16x8xf32>
    %97 = vector.shape_cast %96 : vector<16x16x8xf32> to vector<256x8xf32>
    %c1_96 = arith.constant 1 : index
    %c1_97 = arith.constant 1 : index
    %c2_98 = arith.constant 2 : index
    %c0_99 = arith.constant 0 : index
    %c0_100 = arith.constant 0 : index
    %98 = vector.load %arg5[%c1_96, %c1_97, %c2_98, %c0_99, %c0_100] : memref<3x3x3x8x4xf32, #tpu.memory_space<vmem>>, vector<1x1x1x8x4xf32>
    %99 = vector.shape_cast %98 : vector<1x1x1x8x4xf32> to vector<8x4xf32>
    %cst_101 = arith.constant dense<0.000000e+00> : vector<256x4xf32>
    %100 = tpu.matmul %97, %99, %cst_101 {dimension_numbers = #tpu.dot_dimension_numbers<[1], [0], [0], [1], [0, 0, 1, 1], [], []>} : vector<256x8xf32>, vector<8x4xf32>, vector<256x4xf32> -> vector<256x4xf32>
    %101 = arith.addf %95, %100 : vector<256x4xf32>
    %102 = vector.extract_strided_slice %3 {offsets = [2, 0, 0], sizes = [16, 18, 8], strides = [1, 1, 1]} : vector<18x18x8xf32> to vector<16x18x8xf32>
    %103 = vector.extract_strided_slice %102 {offsets = [0, 0, 0], sizes = [16, 16, 8], strides = [1, 1, 1]} : vector<16x18x8xf32> to vector<16x16x8xf32>
    %104 = vector.shape_cast %103 : vector<16x16x8xf32> to vector<256x8xf32>
    %c1_102 = arith.constant 1 : index
    %c2_103 = arith.constant 2 : index
    %c0_104 = arith.constant 0 : index
    %c0_105 = arith.constant 0 : index
    %c0_106 = arith.constant 0 : index
    %105 = vector.load %arg5[%c1_102, %c2_103, %c0_104, %c0_105, %c0_106] : memref<3x3x3x8x4xf32, #tpu.memory_space<vmem>>, vector<1x1x1x8x4xf32>
    %106 = vector.shape_cast %105 : vector<1x1x1x8x4xf32> to vector<8x4xf32>
    %cst_107 = arith.constant dense<0.000000e+00> : vector<256x4xf32>
    %107 = tpu.matmul %104, %106, %cst_107 {dimension_numbers = #tpu.dot_dimension_numbers<[1], [0], [0], [1], [0, 0, 1, 1], [], []>} : vector<256x8xf32>, vector<8x4xf32>, vector<256x4xf32> -> vector<256x4xf32>
    %108 = arith.addf %101, %107 : vector<256x4xf32>
    %109 = vector.extract_strided_slice %102 {offsets = [0, 1, 0], sizes = [16, 16, 8], strides = [1, 1, 1]} : vector<16x18x8xf32> to vector<16x16x8xf32>
    %110 = vector.shape_cast %109 : vector<16x16x8xf32> to vector<256x8xf32>
    %c1_108 = arith.constant 1 : index
    %c2_109 = arith.constant 2 : index
    %c1_110 = arith.constant 1 : index
    %c0_111 = arith.constant 0 : index
    %c0_112 = arith.constant 0 : index
    %111 = vector.load %arg5[%c1_108, %c2_109, %c1_110, %c0_111, %c0_112] : memref<3x3x3x8x4xf32, #tpu.memory_space<vmem>>, vector<1x1x1x8x4xf32>
    %112 = vector.shape_cast %111 : vector<1x1x1x8x4xf32> to vector<8x4xf32>
    %cst_113 = arith.constant dense<0.000000e+00> : vector<256x4xf32>
    %113 = tpu.matmul %110, %112, %cst_113 {dimension_numbers = #tpu.dot_dimension_numbers<[1], [0], [0], [1], [0, 0, 1, 1], [], []>} : vector<256x8xf32>, vector<8x4xf32>, vector<256x4xf32> -> vector<256x4xf32>
    %114 = arith.addf %108, %113 : vector<256x4xf32>
    %115 = vector.extract_strided_slice %102 {offsets = [0, 2, 0], sizes = [16, 16, 8], strides = [1, 1, 1]} : vector<16x18x8xf32> to vector<16x16x8xf32>
    %116 = vector.shape_cast %115 : vector<16x16x8xf32> to vector<256x8xf32>
    %c1_114 = arith.constant 1 : index
    %c2_115 = arith.constant 2 : index
    %c2_116 = arith.constant 2 : index
    %c0_117 = arith.constant 0 : index
    %c0_118 = arith.constant 0 : index
    %117 = vector.load %arg5[%c1_114, %c2_115, %c2_116, %c0_117, %c0_118] : memref<3x3x3x8x4xf32, #tpu.memory_space<vmem>>, vector<1x1x1x8x4xf32>
    %118 = vector.shape_cast %117 : vector<1x1x1x8x4xf32> to vector<8x4xf32>
    %cst_119 = arith.constant dense<0.000000e+00> : vector<256x4xf32>
    %119 = tpu.matmul %116, %118, %cst_119 {dimension_numbers = #tpu.dot_dimension_numbers<[1], [0], [0], [1], [0, 0, 1, 1], [], []>} : vector<256x8xf32>, vector<8x4xf32>, vector<256x4xf32> -> vector<256x4xf32>
    %120 = arith.addf %114, %119 : vector<256x4xf32>
    %121 = vector.extract_strided_slice %5 {offsets = [0, 0, 0], sizes = [16, 18, 8], strides = [1, 1, 1]} : vector<18x18x8xf32> to vector<16x18x8xf32>
    %122 = vector.extract_strided_slice %121 {offsets = [0, 0, 0], sizes = [16, 16, 8], strides = [1, 1, 1]} : vector<16x18x8xf32> to vector<16x16x8xf32>
    %123 = vector.shape_cast %122 : vector<16x16x8xf32> to vector<256x8xf32>
    %c2_120 = arith.constant 2 : index
    %c0_121 = arith.constant 0 : index
    %c0_122 = arith.constant 0 : index
    %c0_123 = arith.constant 0 : index
    %c0_124 = arith.constant 0 : index
    %124 = vector.load %arg5[%c2_120, %c0_121, %c0_122, %c0_123, %c0_124] : memref<3x3x3x8x4xf32, #tpu.memory_space<vmem>>, vector<1x1x1x8x4xf32>
    %125 = vector.shape_cast %124 : vector<1x1x1x8x4xf32> to vector<8x4xf32>
    %cst_125 = arith.constant dense<0.000000e+00> : vector<256x4xf32>
    %126 = tpu.matmul %123, %125, %cst_125 {dimension_numbers = #tpu.dot_dimension_numbers<[1], [0], [0], [1], [0, 0, 1, 1], [], []>} : vector<256x8xf32>, vector<8x4xf32>, vector<256x4xf32> -> vector<256x4xf32>
    %127 = arith.addf %120, %126 : vector<256x4xf32>
    %128 = vector.extract_strided_slice %121 {offsets = [0, 1, 0], sizes = [16, 16, 8], strides = [1, 1, 1]} : vector<16x18x8xf32> to vector<16x16x8xf32>
    %129 = vector.shape_cast %128 : vector<16x16x8xf32> to vector<256x8xf32>
    %c2_126 = arith.constant 2 : index
    %c0_127 = arith.constant 0 : index
    %c1_128 = arith.constant 1 : index
    %c0_129 = arith.constant 0 : index
    %c0_130 = arith.constant 0 : index
    %130 = vector.load %arg5[%c2_126, %c0_127, %c1_128, %c0_129, %c0_130] : memref<3x3x3x8x4xf32, #tpu.memory_space<vmem>>, vector<1x1x1x8x4xf32>
    %131 = vector.shape_cast %130 : vector<1x1x1x8x4xf32> to vector<8x4xf32>
    %cst_131 = arith.constant dense<0.000000e+00> : vector<256x4xf32>
    %132 = tpu.matmul %129, %131, %cst_131 {dimension_numbers = #tpu.dot_dimension_numbers<[1], [0], [0], [1], [0, 0, 1, 1], [], []>} : vector<256x8xf32>, vector<8x4xf32>, vector<256x4xf32> -> vector<256x4xf32>
    %133 = arith.addf %127, %132 : vector<256x4xf32>
    %134 = vector.extract_strided_slice %121 {offsets = [0, 2, 0], sizes = [16, 16, 8], strides = [1, 1, 1]} : vector<16x18x8xf32> to vector<16x16x8xf32>
    %135 = vector.shape_cast %134 : vector<16x16x8xf32> to vector<256x8xf32>
    %c2_132 = arith.constant 2 : index
    %c0_133 = arith.constant 0 : index
    %c2_134 = arith.constant 2 : index
    %c0_135 = arith.constant 0 : index
    %c0_136 = arith.constant 0 : index
    %136 = vector.load %arg5[%c2_132, %c0_133, %c2_134, %c0_135, %c0_136] : memref<3x3x3x8x4xf32, #tpu.memory_space<vmem>>, vector<1x1x1x8x4xf32>
    %137 = vector.shape_cast %136 : vector<1x1x1x8x4xf32> to vector<8x4xf32>
    %cst_137 = arith.constant dense<0.000000e+00> : vector<256x4xf32>
    %138 = tpu.matmul %135, %137, %cst_137 {dimension_numbers = #tpu.dot_dimension_numbers<[1], [0], [0], [1], [0, 0, 1, 1], [], []>} : vector<256x8xf32>, vector<8x4xf32>, vector<256x4xf32> -> vector<256x4xf32>
    %139 = arith.addf %133, %138 : vector<256x4xf32>
    %140 = vector.extract_strided_slice %5 {offsets = [1, 0, 0], sizes = [16, 18, 8], strides = [1, 1, 1]} : vector<18x18x8xf32> to vector<16x18x8xf32>
    %141 = vector.extract_strided_slice %140 {offsets = [0, 0, 0], sizes = [16, 16, 8], strides = [1, 1, 1]} : vector<16x18x8xf32> to vector<16x16x8xf32>
    %142 = vector.shape_cast %141 : vector<16x16x8xf32> to vector<256x8xf32>
    %c2_138 = arith.constant 2 : index
    %c1_139 = arith.constant 1 : index
    %c0_140 = arith.constant 0 : index
    %c0_141 = arith.constant 0 : index
    %c0_142 = arith.constant 0 : index
    %143 = vector.load %arg5[%c2_138, %c1_139, %c0_140, %c0_141, %c0_142] : memref<3x3x3x8x4xf32, #tpu.memory_space<vmem>>, vector<1x1x1x8x4xf32>
    %144 = vector.shape_cast %143 : vector<1x1x1x8x4xf32> to vector<8x4xf32>
    %cst_143 = arith.constant dense<0.000000e+00> : vector<256x4xf32>
    %145 = tpu.matmul %142, %144, %cst_143 {dimension_numbers = #tpu.dot_dimension_numbers<[1], [0], [0], [1], [0, 0, 1, 1], [], []>} : vector<256x8xf32>, vector<8x4xf32>, vector<256x4xf32> -> vector<256x4xf32>
    %146 = arith.addf %139, %145 : vector<256x4xf32>
    %147 = vector.extract_strided_slice %140 {offsets = [0, 1, 0], sizes = [16, 16, 8], strides = [1, 1, 1]} : vector<16x18x8xf32> to vector<16x16x8xf32>
    %148 = vector.shape_cast %147 : vector<16x16x8xf32> to vector<256x8xf32>
    %c2_144 = arith.constant 2 : index
    %c1_145 = arith.constant 1 : index
    %c1_146 = arith.constant 1 : index
    %c0_147 = arith.constant 0 : index
    %c0_148 = arith.constant 0 : index
    %149 = vector.load %arg5[%c2_144, %c1_145, %c1_146, %c0_147, %c0_148] : memref<3x3x3x8x4xf32, #tpu.memory_space<vmem>>, vector<1x1x1x8x4xf32>
    %150 = vector.shape_cast %149 : vector<1x1x1x8x4xf32> to vector<8x4xf32>
    %cst_149 = arith.constant dense<0.000000e+00> : vector<256x4xf32>
    %151 = tpu.matmul %148, %150, %cst_149 {dimension_numbers = #tpu.dot_dimension_numbers<[1], [0], [0], [1], [0, 0, 1, 1], [], []>} : vector<256x8xf32>, vector<8x4xf32>, vector<256x4xf32> -> vector<256x4xf32>
    %152 = arith.addf %146, %151 : vector<256x4xf32>
    %153 = vector.extract_strided_slice %140 {offsets = [0, 2, 0], sizes = [16, 16, 8], strides = [1, 1, 1]} : vector<16x18x8xf32> to vector<16x16x8xf32>
    %154 = vector.shape_cast %153 : vector<16x16x8xf32> to vector<256x8xf32>
    %c2_150 = arith.constant 2 : index
    %c1_151 = arith.constant 1 : index
    %c2_152 = arith.constant 2 : index
    %c0_153 = arith.constant 0 : index
    %c0_154 = arith.constant 0 : index
    %155 = vector.load %arg5[%c2_150, %c1_151, %c2_152, %c0_153, %c0_154] : memref<3x3x3x8x4xf32, #tpu.memory_space<vmem>>, vector<1x1x1x8x4xf32>
    %156 = vector.shape_cast %155 : vector<1x1x1x8x4xf32> to vector<8x4xf32>
    %cst_155 = arith.constant dense<0.000000e+00> : vector<256x4xf32>
    %157 = tpu.matmul %154, %156, %cst_155 {dimension_numbers = #tpu.dot_dimension_numbers<[1], [0], [0], [1], [0, 0, 1, 1], [], []>} : vector<256x8xf32>, vector<8x4xf32>, vector<256x4xf32> -> vector<256x4xf32>
    %158 = arith.addf %152, %157 : vector<256x4xf32>
    %159 = vector.extract_strided_slice %5 {offsets = [2, 0, 0], sizes = [16, 18, 8], strides = [1, 1, 1]} : vector<18x18x8xf32> to vector<16x18x8xf32>
    %160 = vector.extract_strided_slice %159 {offsets = [0, 0, 0], sizes = [16, 16, 8], strides = [1, 1, 1]} : vector<16x18x8xf32> to vector<16x16x8xf32>
    %161 = vector.shape_cast %160 : vector<16x16x8xf32> to vector<256x8xf32>
    %c2_156 = arith.constant 2 : index
    %c2_157 = arith.constant 2 : index
    %c0_158 = arith.constant 0 : index
    %c0_159 = arith.constant 0 : index
    %c0_160 = arith.constant 0 : index
    %162 = vector.load %arg5[%c2_156, %c2_157, %c0_158, %c0_159, %c0_160] : memref<3x3x3x8x4xf32, #tpu.memory_space<vmem>>, vector<1x1x1x8x4xf32>
    %163 = vector.shape_cast %162 : vector<1x1x1x8x4xf32> to vector<8x4xf32>
    %cst_161 = arith.constant dense<0.000000e+00> : vector<256x4xf32>
    %164 = tpu.matmul %161, %163, %cst_161 {dimension_numbers = #tpu.dot_dimension_numbers<[1], [0], [0], [1], [0, 0, 1, 1], [], []>} : vector<256x8xf32>, vector<8x4xf32>, vector<256x4xf32> -> vector<256x4xf32>
    %165 = arith.addf %158, %164 : vector<256x4xf32>
    %166 = vector.extract_strided_slice %159 {offsets = [0, 1, 0], sizes = [16, 16, 8], strides = [1, 1, 1]} : vector<16x18x8xf32> to vector<16x16x8xf32>
    %167 = vector.shape_cast %166 : vector<16x16x8xf32> to vector<256x8xf32>
    %c2_162 = arith.constant 2 : index
    %c2_163 = arith.constant 2 : index
    %c1_164 = arith.constant 1 : index
    %c0_165 = arith.constant 0 : index
    %c0_166 = arith.constant 0 : index
    %168 = vector.load %arg5[%c2_162, %c2_163, %c1_164, %c0_165, %c0_166] : memref<3x3x3x8x4xf32, #tpu.memory_space<vmem>>, vector<1x1x1x8x4xf32>
    %169 = vector.shape_cast %168 : vector<1x1x1x8x4xf32> to vector<8x4xf32>
    %cst_167 = arith.constant dense<0.000000e+00> : vector<256x4xf32>
    %170 = tpu.matmul %167, %169, %cst_167 {dimension_numbers = #tpu.dot_dimension_numbers<[1], [0], [0], [1], [0, 0, 1, 1], [], []>} : vector<256x8xf32>, vector<8x4xf32>, vector<256x4xf32> -> vector<256x4xf32>
    %171 = arith.addf %165, %170 : vector<256x4xf32>
    %172 = vector.extract_strided_slice %159 {offsets = [0, 2, 0], sizes = [16, 16, 8], strides = [1, 1, 1]} : vector<16x18x8xf32> to vector<16x16x8xf32>
    %173 = vector.shape_cast %172 : vector<16x16x8xf32> to vector<256x8xf32>
    %c2_168 = arith.constant 2 : index
    %c2_169 = arith.constant 2 : index
    %c2_170 = arith.constant 2 : index
    %c0_171 = arith.constant 0 : index
    %c0_172 = arith.constant 0 : index
    %174 = vector.load %arg5[%c2_168, %c2_169, %c2_170, %c0_171, %c0_172] : memref<3x3x3x8x4xf32, #tpu.memory_space<vmem>>, vector<1x1x1x8x4xf32>
    %175 = vector.shape_cast %174 : vector<1x1x1x8x4xf32> to vector<8x4xf32>
    %cst_173 = arith.constant dense<0.000000e+00> : vector<256x4xf32>
    %176 = tpu.matmul %173, %175, %cst_173 {dimension_numbers = #tpu.dot_dimension_numbers<[1], [0], [0], [1], [0, 0, 1, 1], [], []>} : vector<256x8xf32>, vector<8x4xf32>, vector<256x4xf32> -> vector<256x4xf32>
    %177 = arith.addf %171, %176 : vector<256x4xf32>
    %178 = tpu.transpose %177, [1, 0] : vector<256x4xf32> -> vector<4x256xf32>
    %c0_174 = arith.constant 0 : index
    %c0_175 = arith.constant 0 : index
    %179 = vector.load %arg6[%c0_174, %c0_175] : memref<4x1xf32, #tpu.memory_space<vmem>>, vector<4x1xf32>
    %180 = vector.broadcast %179 : vector<4x1xf32> to vector<4x256xf32>
    %181 = arith.addf %178, %180 : vector<4x256xf32>
    %c0_176 = arith.constant 0 : index
    %c0_177 = arith.constant 0 : index
    %c0_178 = arith.constant 0 : index
    %182 = vector.load %arg7[%c0_176, %c0_177, %c0_178] : memref<1x4x256xf32, #tpu.memory_space<vmem>>, vector<1x4x256xf32>
    %183 = vector.shape_cast %182 : vector<1x4x256xf32> to vector<4x256xf32>
    %184 = vector.shape_cast %181 : vector<4x256xf32> to vector<1x4x256xf32>
    tpu.vector_store %arg7[%c0_176, %c0_177, %c0_178], %184 {strides = array<i32>} : memref<1x4x256xf32, #tpu.memory_space<vmem>>, vector<1x4x256xf32>,
    return
  }
  func.func @transform_0(%arg0: i32, %arg1: i32) -> (i32, i32, i32, i32, i32) {
    %c0_i32 = arith.constant 0 : i32
    %0 = arith.addi %arg1, %c0_i32 : i32
    %c0_i32_0 = arith.constant 0 : i32
    %c0_i32_1 = arith.constant 0 : i32
    %c0_i32_2 = arith.constant 0 : i32
    %c0_i32_3 = arith.constant 0 : i32
    return %arg0, %0, %c0_i32_0, %c0_i32_1, %c0_i32_2 : i32, i32, i32, i32, i32
  }
  func.func @transform_1(%arg0: i32, %arg1: i32) -> (i32, i32, i32, i32, i32) {
    %c1_i32 = arith.constant 1 : i32
    %0 = arith.addi %arg1, %c1_i32 : i32
    %c0_i32 = arith.constant 0 : i32
    %c0_i32_0 = arith.constant 0 : i32
    %c0_i32_1 = arith.constant 0 : i32
    %c0_i32_2 = arith.constant 0 : i32
    return %arg0, %0, %c0_i32, %c0_i32_0, %c0_i32_1 : i32, i32, i32, i32, i32
  }
  func.func @transform_2(%arg0: i32, %arg1: i32) -> (i32, i32, i32, i32, i32) {
    %c2_i32 = arith.constant 2 : i32
    %0 = arith.addi %arg1, %c2_i32 : i32
    %c0_i32 = arith.constant 0 : i32
    %c0_i32_0 = arith.constant 0 : i32
    %c0_i32_1 = arith.constant 0 : i32
    %c0_i32_2 = arith.constant 0 : i32
    return %arg0, %0, %c0_i32, %c0_i32_0, %c0_i32_1 : i32, i32, i32, i32, i32
  }
  func.func @transform_3(%arg0: i32, %arg1: i32) -> (i32, i32, i32, i32, i32) {
    %c0_i32 = arith.constant 0 : i32
    %c0_i32_0 = arith.constant 0 : i32
    %c0_i32_1 = arith.constant 0 : i32
    %c0_i32_2 = arith.constant 0 : i32
    %c0_i32_3 = arith.constant 0 : i32
    %c0_i32_4 = arith.constant 0 : i32
    return %c0_i32, %c0_i32_0, %c0_i32_1, %c0_i32_2, %c0_i32_3 : i32, i32, i32, i32, i32
  }
  func.func @transform_4(%arg0: i32, %arg1: i32) -> (i32, i32) {
    %c0_i32 = arith.constant 0 : i32
    %c0_i32_0 = arith.constant 0 : i32
    %c0_i32_1 = arith.constant 0 : i32
    return %c0_i32, %c0_i32_0 : i32, i32
  }
  func.func @transform_5(%arg0: i32, %arg1: i32) -> (i32, i32, i32) {
    %c0_i32 = arith.constant 0 : i32
    %c0_i32_0 = arith.constant 0 : i32
    return %arg0, %c0_i32, %arg1 : i32, i32, i32
  }
}

</mosaic_0001>

<llo_original>
// kernel: out_conv.1
$region0: #{out_conv.1}
  #allocation0 [shape = 'u32[]', space=smem, size = 0x4, offset = 0x4, fixed_abs, tag = 'smem constant byte address 0x4 - core index']
  #allocation1 [shape = 'u32[144,128]{1,0:T(1,128)}', space=vmem, size = 0x12000, scoped, tag = 'internal scratch']
  %s0 = inlined_call_operand.vmem [shape: f32[2,10,18,18,8], index: 0, kind: input, shape index: {}, may-alias: {0,1,2}]
  %s1 = inlined_call_operand.vmem [shape: f32[2,10,18,18,8], index: 1, kind: input, shape index: {}, may-alias: {0,1,2}]
  %s2 = inlined_call_operand.vmem [shape: f32[2,10,18,18,8], index: 2, kind: input, shape index: {}, may-alias: {0,1,2}]
  %s3 = inlined_call_operand.vmem [shape: f32[3,3,3,8,4], index: 3, kind: input, shape index: {}]
  %s4 = inlined_call_operand.vmem [shape: f32[4,1], index: 4, kind: input, shape index: {}]
  %s5 = inlined_call_operand.vmem [shape: f32[2,4,2048], index: 5, kind: output, shape index: {}]
  %s6 = sld [smem:[#allocation0]]
  $region53: #{out_conv.1} parent=0
    _
  %s8 = ssub.s32 1, %s6
  %s9 = scalar_select 0, %s8, %s6
  loop: start=0, step=1, limit=18
  $region2: #{out_conv.1} parent=0 // loop_pre_header
    _
  $region3: #{out_conv.1} parent=0 // loop_header
    %s11 = sphi 0, %s15
    %p12 = scmp.ge.s32.totalorder %s11, 18
    %s18 = sphi 0, %s30
    %s19 = sphi 0, %s26
    %s20 = sphi 0, %s18
    %s21 = sphi 0, %s19
    %s22 = sphi 0, %s20
    %s23 = sphi 0, %s21
    %s35 = sphi 0, %s37
    %s38 = sphi 0, %s35
    %s39 = sphi 0, %s38
    %s55 = sphi 0, %s39
    %s65 = sphi 0, %s67
    %s68 = sphi 0, %s65
    %s69 = sphi 0, %s68
    %s85 = sphi 0, %s69
    %s95 = sphi 0, %s97
    %s98 = sphi 0, %s95
    %s99 = sphi 0, %s98
    %s115 = sphi 0, %s99
    %s119 = sphi 0, %s119
    %s121 = sphi 0, %s119
    %s122 = sphi 0, %s121
    %s136 = sphi 0, %s122
    %s140 = sphi 0, %s140
    %s142 = sphi 0, %s140
    %s143 = sphi 0, %s142
    %s157 = sphi 0, %s143
    %s165 = sphi 0, %s167
    %s168 = sphi 0, %s165
    %s169 = sphi 0, %s168
    %s185 = sphi 0, %s169
  $region4: #{out_conv.1} parent=0 // loop_header_branch
    %14 = sbr.rel (%p12) target = $region8
  $region5: #{out_conv.1} parent=0 // loop_body
    %s16 = ssub.s32 %s11, 1
    %s17 = ssub.s32 %s11, 2
    %s24 = sadd.s32 1, %s19
    %p25 = scmp.ge.s32.totalorder %s24, 8
    %s26 = scalar_select %p25, 0, %s24
    %s27 = sadd.s32 1, %s18
    %s28 = scalar_select %p25, %s27, %s18
    %p29 = scmp.ge.s32.totalorder %s28, 2
    %s30 = scalar_select %p29, 0, %s28
    %s31 = ssub.s32 %s18, %s30
    %s32 = ssub.s32 %s19, %s26
    %s33 = sor.u32 %s31, %s32
    %p34 = scmp.eq.s32.totalorder %s33, 0
    %s36 = sadd.s32 %s35, 1
    %s37 = scalar_select %p34, %s35, %s36
    %p40 = pneg %p34
    %p41 = scmp.eq.s32.totalorder %s11, 15
    %p42 = por %p40, %p41
    %p43 = scmp.ne.s32.totalorder %s35, %s38
    %p44 = scmp.eq.s32.totalorder %s11, 0
    %p45 = por %p43, %p44
    %p46 = scmp.ne.s32.totalorder %s35, %s38
    %p47 = scmp.eq.s32.totalorder %s16, 15
    %p48 = por %p46, %p47
    %p49 = scmp.ne.s32.totalorder %s38, %s39
    %p50 = scmp.eq.s32.totalorder %s16, 0
    %p51 = por %p49, %p50
    %p52 = scmp.ne.s32.totalorder %s38, %s39
    %p53 = scmp.eq.s32.totalorder %s17, 15
    %p54 = por %p52, %p53
    %p56 = scmp.ne.s32.totalorder %s39, %s55
    %p57 = scmp.eq.s32.totalorder %s17, 0
    %p58 = por %p56, %p57
    %s59 = sadd.s32 %s19, 1
    %s60 = sadd.s32 %s26, 1
    %s61 = ssub.s32 %s18, %s30
    %s62 = ssub.s32 %s59, %s60
    %s63 = sor.u32 %s61, %s62
    %p64 = scmp.eq.s32.totalorder %s63, 0
    %s66 = sadd.s32 %s65, 1
    %s67 = scalar_select %p64, %s65, %s66
    %p70 = pneg %p64
    %p71 = scmp.eq.s32.totalorder %s11, 15
    %p72 = por %p70, %p71
    %p73 = scmp.ne.s32.totalorder %s65, %s68
    %p74 = scmp.eq.s32.totalorder %s11, 0
    %p75 = por %p73, %p74
    %p76 = scmp.ne.s32.totalorder %s65, %s68
    %p77 = scmp.eq.s32.totalorder %s16, 15
    %p78 = por %p76, %p77
    %p79 = scmp.ne.s32.totalorder %s68, %s69
    %p80 = scmp.eq.s32.totalorder %s16, 0
    %p81 = por %p79, %p80
    %p82 = scmp.ne.s32.totalorder %s68, %s69
    %p83 = scmp.eq.s32.totalorder %s17, 15
    %p84 = por %p82, %p83
    %p86 = scmp.ne.s32.totalorder %s69, %s85
    %p87 = scmp.eq.s32.totalorder %s17, 0
    %p88 = por %p86, %p87
    %s89 = sadd.s32 %s19, 2
    %s90 = sadd.s32 %s26, 2
    %s91 = ssub.s32 %s18, %s30
    %s92 = ssub.s32 %s89, %s90
    %s93 = sor.u32 %s91, %s92
    %p94 = scmp.eq.s32.totalorder %s93, 0
    %s96 = sadd.s32 %s95, 1
    %s97 = scalar_select %p94, %s95, %s96
    %p100 = pneg %p94
    %p101 = scmp.eq.s32.totalorder %s11, 15
    %p102 = por %p100, %p101
    %p103 = scmp.ne.s32.totalorder %s95, %s98
    %p104 = scmp.eq.s32.totalorder %s11, 0
    %p105 = por %p103, %p104
    %p106 = scmp.ne.s32.totalorder %s95, %s98
    %p107 = scmp.eq.s32.totalorder %s16, 15
    %p108 = por %p106, %p107
    %p109 = scmp.ne.s32.totalorder %s98, %s99
    %p110 = scmp.eq.s32.totalorder %s16, 0
    %p111 = por %p109, %p110
    %p112 = scmp.ne.s32.totalorder %s98, %s99
    %p113 = scmp.eq.s32.totalorder %s17, 15
    %p114 = por %p112, %p113
    %p116 = scmp.ne.s32.totalorder %s99, %s115
    %p117 = scmp.eq.s32.totalorder %s17, 0
    %p118 = por %p116, %p117
    %s120 = sadd.s32 %s119, 1
    %p123 = scmp.eq.s32.totalorder %s11, 15
    %p124 = scmp.ne.s32.totalorder %s119, %s121
    %p125 = scmp.eq.s32.totalorder %s11, 0
    %p126 = por %p124, %p125
    %p127 = scmp.ne.s32.totalorder %s119, %s121
    %p128 = scmp.eq.s32.totalorder %s16, 15
    %p129 = por %p127, %p128
    %p130 = scmp.ne.s32.totalorder %s121, %s122
    %p131 = scmp.eq.s32.totalorder %s16, 0
    %p132 = por %p130, %p131
    %p133 = scmp.ne.s32.totalorder %s121, %s122
    %p134 = scmp.eq.s32.totalorder %s17, 15
    %p135 = por %p133, %p134
    %p137 = scmp.ne.s32.totalorder %s122, %s136
    %p138 = scmp.eq.s32.totalorder %s17, 0
    %p139 = por %p137, %p138
    %s141 = sadd.s32 %s140, 1
    %p144 = scmp.eq.s32.totalorder %s11, 15
    %p145 = scmp.ne.s32.totalorder %s140, %s142
    %p146 = scmp.eq.s32.totalorder %s11, 0
    %p147 = por %p145, %p146
    %p148 = scmp.ne.s32.totalorder %s140, %s142
    %p149 = scmp.eq.s32.totalorder %s16, 15
    %p150 = por %p148, %p149
    %p151 = scmp.ne.s32.totalorder %s142, %s143
    %p152 = scmp.eq.s32.totalorder %s16, 0
    %p153 = por %p151, %p152
    %p154 = scmp.ne.s32.totalorder %s142, %s143
    %p155 = scmp.eq.s32.totalorder %s17, 15
    %p156 = por %p154, %p155
    %p158 = scmp.ne.s32.totalorder %s143, %s157
    %p159 = scmp.eq.s32.totalorder %s17, 0
    %p160 = por %p158, %p159
    %s161 = ssub.s32 %s18, %s30
    %s162 = ssub.s32 %s19, %s26
    %s163 = sor.u32 %s161, %s162
    %p164 = scmp.eq.s32.totalorder %s163, 0
    %s166 = sadd.s32 %s165, 1
    %s167 = scalar_select %p164, %s165, %s166
    %p170 = pneg %p164
    %p171 = scmp.eq.s32.totalorder %s11, 15
    %p172 = por %p170, %p171
    %p173 = scmp.ne.s32.totalorder %s165, %s168
    %p174 = scmp.eq.s32.totalorder %s11, 0
    %p175 = por %p173, %p174
    %p176 = scmp.ne.s32.totalorder %s165, %s168
    %p177 = scmp.eq.s32.totalorder %s16, 15
    %p178 = por %p176, %p177
    %p179 = scmp.ne.s32.totalorder %s168, %s169
    %p180 = scmp.eq.s32.totalorder %s16, 0
    %p181 = por %p179, %p180
    %p182 = scmp.ne.s32.totalorder %s168, %s169
    %p183 = scmp.eq.s32.totalorder %s17, 15
    %p184 = por %p182, %p183
    %p186 = scmp.ne.s32.totalorder %s169, %s185
    %p187 = scmp.eq.s32.totalorder %s17, 0
    %p188 = por %p186, %p187
    %p189 = scmp.le.s32.totalorder 1, %s11
    %p190 = scmp.lt.s32.totalorder %s11, 17
    %p191 = pnand %p189, %p190
    %p192 = pneg %p191
    // Predicated region
    $region9: #{out_conv.1} parent=5 // pred_check
      _
    $region10: #{out_conv.1} parent=5 // pred_check_branch
      %194 = sbr.rel (%p191) target = $region12
    $region11: #{out_conv.1} parent=5 // pred_region
      %s195 = ssub.s32 %s11, 1
      // Predicated region
      $region13: #{out_conv.1} parent=11 // pred_check
        %p196 = pneg %p132
      $region14: #{out_conv.1} parent=11 // pred_check_branch
        %198 = sbr.rel (%p196) target = $region16
      $region15: #{out_conv.1} parent=11 // pred_region
        _
      $region16: #{out_conv.1} parent=11 // pred_fallthru
        _
      // Predicated region
      $region17: #{out_conv.1} parent=11 // pred_check
        %p199 = pneg %p153
      $region18: #{out_conv.1} parent=11 // pred_check_branch
        %201 = sbr.rel (%p199) target = $region20
      $region19: #{out_conv.1} parent=11 // pred_region
        _
      $region20: #{out_conv.1} parent=11 // pred_fallthru
        _
    $region12: #{out_conv.1} parent=5 // pred_fallthru
      _
    %p202 = scmp.lt.s32.totalorder %s11, 16
    // Predicated region
    $region21: #{out_conv.1} parent=5 // pred_check
      %p203 = pneg %p202
    $region22: #{out_conv.1} parent=5 // pred_check_branch
      %205 = sbr.rel (%p203) target = $region24
    $region23: #{out_conv.1} parent=5 // pred_region
      // Predicated region
      $region25: #{out_conv.1} parent=23 // pred_check
        %p206 = pneg %p45
      $region26: #{out_conv.1} parent=23 // pred_check_branch
        %208 = sbr.rel (%p206) target = $region28
      $region27: #{out_conv.1} parent=23 // pred_region
        %p209 = scmp.lt.s32.totalorder %s18, 1
        %s210 = scalar_select %p209, %s18, 1
        %p211 = scmp.lt.s32.totalorder %s19, 9
        %s212 = scalar_select %p211, %s19, 9
        %s213 = smul.addr %s212, 54
        %s214 = smul.addr %s210, 540
        %s215 = sadd.s32 %s213, %s214
        %s216 = smul.addr %s215, 8
        %s217 = scalar_lea.vmem %s0, %s216
      $region28: #{out_conv.1} parent=23 // pred_fallthru
        _
      // Predicated region
      $region29: #{out_conv.1} parent=23 // pred_check
        %p218 = pneg %p75
      $region30: #{out_conv.1} parent=23 // pred_check_branch
        %220 = sbr.rel (%p218) target = $region32
      $region31: #{out_conv.1} parent=23 // pred_region
        %s221 = sadd.s32 %s19, 1
        %p222 = scmp.lt.s32.totalorder %s18, 1
        %s223 = scalar_select %p222, %s18, 1
        %p224 = scmp.lt.s32.totalorder %s221, 9
        %s225 = scalar_select %p224, %s221, 9
        %s226 = smul.addr %s225, 54
        %s227 = smul.addr %s223, 540
        %s228 = sadd.s32 %s226, %s227
        %s229 = smul.addr %s228, 8
        %s230 = scalar_lea.vmem %s1, %s229
        %s231 = sadd.s32 %s19, 1
      $region32: #{out_conv.1} parent=23 // pred_fallthru
        _
      // Predicated region
      $region33: #{out_conv.1} parent=23 // pred_check
        %p232 = pneg %p105
      $region34: #{out_conv.1} parent=23 // pred_check_branch
        %234 = sbr.rel (%p232) target = $region36
      $region35: #{out_conv.1} parent=23 // pred_region
        %s235 = sadd.s32 %s19, 2
        %p236 = scmp.lt.s32.totalorder %s18, 1
        %s237 = scalar_select %p236, %s18, 1
        %p238 = scmp.lt.s32.totalorder %s235, 9
        %s239 = scalar_select %p238, %s235, 9
        %s240 = smul.addr %s239, 54
        %s241 = smul.addr %s237, 540
        %s242 = sadd.s32 %s240, %s241
        %s243 = smul.addr %s242, 8
        %s244 = scalar_lea.vmem %s2, %s243
        %s245 = sadd.s32 %s19, 2
      $region36: #{out_conv.1} parent=23 // pred_fallthru
        _
    $region24: #{out_conv.1} parent=5 // pred_fallthru
      _
    %p246 = scmp.le.s32.totalorder 1, %s11
    %p247 = scmp.lt.s32.totalorder %s11, 17
    %p248 = pnand %p246, %p247
    %p249 = pneg %p248
    // Predicated region
    $region37: #{out_conv.1} parent=5 // pred_check
      _
    $region38: #{out_conv.1} parent=5 // pred_check_branch
      %251 = sbr.rel (%p248) target = $region40
    $region39: #{out_conv.1} parent=5 // pred_region
      %s252 = ssub.s32 %s11, 1
      %p253 = scmp.lt.s32.totalorder %s20, 1
      %s254 = scalar_select %p253, %s20, 1
      %p255 = scmp.lt.s32.totalorder %s21, 9
      %s256 = scalar_select %p255, %s21, 9
      %s257 = smul.addr %s256, 54
      %s258 = smul.addr %s254, 540
      %s259 = sadd.s32 %s257, %s258
      %s260 = smul.addr %s259, 8
      %s261 = scalar_lea.vmem %s0, %s260
      %p262 = pneg %p51
      %p263 = pneg %p48
      %s264 = sadd.s32 %s21, 1
      %p265 = scmp.lt.s32.totalorder %s20, 1
      %s266 = scalar_select %p265, %s20, 1
      %p267 = scmp.lt.s32.totalorder %s264, 9
      %s268 = scalar_select %p267, %s264, 9
      %s269 = smul.addr %s268, 54
      %s270 = smul.addr %s266, 540
      %s271 = sadd.s32 %s269, %s270
      %s272 = smul.addr %s271, 8
      %s273 = scalar_lea.vmem %s1, %s272
      %p274 = pneg %p81
      %p275 = pneg %p78
      %s276 = sadd.s32 %s21, 2
      %p277 = scmp.lt.s32.totalorder %s20, 1
      %s278 = scalar_select %p277, %s20, 1
      %p279 = scmp.lt.s32.totalorder %s276, 9
      %s280 = scalar_select %p279, %s276, 9
      %s281 = smul.addr %s280, 54
      %s282 = smul.addr %s278, 540
      %s283 = sadd.s32 %s281, %s282
      %s284 = smul.addr %s283, 8
      %s285 = scalar_lea.vmem %s2, %s284
      %p286 = pneg %p111
      %p287 = pneg %p108
      %p288 = pneg %p132
      %p289 = pneg %p129
      %p290 = pneg %p153
      %p291 = pneg %p150
      %p292 = pneg %p181
      %p293 = pneg %p178
      %s294 = smul.u32 2, %s21
      %p295 = scmp.lt.s32.totalorder %s20, 1
      %s296 = scalar_select %p295, %s20, 1
      %p297 = scmp.lt.s32.totalorder %s294, 15
      %s298 = scalar_select %p297, %s294, 15
      %s299 = smul.addr %s296, 16
      %s300 = sadd.s32 %s298, %s299
      %s301 = smul.addr %s300, 4
      %s302 = scalar_lea.vmem %s5, %s301
      %p303 = scmp.lt.s32.totalorder %s20, 1
      %s304 = scalar_select %p303, %s20, 1
      %p305 = scmp.lt.s32.totalorder %s21, 9
      %s306 = scalar_select %p305, %s21, 9
      %s307 = smul.addr %s306, 54
      %s308 = smul.addr %s304, 540
      %s309 = sadd.s32 %s307, %s308
      %s310 = smul.addr %s309, 8
      %s311 = scalar_lea.vmem %s0, %s310
      %s312 = sadd.s32 %s21, 1
      %p313 = scmp.lt.s32.totalorder %s20, 1
      %s314 = scalar_select %p313, %s20, 1
      %p315 = scmp.lt.s32.totalorder %s312, 9
      %s316 = scalar_select %p315, %s312, 9
      %s317 = smul.addr %s316, 54
      %s318 = smul.addr %s314, 540
      %s319 = sadd.s32 %s317, %s318
      %s320 = smul.addr %s319, 8
      %s321 = scalar_lea.vmem %s1, %s320
      %s322 = sadd.s32 %s21, 1
      %s323 = sadd.s32 %s21, 2
      %p324 = scmp.lt.s32.totalorder %s20, 1
      %s325 = scalar_select %p324, %s20, 1
      %p326 = scmp.lt.s32.totalorder %s323, 9
      %s327 = scalar_select %p326, %s323, 9
      %s328 = smul.addr %s327, 54
      %s329 = smul.addr %s325, 540
      %s330 = sadd.s32 %s328, %s329
      %s331 = smul.addr %s330, 8
      %s332 = scalar_lea.vmem %s2, %s331
      %s333 = sadd.s32 %s21, 2
      %s334 = smul.u32 2, %s21
      %p335 = scmp.lt.s32.totalorder %s20, 1
      %s336 = scalar_select %p335, %s20, 1
      %p337 = scmp.lt.s32.totalorder %s334, 15
      %s338 = scalar_select %p337, %s334, 15
      %s339 = smul.addr %s336, 16
      %s340 = sadd.s32 %s338, %s339
      %s341 = smul.addr %s340, 4
      %s342 = scalar_lea.vmem %s5, %s341
      %s343 = smul.u32 2, %s21
      %v344 = vld [vmem:[%s311] sm:$0xff]
      %v345 = vld [vmem:[%s311 + $0x8] sm:$0xff]
      %v346 = vld [vmem:[%s311 + $0x10] sm:$0x3]
      %v347 = vld [vmem:[%s311 + $0x18] sm:$0xff]
      %v348 = vld [vmem:[%s311 + $0x20] sm:$0xff]
      %v349 = vld [vmem:[%s311 + $0x28] sm:$0x3]
      %v350 = vld [vmem:[%s311 + $0x30] sm:$0xff]
      %v351 = vld [vmem:[%s311 + $0x38] sm:$0xff]
      %v352 = vld [vmem:[%s311 + $0x40] sm:$0x3]
      %v353 = vld [vmem:[%s311 + $0x48] sm:$0xff]
      %v354 = vld [vmem:[%s311 + $0x50] sm:$0xff]
      %v355 = vld [vmem:[%s311 + $0x58] sm:$0x3]
      %v356 = vld [vmem:[%s311 + $0x60] sm:$0xff]
      %v357 = vld [vmem:[%s311 + $0x68] sm:$0xff]
      %v358 = vld [vmem:[%s311 + $0x70] sm:$0x3]
      %v359 = vld [vmem:[%s311 + $0x78] sm:$0xff]
      %v360 = vld [vmem:[%s311 + $0x80] sm:$0xff]
      %v361 = vld [vmem:[%s311 + $0x88] sm:$0x3]
      %v362 = vld [vmem:[%s311 + $0x90] sm:$0xff]
      %v363 = vld [vmem:[%s311 + $0x98] sm:$0xff]
      %v364 = vld [vmem:[%s311 + $0xa0] sm:$0x3]
      %v365 = vld [vmem:[%s311 + $0xa8] sm:$0xff]
      %v366 = vld [vmem:[%s311 + $0xb0] sm:$0xff]
      %v367 = vld [vmem:[%s311 + $0xb8] sm:$0x3]
      %v368 = vld [vmem:[%s311 + $0xc0] sm:$0xff]
      %v369 = vld [vmem:[%s311 + $0xc8] sm:$0xff]
      %v370 = vld [vmem:[%s311 + $0xd0] sm:$0x3]
      %v371 = vld [vmem:[%s311 + $0xd8] sm:$0xff]
      %v372 = vld [vmem:[%s311 + $0xe0] sm:$0xff]
      %v373 = vld [vmem:[%s311 + $0xe8] sm:$0x3]
      %v374 = vld [vmem:[%s311 + $0xf0] sm:$0xff]
      %v375 = vld [vmem:[%s311 + $0xf8] sm:$0xff]
      %v376 = vld [vmem:[%s311 + $0x100] sm:$0x3]
      %v377 = vld [vmem:[%s311 + $0x108] sm:$0xff]
      %v378 = vld [vmem:[%s311 + $0x110] sm:$0xff]
      %v379 = vld [vmem:[%s311 + $0x118] sm:$0x3]
      %v380 = vld [vmem:[%s311 + $0x120] sm:$0xff]
      %v381 = vld [vmem:[%s311 + $0x128] sm:$0xff]
      %v382 = vld [vmem:[%s311 + $0x130] sm:$0x3]
      %v383 = vld [vmem:[%s311 + $0x138] sm:$0xff]
      %v384 = vld [vmem:[%s311 + $0x140] sm:$0xff]
      %v385 = vld [vmem:[%s311 + $0x148] sm:$0x3]
      %v386 = vld [vmem:[%s311 + $0x150] sm:$0xff]
      %v387 = vld [vmem:[%s311 + $0x158] sm:$0xff]
      %v388 = vld [vmem:[%s311 + $0x160] sm:$0x3]
      %v389 = vld [vmem:[%s311 + $0x168] sm:$0xff]
      %v390 = vld [vmem:[%s311 + $0x170] sm:$0xff]
      %v391 = vld [vmem:[%s311 + $0x178] sm:$0x3]
      %v392 = vld [vmem:[%s311 + $0x180] sm:$0xff]
      %v393 = vld [vmem:[%s311 + $0x188] sm:$0xff]
      %v394 = vld [vmem:[%s311 + $0x190] sm:$0x3]
      %v395 = vld [vmem:[%s311 + $0x198] sm:$0xff]
      %v396 = vld [vmem:[%s311 + $0x1a0] sm:$0xff]
      %v397 = vld [vmem:[%s311 + $0x1a8] sm:$0x3]
      %v398 = vld [vmem:[%s321] sm:$0xff]
      %v399 = vld [vmem:[%s321 + $0x8] sm:$0xff]
      %v400 = vld [vmem:[%s321 + $0x10] sm:$0x3]
      %v401 = vld [vmem:[%s321 + $0x18] sm:$0xff]
      %v402 = vld [vmem:[%s321 + $0x20] sm:$0xff]
      %v403 = vld [vmem:[%s321 + $0x28] sm:$0x3]
      %v404 = vld [vmem:[%s321 + $0x30] sm:$0xff]
      %v405 = vld [vmem:[%s321 + $0x38] sm:$0xff]
      %v406 = vld [vmem:[%s321 + $0x40] sm:$0x3]
      %v407 = vld [vmem:[%s321 + $0x48] sm:$0xff]
      %v408 = vld [vmem:[%s321 + $0x50] sm:$0xff]
      %v409 = vld [vmem:[%s321 + $0x58] sm:$0x3]
      %v410 = vld [vmem:[%s321 + $0x60] sm:$0xff]
      %v411 = vld [vmem:[%s321 + $0x68] sm:$0xff]
      %v412 = vld [vmem:[%s321 + $0x70] sm:$0x3]
      %v413 = vld [vmem:[%s321 + $0x78] sm:$0xff]
      %v414 = vld [vmem:[%s321 + $0x80] sm:$0xff]
      %v415 = vld [vmem:[%s321 + $0x88] sm:$0x3]
      %v416 = vld [vmem:[%s321 + $0x90] sm:$0xff]
      %v417 = vld [vmem:[%s321 + $0x98] sm:$0xff]
      %v418 = vld [vmem:[%s321 + $0xa0] sm:$0x3]
      %v419 = vld [vmem:[%s321 + $0xa8] sm:$0xff]
      %v420 = vld [vmem:[%s321 + $0xb0] sm:$0xff]
      %v421 = vld [vmem:[%s321 + $0xb8] sm:$0x3]
      %v422 = vld [vmem:[%s321 + $0xc0] sm:$0xff]
      %v423 = vld [vmem:[%s321 + $0xc8] sm:$0xff]
      %v424 = vld [vmem:[%s321 + $0xd0] sm:$0x3]
      %v425 = vld [vmem:[%s321 + $0xd8] sm:$0xff]
      %v426 = vld [vmem:[%s321 + $0xe0] sm:$0xff]
      %v427 = vld [vmem:[%s321 + $0xe8] sm:$0x3]
      %v428 = vld [vmem:[%s321 + $0xf0] sm:$0xff]
      %v429 = vld [vmem:[%s321 + $0xf8] sm:$0xff]
      %v430 = vld [vmem:[%s321 + $0x100] sm:$0x3]
      %v431 = vld [vmem:[%s321 + $0x108] sm:$0xff]
      %v432 = vld [vmem:[%s321 + $0x110] sm:$0xff]
      %v433 = vld [vmem:[%s321 + $0x118] sm:$0x3]
      %v434 = vld [vmem:[%s321 + $0x120] sm:$0xff]
      %v435 = vld [vmem:[%s321 + $0x128] sm:$0xff]
      %v436 = vld [vmem:[%s321 + $0x130] sm:$0x3]
      %v437 = vld [vmem:[%s321 + $0x138] sm:$0xff]
      %v438 = vld [vmem:[%s321 + $0x140] sm:$0xff]
      %v439 = vld [vmem:[%s321 + $0x148] sm:$0x3]
      %v440 = vld [vmem:[%s321 + $0x150] sm:$0xff]
      %v441 = vld [vmem:[%s321 + $0x158] sm:$0xff]
      %v442 = vld [vmem:[%s321 + $0x160] sm:$0x3]
      %v443 = vld [vmem:[%s321 + $0x168] sm:$0xff]
      %v444 = vld [vmem:[%s321 + $0x170] sm:$0xff]
      %v445 = vld [vmem:[%s321 + $0x178] sm:$0x3]
      %v446 = vld [vmem:[%s321 + $0x180] sm:$0xff]
      %v447 = vld [vmem:[%s321 + $0x188] sm:$0xff]
      %v448 = vld [vmem:[%s321 + $0x190] sm:$0x3]
      %v449 = vld [vmem:[%s321 + $0x198] sm:$0xff]
      %v450 = vld [vmem:[%s321 + $0x1a0] sm:$0xff]
      %v451 = vld [vmem:[%s321 + $0x1a8] sm:$0x3]
      %v452 = vld [vmem:[%s332] sm:$0xff]
      %v453 = vld [vmem:[%s332 + $0x8] sm:$0xff]
      %v454 = vld [vmem:[%s332 + $0x10] sm:$0x3]
      %v455 = vld [vmem:[%s332 + $0x18] sm:$0xff]
      %v456 = vld [vmem:[%s332 + $0x20] sm:$0xff]
      %v457 = vld [vmem:[%s332 + $0x28] sm:$0x3]
      %v458 = vld [vmem:[%s332 + $0x30] sm:$0xff]
      %v459 = vld [vmem:[%s332 + $0x38] sm:$0xff]
      %v460 = vld [vmem:[%s332 + $0x40] sm:$0x3]
      %v461 = vld [vmem:[%s332 + $0x48] sm:$0xff]
      %v462 = vld [vmem:[%s332 + $0x50] sm:$0xff]
      %v463 = vld [vmem:[%s332 + $0x58] sm:$0x3]
      %v464 = vld [vmem:[%s332 + $0x60] sm:$0xff]
      %v465 = vld [vmem:[%s332 + $0x68] sm:$0xff]
      %v466 = vld [vmem:[%s332 + $0x70] sm:$0x3]
      %v467 = vld [vmem:[%s332 + $0x78] sm:$0xff]
      %v468 = vld [vmem:[%s332 + $0x80] sm:$0xff]
      %v469 = vld [vmem:[%s332 + $0x88] sm:$0x3]
      %v470 = vld [vmem:[%s332 + $0x90] sm:$0xff]
      %v471 = vld [vmem:[%s332 + $0x98] sm:$0xff]
      %v472 = vld [vmem:[%s332 + $0xa0] sm:$0x3]
      %v473 = vld [vmem:[%s332 + $0xa8] sm:$0xff]
      %v474 = vld [vmem:[%s332 + $0xb0] sm:$0xff]
      %v475 = vld [vmem:[%s332 + $0xb8] sm:$0x3]
      %v476 = vld [vmem:[%s332 + $0xc0] sm:$0xff]
      %v477 = vld [vmem:[%s332 + $0xc8] sm:$0xff]
      %v478 = vld [vmem:[%s332 + $0xd0] sm:$0x3]
      %v479 = vld [vmem:[%s332 + $0xd8] sm:$0xff]
      %v480 = vld [vmem:[%s332 + $0xe0] sm:$0xff]
      %v481 = vld [vmem:[%s332 + $0xe8] sm:$0x3]
      %v482 = vld [vmem:[%s332 + $0xf0] sm:$0xff]
      %v483 = vld [vmem:[%s332 + $0xf8] sm:$0xff]
      %v484 = vld [vmem:[%s332 + $0x100] sm:$0x3]
      %v485 = vld [vmem:[%s332 + $0x108] sm:$0xff]
      %v486 = vld [vmem:[%s332 + $0x110] sm:$0xff]
      %v487 = vld [vmem:[%s332 + $0x118] sm:$0x3]
      %v488 = vld [vmem:[%s332 + $0x120] sm:$0xff]
      %v489 = vld [vmem:[%s332 + $0x128] sm:$0xff]
      %v490 = vld [vmem:[%s332 + $0x130] sm:$0x3]
      %v491 = vld [vmem:[%s332 + $0x138] sm:$0xff]
      %v492 = vld [vmem:[%s332 + $0x140] sm:$0xff]
      %v493 = vld [vmem:[%s332 + $0x148] sm:$0x3]
      %v494 = vld [vmem:[%s332 + $0x150] sm:$0xff]
      %v495 = vld [vmem:[%s332 + $0x158] sm:$0xff]
      %v496 = vld [vmem:[%s332 + $0x160] sm:$0x3]
      %v497 = vld [vmem:[%s332 + $0x168] sm:$0xff]
      %v498 = vld [vmem:[%s332 + $0x170] sm:$0xff]
      %v499 = vld [vmem:[%s332 + $0x178] sm:$0x3]
      %v500 = vld [vmem:[%s332 + $0x180] sm:$0xff]
      %v501 = vld [vmem:[%s332 + $0x188] sm:$0xff]
      %v502 = vld [vmem:[%s332 + $0x190] sm:$0x3]
      %v503 = vld [vmem:[%s332 + $0x198] sm:$0xff]
      %v504 = vld [vmem:[%s332 + $0x1a0] sm:$0xff]
      %v505 = vld [vmem:[%s332 + $0x1a8] sm:$0x3]
      %v506 = vld [vmem:[%s3] sm:$0xff]
      %vm555 = vcmask 1046528
      %v556 = vrot.slane %v344, 1
      %v557 = vrot.slane %v345, 1
      %v558 = vsel %vm555, %v556, %v557
      %v559 = vrot.slane %v346, 1
      %v560 = vsel %vm555, %v557, %v559
      %v561 = vrot.slane %v347, 1
      %v562 = vrot.slane %v348, 1
      %v563 = vsel %vm555, %v561, %v562
      %v564 = vrot.slane %v349, 1
      %v565 = vsel %vm555, %v562, %v564
      %v566 = vrot.slane %v350, 1
      %v567 = vrot.slane %v351, 1
      %v568 = vsel %vm555, %v566, %v567
      %v569 = vrot.slane %v352, 1
      %v570 = vsel %vm555, %v567, %v569
      %v571 = vrot.slane %v353, 1
      %v572 = vrot.slane %v354, 1
      %v573 = vsel %vm555, %v571, %v572
      %v574 = vrot.slane %v355, 1
      %v575 = vsel %vm555, %v572, %v574
      %v576 = vrot.slane %v356, 1
      %v577 = vrot.slane %v357, 1
      %v578 = vsel %vm555, %v576, %v577
      %v579 = vrot.slane %v358, 1
      %v580 = vsel %vm555, %v577, %v579
      %v581 = vrot.slane %v359, 1
      %v582 = vrot.slane %v360, 1
      %v583 = vsel %vm555, %v581, %v582
      %v584 = vrot.slane %v361, 1
      %v585 = vsel %vm555, %v582, %v584
      %v586 = vrot.slane %v362, 1
      %v587 = vrot.slane %v363, 1
      %v588 = vsel %vm555, %v586, %v587
      %v589 = vrot.slane %v364, 1
      %v590 = vsel %vm555, %v587, %v589
      %v591 = vrot.slane %v365, 1
      %v592 = vrot.slane %v366, 1
      %v593 = vsel %vm555, %v591, %v592
      %v594 = vrot.slane %v367, 1
      %v595 = vsel %vm555, %v592, %v594
      %v596 = vrot.slane %v368, 1
      %v597 = vrot.slane %v369, 1
      %v598 = vsel %vm555, %v596, %v597
      %v599 = vrot.slane %v370, 1
      %v600 = vsel %vm555, %v597, %v599
      %v601 = vrot.slane %v371, 1
      %v602 = vrot.slane %v372, 1
      %v603 = vsel %vm555, %v601, %v602
      %v604 = vrot.slane %v373, 1
      %v605 = vsel %vm555, %v602, %v604
      %v606 = vrot.slane %v374, 1
      %v607 = vrot.slane %v375, 1
      %v608 = vsel %vm555, %v606, %v607
      %v609 = vrot.slane %v376, 1
      %v610 = vsel %vm555, %v607, %v609
      %v611 = vrot.slane %v377, 1
      %v612 = vrot.slane %v378, 1
      %v613 = vsel %vm555, %v611, %v612
      %v614 = vrot.slane %v379, 1
      %v615 = vsel %vm555, %v612, %v614
      %v616 = vrot.slane %v380, 1
      %v617 = vrot.slane %v381, 1
      %v618 = vsel %vm555, %v616, %v617
      %v619 = vrot.slane %v382, 1
      %v620 = vsel %vm555, %v617, %v619
      %v621 = vrot.slane %v383, 1
      %v622 = vrot.slane %v384, 1
      %v623 = vsel %vm555, %v621, %v622
      %v624 = vrot.slane %v385, 1
      %v625 = vsel %vm555, %v622, %v624
      %v626 = vrot.slane %v386, 1
      %v627 = vrot.slane %v387, 1
      %v628 = vsel %vm555, %v626, %v627
      %v629 = vrot.slane %v388, 1
      %v630 = vsel %vm555, %v627, %v629
      %v631 = vrot.slane %v389, 1
      %v632 = vrot.slane %v390, 1
      %v633 = vsel %vm555, %v631, %v632
      %v634 = vrot.slane %v391, 1
      %v635 = vsel %vm555, %v632, %v634
      %s636 = scalar_lea.vmem %s3, 8
      %v637 = vld [vmem:[%s636] sm:$0xff]
      %vm638 = vcmask 64512
      %v639 = vsel %vm638, %v558, 0
      %v641 = vsel %vm638, %v560, 0
      %v643 = vsel %vm638, %v563, 0
      %v645 = vsel %vm638, %v565, 0
      %v647 = vsel %vm638, %v568, 0
      %v649 = vsel %vm638, %v570, 0
      %v651 = vsel %vm638, %v573, 0
      %v653 = vsel %vm638, %v575, 0
      %v655 = vsel %vm638, %v578, 0
      %v657 = vsel %vm638, %v580, 0
      %v659 = vsel %vm638, %v583, 0
      %v661 = vsel %vm638, %v585, 0
      %v663 = vsel %vm638, %v588, 0
      %v665 = vsel %vm638, %v590, 0
      %v667 = vsel %vm638, %v593, 0
      %v669 = vsel %vm638, %v595, 0
      %v671 = vsel %vm638, %v598, 0
      %v673 = vsel %vm638, %v600, 0
      %v675 = vsel %vm638, %v603, 0
      %v677 = vsel %vm638, %v605, 0
      %v679 = vsel %vm638, %v608, 0
      %v681 = vsel %vm638, %v610, 0
      %v683 = vsel %vm638, %v613, 0
      %v685 = vsel %vm638, %v615, 0
      %v687 = vsel %vm638, %v618, 0
      %v689 = vsel %vm638, %v620, 0
      %v691 = vsel %vm638, %v623, 0
      %v693 = vsel %vm638, %v625, 0
      %v695 = vsel %vm638, %v628, 0
      %v697 = vsel %vm638, %v630, 0
      %v699 = vsel %vm638, %v633, 0
      %v701 = vsel %vm638, %v635, 0
      %703 = vmatprep.subr.mxu0 0.0
      %704 = vmatpush1.msra.mxu0 0.0
      %705 = vmatprep.subr.mxu0 0.0
      %706 = vmatpush1.msra.mxu0 0.0
      %707 = vmatprep.subr.mxu0 0.0
      %708 = vmatpush1.msra.mxu0 0.0
      %709 = vmatprep.subr.mxu0 0.0
      %710 = vmatpush1.msra.mxu0 0.0
      %711 = vmatprep.subr.mxu0 0.0
      %712 = vmatpush1.msra.mxu0 0.0
      %713 = vmatprep.subr.mxu0 0.0
      %714 = vmatpush1.msra.mxu0 0.0
      %715 = vmatprep.subr.mxu0 0.0
      %716 = vmatpush1.msra.mxu0 0.0
      %717 = vmatprep.subr.mxu0 0.0
      %718 = vmatpush1.msra.mxu0 0.0
      %719 = vmatprep.subr.mxu0 0.0
      %720 = vmatpush1.msra.mxu0 0.0
      %721 = vmatprep.subr.mxu0 0.0
      %722 = vmatpush1.msra.mxu0 0.0
      %723 = vmatprep.subr.mxu0 0.0
      %724 = vmatpush1.msra.mxu0 0.0
      %725 = vmatprep.subr.mxu0 0.0
      %726 = vmatpush1.msra.mxu0 0.0
      %727 = vmatprep.subr.mxu0 0.0
      %728 = vmatpush1.msra.mxu0 0.0
      %729 = vmatprep.subr.mxu0 0.0
      %730 = vmatpush1.msra.mxu0 0.0
      %731 = vmatprep.subr.mxu0 0.0
      %732 = vmatpush1.msra.mxu0 0.0
      %733 = vmatprep.subr.mxu0 0.0
      %734 = vmatpush1.msra.mxu0 %v637
      %735 = vmatprep.subr.mxu0 0.0
      %736 = vmatpush2.msra.mxu0 0.0
      %737 = vmatprep.subr.mxu0 0.0
      %738 = vmatpush2.msra.mxu0 0.0
      %739 = vmatprep.subr.mxu0 0.0
      %740 = vmatpush2.msra.mxu0 0.0
      %741 = vmatprep.subr.mxu0 0.0
      %742 = vmatpush2.msra.mxu0 0.0
      %743 = vmatprep.subr.mxu0 0.0
      %744 = vmatpush2.msra.mxu0 0.0
      %745 = vmatprep.subr.mxu0 0.0
      %746 = vmatpush2.msra.mxu0 0.0
      %747 = vmatprep.subr.mxu0 0.0
      %748 = vmatpush2.msra.mxu0 0.0
      %749 = vmatprep.subr.mxu0 0.0
      %750 = vmatpush2.msra.mxu0 0.0
      %751 = vmatprep.subr.mxu0 0.0
      %752 = vmatpush2.msra.mxu0 0.0
      %753 = vmatprep.subr.mxu0 0.0
      %754 = vmatpush2.msra.mxu0 0.0
      %755 = vmatprep.subr.mxu0 0.0
      %756 = vmatpush2.msra.mxu0 0.0
      %757 = vmatprep.subr.mxu0 0.0
      %758 = vmatpush2.msra.mxu0 0.0
      %759 = vmatprep.subr.mxu0 0.0
      %760 = vmatpush2.msra.mxu0 0.0
      %761 = vmatprep.subr.mxu0 0.0
      %762 = vmatpush2.msra.mxu0 0.0
      %763 = vmatprep.subr.mxu0 0.0
      %764 = vmatpush2.msra.mxu0 0.0
      %765 = vmatprep.subr.mxu0 0.0
      %766 = vmatpush2.msra.mxu0 0.0
      %767 = vmatprep.mubr.f32.mxu0 0.0
      %768 = vmatmul.mubr.f32.gmra.mxu0 %v639
      %v769 = vpop.f32.mrf.mxu0
      %v770 = vadd.f32 0.0, %v769
      %v771 = vpop.f32.mrf.mxu0
      %772 = vmatprep.mubr.f32.mxu0 0.0
      %773 = vmatmul.mubr.f32.gmra.mxu0 %v641
      %v774 = vpop.f32.mrf.mxu0
      %v775 = vadd.f32 0.0, %v774
      %v776 = vpop.f32.mrf.mxu0
      %777 = vmatprep.mubr.f32.mxu0 0.0
      %778 = vmatmul.mubr.f32.gmra.mxu0 %v643
      %v779 = vpop.f32.mrf.mxu0
      %v780 = vadd.f32 0.0, %v779
      %v781 = vpop.f32.mrf.mxu0
      %782 = vmatprep.mubr.f32.mxu0 0.0
      %783 = vmatmul.mubr.f32.gmra.mxu0 %v645
      %v784 = vpop.f32.mrf.mxu0
      %v785 = vadd.f32 0.0, %v784
      %v786 = vpop.f32.mrf.mxu0
      %787 = vmatprep.mubr.f32.mxu0 0.0
      %788 = vmatmul.mubr.f32.gmra.mxu0 %v647
      %v789 = vpop.f32.mrf.mxu0
      %v790 = vadd.f32 0.0, %v789
      %v791 = vpop.f32.mrf.mxu0
      %792 = vmatprep.mubr.f32.mxu0 0.0
      %793 = vmatmul.mubr.f32.gmra.mxu0 %v649
      %v794 = vpop.f32.mrf.mxu0
      %v795 = vadd.f32 0.0, %v794
      %v796 = vpop.f32.mrf.mxu0
      %797 = vmatprep.mubr.f32.mxu0 0.0
      %798 = vmatmul.mubr.f32.gmra.mxu0 %v651
      %v799 = vpop.f32.mrf.mxu0
      %v800 = vadd.f32 0.0, %v799
      %v801 = vpop.f32.mrf.mxu0
      %802 = vmatprep.mubr.f32.mxu0 0.0
      %803 = vmatmul.mubr.f32.gmra.mxu0 %v653
      %v804 = vpop.f32.mrf.mxu0
      %v805 = vadd.f32 0.0, %v804
      %v806 = vpop.f32.mrf.mxu0
      %807 = vmatprep.mubr.f32.mxu0 0.0
      %808 = vmatmul.mubr.f32.gmra.mxu0 %v655
      %v809 = vpop.f32.mrf.mxu0
      %v810 = vadd.f32 0.0, %v809
      %v811 = vpop.f32.mrf.mxu0
      %812 = vmatprep.mubr.f32.mxu0 0.0
      %813 = vmatmul.mubr.f32.gmra.mxu0 %v657
      %v814 = vpop.f32.mrf.mxu0
      %v815 = vadd.f32 0.0, %v814
      %v816 = vpop.f32.mrf.mxu0
      %817 = vmatprep.mubr.f32.mxu0 0.0
      %818 = vmatmul.mubr.f32.gmra.mxu0 %v659
      %v819 = vpop.f32.mrf.mxu0
      %v820 = vadd.f32 0.0, %v819
      %v821 = vpop.f32.mrf.mxu0
      %822 = vmatprep.mubr.f32.mxu0 0.0
      %823 = vmatmul.mubr.f32.gmra.mxu0 %v661
      %v824 = vpop.f32.mrf.mxu0
      %v825 = vadd.f32 0.0, %v824
      %v826 = vpop.f32.mrf.mxu0
      %827 = vmatprep.mubr.f32.mxu0 0.0
      %828 = vmatmul.mubr.f32.gmra.mxu0 %v663
      %v829 = vpop.f32.mrf.mxu0
      %v830 = vadd.f32 0.0, %v829
      %v831 = vpop.f32.mrf.mxu0
      %832 = vmatprep.mubr.f32.mxu0 0.0
      %833 = vmatmul.mubr.f32.gmra.mxu0 %v665
      %v834 = vpop.f32.mrf.mxu0
      %v835 = vadd.f32 0.0, %v834
      %v836 = vpop.f32.mrf.mxu0
      %837 = vmatprep.mubr.f32.mxu0 0.0
      %838 = vmatmul.mubr.f32.gmra.mxu0 %v667
      %v839 = vpop.f32.mrf.mxu0
      %v840 = vadd.f32 0.0, %v839
      %v841 = vpop.f32.mrf.mxu0
      %842 = vmatprep.mubr.f32.mxu0 0.0
      %843 = vmatmul.mubr.f32.gmra.mxu0 %v669
      %v844 = vpop.f32.mrf.mxu0
      %v845 = vadd.f32 0.0, %v844
      %v846 = vpop.f32.mrf.mxu0
      %847 = vmatprep.mubr.f32.mxu0 0.0
      %848 = vmatmul.mubr.f32.gmra.mxu0 %v671
      %v849 = vpop.f32.mrf.mxu0
      %v850 = vadd.f32 0.0, %v849
      %v851 = vpop.f32.mrf.mxu0
      %852 = vmatprep.mubr.f32.mxu0 0.0
      %853 = vmatmul.mubr.f32.gmra.mxu0 %v673
      %v854 = vpop.f32.mrf.mxu0
      %v855 = vadd.f32 0.0, %v854
      %v856 = vpop.f32.mrf.mxu0
      %857 = vmatprep.mubr.f32.mxu0 0.0
      %858 = vmatmul.mubr.f32.gmra.mxu0 %v675
      %v859 = vpop.f32.mrf.mxu0
      %v860 = vadd.f32 0.0, %v859
      %v861 = vpop.f32.mrf.mxu0
      %862 = vmatprep.mubr.f32.mxu0 0.0
      %863 = vmatmul.mubr.f32.gmra.mxu0 %v677
      %v864 = vpop.f32.mrf.mxu0
      %v865 = vadd.f32 0.0, %v864
      %v866 = vpop.f32.mrf.mxu0
      %867 = vmatprep.mubr.f32.mxu0 0.0
      %868 = vmatmul.mubr.f32.gmra.mxu0 %v679
      %v869 = vpop.f32.mrf.mxu0
      %v870 = vadd.f32 0.0, %v869
      %v871 = vpop.f32.mrf.mxu0
      %872 = vmatprep.mubr.f32.mxu0 0.0
      %873 = vmatmul.mubr.f32.gmra.mxu0 %v681
      %v874 = vpop.f32.mrf.mxu0
      %v875 = vadd.f32 0.0, %v874
      %v876 = vpop.f32.mrf.mxu0
      %877 = vmatprep.mubr.f32.mxu0 0.0
      %878 = vmatmul.mubr.f32.gmra.mxu0 %v683
      %v879 = vpop.f32.mrf.mxu0
      %v880 = vadd.f32 0.0, %v879
      %v881 = vpop.f32.mrf.mxu0
      %882 = vmatprep.mubr.f32.mxu0 0.0
      %883 = vmatmul.mubr.f32.gmra.mxu0 %v685
      %v884 = vpop.f32.mrf.mxu0
      %v885 = vadd.f32 0.0, %v884
      %v886 = vpop.f32.mrf.mxu0
      %887 = vmatprep.mubr.f32.mxu0 0.0
      %888 = vmatmul.mubr.f32.gmra.mxu0 %v687
      %v889 = vpop.f32.mrf.mxu0
      %v890 = vadd.f32 0.0, %v889
      %v891 = vpop.f32.mrf.mxu0
      %892 = vmatprep.mubr.f32.mxu0 0.0
      %893 = vmatmul.mubr.f32.gmra.mxu0 %v689
      %v894 = vpop.f32.mrf.mxu0
      %v895 = vadd.f32 0.0, %v894
      %v896 = vpop.f32.mrf.mxu0
      %897 = vmatprep.mubr.f32.mxu0 0.0
      %898 = vmatmul.mubr.f32.gmra.mxu0 %v691
      %v899 = vpop.f32.mrf.mxu0
      %v900 = vadd.f32 0.0, %v899
      %v901 = vpop.f32.mrf.mxu0
      %902 = vmatprep.mubr.f32.mxu0 0.0
      %903 = vmatmul.mubr.f32.gmra.mxu0 %v693
      %v904 = vpop.f32.mrf.mxu0
      %v905 = vadd.f32 0.0, %v904
      %v906 = vpop.f32.mrf.mxu0
      %907 = vmatprep.mubr.f32.mxu0 0.0
      %908 = vmatmul.mubr.f32.gmra.mxu0 %v695
      %v909 = vpop.f32.mrf.mxu0
      %v910 = vadd.f32 0.0, %v909
      %v911 = vpop.f32.mrf.mxu0
      %912 = vmatprep.mubr.f32.mxu0 0.0
      %913 = vmatmul.mubr.f32.gmra.mxu0 %v697
      %v914 = vpop.f32.mrf.mxu0
      %v915 = vadd.f32 0.0, %v914
      %v916 = vpop.f32.mrf.mxu0
      %917 = vmatprep.mubr.f32.mxu0 0.0
      %918 = vmatmul.mubr.f32.gmra.mxu0 %v699
      %v919 = vpop.f32.mrf.mxu0
      %v920 = vadd.f32 0.0, %v919
      %v921 = vpop.f32.mrf.mxu0
      %922 = vmatprep.mubr.f32.mxu0 0.0
      %923 = vmatmul.mubr.f32.gmra.mxu0 %v701
      %v924 = vpop.f32.mrf.mxu0
      %v925 = vadd.f32 0.0, %v924
      %v926 = vpop.f32.mrf.mxu0
      %927 = vdwg.mxu0
      %v928 = vsel %vm638, %v344, 0
      %v930 = vsel %vm638, %v345, 0
      %v932 = vsel %vm638, %v347, 0
      %v934 = vsel %vm638, %v348, 0
      %v936 = vsel %vm638, %v350, 0
      %v938 = vsel %vm638, %v351, 0
      %v940 = vsel %vm638, %v353, 0
      %v942 = vsel %vm638, %v354, 0
      %v944 = vsel %vm638, %v356, 0
      %v946 = vsel %vm638, %v357, 0
      %v948 = vsel %vm638, %v359, 0
      %v950 = vsel %vm638, %v360, 0
      %v952 = vsel %vm638, %v362, 0
      %v954 = vsel %vm638, %v363, 0
      %v956 = vsel %vm638, %v365, 0
      %v958 = vsel %vm638, %v366, 0
      %v960 = vsel %vm638, %v368, 0
      %v962 = vsel %vm638, %v369, 0
      %v964 = vsel %vm638, %v371, 0
      %v966 = vsel %vm638, %v372, 0
      %v968 = vsel %vm638, %v374, 0
      %v970 = vsel %vm638, %v375, 0
      %v972 = vsel %vm638, %v377, 0
      %v974 = vsel %vm638, %v378, 0
      %v976 = vsel %vm638, %v380, 0
      %v978 = vsel %vm638, %v381, 0
      %v980 = vsel %vm638, %v383, 0
      %v982 = vsel %vm638, %v384, 0
      %v984 = vsel %vm638, %v386, 0
      %v986 = vsel %vm638, %v387, 0
      %v988 = vsel %vm638, %v389, 0
      %v990 = vsel %vm638, %v390, 0
      %992 = vmatprep.subr.mxu0 0.0
      %993 = vmatpush1.msra.mxu0 0.0
      %994 = vmatprep.subr.mxu0 0.0
      %995 = vmatpush1.msra.mxu0 0.0
      %996 = vmatprep.subr.mxu0 0.0
      %997 = vmatpush1.msra.mxu0 0.0
      %998 = vmatprep.subr.mxu0 0.0
      %999 = vmatpush1.msra.mxu0 0.0
      %1000 = vmatprep.subr.mxu0 0.0
      %1001 = vmatpush1.msra.mxu0 0.0
      %1002 = vmatprep.subr.mxu0 0.0
      %1003 = vmatpush1.msra.mxu0 0.0
      %1004 = vmatprep.subr.mxu0 0.0
      %1005 = vmatpush1.msra.mxu0 0.0
      %1006 = vmatprep.subr.mxu0 0.0
      %1007 = vmatpush1.msra.mxu0 0.0
      %1008 = vmatprep.subr.mxu0 0.0
      %1009 = vmatpush1.msra.mxu0 0.0
      %1010 = vmatprep.subr.mxu0 0.0
      %1011 = vmatpush1.msra.mxu0 0.0
      %1012 = vmatprep.subr.mxu0 0.0
      %1013 = vmatpush1.msra.mxu0 0.0
      %1014 = vmatprep.subr.mxu0 0.0
      %1015 = vmatpush1.msra.mxu0 0.0
      %1016 = vmatprep.subr.mxu0 0.0
      %1017 = vmatpush1.msra.mxu0 0.0
      %1018 = vmatprep.subr.mxu0 0.0
      %1019 = vmatpush1.msra.mxu0 0.0
      %1020 = vmatprep.subr.mxu0 0.0
      %1021 = vmatpush1.msra.mxu0 0.0
      %1022 = vmatprep.subr.mxu0 0.0
      %1023 = vmatpush1.msra.mxu0 %v506
      %1024 = vmatprep.subr.mxu0 0.0
      %1025 = vmatpush2.msra.mxu0 0.0
      %1026 = vmatprep.subr.mxu0 0.0
      %1027 = vmatpush2.msra.mxu0 0.0
      %1028 = vmatprep.subr.mxu0 0.0
      %1029 = vmatpush2.msra.mxu0 0.0
      %1030 = vmatprep.subr.mxu0 0.0
      %1031 = vmatpush2.msra.mxu0 0.0
      %1032 = vmatprep.subr.mxu0 0.0
      %1033 = vmatpush2.msra.mxu0 0.0
      %1034 = vmatprep.subr.mxu0 0.0
      %1035 = vmatpush2.msra.mxu0 0.0
      %1036 = vmatprep.subr.mxu0 0.0
      %1037 = vmatpush2.msra.mxu0 0.0
      %1038 = vmatprep.subr.mxu0 0.0
      %1039 = vmatpush2.msra.mxu0 0.0
      %1040 = vmatprep.subr.mxu0 0.0
      %1041 = vmatpush2.msra.mxu0 0.0
      %1042 = vmatprep.subr.mxu0 0.0
      %1043 = vmatpush2.msra.mxu0 0.0
      %1044 = vmatprep.subr.mxu0 0.0
      %1045 = vmatpush2.msra.mxu0 0.0
      %1046 = vmatprep.subr.mxu0 0.0
      %1047 = vmatpush2.msra.mxu0 0.0
      %1048 = vmatprep.subr.mxu0 0.0
      %1049 = vmatpush2.msra.mxu0 0.0
      %1050 = vmatprep.subr.mxu0 0.0
      %1051 = vmatpush2.msra.mxu0 0.0
      %1052 = vmatprep.subr.mxu0 0.0
      %1053 = vmatpush2.msra.mxu0 0.0
      %1054 = vmatprep.subr.mxu0 0.0
      %1055 = vmatpush2.msra.mxu0 0.0
      %1056 = vmatprep.mubr.f32.mxu0 0.0
      %1057 = vmatmul.mubr.f32.gmra.mxu0 %v928
      %v1058 = vpop.f32.mrf.mxu0
      %v1059 = vadd.f32 %v770, %v1058
      %v1060 = vpop.f32.mrf.mxu0
      %1061 = vmatprep.mubr.f32.mxu0 0.0
      %1062 = vmatmul.mubr.f32.gmra.mxu0 %v930
      %v1063 = vpop.f32.mrf.mxu0
      %v1064 = vadd.f32 %v775, %v1063
      %v1065 = vpop.f32.mrf.mxu0
      %1066 = vmatprep.mubr.f32.mxu0 0.0
      %1067 = vmatmul.mubr.f32.gmra.mxu0 %v932
      %v1068 = vpop.f32.mrf.mxu0
      %v1069 = vadd.f32 %v780, %v1068
      %v1070 = vpop.f32.mrf.mxu0
      %1071 = vmatprep.mubr.f32.mxu0 0.0
      %1072 = vmatmul.mubr.f32.gmra.mxu0 %v934
      %v1073 = vpop.f32.mrf.mxu0
      %v1074 = vadd.f32 %v785, %v1073
      %v1075 = vpop.f32.mrf.mxu0
      %1076 = vmatprep.mubr.f32.mxu0 0.0
      %1077 = vmatmul.mubr.f32.gmra.mxu0 %v936
      %v1078 = vpop.f32.mrf.mxu0
      %v1079 = vadd.f32 %v790, %v1078
      %v1080 = vpop.f32.mrf.mxu0
      %1081 = vmatprep.mubr.f32.mxu0 0.0
      %1082 = vmatmul.mubr.f32.gmra.mxu0 %v938
      %v1083 = vpop.f32.mrf.mxu0
      %v1084 = vadd.f32 %v795, %v1083
      %v1085 = vpop.f32.mrf.mxu0
      %1086 = vmatprep.mubr.f32.mxu0 0.0
      %1087 = vmatmul.mubr.f32.gmra.mxu0 %v940
      %v1088 = vpop.f32.mrf.mxu0
      %v1089 = vadd.f32 %v800, %v1088
      %v1090 = vpop.f32.mrf.mxu0
      %1091 = vmatprep.mubr.f32.mxu0 0.0
      %1092 = vmatmul.mubr.f32.gmra.mxu0 %v942
      %v1093 = vpop.f32.mrf.mxu0
      %v1094 = vadd.f32 %v805, %v1093
      %v1095 = vpop.f32.mrf.mxu0
      %1096 = vmatprep.mubr.f32.mxu0 0.0
      %1097 = vmatmul.mubr.f32.gmra.mxu0 %v944
      %v1098 = vpop.f32.mrf.mxu0
      %v1099 = vadd.f32 %v810, %v1098
      %v1100 = vpop.f32.mrf.mxu0
      %1101 = vmatprep.mubr.f32.mxu0 0.0
      %1102 = vmatmul.mubr.f32.gmra.mxu0 %v946
      %v1103 = vpop.f32.mrf.mxu0
      %v1104 = vadd.f32 %v815, %v1103
      %v1105 = vpop.f32.mrf.mxu0
      %1106 = vmatprep.mubr.f32.mxu0 0.0
      %1107 = vmatmul.mubr.f32.gmra.mxu0 %v948
      %v1108 = vpop.f32.mrf.mxu0
      %v1109 = vadd.f32 %v820, %v1108
      %v1110 = vpop.f32.mrf.mxu0
      %1111 = vmatprep.mubr.f32.mxu0 0.0
      %1112 = vmatmul.mubr.f32.gmra.mxu0 %v950
      %v1113 = vpop.f32.mrf.mxu0
      %v1114 = vadd.f32 %v825, %v1113
      %v1115 = vpop.f32.mrf.mxu0
      %1116 = vmatprep.mubr.f32.mxu0 0.0
      %1117 = vmatmul.mubr.f32.gmra.mxu0 %v952
      %v1118 = vpop.f32.mrf.mxu0
      %v1119 = vadd.f32 %v830, %v1118
      %v1120 = vpop.f32.mrf.mxu0
      %1121 = vmatprep.mubr.f32.mxu0 0.0
      %1122 = vmatmul.mubr.f32.gmra.mxu0 %v954
      %v1123 = vpop.f32.mrf.mxu0
      %v1124 = vadd.f32 %v835, %v1123
      %v1125 = vpop.f32.mrf.mxu0
      %1126 = vmatprep.mubr.f32.mxu0 0.0
      %1127 = vmatmul.mubr.f32.gmra.mxu0 %v956
      %v1128 = vpop.f32.mrf.mxu0
      %v1129 = vadd.f32 %v840, %v1128
      %v1130 = vpop.f32.mrf.mxu0
      %1131 = vmatprep.mubr.f32.mxu0 0.0
      %1132 = vmatmul.mubr.f32.gmra.mxu0 %v958
      %v1133 = vpop.f32.mrf.mxu0
      %v1134 = vadd.f32 %v845, %v1133
      %v1135 = vpop.f32.mrf.mxu0
      %1136 = vmatprep.mubr.f32.mxu0 0.0
      %1137 = vmatmul.mubr.f32.gmra.mxu0 %v960
      %v1138 = vpop.f32.mrf.mxu0
      %v1139 = vadd.f32 %v850, %v1138
      %v1140 = vpop.f32.mrf.mxu0
      %1141 = vmatprep.mubr.f32.mxu0 0.0
      %1142 = vmatmul.mubr.f32.gmra.mxu0 %v962
      %v1143 = vpop.f32.mrf.mxu0
      %v1144 = vadd.f32 %v855, %v1143
      %v1145 = vpop.f32.mrf.mxu0
      %1146 = vmatprep.mubr.f32.mxu0 0.0
      %1147 = vmatmul.mubr.f32.gmra.mxu0 %v964
      %v1148 = vpop.f32.mrf.mxu0
      %v1149 = vadd.f32 %v860, %v1148
      %v1150 = vpop.f32.mrf.mxu0
      %1151 = vmatprep.mubr.f32.mxu0 0.0
      %1152 = vmatmul.mubr.f32.gmra.mxu0 %v966
      %v1153 = vpop.f32.mrf.mxu0
      %v1154 = vadd.f32 %v865, %v1153
      %v1155 = vpop.f32.mrf.mxu0
      %1156 = vmatprep.mubr.f32.mxu0 0.0
      %1157 = vmatmul.mubr.f32.gmra.mxu0 %v968
      %v1158 = vpop.f32.mrf.mxu0
      %v1159 = vadd.f32 %v870, %v1158
      %v1160 = vpop.f32.mrf.mxu0
      %1161 = vmatprep.mubr.f32.mxu0 0.0
      %1162 = vmatmul.mubr.f32.gmra.mxu0 %v970
      %v1163 = vpop.f32.mrf.mxu0
      %v1164 = vadd.f32 %v875, %v1163
      %v1165 = vpop.f32.mrf.mxu0
      %1166 = vmatprep.mubr.f32.mxu0 0.0
      %1167 = vmatmul.mubr.f32.gmra.mxu0 %v972
      %v1168 = vpop.f32.mrf.mxu0
      %v1169 = vadd.f32 %v880, %v1168
      %v1170 = vpop.f32.mrf.mxu0
      %1171 = vmatprep.mubr.f32.mxu0 0.0
      %1172 = vmatmul.mubr.f32.gmra.mxu0 %v974
      %v1173 = vpop.f32.mrf.mxu0
      %v1174 = vadd.f32 %v885, %v1173
      %v1175 = vpop.f32.mrf.mxu0
      %1176 = vmatprep.mubr.f32.mxu0 0.0
      %1177 = vmatmul.mubr.f32.gmra.mxu0 %v976
      %v1178 = vpop.f32.mrf.mxu0
      %v1179 = vadd.f32 %v890, %v1178
      %v1180 = vpop.f32.mrf.mxu0
      %1181 = vmatprep.mubr.f32.mxu0 0.0
      %1182 = vmatmul.mubr.f32.gmra.mxu0 %v978
      %v1183 = vpop.f32.mrf.mxu0
      %v1184 = vadd.f32 %v895, %v1183
      %v1185 = vpop.f32.mrf.mxu0
      %1186 = vmatprep.mubr.f32.mxu0 0.0
      %1187 = vmatmul.mubr.f32.gmra.mxu0 %v980
      %v1188 = vpop.f32.mrf.mxu0
      %v1189 = vadd.f32 %v900, %v1188
      %v1190 = vpop.f32.mrf.mxu0
      %1191 = vmatprep.mubr.f32.mxu0 0.0
      %1192 = vmatmul.mubr.f32.gmra.mxu0 %v982
      %v1193 = vpop.f32.mrf.mxu0
      %v1194 = vadd.f32 %v905, %v1193
      %v1195 = vpop.f32.mrf.mxu0
      %1196 = vmatprep.mubr.f32.mxu0 0.0
      %1197 = vmatmul.mubr.f32.gmra.mxu0 %v984
      %v1198 = vpop.f32.mrf.mxu0
      %v1199 = vadd.f32 %v910, %v1198
      %v1200 = vpop.f32.mrf.mxu0
      %1201 = vmatprep.mubr.f32.mxu0 0.0
      %1202 = vmatmul.mubr.f32.gmra.mxu0 %v986
      %v1203 = vpop.f32.mrf.mxu0
      %v1204 = vadd.f32 %v915, %v1203
      %v1205 = vpop.f32.mrf.mxu0
      %1206 = vmatprep.mubr.f32.mxu0 0.0
      %1207 = vmatmul.mubr.f32.gmra.mxu0 %v988
      %v1208 = vpop.f32.mrf.mxu0
      %v1209 = vadd.f32 %v920, %v1208
      %v1210 = vpop.f32.mrf.mxu0
      %1211 = vmatprep.mubr.f32.mxu0 0.0
      %1212 = vmatmul.mubr.f32.gmra.mxu0 %v990
      %v1213 = vpop.f32.mrf.mxu0
      %v1214 = vadd.f32 %v925, %v1213
      %v1215 = vpop.f32.mrf.mxu0
      %1216 = vdwg.mxu0
      %vm1217 = vcmask 1045504
      %v1218 = vrot.slane %v344, 2
      %v1219 = vrot.slane %v345, 2
      %v1220 = vsel %vm1217, %v1218, %v1219
      %v1221 = vrot.slane %v346, 2
      %v1222 = vsel %vm1217, %v1219, %v1221
      %v1223 = vrot.slane %v347, 2
      %v1224 = vrot.slane %v348, 2
      %v1225 = vsel %vm1217, %v1223, %v1224
      %v1226 = vrot.slane %v349, 2
      %v1227 = vsel %vm1217, %v1224, %v1226
      %v1228 = vrot.slane %v350, 2
      %v1229 = vrot.slane %v351, 2
      %v1230 = vsel %vm1217, %v1228, %v1229
      %v1231 = vrot.slane %v352, 2
      %v1232 = vsel %vm1217, %v1229, %v1231
      %v1233 = vrot.slane %v353, 2
      %v1234 = vrot.slane %v354, 2
      %v1235 = vsel %vm1217, %v1233, %v1234
      %v1236 = vrot.slane %v355, 2
      %v1237 = vsel %vm1217, %v1234, %v1236
      %v1238 = vrot.slane %v356, 2
      %v1239 = vrot.slane %v357, 2
      %v1240 = vsel %vm1217, %v1238, %v1239
      %v1241 = vrot.slane %v358, 2
      %v1242 = vsel %vm1217, %v1239, %v1241
      %v1243 = vrot.slane %v359, 2
      %v1244 = vrot.slane %v360, 2
      %v1245 = vsel %vm1217, %v1243, %v1244
      %v1246 = vrot.slane %v361, 2
      %v1247 = vsel %vm1217, %v1244, %v1246
      %v1248 = vrot.slane %v362, 2
      %v1249 = vrot.slane %v363, 2
      %v1250 = vsel %vm1217, %v1248, %v1249
      %v1251 = vrot.slane %v364, 2
      %v1252 = vsel %vm1217, %v1249, %v1251
      %v1253 = vrot.slane %v365, 2
      %v1254 = vrot.slane %v366, 2
      %v1255 = vsel %vm1217, %v1253, %v1254
      %v1256 = vrot.slane %v367, 2
      %v1257 = vsel %vm1217, %v1254, %v1256
      %v1258 = vrot.slane %v368, 2
      %v1259 = vrot.slane %v369, 2
      %v1260 = vsel %vm1217, %v1258, %v1259
      %v1261 = vrot.slane %v370, 2
      %v1262 = vsel %vm1217, %v1259, %v1261
      %v1263 = vrot.slane %v371, 2
      %v1264 = vrot.slane %v372, 2
      %v1265 = vsel %vm1217, %v1263, %v1264
      %v1266 = vrot.slane %v373, 2
      %v1267 = vsel %vm1217, %v1264, %v1266
      %v1268 = vrot.slane %v374, 2
      %v1269 = vrot.slane %v375, 2
      %v1270 = vsel %vm1217, %v1268, %v1269
      %v1271 = vrot.slane %v376, 2
      %v1272 = vsel %vm1217, %v1269, %v1271
      %v1273 = vrot.slane %v377, 2
      %v1274 = vrot.slane %v378, 2
      %v1275 = vsel %vm1217, %v1273, %v1274
      %v1276 = vrot.slane %v379, 2
      %v1277 = vsel %vm1217, %v1274, %v1276
      %v1278 = vrot.slane %v380, 2
      %v1279 = vrot.slane %v381, 2
      %v1280 = vsel %vm1217, %v1278, %v1279
      %v1281 = vrot.slane %v382, 2
      %v1282 = vsel %vm1217, %v1279, %v1281
      %v1283 = vrot.slane %v383, 2
      %v1284 = vrot.slane %v384, 2
      %v1285 = vsel %vm1217, %v1283, %v1284
      %v1286 = vrot.slane %v385, 2
      %v1287 = vsel %vm1217, %v1284, %v1286
      %v1288 = vrot.slane %v386, 2
      %v1289 = vrot.slane %v387, 2
      %v1290 = vsel %vm1217, %v1288, %v1289
      %v1291 = vrot.slane %v388, 2
      %v1292 = vsel %vm1217, %v1289, %v1291
      %v1293 = vrot.slane %v389, 2
      %v1294 = vrot.slane %v390, 2
      %v1295 = vsel %vm1217, %v1293, %v1294
      %v1296 = vrot.slane %v391, 2
      %v1297 = vsel %vm1217, %v1294, %v1296
      %s1298 = scalar_lea.vmem %s3, 16
      %v1299 = vld [vmem:[%s1298] sm:$0xff]
      %v1300 = vsel %vm638, %v1220, 0
      %v1302 = vsel %vm638, %v1222, 0
      %v1304 = vsel %vm638, %v1225, 0
      %v1306 = vsel %vm638, %v1227, 0
      %v1308 = vsel %vm638, %v1230, 0
      %v1310 = vsel %vm638, %v1232, 0
      %v1312 = vsel %vm638, %v1235, 0
      %v1314 = vsel %vm638, %v1237, 0
      %v1316 = vsel %vm638, %v1240, 0
      %v1318 = vsel %vm638, %v1242, 0
      %v1320 = vsel %vm638, %v1245, 0
      %v1322 = vsel %vm638, %v1247, 0
      %v1324 = vsel %vm638, %v1250, 0
      %v1326 = vsel %vm638, %v1252, 0
      %v1328 = vsel %vm638, %v1255, 0
      %v1330 = vsel %vm638, %v1257, 0
      %v1332 = vsel %vm638, %v1260, 0
      %v1334 = vsel %vm638, %v1262, 0
      %v1336 = vsel %vm638, %v1265, 0
      %v1338 = vsel %vm638, %v1267, 0
      %v1340 = vsel %vm638, %v1270, 0
      %v1342 = vsel %vm638, %v1272, 0
      %v1344 = vsel %vm638, %v1275, 0
      %v1346 = vsel %vm638, %v1277, 0
      %v1348 = vsel %vm638, %v1280, 0
      %v1350 = vsel %vm638, %v1282, 0
      %v1352 = vsel %vm638, %v1285, 0
      %v1354 = vsel %vm638, %v1287, 0
      %v1356 = vsel %vm638, %v1290, 0
      %v1358 = vsel %vm638, %v1292, 0
      %v1360 = vsel %vm638, %v1295, 0
      %v1362 = vsel %vm638, %v1297, 0
      %1364 = vmatprep.subr.mxu0 0.0
      %1365 = vmatpush1.msra.mxu0 0.0
      %1366 = vmatprep.subr.mxu0 0.0
      %1367 = vmatpush1.msra.mxu0 0.0
      %1368 = vmatprep.subr.mxu0 0.0
      %1369 = vmatpush1.msra.mxu0 0.0
      %1370 = vmatprep.subr.mxu0 0.0
      %1371 = vmatpush1.msra.mxu0 0.0
      %1372 = vmatprep.subr.mxu0 0.0
      %1373 = vmatpush1.msra.mxu0 0.0
      %1374 = vmatprep.subr.mxu0 0.0
      %1375 = vmatpush1.msra.mxu0 0.0
      %1376 = vmatprep.subr.mxu0 0.0
      %1377 = vmatpush1.msra.mxu0 0.0
      %1378 = vmatprep.subr.mxu0 0.0
      %1379 = vmatpush1.msra.mxu0 0.0
      %1380 = vmatprep.subr.mxu0 0.0
      %1381 = vmatpush1.msra.mxu0 0.0
      %1382 = vmatprep.subr.mxu0 0.0
      %1383 = vmatpush1.msra.mxu0 0.0
      %1384 = vmatprep.subr.mxu0 0.0
      %1385 = vmatpush1.msra.mxu0 0.0
      %1386 = vmatprep.subr.mxu0 0.0
      %1387 = vmatpush1.msra.mxu0 0.0
      %1388 = vmatprep.subr.mxu0 0.0
      %1389 = vmatpush1.msra.mxu0 0.0
      %1390 = vmatprep.subr.mxu0 0.0
      %1391 = vmatpush1.msra.mxu0 0.0
      %1392 = vmatprep.subr.mxu0 0.0
      %1393 = vmatpush1.msra.mxu0 0.0
      %1394 = vmatprep.subr.mxu0 0.0
      %1395 = vmatpush1.msra.mxu0 %v1299
      %1396 = vmatprep.subr.mxu0 0.0
      %1397 = vmatpush2.msra.mxu0 0.0
      %1398 = vmatprep.subr.mxu0 0.0
      %1399 = vmatpush2.msra.mxu0 0.0
      %1400 = vmatprep.subr.mxu0 0.0
      %1401 = vmatpush2.msra.mxu0 0.0
      %1402 = vmatprep.subr.mxu0 0.0
      %1403 = vmatpush2.msra.mxu0 0.0
      %1404 = vmatprep.subr.mxu0 0.0
      %1405 = vmatpush2.msra.mxu0 0.0
      %1406 = vmatprep.subr.mxu0 0.0
      %1407 = vmatpush2.msra.mxu0 0.0
      %1408 = vmatprep.subr.mxu0 0.0
      %1409 = vmatpush2.msra.mxu0 0.0
      %1410 = vmatprep.subr.mxu0 0.0
      %1411 = vmatpush2.msra.mxu0 0.0
      %1412 = vmatprep.subr.mxu0 0.0
      %1413 = vmatpush2.msra.mxu0 0.0
      %1414 = vmatprep.subr.mxu0 0.0
      %1415 = vmatpush2.msra.mxu0 0.0
      %1416 = vmatprep.subr.mxu0 0.0
      %1417 = vmatpush2.msra.mxu0 0.0
      %1418 = vmatprep.subr.mxu0 0.0
      %1419 = vmatpush2.msra.mxu0 0.0
      %1420 = vmatprep.subr.mxu0 0.0
      %1421 = vmatpush2.msra.mxu0 0.0
      %1422 = vmatprep.subr.mxu0 0.0
      %1423 = vmatpush2.msra.mxu0 0.0
      %1424 = vmatprep.subr.mxu0 0.0
      %1425 = vmatpush2.msra.mxu0 0.0
      %1426 = vmatprep.subr.mxu0 0.0
      %1427 = vmatpush2.msra.mxu0 0.0
      %1428 = vmatprep.mubr.f32.mxu0 0.0
      %1429 = vmatmul.mubr.f32.gmra.mxu0 %v1300
      %v1430 = vpop.f32.mrf.mxu0
      %v1431 = vadd.f32 0.0, %v1430
      %v1432 = vpop.f32.mrf.mxu0
      %1433 = vmatprep.mubr.f32.mxu0 0.0
      %1434 = vmatmul.mubr.f32.gmra.mxu0 %v1302
      %v1435 = vpop.f32.mrf.mxu0
      %v1436 = vadd.f32 0.0, %v1435
      %v1437 = vpop.f32.mrf.mxu0
      %1438 = vmatprep.mubr.f32.mxu0 0.0
      %1439 = vmatmul.mubr.f32.gmra.mxu0 %v1304
      %v1440 = vpop.f32.mrf.mxu0
      %v1441 = vadd.f32 0.0, %v1440
      %v1442 = vpop.f32.mrf.mxu0
      %1443 = vmatprep.mubr.f32.mxu0 0.0
      %1444 = vmatmul.mubr.f32.gmra.mxu0 %v1306
      %v1445 = vpop.f32.mrf.mxu0
      %v1446 = vadd.f32 0.0, %v1445
      %v1447 = vpop.f32.mrf.mxu0
      %1448 = vmatprep.mubr.f32.mxu0 0.0
      %1449 = vmatmul.mubr.f32.gmra.mxu0 %v1308
      %v1450 = vpop.f32.mrf.mxu0
      %v1451 = vadd.f32 0.0, %v1450
      %v1452 = vpop.f32.mrf.mxu0
      %1453 = vmatprep.mubr.f32.mxu0 0.0
      %1454 = vmatmul.mubr.f32.gmra.mxu0 %v1310
      %v1455 = vpop.f32.mrf.mxu0
      %v1456 = vadd.f32 0.0, %v1455
      %v1457 = vpop.f32.mrf.mxu0
      %1458 = vmatprep.mubr.f32.mxu0 0.0
      %1459 = vmatmul.mubr.f32.gmra.mxu0 %v1312
      %v1460 = vpop.f32.mrf.mxu0
      %v1461 = vadd.f32 0.0, %v1460
      %v1462 = vpop.f32.mrf.mxu0
      %1463 = vmatprep.mubr.f32.mxu0 0.0
      %1464 = vmatmul.mubr.f32.gmra.mxu0 %v1314
      %v1465 = vpop.f32.mrf.mxu0
      %v1466 = vadd.f32 0.0, %v1465
      %v1467 = vpop.f32.mrf.mxu0
      %1468 = vmatprep.mubr.f32.mxu0 0.0
      %1469 = vmatmul.mubr.f32.gmra.mxu0 %v1316
      %v1470 = vpop.f32.mrf.mxu0
      %v1471 = vadd.f32 0.0, %v1470
      %v1472 = vpop.f32.mrf.mxu0
      %1473 = vmatprep.mubr.f32.mxu0 0.0
      %1474 = vmatmul.mubr.f32.gmra.mxu0 %v1318
      %v1475 = vpop.f32.mrf.mxu0
      %v1476 = vadd.f32 0.0, %v1475
      %v1477 = vpop.f32.mrf.mxu0
      %1478 = vmatprep.mubr.f32.mxu0 0.0
      %1479 = vmatmul.mubr.f32.gmra.mxu0 %v1320
      %v1480 = vpop.f32.mrf.mxu0
      %v1481 = vadd.f32 0.0, %v1480
      %v1482 = vpop.f32.mrf.mxu0
      %1483 = vmatprep.mubr.f32.mxu0 0.0
      %1484 = vmatmul.mubr.f32.gmra.mxu0 %v1322
      %v1485 = vpop.f32.mrf.mxu0
      %v1486 = vadd.f32 0.0, %v1485
      %v1487 = vpop.f32.mrf.mxu0
      %1488 = vmatprep.mubr.f32.mxu0 0.0
      %1489 = vmatmul.mubr.f32.gmra.mxu0 %v1324
      %v1490 = vpop.f32.mrf.mxu0
      %v1491 = vadd.f32 0.0, %v1490
      %v1492 = vpop.f32.mrf.mxu0
      %1493 = vmatprep.mubr.f32.mxu0 0.0
      %1494 = vmatmul.mubr.f32.gmra.mxu0 %v1326
      %v1495 = vpop.f32.mrf.mxu0
      %v1496 = vadd.f32 0.0, %v1495
      %v1497 = vpop.f32.mrf.mxu0
      %1498 = vmatprep.mubr.f32.mxu0 0.0
      %1499 = vmatmul.mubr.f32.gmra.mxu0 %v1328
      %v1500 = vpop.f32.mrf.mxu0
      %v1501 = vadd.f32 0.0, %v1500
      %v1502 = vpop.f32.mrf.mxu0
      %1503 = vmatprep.mubr.f32.mxu0 0.0
      %1504 = vmatmul.mubr.f32.gmra.mxu0 %v1330
      %v1505 = vpop.f32.mrf.mxu0
      %v1506 = vadd.f32 0.0, %v1505
      %v1507 = vpop.f32.mrf.mxu0
      %1508 = vmatprep.mubr.f32.mxu0 0.0
      %1509 = vmatmul.mubr.f32.gmra.mxu0 %v1332
      %v1510 = vpop.f32.mrf.mxu0
      %v1511 = vadd.f32 0.0, %v1510
      %v1512 = vpop.f32.mrf.mxu0
      %1513 = vmatprep.mubr.f32.mxu0 0.0
      %1514 = vmatmul.mubr.f32.gmra.mxu0 %v1334
      %v1515 = vpop.f32.mrf.mxu0
      %v1516 = vadd.f32 0.0, %v1515
      %v1517 = vpop.f32.mrf.mxu0
      %1518 = vmatprep.mubr.f32.mxu0 0.0
      %1519 = vmatmul.mubr.f32.gmra.mxu0 %v1336
      %v1520 = vpop.f32.mrf.mxu0
      %v1521 = vadd.f32 0.0, %v1520
      %v1522 = vpop.f32.mrf.mxu0
      %1523 = vmatprep.mubr.f32.mxu0 0.0
      %1524 = vmatmul.mubr.f32.gmra.mxu0 %v1338
      %v1525 = vpop.f32.mrf.mxu0
      %v1526 = vadd.f32 0.0, %v1525
      %v1527 = vpop.f32.mrf.mxu0
      %1528 = vmatprep.mubr.f32.mxu0 0.0
      %1529 = vmatmul.mubr.f32.gmra.mxu0 %v1340
      %v1530 = vpop.f32.mrf.mxu0
      %v1531 = vadd.f32 0.0, %v1530
      %v1532 = vpop.f32.mrf.mxu0
      %1533 = vmatprep.mubr.f32.mxu0 0.0
      %1534 = vmatmul.mubr.f32.gmra.mxu0 %v1342
      %v1535 = vpop.f32.mrf.mxu0
      %v1536 = vadd.f32 0.0, %v1535
      %v1537 = vpop.f32.mrf.mxu0
      %1538 = vmatprep.mubr.f32.mxu0 0.0
      %1539 = vmatmul.mubr.f32.gmra.mxu0 %v1344
      %v1540 = vpop.f32.mrf.mxu0
      %v1541 = vadd.f32 0.0, %v1540
      %v1542 = vpop.f32.mrf.mxu0
      %1543 = vmatprep.mubr.f32.mxu0 0.0
      %1544 = vmatmul.mubr.f32.gmra.mxu0 %v1346
      %v1545 = vpop.f32.mrf.mxu0
      %v1546 = vadd.f32 0.0, %v1545
      %v1547 = vpop.f32.mrf.mxu0
      %1548 = vmatprep.mubr.f32.mxu0 0.0
      %1549 = vmatmul.mubr.f32.gmra.mxu0 %v1348
      %v1550 = vpop.f32.mrf.mxu0
      %v1551 = vadd.f32 0.0, %v1550
      %v1552 = vpop.f32.mrf.mxu0
      %1553 = vmatprep.mubr.f32.mxu0 0.0
      %1554 = vmatmul.mubr.f32.gmra.mxu0 %v1350
      %v1555 = vpop.f32.mrf.mxu0
      %v1556 = vadd.f32 0.0, %v1555
      %v1557 = vpop.f32.mrf.mxu0
      %1558 = vmatprep.mubr.f32.mxu0 0.0
      %1559 = vmatmul.mubr.f32.gmra.mxu0 %v1352
      %v1560 = vpop.f32.mrf.mxu0
      %v1561 = vadd.f32 0.0, %v1560
      %v1562 = vpop.f32.mrf.mxu0
      %1563 = vmatprep.mubr.f32.mxu0 0.0
      %1564 = vmatmul.mubr.f32.gmra.mxu0 %v1354
      %v1565 = vpop.f32.mrf.mxu0
      %v1566 = vadd.f32 0.0, %v1565
      %v1567 = vpop.f32.mrf.mxu0
      %1568 = vmatprep.mubr.f32.mxu0 0.0
      %1569 = vmatmul.mubr.f32.gmra.mxu0 %v1356
      %v1570 = vpop.f32.mrf.mxu0
      %v1571 = vadd.f32 0.0, %v1570
      %v1572 = vpop.f32.mrf.mxu0
      %1573 = vmatprep.mubr.f32.mxu0 0.0
      %1574 = vmatmul.mubr.f32.gmra.mxu0 %v1358
      %v1575 = vpop.f32.mrf.mxu0
      %v1576 = vadd.f32 0.0, %v1575
      %v1577 = vpop.f32.mrf.mxu0
      %1578 = vmatprep.mubr.f32.mxu0 0.0
      %1579 = vmatmul.mubr.f32.gmra.mxu0 %v1360
      %v1580 = vpop.f32.mrf.mxu0
      %v1581 = vadd.f32 0.0, %v1580
      %v1582 = vpop.f32.mrf.mxu0
      %1583 = vmatprep.mubr.f32.mxu0 0.0
      %1584 = vmatmul.mubr.f32.gmra.mxu0 %v1362
      %v1585 = vpop.f32.mrf.mxu0
      %v1586 = vadd.f32 0.0, %v1585
      %v1587 = vpop.f32.mrf.mxu0
      %1588 = vdwg.mxu0
      %v1589 = vadd.f32 %v1059, %v1431
      %v1590 = vadd.f32 %v1064, %v1436
      %v1591 = vadd.f32 %v1069, %v1441
      %v1592 = vadd.f32 %v1074, %v1446
      %v1593 = vadd.f32 %v1079, %v1451
      %v1594 = vadd.f32 %v1084, %v1456
      %v1595 = vadd.f32 %v1089, %v1461
      %v1596 = vadd.f32 %v1094, %v1466
      %v1597 = vadd.f32 %v1099, %v1471
      %v1598 = vadd.f32 %v1104, %v1476
      %v1599 = vadd.f32 %v1109, %v1481
      %v1600 = vadd.f32 %v1114, %v1486
      %v1601 = vadd.f32 %v1119, %v1491
      %v1602 = vadd.f32 %v1124, %v1496
      %v1603 = vadd.f32 %v1129, %v1501
      %v1604 = vadd.f32 %v1134, %v1506
      %v1605 = vadd.f32 %v1139, %v1511
      %v1606 = vadd.f32 %v1144, %v1516
      %v1607 = vadd.f32 %v1149, %v1521
      %v1608 = vadd.f32 %v1154, %v1526
      %v1609 = vadd.f32 %v1159, %v1531
      %v1610 = vadd.f32 %v1164, %v1536
      %v1611 = vadd.f32 %v1169, %v1541
      %v1612 = vadd.f32 %v1174, %v1546
      %v1613 = vadd.f32 %v1179, %v1551
      %v1614 = vadd.f32 %v1184, %v1556
      %v1615 = vadd.f32 %v1189, %v1561
      %v1616 = vadd.f32 %v1194, %v1566
      %v1617 = vadd.f32 %v1199, %v1571
      %v1618 = vadd.f32 %v1204, %v1576
      %v1619 = vadd.f32 %v1209, %v1581
      %v1620 = vadd.f32 %v1214, %v1586
      %s1621 = scalar_lea.vmem %s3, 24
      %v1622 = vld [vmem:[%s1621] sm:$0xff]
      %v1624 = vsel %vm638, %v392, 0
      %v1627 = vsel %vm638, %v393, 0
      %1629 = vmatprep.subr.mxu0 0.0
      %1630 = vmatpush1.msra.mxu0 0.0
      %1631 = vmatprep.subr.mxu0 0.0
      %1632 = vmatpush1.msra.mxu0 0.0
      %1633 = vmatprep.subr.mxu0 0.0
      %1634 = vmatpush1.msra.mxu0 0.0
      %1635 = vmatprep.subr.mxu0 0.0
      %1636 = vmatpush1.msra.mxu0 0.0
      %1637 = vmatprep.subr.mxu0 0.0
      %1638 = vmatpush1.msra.mxu0 0.0
      %1639 = vmatprep.subr.mxu0 0.0
      %1640 = vmatpush1.msra.mxu0 0.0
      %1641 = vmatprep.subr.mxu0 0.0
      %1642 = vmatpush1.msra.mxu0 0.0
      %1643 = vmatprep.subr.mxu0 0.0
      %1644 = vmatpush1.msra.mxu0 0.0
      %1645 = vmatprep.subr.mxu0 0.0
      %1646 = vmatpush1.msra.mxu0 0.0
      %1647 = vmatprep.subr.mxu0 0.0
      %1648 = vmatpush1.msra.mxu0 0.0
      %1649 = vmatprep.subr.mxu0 0.0
      %1650 = vmatpush1.msra.mxu0 0.0
      %1651 = vmatprep.subr.mxu0 0.0
      %1652 = vmatpush1.msra.mxu0 0.0
      %1653 = vmatprep.subr.mxu0 0.0
      %1654 = vmatpush1.msra.mxu0 0.0
      %1655 = vmatprep.subr.mxu0 0.0
      %1656 = vmatpush1.msra.mxu0 0.0
      %1657 = vmatprep.subr.mxu0 0.0
      %1658 = vmatpush1.msra.mxu0 0.0
      %1659 = vmatprep.subr.mxu0 0.0
      %1660 = vmatpush1.msra.mxu0 %v1622
      %1661 = vmatprep.subr.mxu0 0.0
      %1662 = vmatpush2.msra.mxu0 0.0
      %1663 = vmatprep.subr.mxu0 0.0
      %1664 = vmatpush2.msra.mxu0 0.0
      %1665 = vmatprep.subr.mxu0 0.0
      %1666 = vmatpush2.msra.mxu0 0.0
      %1667 = vmatprep.subr.mxu0 0.0
      %1668 = vmatpush2.msra.mxu0 0.0
      %1669 = vmatprep.subr.mxu0 0.0
      %1670 = vmatpush2.msra.mxu0 0.0
      %1671 = vmatprep.subr.mxu0 0.0
      %1672 = vmatpush2.msra.mxu0 0.0
      %1673 = vmatprep.subr.mxu0 0.0
      %1674 = vmatpush2.msra.mxu0 0.0
      %1675 = vmatprep.subr.mxu0 0.0
      %1676 = vmatpush2.msra.mxu0 0.0
      %1677 = vmatprep.subr.mxu0 0.0
      %1678 = vmatpush2.msra.mxu0 0.0
      %1679 = vmatprep.subr.mxu0 0.0
      %1680 = vmatpush2.msra.mxu0 0.0
      %1681 = vmatprep.subr.mxu0 0.0
      %1682 = vmatpush2.msra.mxu0 0.0
      %1683 = vmatprep.subr.mxu0 0.0
      %1684 = vmatpush2.msra.mxu0 0.0
      %1685 = vmatprep.subr.mxu0 0.0
      %1686 = vmatpush2.msra.mxu0 0.0
      %1687 = vmatprep.subr.mxu0 0.0
      %1688 = vmatpush2.msra.mxu0 0.0
      %1689 = vmatprep.subr.mxu0 0.0
      %1690 = vmatpush2.msra.mxu0 0.0
      %1691 = vmatprep.subr.mxu0 0.0
      %1692 = vmatpush2.msra.mxu0 0.0
      %1693 = vmatprep.mubr.f32.mxu0 0.0
      %1694 = vmatmul.mubr.f32.gmra.mxu0 %v932
      %v1695 = vpop.f32.mrf.mxu0
      %v1696 = vadd.f32 0.0, %v1695
      %v1697 = vpop.f32.mrf.mxu0
      %1698 = vmatprep.mubr.f32.mxu0 0.0
      %1699 = vmatmul.mubr.f32.gmra.mxu0 %v934
      %v1700 = vpop.f32.mrf.mxu0
      %v1701 = vadd.f32 0.0, %v1700
      %v1702 = vpop.f32.mrf.mxu0
      %1703 = vmatprep.mubr.f32.mxu0 0.0
      %1704 = vmatmul.mubr.f32.gmra.mxu0 %v936
      %v1705 = vpop.f32.mrf.mxu0
      %v1706 = vadd.f32 0.0, %v1705
      %v1707 = vpop.f32.mrf.mxu0
      %1708 = vmatprep.mubr.f32.mxu0 0.0
      %1709 = vmatmul.mubr.f32.gmra.mxu0 %v938
      %v1710 = vpop.f32.mrf.mxu0
      %v1711 = vadd.f32 0.0, %v1710
      %v1712 = vpop.f32.mrf.mxu0
      %1713 = vmatprep.mubr.f32.mxu0 0.0
      %1714 = vmatmul.mubr.f32.gmra.mxu0 %v940
      %v1715 = vpop.f32.mrf.mxu0
      %v1716 = vadd.f32 0.0, %v1715
      %v1717 = vpop.f32.mrf.mxu0
      %1718 = vmatprep.mubr.f32.mxu0 0.0
      %1719 = vmatmul.mubr.f32.gmra.mxu0 %v942
      %v1720 = vpop.f32.mrf.mxu0
      %v1721 = vadd.f32 0.0, %v1720
      %v1722 = vpop.f32.mrf.mxu0
      %1723 = vmatprep.mubr.f32.mxu0 0.0
      %1724 = vmatmul.mubr.f32.gmra.mxu0 %v944
      %v1725 = vpop.f32.mrf.mxu0
      %v1726 = vadd.f32 0.0, %v1725
      %v1727 = vpop.f32.mrf.mxu0
      %1728 = vmatprep.mubr.f32.mxu0 0.0
      %1729 = vmatmul.mubr.f32.gmra.mxu0 %v946
      %v1730 = vpop.f32.mrf.mxu0
      %v1731 = vadd.f32 0.0, %v1730
      %v1732 = vpop.f32.mrf.mxu0
      %1733 = vmatprep.mubr.f32.mxu0 0.0
      %1734 = vmatmul.mubr.f32.gmra.mxu0 %v948
      %v1735 = vpop.f32.mrf.mxu0
      %v1736 = vadd.f32 0.0, %v1735
      %v1737 = vpop.f32.mrf.mxu0
      %1738 = vmatprep.mubr.f32.mxu0 0.0
      %1739 = vmatmul.mubr.f32.gmra.mxu0 %v950
      %v1740 = vpop.f32.mrf.mxu0
      %v1741 = vadd.f32 0.0, %v1740
      %v1742 = vpop.f32.mrf.mxu0
      %1743 = vmatprep.mubr.f32.mxu0 0.0
      %1744 = vmatmul.mubr.f32.gmra.mxu0 %v952
      %v1745 = vpop.f32.mrf.mxu0
      %v1746 = vadd.f32 0.0, %v1745
      %v1747 = vpop.f32.mrf.mxu0
      %1748 = vmatprep.mubr.f32.mxu0 0.0
      %1749 = vmatmul.mubr.f32.gmra.mxu0 %v954
      %v1750 = vpop.f32.mrf.mxu0
      %v1751 = vadd.f32 0.0, %v1750
      %v1752 = vpop.f32.mrf.mxu0
      %1753 = vmatprep.mubr.f32.mxu0 0.0
      %1754 = vmatmul.mubr.f32.gmra.mxu0 %v956
      %v1755 = vpop.f32.mrf.mxu0
      %v1756 = vadd.f32 0.0, %v1755
      %v1757 = vpop.f32.mrf.mxu0
      %1758 = vmatprep.mubr.f32.mxu0 0.0
      %1759 = vmatmul.mubr.f32.gmra.mxu0 %v958
      %v1760 = vpop.f32.mrf.mxu0
      %v1761 = vadd.f32 0.0, %v1760
      %v1762 = vpop.f32.mrf.mxu0
      %1763 = vmatprep.mubr.f32.mxu0 0.0
      %1764 = vmatmul.mubr.f32.gmra.mxu0 %v960
      %v1765 = vpop.f32.mrf.mxu0
      %v1766 = vadd.f32 0.0, %v1765
      %v1767 = vpop.f32.mrf.mxu0
      %1768 = vmatprep.mubr.f32.mxu0 0.0
      %1769 = vmatmul.mubr.f32.gmra.mxu0 %v962
      %v1770 = vpop.f32.mrf.mxu0
      %v1771 = vadd.f32 0.0, %v1770
      %v1772 = vpop.f32.mrf.mxu0
      %1773 = vmatprep.mubr.f32.mxu0 0.0
      %1774 = vmatmul.mubr.f32.gmra.mxu0 %v964
      %v1775 = vpop.f32.mrf.mxu0
      %v1776 = vadd.f32 0.0, %v1775
      %v1777 = vpop.f32.mrf.mxu0
      %1778 = vmatprep.mubr.f32.mxu0 0.0
      %1779 = vmatmul.mubr.f32.gmra.mxu0 %v966
      %v1780 = vpop.f32.mrf.mxu0
      %v1781 = vadd.f32 0.0, %v1780
      %v1782 = vpop.f32.mrf.mxu0
      %1783 = vmatprep.mubr.f32.mxu0 0.0
      %1784 = vmatmul.mubr.f32.gmra.mxu0 %v968
      %v1785 = vpop.f32.mrf.mxu0
      %v1786 = vadd.f32 0.0, %v1785
      %v1787 = vpop.f32.mrf.mxu0
      %1788 = vmatprep.mubr.f32.mxu0 0.0
      %1789 = vmatmul.mubr.f32.gmra.mxu0 %v970
      %v1790 = vpop.f32.mrf.mxu0
      %v1791 = vadd.f32 0.0, %v1790
      %v1792 = vpop.f32.mrf.mxu0
      %1793 = vmatprep.mubr.f32.mxu0 0.0
      %1794 = vmatmul.mubr.f32.gmra.mxu0 %v972
      %v1795 = vpop.f32.mrf.mxu0
      %v1796 = vadd.f32 0.0, %v1795
      %v1797 = vpop.f32.mrf.mxu0
      %1798 = vmatprep.mubr.f32.mxu0 0.0
      %1799 = vmatmul.mubr.f32.gmra.mxu0 %v974
      %v1800 = vpop.f32.mrf.mxu0
      %v1801 = vadd.f32 0.0, %v1800
      %v1802 = vpop.f32.mrf.mxu0
      %1803 = vmatprep.mubr.f32.mxu0 0.0
      %1804 = vmatmul.mubr.f32.gmra.mxu0 %v976
      %v1805 = vpop.f32.mrf.mxu0
      %v1806 = vadd.f32 0.0, %v1805
      %v1807 = vpop.f32.mrf.mxu0
      %1808 = vmatprep.mubr.f32.mxu0 0.0
      %1809 = vmatmul.mubr.f32.gmra.mxu0 %v978
      %v1810 = vpop.f32.mrf.mxu0
      %v1811 = vadd.f32 0.0, %v1810
      %v1812 = vpop.f32.mrf.mxu0
      %1813 = vmatprep.mubr.f32.mxu0 0.0
      %1814 = vmatmul.mubr.f32.gmra.mxu0 %v980
      %v1815 = vpop.f32.mrf.mxu0
      %v1816 = vadd.f32 0.0, %v1815
      %v1817 = vpop.f32.mrf.mxu0
      %1818 = vmatprep.mubr.f32.mxu0 0.0
      %1819 = vmatmul.mubr.f32.gmra.mxu0 %v982
      %v1820 = vpop.f32.mrf.mxu0
      %v1821 = vadd.f32 0.0, %v1820
      %v1822 = vpop.f32.mrf.mxu0
      %1823 = vmatprep.mubr.f32.mxu0 0.0
      %1824 = vmatmul.mubr.f32.gmra.mxu0 %v984
      %v1825 = vpop.f32.mrf.mxu0
      %v1826 = vadd.f32 0.0, %v1825
      %v1827 = vpop.f32.mrf.mxu0
      %1828 = vmatprep.mubr.f32.mxu0 0.0
      %1829 = vmatmul.mubr.f32.gmra.mxu0 %v986
      %v1830 = vpop.f32.mrf.mxu0
      %v1831 = vadd.f32 0.0, %v1830
      %v1832 = vpop.f32.mrf.mxu0
      %1833 = vmatprep.mubr.f32.mxu0 0.0
      %1834 = vmatmul.mubr.f32.gmra.mxu0 %v988
      %v1835 = vpop.f32.mrf.mxu0
      %v1836 = vadd.f32 0.0, %v1835
      %v1837 = vpop.f32.mrf.mxu0
      %1838 = vmatprep.mubr.f32.mxu0 0.0
      %1839 = vmatmul.mubr.f32.gmra.mxu0 %v990
      %v1840 = vpop.f32.mrf.mxu0
      %v1841 = vadd.f32 0.0, %v1840
      %v1842 = vpop.f32.mrf.mxu0
      %1843 = vmatprep.mubr.f32.mxu0 0.0
      %1844 = vmatmul.mubr.f32.gmra.mxu0 %v1624
      %v1845 = vpop.f32.mrf.mxu0
      %v1846 = vadd.f32 0.0, %v1845
      %v1847 = vpop.f32.mrf.mxu0
      %1848 = vmatprep.mubr.f32.mxu0 0.0
      %1849 = vmatmul.mubr.f32.gmra.mxu0 %v1627
      %v1850 = vpop.f32.mrf.mxu0
      %v1851 = vadd.f32 0.0, %v1850
      %v1852 = vpop.f32.mrf.mxu0
      %1853 = vdwg.mxu0
      %v1854 = vadd.f32 %v1589, %v1696
      %v1855 = vadd.f32 %v1590, %v1701
      %v1856 = vadd.f32 %v1591, %v1706
      %v1857 = vadd.f32 %v1592, %v1711
      %v1858 = vadd.f32 %v1593, %v1716
      %v1859 = vadd.f32 %v1594, %v1721
      %v1860 = vadd.f32 %v1595, %v1726
      %v1861 = vadd.f32 %v1596, %v1731
      %v1862 = vadd.f32 %v1597, %v1736
      %v1863 = vadd.f32 %v1598, %v1741
      %v1864 = vadd.f32 %v1599, %v1746
      %v1865 = vadd.f32 %v1600, %v1751
      %v1866 = vadd.f32 %v1601, %v1756
      %v1867 = vadd.f32 %v1602, %v1761
      %v1868 = vadd.f32 %v1603, %v1766
      %v1869 = vadd.f32 %v1604, %v1771
      %v1870 = vadd.f32 %v1605, %v1776
      %v1871 = vadd.f32 %v1606, %v1781
      %v1872 = vadd.f32 %v1607, %v1786
      %v1873 = vadd.f32 %v1608, %v1791
      %v1874 = vadd.f32 %v1609, %v1796
      %v1875 = vadd.f32 %v1610, %v1801
      %v1876 = vadd.f32 %v1611, %v1806
      %v1877 = vadd.f32 %v1612, %v1811
      %v1878 = vadd.f32 %v1613, %v1816
      %v1879 = vadd.f32 %v1614, %v1821
      %v1880 = vadd.f32 %v1615, %v1826
      %v1881 = vadd.f32 %v1616, %v1831
      %v1882 = vadd.f32 %v1617, %v1836
      %v1883 = vadd.f32 %v1618, %v1841
      %v1884 = vadd.f32 %v1619, %v1846
      %v1885 = vadd.f32 %v1620, %v1851
      %v1887 = vrot.slane %v392, 1
      %v1888 = vrot.slane %v393, 1
      %v1889 = vsel %vm555, %v1887, %v1888
      %v1890 = vrot.slane %v394, 1
      %v1891 = vsel %vm555, %v1888, %v1890
      %s1892 = scalar_lea.vmem %s3, 32
      %v1893 = vld [vmem:[%s1892] sm:$0xff]
      %v1894 = vsel %vm638, %v1889, 0
      %v1896 = vsel %vm638, %v1891, 0
      %1898 = vmatprep.subr.mxu0 0.0
      %1899 = vmatpush1.msra.mxu0 0.0
      %1900 = vmatprep.subr.mxu0 0.0
      %1901 = vmatpush1.msra.mxu0 0.0
      %1902 = vmatprep.subr.mxu0 0.0
      %1903 = vmatpush1.msra.mxu0 0.0
      %1904 = vmatprep.subr.mxu0 0.0
      %1905 = vmatpush1.msra.mxu0 0.0
      %1906 = vmatprep.subr.mxu0 0.0
      %1907 = vmatpush1.msra.mxu0 0.0
      %1908 = vmatprep.subr.mxu0 0.0
      %1909 = vmatpush1.msra.mxu0 0.0
      %1910 = vmatprep.subr.mxu0 0.0
      %1911 = vmatpush1.msra.mxu0 0.0
      %1912 = vmatprep.subr.mxu0 0.0
      %1913 = vmatpush1.msra.mxu0 0.0
      %1914 = vmatprep.subr.mxu0 0.0
      %1915 = vmatpush1.msra.mxu0 0.0
      %1916 = vmatprep.subr.mxu0 0.0
      %1917 = vmatpush1.msra.mxu0 0.0
      %1918 = vmatprep.subr.mxu0 0.0
      %1919 = vmatpush1.msra.mxu0 0.0
      %1920 = vmatprep.subr.mxu0 0.0
      %1921 = vmatpush1.msra.mxu0 0.0
      %1922 = vmatprep.subr.mxu0 0.0
      %1923 = vmatpush1.msra.mxu0 0.0
      %1924 = vmatprep.subr.mxu0 0.0
      %1925 = vmatpush1.msra.mxu0 0.0
      %1926 = vmatprep.subr.mxu0 0.0
      %1927 = vmatpush1.msra.mxu0 0.0
      %1928 = vmatprep.subr.mxu0 0.0
      %1929 = vmatpush1.msra.mxu0 %v1893
      %1930 = vmatprep.subr.mxu0 0.0
      %1931 = vmatpush2.msra.mxu0 0.0
      %1932 = vmatprep.subr.mxu0 0.0
      %1933 = vmatpush2.msra.mxu0 0.0
      %1934 = vmatprep.subr.mxu0 0.0
      %1935 = vmatpush2.msra.mxu0 0.0
      %1936 = vmatprep.subr.mxu0 0.0
      %1937 = vmatpush2.msra.mxu0 0.0
      %1938 = vmatprep.subr.mxu0 0.0
      %1939 = vmatpush2.msra.mxu0 0.0
      %1940 = vmatprep.subr.mxu0 0.0
      %1941 = vmatpush2.msra.mxu0 0.0
      %1942 = vmatprep.subr.mxu0 0.0
      %1943 = vmatpush2.msra.mxu0 0.0
      %1944 = vmatprep.subr.mxu0 0.0
      %1945 = vmatpush2.msra.mxu0 0.0
      %1946 = vmatprep.subr.mxu0 0.0
      %1947 = vmatpush2.msra.mxu0 0.0
      %1948 = vmatprep.subr.mxu0 0.0
      %1949 = vmatpush2.msra.mxu0 0.0
      %1950 = vmatprep.subr.mxu0 0.0
      %1951 = vmatpush2.msra.mxu0 0.0
      %1952 = vmatprep.subr.mxu0 0.0
      %1953 = vmatpush2.msra.mxu0 0.0
      %1954 = vmatprep.subr.mxu0 0.0
      %1955 = vmatpush2.msra.mxu0 0.0
      %1956 = vmatprep.subr.mxu0 0.0
      %1957 = vmatpush2.msra.mxu0 0.0
      %1958 = vmatprep.subr.mxu0 0.0
      %1959 = vmatpush2.msra.mxu0 0.0
      %1960 = vmatprep.subr.mxu0 0.0
      %1961 = vmatpush2.msra.mxu0 0.0
      %1962 = vmatprep.mubr.f32.mxu0 0.0
      %1963 = vmatmul.mubr.f32.gmra.mxu0 %v643
      %v1964 = vpop.f32.mrf.mxu0
      %v1965 = vadd.f32 0.0, %v1964
      %v1966 = vpop.f32.mrf.mxu0
      %1967 = vmatprep.mubr.f32.mxu0 0.0
      %1968 = vmatmul.mubr.f32.gmra.mxu0 %v645
      %v1969 = vpop.f32.mrf.mxu0
      %v1970 = vadd.f32 0.0, %v1969
      %v1971 = vpop.f32.mrf.mxu0
      %1972 = vmatprep.mubr.f32.mxu0 0.0
      %1973 = vmatmul.mubr.f32.gmra.mxu0 %v647
      %v1974 = vpop.f32.mrf.mxu0
      %v1975 = vadd.f32 0.0, %v1974
      %v1976 = vpop.f32.mrf.mxu0
      %1977 = vmatprep.mubr.f32.mxu0 0.0
      %1978 = vmatmul.mubr.f32.gmra.mxu0 %v649
      %v1979 = vpop.f32.mrf.mxu0
      %v1980 = vadd.f32 0.0, %v1979
      %v1981 = vpop.f32.mrf.mxu0
      %1982 = vmatprep.mubr.f32.mxu0 0.0
      %1983 = vmatmul.mubr.f32.gmra.mxu0 %v651
      %v1984 = vpop.f32.mrf.mxu0
      %v1985 = vadd.f32 0.0, %v1984
      %v1986 = vpop.f32.mrf.mxu0
      %1987 = vmatprep.mubr.f32.mxu0 0.0
      %1988 = vmatmul.mubr.f32.gmra.mxu0 %v653
      %v1989 = vpop.f32.mrf.mxu0
      %v1990 = vadd.f32 0.0, %v1989
      %v1991 = vpop.f32.mrf.mxu0
      %1992 = vmatprep.mubr.f32.mxu0 0.0
      %1993 = vmatmul.mubr.f32.gmra.mxu0 %v655
      %v1994 = vpop.f32.mrf.mxu0
      %v1995 = vadd.f32 0.0, %v1994
      %v1996 = vpop.f32.mrf.mxu0
      %1997 = vmatprep.mubr.f32.mxu0 0.0
      %1998 = vmatmul.mubr.f32.gmra.mxu0 %v657
      %v1999 = vpop.f32.mrf.mxu0
      %v2000 = vadd.f32 0.0, %v1999
      %v2001 = vpop.f32.mrf.mxu0
      %2002 = vmatprep.mubr.f32.mxu0 0.0
      %2003 = vmatmul.mubr.f32.gmra.mxu0 %v659
      %v2004 = vpop.f32.mrf.mxu0
      %v2005 = vadd.f32 0.0, %v2004
      %v2006 = vpop.f32.mrf.mxu0
      %2007 = vmatprep.mubr.f32.mxu0 0.0
      %2008 = vmatmul.mubr.f32.gmra.mxu0 %v661
      %v2009 = vpop.f32.mrf.mxu0
      %v2010 = vadd.f32 0.0, %v2009
      %v2011 = vpop.f32.mrf.mxu0
      %2012 = vmatprep.mubr.f32.mxu0 0.0
      %2013 = vmatmul.mubr.f32.gmra.mxu0 %v663
      %v2014 = vpop.f32.mrf.mxu0
      %v2015 = vadd.f32 0.0, %v2014
      %v2016 = vpop.f32.mrf.mxu0
      %2017 = vmatprep.mubr.f32.mxu0 0.0
      %2018 = vmatmul.mubr.f32.gmra.mxu0 %v665
      %v2019 = vpop.f32.mrf.mxu0
      %v2020 = vadd.f32 0.0, %v2019
      %v2021 = vpop.f32.mrf.mxu0
      %2022 = vmatprep.mubr.f32.mxu0 0.0
      %2023 = vmatmul.mubr.f32.gmra.mxu0 %v667
      %v2024 = vpop.f32.mrf.mxu0
      %v2025 = vadd.f32 0.0, %v2024
      %v2026 = vpop.f32.mrf.mxu0
      %2027 = vmatprep.mubr.f32.mxu0 0.0
      %2028 = vmatmul.mubr.f32.gmra.mxu0 %v669
      %v2029 = vpop.f32.mrf.mxu0
      %v2030 = vadd.f32 0.0, %v2029
      %v2031 = vpop.f32.mrf.mxu0
      %2032 = vmatprep.mubr.f32.mxu0 0.0
      %2033 = vmatmul.mubr.f32.gmra.mxu0 %v671
      %v2034 = vpop.f32.mrf.mxu0
      %v2035 = vadd.f32 0.0, %v2034
      %v2036 = vpop.f32.mrf.mxu0
      %2037 = vmatprep.mubr.f32.mxu0 0.0
      %2038 = vmatmul.mubr.f32.gmra.mxu0 %v673
      %v2039 = vpop.f32.mrf.mxu0
      %v2040 = vadd.f32 0.0, %v2039
      %v2041 = vpop.f32.mrf.mxu0
      %2042 = vmatprep.mubr.f32.mxu0 0.0
      %2043 = vmatmul.mubr.f32.gmra.mxu0 %v675
      %v2044 = vpop.f32.mrf.mxu0
      %v2045 = vadd.f32 0.0, %v2044
      %v2046 = vpop.f32.mrf.mxu0
      %2047 = vmatprep.mubr.f32.mxu0 0.0
      %2048 = vmatmul.mubr.f32.gmra.mxu0 %v677
      %v2049 = vpop.f32.mrf.mxu0
      %v2050 = vadd.f32 0.0, %v2049
      %v2051 = vpop.f32.mrf.mxu0
      %2052 = vmatprep.mubr.f32.mxu0 0.0
      %2053 = vmatmul.mubr.f32.gmra.mxu0 %v679
      %v2054 = vpop.f32.mrf.mxu0
      %v2055 = vadd.f32 0.0, %v2054
      %v2056 = vpop.f32.mrf.mxu0
      %2057 = vmatprep.mubr.f32.mxu0 0.0
      %2058 = vmatmul.mubr.f32.gmra.mxu0 %v681
      %v2059 = vpop.f32.mrf.mxu0
      %v2060 = vadd.f32 0.0, %v2059
      %v2061 = vpop.f32.mrf.mxu0
      %2062 = vmatprep.mubr.f32.mxu0 0.0
      %2063 = vmatmul.mubr.f32.gmra.mxu0 %v683
      %v2064 = vpop.f32.mrf.mxu0
      %v2065 = vadd.f32 0.0, %v2064
      %v2066 = vpop.f32.mrf.mxu0
      %2067 = vmatprep.mubr.f32.mxu0 0.0
      %2068 = vmatmul.mubr.f32.gmra.mxu0 %v685
      %v2069 = vpop.f32.mrf.mxu0
      %v2070 = vadd.f32 0.0, %v2069
      %v2071 = vpop.f32.mrf.mxu0
      %2072 = vmatprep.mubr.f32.mxu0 0.0
      %2073 = vmatmul.mubr.f32.gmra.mxu0 %v687
      %v2074 = vpop.f32.mrf.mxu0
      %v2075 = vadd.f32 0.0, %v2074
      %v2076 = vpop.f32.mrf.mxu0
      %2077 = vmatprep.mubr.f32.mxu0 0.0
      %2078 = vmatmul.mubr.f32.gmra.mxu0 %v689
      %v2079 = vpop.f32.mrf.mxu0
      %v2080 = vadd.f32 0.0, %v2079
      %v2081 = vpop.f32.mrf.mxu0
      %2082 = vmatprep.mubr.f32.mxu0 0.0
      %2083 = vmatmul.mubr.f32.gmra.mxu0 %v691
      %v2084 = vpop.f32.mrf.mxu0
      %v2085 = vadd.f32 0.0, %v2084
      %v2086 = vpop.f32.mrf.mxu0
      %2087 = vmatprep.mubr.f32.mxu0 0.0
      %2088 = vmatmul.mubr.f32.gmra.mxu0 %v693
      %v2089 = vpop.f32.mrf.mxu0
      %v2090 = vadd.f32 0.0, %v2089
      %v2091 = vpop.f32.mrf.mxu0
      %2092 = vmatprep.mubr.f32.mxu0 0.0
      %2093 = vmatmul.mubr.f32.gmra.mxu0 %v695
      %v2094 = vpop.f32.mrf.mxu0
      %v2095 = vadd.f32 0.0, %v2094
      %v2096 = vpop.f32.mrf.mxu0
      %2097 = vmatprep.mubr.f32.mxu0 0.0
      %2098 = vmatmul.mubr.f32.gmra.mxu0 %v697
      %v2099 = vpop.f32.mrf.mxu0
      %v2100 = vadd.f32 0.0, %v2099
      %v2101 = vpop.f32.mrf.mxu0
      %2102 = vmatprep.mubr.f32.mxu0 0.0
      %2103 = vmatmul.mubr.f32.gmra.mxu0 %v699
      %v2104 = vpop.f32.mrf.mxu0
      %v2105 = vadd.f32 0.0, %v2104
      %v2106 = vpop.f32.mrf.mxu0
      %2107 = vmatprep.mubr.f32.mxu0 0.0
      %2108 = vmatmul.mubr.f32.gmra.mxu0 %v701
      %v2109 = vpop.f32.mrf.mxu0
      %v2110 = vadd.f32 0.0, %v2109
      %v2111 = vpop.f32.mrf.mxu0
      %2112 = vmatprep.mubr.f32.mxu0 0.0
      %2113 = vmatmul.mubr.f32.gmra.mxu0 %v1894
      %v2114 = vpop.f32.mrf.mxu0
      %v2115 = vadd.f32 0.0, %v2114
      %v2116 = vpop.f32.mrf.mxu0
      %2117 = vmatprep.mubr.f32.mxu0 0.0
      %2118 = vmatmul.mubr.f32.gmra.mxu0 %v1896
      %v2119 = vpop.f32.mrf.mxu0
      %v2120 = vadd.f32 0.0, %v2119
      %v2121 = vpop.f32.mrf.mxu0
      %2122 = vdwg.mxu0
      %v2123 = vadd.f32 %v1854, %v1965
      %v2124 = vadd.f32 %v1855, %v1970
      %v2125 = vadd.f32 %v1856, %v1975
      %v2126 = vadd.f32 %v1857, %v1980
      %v2127 = vadd.f32 %v1858, %v1985
      %v2128 = vadd.f32 %v1859, %v1990
      %v2129 = vadd.f32 %v1860, %v1995
      %v2130 = vadd.f32 %v1861, %v2000
      %v2131 = vadd.f32 %v1862, %v2005
      %v2132 = vadd.f32 %v1863, %v2010
      %v2133 = vadd.f32 %v1864, %v2015
      %v2134 = vadd.f32 %v1865, %v2020
      %v2135 = vadd.f32 %v1866, %v2025
      %v2136 = vadd.f32 %v1867, %v2030
      %v2137 = vadd.f32 %v1868, %v2035
      %v2138 = vadd.f32 %v1869, %v2040
      %v2139 = vadd.f32 %v1870, %v2045
      %v2140 = vadd.f32 %v1871, %v2050
      %v2141 = vadd.f32 %v1872, %v2055
      %v2142 = vadd.f32 %v1873, %v2060
      %v2143 = vadd.f32 %v1874, %v2065
      %v2144 = vadd.f32 %v1875, %v2070
      %v2145 = vadd.f32 %v1876, %v2075
      %v2146 = vadd.f32 %v1877, %v2080
      %v2147 = vadd.f32 %v1878, %v2085
      %v2148 = vadd.f32 %v1879, %v2090
      %v2149 = vadd.f32 %v1880, %v2095
      %v2150 = vadd.f32 %v1881, %v2100
      %v2151 = vadd.f32 %v1882, %v2105
      %v2152 = vadd.f32 %v1883, %v2110
      %v2153 = vadd.f32 %v1884, %v2115
      %v2154 = vadd.f32 %v1885, %v2120
      %v2155 = vrot.slane %v392, 2
      %v2156 = vrot.slane %v393, 2
      %v2157 = vsel %vm1217, %v2155, %v2156
      %v2158 = vrot.slane %v394, 2
      %v2159 = vsel %vm1217, %v2156, %v2158
      %s2160 = scalar_lea.vmem %s3, 40
      %v2161 = vld [vmem:[%s2160] sm:$0xff]
      %v2162 = vsel %vm638, %v2157, 0
      %v2164 = vsel %vm638, %v2159, 0
      %2166 = vmatprep.subr.mxu0 0.0
      %2167 = vmatpush1.msra.mxu0 0.0
      %2168 = vmatprep.subr.mxu0 0.0
      %2169 = vmatpush1.msra.mxu0 0.0
      %2170 = vmatprep.subr.mxu0 0.0
      %2171 = vmatpush1.msra.mxu0 0.0
      %2172 = vmatprep.subr.mxu0 0.0
      %2173 = vmatpush1.msra.mxu0 0.0
      %2174 = vmatprep.subr.mxu0 0.0
      %2175 = vmatpush1.msra.mxu0 0.0
      %2176 = vmatprep.subr.mxu0 0.0
      %2177 = vmatpush1.msra.mxu0 0.0
      %2178 = vmatprep.subr.mxu0 0.0
      %2179 = vmatpush1.msra.mxu0 0.0
      %2180 = vmatprep.subr.mxu0 0.0
      %2181 = vmatpush1.msra.mxu0 0.0
      %2182 = vmatprep.subr.mxu0 0.0
      %2183 = vmatpush1.msra.mxu0 0.0
      %2184 = vmatprep.subr.mxu0 0.0
      %2185 = vmatpush1.msra.mxu0 0.0
      %2186 = vmatprep.subr.mxu0 0.0
      %2187 = vmatpush1.msra.mxu0 0.0
      %2188 = vmatprep.subr.mxu0 0.0
      %2189 = vmatpush1.msra.mxu0 0.0
      %2190 = vmatprep.subr.mxu0 0.0
      %2191 = vmatpush1.msra.mxu0 0.0
      %2192 = vmatprep.subr.mxu0 0.0
      %2193 = vmatpush1.msra.mxu0 0.0
      %2194 = vmatprep.subr.mxu0 0.0
      %2195 = vmatpush1.msra.mxu0 0.0
      %2196 = vmatprep.subr.mxu0 0.0
      %2197 = vmatpush1.msra.mxu0 %v2161
      %2198 = vmatprep.subr.mxu0 0.0
      %2199 = vmatpush2.msra.mxu0 0.0
      %2200 = vmatprep.subr.mxu0 0.0
      %2201 = vmatpush2.msra.mxu0 0.0
      %2202 = vmatprep.subr.mxu0 0.0
      %2203 = vmatpush2.msra.mxu0 0.0
      %2204 = vmatprep.subr.mxu0 0.0
      %2205 = vmatpush2.msra.mxu0 0.0
      %2206 = vmatprep.subr.mxu0 0.0
      %2207 = vmatpush2.msra.mxu0 0.0
      %2208 = vmatprep.subr.mxu0 0.0
      %2209 = vmatpush2.msra.mxu0 0.0
      %2210 = vmatprep.subr.mxu0 0.0
      %2211 = vmatpush2.msra.mxu0 0.0
      %2212 = vmatprep.subr.mxu0 0.0
      %2213 = vmatpush2.msra.mxu0 0.0
      %2214 = vmatprep.subr.mxu0 0.0
      %2215 = vmatpush2.msra.mxu0 0.0
      %2216 = vmatprep.subr.mxu0 0.0
      %2217 = vmatpush2.msra.mxu0 0.0
      %2218 = vmatprep.subr.mxu0 0.0
      %2219 = vmatpush2.msra.mxu0 0.0
      %2220 = vmatprep.subr.mxu0 0.0
      %2221 = vmatpush2.msra.mxu0 0.0
      %2222 = vmatprep.subr.mxu0 0.0
      %2223 = vmatpush2.msra.mxu0 0.0
      %2224 = vmatprep.subr.mxu0 0.0
      %2225 = vmatpush2.msra.mxu0 0.0
      %2226 = vmatprep.subr.mxu0 0.0
      %2227 = vmatpush2.msra.mxu0 0.0
      %2228 = vmatprep.subr.mxu0 0.0
      %2229 = vmatpush2.msra.mxu0 0.0
      %2230 = vmatprep.mubr.f32.mxu0 0.0
      %2231 = vmatmul.mubr.f32.gmra.mxu0 %v1304
      %v2232 = vpop.f32.mrf.mxu0
      %v2233 = vadd.f32 0.0, %v2232
      %v2234 = vpop.f32.mrf.mxu0
      %2235 = vmatprep.mubr.f32.mxu0 0.0
      %2236 = vmatmul.mubr.f32.gmra.mxu0 %v1306
      %v2237 = vpop.f32.mrf.mxu0
      %v2238 = vadd.f32 0.0, %v2237
      %v2239 = vpop.f32.mrf.mxu0
      %2240 = vmatprep.mubr.f32.mxu0 0.0
      %2241 = vmatmul.mubr.f32.gmra.mxu0 %v1308
      %v2242 = vpop.f32.mrf.mxu0
      %v2243 = vadd.f32 0.0, %v2242
      %v2244 = vpop.f32.mrf.mxu0
      %2245 = vmatprep.mubr.f32.mxu0 0.0
      %2246 = vmatmul.mubr.f32.gmra.mxu0 %v1310
      %v2247 = vpop.f32.mrf.mxu0
      %v2248 = vadd.f32 0.0, %v2247
      %v2249 = vpop.f32.mrf.mxu0
      %2250 = vmatprep.mubr.f32.mxu0 0.0
      %2251 = vmatmul.mubr.f32.gmra.mxu0 %v1312
      %v2252 = vpop.f32.mrf.mxu0
      %v2253 = vadd.f32 0.0, %v2252
      %v2254 = vpop.f32.mrf.mxu0
      %2255 = vmatprep.mubr.f32.mxu0 0.0
      %2256 = vmatmul.mubr.f32.gmra.mxu0 %v1314
      %v2257 = vpop.f32.mrf.mxu0
      %v2258 = vadd.f32 0.0, %v2257
      %v2259 = vpop.f32.mrf.mxu0
      %2260 = vmatprep.mubr.f32.mxu0 0.0
      %2261 = vmatmul.mubr.f32.gmra.mxu0 %v1316
      %v2262 = vpop.f32.mrf.mxu0
      %v2263 = vadd.f32 0.0, %v2262
      %v2264 = vpop.f32.mrf.mxu0
      %2265 = vmatprep.mubr.f32.mxu0 0.0
      %2266 = vmatmul.mubr.f32.gmra.mxu0 %v1318
      %v2267 = vpop.f32.mrf.mxu0
      %v2268 = vadd.f32 0.0, %v2267
      %v2269 = vpop.f32.mrf.mxu0
      %2270 = vmatprep.mubr.f32.mxu0 0.0
      %2271 = vmatmul.mubr.f32.gmra.mxu0 %v1320
      %v2272 = vpop.f32.mrf.mxu0
      %v2273 = vadd.f32 0.0, %v2272
      %v2274 = vpop.f32.mrf.mxu0
      %2275 = vmatprep.mubr.f32.mxu0 0.0
      %2276 = vmatmul.mubr.f32.gmra.mxu0 %v1322
      %v2277 = vpop.f32.mrf.mxu0
      %v2278 = vadd.f32 0.0, %v2277
      %v2279 = vpop.f32.mrf.mxu0
      %2280 = vmatprep.mubr.f32.mxu0 0.0
      %2281 = vmatmul.mubr.f32.gmra.mxu0 %v1324
      %v2282 = vpop.f32.mrf.mxu0
      %v2283 = vadd.f32 0.0, %v2282
      %v2284 = vpop.f32.mrf.mxu0
      %2285 = vmatprep.mubr.f32.mxu0 0.0
      %2286 = vmatmul.mubr.f32.gmra.mxu0 %v1326
      %v2287 = vpop.f32.mrf.mxu0
      %v2288 = vadd.f32 0.0, %v2287
      %v2289 = vpop.f32.mrf.mxu0
      %2290 = vmatprep.mubr.f32.mxu0 0.0
      %2291 = vmatmul.mubr.f32.gmra.mxu0 %v1328
      %v2292 = vpop.f32.mrf.mxu0
      %v2293 = vadd.f32 0.0, %v2292
      %v2294 = vpop.f32.mrf.mxu0
      %2295 = vmatprep.mubr.f32.mxu0 0.0
      %2296 = vmatmul.mubr.f32.gmra.mxu0 %v1330
      %v2297 = vpop.f32.mrf.mxu0
      %v2298 = vadd.f32 0.0, %v2297
      %v2299 = vpop.f32.mrf.mxu0
      %2300 = vmatprep.mubr.f32.mxu0 0.0
      %2301 = vmatmul.mubr.f32.gmra.mxu0 %v1332
      %v2302 = vpop.f32.mrf.mxu0
      %v2303 = vadd.f32 0.0, %v2302
      %v2304 = vpop.f32.mrf.mxu0
      %2305 = vmatprep.mubr.f32.mxu0 0.0
      %2306 = vmatmul.mubr.f32.gmra.mxu0 %v1334
      %v2307 = vpop.f32.mrf.mxu0
      %v2308 = vadd.f32 0.0, %v2307
      %v2309 = vpop.f32.mrf.mxu0
      %2310 = vmatprep.mubr.f32.mxu0 0.0
      %2311 = vmatmul.mubr.f32.gmra.mxu0 %v1336
      %v2312 = vpop.f32.mrf.mxu0
      %v2313 = vadd.f32 0.0, %v2312
      %v2314 = vpop.f32.mrf.mxu0
      %2315 = vmatprep.mubr.f32.mxu0 0.0
      %2316 = vmatmul.mubr.f32.gmra.mxu0 %v1338
      %v2317 = vpop.f32.mrf.mxu0
      %v2318 = vadd.f32 0.0, %v2317
      %v2319 = vpop.f32.mrf.mxu0
      %2320 = vmatprep.mubr.f32.mxu0 0.0
      %2321 = vmatmul.mubr.f32.gmra.mxu0 %v1340
      %v2322 = vpop.f32.mrf.mxu0
      %v2323 = vadd.f32 0.0, %v2322
      %v2324 = vpop.f32.mrf.mxu0
      %2325 = vmatprep.mubr.f32.mxu0 0.0
      %2326 = vmatmul.mubr.f32.gmra.mxu0 %v1342
      %v2327 = vpop.f32.mrf.mxu0
      %v2328 = vadd.f32 0.0, %v2327
      %v2329 = vpop.f32.mrf.mxu0
      %2330 = vmatprep.mubr.f32.mxu0 0.0
      %2331 = vmatmul.mubr.f32.gmra.mxu0 %v1344
      %v2332 = vpop.f32.mrf.mxu0
      %v2333 = vadd.f32 0.0, %v2332
      %v2334 = vpop.f32.mrf.mxu0
      %2335 = vmatprep.mubr.f32.mxu0 0.0
      %2336 = vmatmul.mubr.f32.gmra.mxu0 %v1346
      %v2337 = vpop.f32.mrf.mxu0
      %v2338 = vadd.f32 0.0, %v2337
      %v2339 = vpop.f32.mrf.mxu0
      %2340 = vmatprep.mubr.f32.mxu0 0.0
      %2341 = vmatmul.mubr.f32.gmra.mxu0 %v1348
      %v2342 = vpop.f32.mrf.mxu0
      %v2343 = vadd.f32 0.0, %v2342
      %v2344 = vpop.f32.mrf.mxu0
      %2345 = vmatprep.mubr.f32.mxu0 0.0
      %2346 = vmatmul.mubr.f32.gmra.mxu0 %v1350
      %v2347 = vpop.f32.mrf.mxu0
      %v2348 = vadd.f32 0.0, %v2347
      %v2349 = vpop.f32.mrf.mxu0
      %2350 = vmatprep.mubr.f32.mxu0 0.0
      %2351 = vmatmul.mubr.f32.gmra.mxu0 %v1352
      %v2352 = vpop.f32.mrf.mxu0
      %v2353 = vadd.f32 0.0, %v2352
      %v2354 = vpop.f32.mrf.mxu0
      %2355 = vmatprep.mubr.f32.mxu0 0.0
      %2356 = vmatmul.mubr.f32.gmra.mxu0 %v1354
      %v2357 = vpop.f32.mrf.mxu0
      %v2358 = vadd.f32 0.0, %v2357
      %v2359 = vpop.f32.mrf.mxu0
      %2360 = vmatprep.mubr.f32.mxu0 0.0
      %2361 = vmatmul.mubr.f32.gmra.mxu0 %v1356
      %v2362 = vpop.f32.mrf.mxu0
      %v2363 = vadd.f32 0.0, %v2362
      %v2364 = vpop.f32.mrf.mxu0
      %2365 = vmatprep.mubr.f32.mxu0 0.0
      %2366 = vmatmul.mubr.f32.gmra.mxu0 %v1358
      %v2367 = vpop.f32.mrf.mxu0
      %v2368 = vadd.f32 0.0, %v2367
      %v2369 = vpop.f32.mrf.mxu0
      %2370 = vmatprep.mubr.f32.mxu0 0.0
      %2371 = vmatmul.mubr.f32.gmra.mxu0 %v1360
      %v2372 = vpop.f32.mrf.mxu0
      %v2373 = vadd.f32 0.0, %v2372
      %v2374 = vpop.f32.mrf.mxu0
      %2375 = vmatprep.mubr.f32.mxu0 0.0
      %2376 = vmatmul.mubr.f32.gmra.mxu0 %v1362
      %v2377 = vpop.f32.mrf.mxu0
      %v2378 = vadd.f32 0.0, %v2377
      %v2379 = vpop.f32.mrf.mxu0
      %2380 = vmatprep.mubr.f32.mxu0 0.0
      %2381 = vmatmul.mubr.f32.gmra.mxu0 %v2162
      %v2382 = vpop.f32.mrf.mxu0
      %v2383 = vadd.f32 0.0, %v2382
      %v2384 = vpop.f32.mrf.mxu0
      %2385 = vmatprep.mubr.f32.mxu0 0.0
      %2386 = vmatmul.mubr.f32.gmra.mxu0 %v2164
      %v2387 = vpop.f32.mrf.mxu0
      %v2388 = vadd.f32 0.0, %v2387
      %v2389 = vpop.f32.mrf.mxu0
      %2390 = vdwg.mxu0
      %v2391 = vadd.f32 %v2123, %v2233
      %v2392 = vadd.f32 %v2124, %v2238
      %v2393 = vadd.f32 %v2125, %v2243
      %v2394 = vadd.f32 %v2126, %v2248
      %v2395 = vadd.f32 %v2127, %v2253
      %v2396 = vadd.f32 %v2128, %v2258
      %v2397 = vadd.f32 %v2129, %v2263
      %v2398 = vadd.f32 %v2130, %v2268
      %v2399 = vadd.f32 %v2131, %v2273
      %v2400 = vadd.f32 %v2132, %v2278
      %v2401 = vadd.f32 %v2133, %v2283
      %v2402 = vadd.f32 %v2134, %v2288
      %v2403 = vadd.f32 %v2135, %v2293
      %v2404 = vadd.f32 %v2136, %v2298
      %v2405 = vadd.f32 %v2137, %v2303
      %v2406 = vadd.f32 %v2138, %v2308
      %v2407 = vadd.f32 %v2139, %v2313
      %v2408 = vadd.f32 %v2140, %v2318
      %v2409 = vadd.f32 %v2141, %v2323
      %v2410 = vadd.f32 %v2142, %v2328
      %v2411 = vadd.f32 %v2143, %v2333
      %v2412 = vadd.f32 %v2144, %v2338
      %v2413 = vadd.f32 %v2145, %v2343
      %v2414 = vadd.f32 %v2146, %v2348
      %v2415 = vadd.f32 %v2147, %v2353
      %v2416 = vadd.f32 %v2148, %v2358
      %v2417 = vadd.f32 %v2149, %v2363
      %v2418 = vadd.f32 %v2150, %v2368
      %v2419 = vadd.f32 %v2151, %v2373
      %v2420 = vadd.f32 %v2152, %v2378
      %v2421 = vadd.f32 %v2153, %v2383
      %v2422 = vadd.f32 %v2154, %v2388
      %s2423 = scalar_lea.vmem %s3, 48
      %v2424 = vld [vmem:[%s2423] sm:$0xff]
      %v2426 = vsel %vm638, %v395, 0
      %v2429 = vsel %vm638, %v396, 0
      %2431 = vmatprep.subr.mxu0 0.0
      %2432 = vmatpush1.msra.mxu0 0.0
      %2433 = vmatprep.subr.mxu0 0.0
      %2434 = vmatpush1.msra.mxu0 0.0
      %2435 = vmatprep.subr.mxu0 0.0
      %2436 = vmatpush1.msra.mxu0 0.0
      %2437 = vmatprep.subr.mxu0 0.0
      %2438 = vmatpush1.msra.mxu0 0.0
      %2439 = vmatprep.subr.mxu0 0.0
      %2440 = vmatpush1.msra.mxu0 0.0
      %2441 = vmatprep.subr.mxu0 0.0
      %2442 = vmatpush1.msra.mxu0 0.0
      %2443 = vmatprep.subr.mxu0 0.0
      %2444 = vmatpush1.msra.mxu0 0.0
      %2445 = vmatprep.subr.mxu0 0.0
      %2446 = vmatpush1.msra.mxu0 0.0
      %2447 = vmatprep.subr.mxu0 0.0
      %2448 = vmatpush1.msra.mxu0 0.0
      %2449 = vmatprep.subr.mxu0 0.0
      %2450 = vmatpush1.msra.mxu0 0.0
      %2451 = vmatprep.subr.mxu0 0.0
      %2452 = vmatpush1.msra.mxu0 0.0
      %2453 = vmatprep.subr.mxu0 0.0
      %2454 = vmatpush1.msra.mxu0 0.0
      %2455 = vmatprep.subr.mxu0 0.0
      %2456 = vmatpush1.msra.mxu0 0.0
      %2457 = vmatprep.subr.mxu0 0.0
      %2458 = vmatpush1.msra.mxu0 0.0
      %2459 = vmatprep.subr.mxu0 0.0
      %2460 = vmatpush1.msra.mxu0 0.0
      %2461 = vmatprep.subr.mxu0 0.0
      %2462 = vmatpush1.msra.mxu0 %v2424
      %2463 = vmatprep.subr.mxu0 0.0
      %2464 = vmatpush2.msra.mxu0 0.0
      %2465 = vmatprep.subr.mxu0 0.0
      %2466 = vmatpush2.msra.mxu0 0.0
      %2467 = vmatprep.subr.mxu0 0.0
      %2468 = vmatpush2.msra.mxu0 0.0
      %2469 = vmatprep.subr.mxu0 0.0
      %2470 = vmatpush2.msra.mxu0 0.0
      %2471 = vmatprep.subr.mxu0 0.0
      %2472 = vmatpush2.msra.mxu0 0.0
      %2473 = vmatprep.subr.mxu0 0.0
      %2474 = vmatpush2.msra.mxu0 0.0
      %2475 = vmatprep.subr.mxu0 0.0
      %2476 = vmatpush2.msra.mxu0 0.0
      %2477 = vmatprep.subr.mxu0 0.0
      %2478 = vmatpush2.msra.mxu0 0.0
      %2479 = vmatprep.subr.mxu0 0.0
      %2480 = vmatpush2.msra.mxu0 0.0
      %2481 = vmatprep.subr.mxu0 0.0
      %2482 = vmatpush2.msra.mxu0 0.0
      %2483 = vmatprep.subr.mxu0 0.0
      %2484 = vmatpush2.msra.mxu0 0.0
      %2485 = vmatprep.subr.mxu0 0.0
      %2486 = vmatpush2.msra.mxu0 0.0
      %2487 = vmatprep.subr.mxu0 0.0
      %2488 = vmatpush2.msra.mxu0 0.0
      %2489 = vmatprep.subr.mxu0 0.0
      %2490 = vmatpush2.msra.mxu0 0.0
      %2491 = vmatprep.subr.mxu0 0.0
      %2492 = vmatpush2.msra.mxu0 0.0
      %2493 = vmatprep.subr.mxu0 0.0
      %2494 = vmatpush2.msra.mxu0 0.0
      %2495 = vmatprep.mubr.f32.mxu0 0.0
      %2496 = vmatmul.mubr.f32.gmra.mxu0 %v936
      %v2497 = vpop.f32.mrf.mxu0
      %v2498 = vadd.f32 0.0, %v2497
      %v2499 = vpop.f32.mrf.mxu0
      %2500 = vmatprep.mubr.f32.mxu0 0.0
      %2501 = vmatmul.mubr.f32.gmra.mxu0 %v938
      %v2502 = vpop.f32.mrf.mxu0
      %v2503 = vadd.f32 0.0, %v2502
      %v2504 = vpop.f32.mrf.mxu0
      %2505 = vmatprep.mubr.f32.mxu0 0.0
      %2506 = vmatmul.mubr.f32.gmra.mxu0 %v940
      %v2507 = vpop.f32.mrf.mxu0
      %v2508 = vadd.f32 0.0, %v2507
      %v2509 = vpop.f32.mrf.mxu0
      %2510 = vmatprep.mubr.f32.mxu0 0.0
      %2511 = vmatmul.mubr.f32.gmra.mxu0 %v942
      %v2512 = vpop.f32.mrf.mxu0
      %v2513 = vadd.f32 0.0, %v2512
      %v2514 = vpop.f32.mrf.mxu0
      %2515 = vmatprep.mubr.f32.mxu0 0.0
      %2516 = vmatmul.mubr.f32.gmra.mxu0 %v944
      %v2517 = vpop.f32.mrf.mxu0
      %v2518 = vadd.f32 0.0, %v2517
      %v2519 = vpop.f32.mrf.mxu0
      %2520 = vmatprep.mubr.f32.mxu0 0.0
      %2521 = vmatmul.mubr.f32.gmra.mxu0 %v946
      %v2522 = vpop.f32.mrf.mxu0
      %v2523 = vadd.f32 0.0, %v2522
      %v2524 = vpop.f32.mrf.mxu0
      %2525 = vmatprep.mubr.f32.mxu0 0.0
      %2526 = vmatmul.mubr.f32.gmra.mxu0 %v948
      %v2527 = vpop.f32.mrf.mxu0
      %v2528 = vadd.f32 0.0, %v2527
      %v2529 = vpop.f32.mrf.mxu0
      %2530 = vmatprep.mubr.f32.mxu0 0.0
      %2531 = vmatmul.mubr.f32.gmra.mxu0 %v950
      %v2532 = vpop.f32.mrf.mxu0
      %v2533 = vadd.f32 0.0, %v2532
      %v2534 = vpop.f32.mrf.mxu0
      %2535 = vmatprep.mubr.f32.mxu0 0.0
      %2536 = vmatmul.mubr.f32.gmra.mxu0 %v952
      %v2537 = vpop.f32.mrf.mxu0
      %v2538 = vadd.f32 0.0, %v2537
      %v2539 = vpop.f32.mrf.mxu0
      %2540 = vmatprep.mubr.f32.mxu0 0.0
      %2541 = vmatmul.mubr.f32.gmra.mxu0 %v954
      %v2542 = vpop.f32.mrf.mxu0
      %v2543 = vadd.f32 0.0, %v2542
      %v2544 = vpop.f32.mrf.mxu0
      %2545 = vmatprep.mubr.f32.mxu0 0.0
      %2546 = vmatmul.mubr.f32.gmra.mxu0 %v956
      %v2547 = vpop.f32.mrf.mxu0
      %v2548 = vadd.f32 0.0, %v2547
      %v2549 = vpop.f32.mrf.mxu0
      %2550 = vmatprep.mubr.f32.mxu0 0.0
      %2551 = vmatmul.mubr.f32.gmra.mxu0 %v958
      %v2552 = vpop.f32.mrf.mxu0
      %v2553 = vadd.f32 0.0, %v2552
      %v2554 = vpop.f32.mrf.mxu0
      %2555 = vmatprep.mubr.f32.mxu0 0.0
      %2556 = vmatmul.mubr.f32.gmra.mxu0 %v960
      %v2557 = vpop.f32.mrf.mxu0
      %v2558 = vadd.f32 0.0, %v2557
      %v2559 = vpop.f32.mrf.mxu0
      %2560 = vmatprep.mubr.f32.mxu0 0.0
      %2561 = vmatmul.mubr.f32.gmra.mxu0 %v962
      %v2562 = vpop.f32.mrf.mxu0
      %v2563 = vadd.f32 0.0, %v2562
      %v2564 = vpop.f32.mrf.mxu0
      %2565 = vmatprep.mubr.f32.mxu0 0.0
      %2566 = vmatmul.mubr.f32.gmra.mxu0 %v964
      %v2567 = vpop.f32.mrf.mxu0
      %v2568 = vadd.f32 0.0, %v2567
      %v2569 = vpop.f32.mrf.mxu0
      %2570 = vmatprep.mubr.f32.mxu0 0.0
      %2571 = vmatmul.mubr.f32.gmra.mxu0 %v966
      %v2572 = vpop.f32.mrf.mxu0
      %v2573 = vadd.f32 0.0, %v2572
      %v2574 = vpop.f32.mrf.mxu0
      %2575 = vmatprep.mubr.f32.mxu0 0.0
      %2576 = vmatmul.mubr.f32.gmra.mxu0 %v968
      %v2577 = vpop.f32.mrf.mxu0
      %v2578 = vadd.f32 0.0, %v2577
      %v2579 = vpop.f32.mrf.mxu0
      %2580 = vmatprep.mubr.f32.mxu0 0.0
      %2581 = vmatmul.mubr.f32.gmra.mxu0 %v970
      %v2582 = vpop.f32.mrf.mxu0
      %v2583 = vadd.f32 0.0, %v2582
      %v2584 = vpop.f32.mrf.mxu0
      %2585 = vmatprep.mubr.f32.mxu0 0.0
      %2586 = vmatmul.mubr.f32.gmra.mxu0 %v972
      %v2587 = vpop.f32.mrf.mxu0
      %v2588 = vadd.f32 0.0, %v2587
      %v2589 = vpop.f32.mrf.mxu0
      %2590 = vmatprep.mubr.f32.mxu0 0.0
      %2591 = vmatmul.mubr.f32.gmra.mxu0 %v974
      %v2592 = vpop.f32.mrf.mxu0
      %v2593 = vadd.f32 0.0, %v2592
      %v2594 = vpop.f32.mrf.mxu0
      %2595 = vmatprep.mubr.f32.mxu0 0.0
      %2596 = vmatmul.mubr.f32.gmra.mxu0 %v976
      %v2597 = vpop.f32.mrf.mxu0
      %v2598 = vadd.f32 0.0, %v2597
      %v2599 = vpop.f32.mrf.mxu0
      %2600 = vmatprep.mubr.f32.mxu0 0.0
      %2601 = vmatmul.mubr.f32.gmra.mxu0 %v978
      %v2602 = vpop.f32.mrf.mxu0
      %v2603 = vadd.f32 0.0, %v2602
      %v2604 = vpop.f32.mrf.mxu0
      %2605 = vmatprep.mubr.f32.mxu0 0.0
      %2606 = vmatmul.mubr.f32.gmra.mxu0 %v980
      %v2607 = vpop.f32.mrf.mxu0
      %v2608 = vadd.f32 0.0, %v2607
      %v2609 = vpop.f32.mrf.mxu0
      %2610 = vmatprep.mubr.f32.mxu0 0.0
      %2611 = vmatmul.mubr.f32.gmra.mxu0 %v982
      %v2612 = vpop.f32.mrf.mxu0
      %v2613 = vadd.f32 0.0, %v2612
      %v2614 = vpop.f32.mrf.mxu0
      %2615 = vmatprep.mubr.f32.mxu0 0.0
      %2616 = vmatmul.mubr.f32.gmra.mxu0 %v984
      %v2617 = vpop.f32.mrf.mxu0
      %v2618 = vadd.f32 0.0, %v2617
      %v2619 = vpop.f32.mrf.mxu0
      %2620 = vmatprep.mubr.f32.mxu0 0.0
      %2621 = vmatmul.mubr.f32.gmra.mxu0 %v986
      %v2622 = vpop.f32.mrf.mxu0
      %v2623 = vadd.f32 0.0, %v2622
      %v2624 = vpop.f32.mrf.mxu0
      %2625 = vmatprep.mubr.f32.mxu0 0.0
      %2626 = vmatmul.mubr.f32.gmra.mxu0 %v988
      %v2627 = vpop.f32.mrf.mxu0
      %v2628 = vadd.f32 0.0, %v2627
      %v2629 = vpop.f32.mrf.mxu0
      %2630 = vmatprep.mubr.f32.mxu0 0.0
      %2631 = vmatmul.mubr.f32.gmra.mxu0 %v990
      %v2632 = vpop.f32.mrf.mxu0
      %v2633 = vadd.f32 0.0, %v2632
      %v2634 = vpop.f32.mrf.mxu0
      %2635 = vmatprep.mubr.f32.mxu0 0.0
      %2636 = vmatmul.mubr.f32.gmra.mxu0 %v1624
      %v2637 = vpop.f32.mrf.mxu0
      %v2638 = vadd.f32 0.0, %v2637
      %v2639 = vpop.f32.mrf.mxu0
      %2640 = vmatprep.mubr.f32.mxu0 0.0
      %2641 = vmatmul.mubr.f32.gmra.mxu0 %v1627
      %v2642 = vpop.f32.mrf.mxu0
      %v2643 = vadd.f32 0.0, %v2642
      %v2644 = vpop.f32.mrf.mxu0
      %2645 = vmatprep.mubr.f32.mxu0 0.0
      %2646 = vmatmul.mubr.f32.gmra.mxu0 %v2426
      %v2647 = vpop.f32.mrf.mxu0
      %v2648 = vadd.f32 0.0, %v2647
      %v2649 = vpop.f32.mrf.mxu0
      %2650 = vmatprep.mubr.f32.mxu0 0.0
      %2651 = vmatmul.mubr.f32.gmra.mxu0 %v2429
      %v2652 = vpop.f32.mrf.mxu0
      %v2653 = vadd.f32 0.0, %v2652
      %v2654 = vpop.f32.mrf.mxu0
      %2655 = vdwg.mxu0
      %v2656 = vadd.f32 %v2391, %v2498
      %v2657 = vadd.f32 %v2392, %v2503
      %v2658 = vadd.f32 %v2393, %v2508
      %v2659 = vadd.f32 %v2394, %v2513
      %v2660 = vadd.f32 %v2395, %v2518
      %v2661 = vadd.f32 %v2396, %v2523
      %v2662 = vadd.f32 %v2397, %v2528
      %v2663 = vadd.f32 %v2398, %v2533
      %v2664 = vadd.f32 %v2399, %v2538
      %v2665 = vadd.f32 %v2400, %v2543
      %v2666 = vadd.f32 %v2401, %v2548
      %v2667 = vadd.f32 %v2402, %v2553
      %v2668 = vadd.f32 %v2403, %v2558
      %v2669 = vadd.f32 %v2404, %v2563
      %v2670 = vadd.f32 %v2405, %v2568
      %v2671 = vadd.f32 %v2406, %v2573
      %v2672 = vadd.f32 %v2407, %v2578
      %v2673 = vadd.f32 %v2408, %v2583
      %v2674 = vadd.f32 %v2409, %v2588
      %v2675 = vadd.f32 %v2410, %v2593
      %v2676 = vadd.f32 %v2411, %v2598
      %v2677 = vadd.f32 %v2412, %v2603
      %v2678 = vadd.f32 %v2413, %v2608
      %v2679 = vadd.f32 %v2414, %v2613
      %v2680 = vadd.f32 %v2415, %v2618
      %v2681 = vadd.f32 %v2416, %v2623
      %v2682 = vadd.f32 %v2417, %v2628
      %v2683 = vadd.f32 %v2418, %v2633
      %v2684 = vadd.f32 %v2419, %v2638
      %v2685 = vadd.f32 %v2420, %v2643
      %v2686 = vadd.f32 %v2421, %v2648
      %v2687 = vadd.f32 %v2422, %v2653
      %v2689 = vrot.slane %v395, 1
      %v2690 = vrot.slane %v396, 1
      %v2691 = vsel %vm555, %v2689, %v2690
      %v2692 = vrot.slane %v397, 1
      %v2693 = vsel %vm555, %v2690, %v2692
      %s2694 = scalar_lea.vmem %s3, 56
      %v2695 = vld [vmem:[%s2694] sm:$0xff]
      %v2696 = vsel %vm638, %v2691, 0
      %v2698 = vsel %vm638, %v2693, 0
      %2700 = vmatprep.subr.mxu0 0.0
      %2701 = vmatpush1.msra.mxu0 0.0
      %2702 = vmatprep.subr.mxu0 0.0
      %2703 = vmatpush1.msra.mxu0 0.0
      %2704 = vmatprep.subr.mxu0 0.0
      %2705 = vmatpush1.msra.mxu0 0.0
      %2706 = vmatprep.subr.mxu0 0.0
      %2707 = vmatpush1.msra.mxu0 0.0
      %2708 = vmatprep.subr.mxu0 0.0
      %2709 = vmatpush1.msra.mxu0 0.0
      %2710 = vmatprep.subr.mxu0 0.0
      %2711 = vmatpush1.msra.mxu0 0.0
      %2712 = vmatprep.subr.mxu0 0.0
      %2713 = vmatpush1.msra.mxu0 0.0
      %2714 = vmatprep.subr.mxu0 0.0
      %2715 = vmatpush1.msra.mxu0 0.0
      %2716 = vmatprep.subr.mxu0 0.0
      %2717 = vmatpush1.msra.mxu0 0.0
      %2718 = vmatprep.subr.mxu0 0.0
      %2719 = vmatpush1.msra.mxu0 0.0
      %2720 = vmatprep.subr.mxu0 0.0
      %2721 = vmatpush1.msra.mxu0 0.0
      %2722 = vmatprep.subr.mxu0 0.0
      %2723 = vmatpush1.msra.mxu0 0.0
      %2724 = vmatprep.subr.mxu0 0.0
      %2725 = vmatpush1.msra.mxu0 0.0
      %2726 = vmatprep.subr.mxu0 0.0
      %2727 = vmatpush1.msra.mxu0 0.0
      %2728 = vmatprep.subr.mxu0 0.0
      %2729 = vmatpush1.msra.mxu0 0.0
      %2730 = vmatprep.subr.mxu0 0.0
      %2731 = vmatpush1.msra.mxu0 %v2695
      %2732 = vmatprep.subr.mxu0 0.0
      %2733 = vmatpush2.msra.mxu0 0.0
      %2734 = vmatprep.subr.mxu0 0.0
      %2735 = vmatpush2.msra.mxu0 0.0
      %2736 = vmatprep.subr.mxu0 0.0
      %2737 = vmatpush2.msra.mxu0 0.0
      %2738 = vmatprep.subr.mxu0 0.0
      %2739 = vmatpush2.msra.mxu0 0.0
      %2740 = vmatprep.subr.mxu0 0.0
      %2741 = vmatpush2.msra.mxu0 0.0
      %2742 = vmatprep.subr.mxu0 0.0
      %2743 = vmatpush2.msra.mxu0 0.0
      %2744 = vmatprep.subr.mxu0 0.0
      %2745 = vmatpush2.msra.mxu0 0.0
      %2746 = vmatprep.subr.mxu0 0.0
      %2747 = vmatpush2.msra.mxu0 0.0
      %2748 = vmatprep.subr.mxu0 0.0
      %2749 = vmatpush2.msra.mxu0 0.0
      %2750 = vmatprep.subr.mxu0 0.0
      %2751 = vmatpush2.msra.mxu0 0.0
      %2752 = vmatprep.subr.mxu0 0.0
      %2753 = vmatpush2.msra.mxu0 0.0
      %2754 = vmatprep.subr.mxu0 0.0
      %2755 = vmatpush2.msra.mxu0 0.0
      %2756 = vmatprep.subr.mxu0 0.0
      %2757 = vmatpush2.msra.mxu0 0.0
      %2758 = vmatprep.subr.mxu0 0.0
      %2759 = vmatpush2.msra.mxu0 0.0
      %2760 = vmatprep.subr.mxu0 0.0
      %2761 = vmatpush2.msra.mxu0 0.0
      %2762 = vmatprep.subr.mxu0 0.0
      %2763 = vmatpush2.msra.mxu0 0.0
      %2764 = vmatprep.mubr.f32.mxu0 0.0
      %2765 = vmatmul.mubr.f32.gmra.mxu0 %v647
      %v2766 = vpop.f32.mrf.mxu0
      %v2767 = vadd.f32 0.0, %v2766
      %v2768 = vpop.f32.mrf.mxu0
      %2769 = vmatprep.mubr.f32.mxu0 0.0
      %2770 = vmatmul.mubr.f32.gmra.mxu0 %v649
      %v2771 = vpop.f32.mrf.mxu0
      %v2772 = vadd.f32 0.0, %v2771
      %v2773 = vpop.f32.mrf.mxu0
      %2774 = vmatprep.mubr.f32.mxu0 0.0
      %2775 = vmatmul.mubr.f32.gmra.mxu0 %v651
      %v2776 = vpop.f32.mrf.mxu0
      %v2777 = vadd.f32 0.0, %v2776
      %v2778 = vpop.f32.mrf.mxu0
      %2779 = vmatprep.mubr.f32.mxu0 0.0
      %2780 = vmatmul.mubr.f32.gmra.mxu0 %v653
      %v2781 = vpop.f32.mrf.mxu0
      %v2782 = vadd.f32 0.0, %v2781
      %v2783 = vpop.f32.mrf.mxu0
      %2784 = vmatprep.mubr.f32.mxu0 0.0
      %2785 = vmatmul.mubr.f32.gmra.mxu0 %v655
      %v2786 = vpop.f32.mrf.mxu0
      %v2787 = vadd.f32 0.0, %v2786
      %v2788 = vpop.f32.mrf.mxu0
      %2789 = vmatprep.mubr.f32.mxu0 0.0
      %2790 = vmatmul.mubr.f32.gmra.mxu0 %v657
      %v2791 = vpop.f32.mrf.mxu0
      %v2792 = vadd.f32 0.0, %v2791
      %v2793 = vpop.f32.mrf.mxu0
      %2794 = vmatprep.mubr.f32.mxu0 0.0
      %2795 = vmatmul.mubr.f32.gmra.mxu0 %v659
      %v2796 = vpop.f32.mrf.mxu0
      %v2797 = vadd.f32 0.0, %v2796
      %v2798 = vpop.f32.mrf.mxu0
      %2799 = vmatprep.mubr.f32.mxu0 0.0
      %2800 = vmatmul.mubr.f32.gmra.mxu0 %v661
      %v2801 = vpop.f32.mrf.mxu0
      %v2802 = vadd.f32 0.0, %v2801
      %v2803 = vpop.f32.mrf.mxu0
      %2804 = vmatprep.mubr.f32.mxu0 0.0
      %2805 = vmatmul.mubr.f32.gmra.mxu0 %v663
      %v2806 = vpop.f32.mrf.mxu0
      %v2807 = vadd.f32 0.0, %v2806
      %v2808 = vpop.f32.mrf.mxu0
      %2809 = vmatprep.mubr.f32.mxu0 0.0
      %2810 = vmatmul.mubr.f32.gmra.mxu0 %v665
      %v2811 = vpop.f32.mrf.mxu0
      %v2812 = vadd.f32 0.0, %v2811
      %v2813 = vpop.f32.mrf.mxu0
      %2814 = vmatprep.mubr.f32.mxu0 0.0
      %2815 = vmatmul.mubr.f32.gmra.mxu0 %v667
      %v2816 = vpop.f32.mrf.mxu0
      %v2817 = vadd.f32 0.0, %v2816
      %v2818 = vpop.f32.mrf.mxu0
      %2819 = vmatprep.mubr.f32.mxu0 0.0
      %2820 = vmatmul.mubr.f32.gmra.mxu0 %v669
      %v2821 = vpop.f32.mrf.mxu0
      %v2822 = vadd.f32 0.0, %v2821
      %v2823 = vpop.f32.mrf.mxu0
      %2824 = vmatprep.mubr.f32.mxu0 0.0
      %2825 = vmatmul.mubr.f32.gmra.mxu0 %v671
      %v2826 = vpop.f32.mrf.mxu0
      %v2827 = vadd.f32 0.0, %v2826
      %v2828 = vpop.f32.mrf.mxu0
      %2829 = vmatprep.mubr.f32.mxu0 0.0
      %2830 = vmatmul.mubr.f32.gmra.mxu0 %v673
      %v2831 = vpop.f32.mrf.mxu0
      %v2832 = vadd.f32 0.0, %v2831
      %v2833 = vpop.f32.mrf.mxu0
      %2834 = vmatprep.mubr.f32.mxu0 0.0
      %2835 = vmatmul.mubr.f32.gmra.mxu0 %v675
      %v2836 = vpop.f32.mrf.mxu0
      %v2837 = vadd.f32 0.0, %v2836
      %v2838 = vpop.f32.mrf.mxu0
      %2839 = vmatprep.mubr.f32.mxu0 0.0
      %2840 = vmatmul.mubr.f32.gmra.mxu0 %v677
      %v2841 = vpop.f32.mrf.mxu0
      %v2842 = vadd.f32 0.0, %v2841
      %v2843 = vpop.f32.mrf.mxu0
      %2844 = vmatprep.mubr.f32.mxu0 0.0
      %2845 = vmatmul.mubr.f32.gmra.mxu0 %v679
      %v2846 = vpop.f32.mrf.mxu0
      %v2847 = vadd.f32 0.0, %v2846
      %v2848 = vpop.f32.mrf.mxu0
      %2849 = vmatprep.mubr.f32.mxu0 0.0
      %2850 = vmatmul.mubr.f32.gmra.mxu0 %v681
      %v2851 = vpop.f32.mrf.mxu0
      %v2852 = vadd.f32 0.0, %v2851
      %v2853 = vpop.f32.mrf.mxu0
      %2854 = vmatprep.mubr.f32.mxu0 0.0
      %2855 = vmatmul.mubr.f32.gmra.mxu0 %v683
      %v2856 = vpop.f32.mrf.mxu0
      %v2857 = vadd.f32 0.0, %v2856
      %v2858 = vpop.f32.mrf.mxu0
      %2859 = vmatprep.mubr.f32.mxu0 0.0
      %2860 = vmatmul.mubr.f32.gmra.mxu0 %v685
      %v2861 = vpop.f32.mrf.mxu0
      %v2862 = vadd.f32 0.0, %v2861
      %v2863 = vpop.f32.mrf.mxu0
      %2864 = vmatprep.mubr.f32.mxu0 0.0
      %2865 = vmatmul.mubr.f32.gmra.mxu0 %v687
      %v2866 = vpop.f32.mrf.mxu0
      %v2867 = vadd.f32 0.0, %v2866
      %v2868 = vpop.f32.mrf.mxu0
      %2869 = vmatprep.mubr.f32.mxu0 0.0
      %2870 = vmatmul.mubr.f32.gmra.mxu0 %v689
      %v2871 = vpop.f32.mrf.mxu0
      %v2872 = vadd.f32 0.0, %v2871
      %v2873 = vpop.f32.mrf.mxu0
      %2874 = vmatprep.mubr.f32.mxu0 0.0
      %2875 = vmatmul.mubr.f32.gmra.mxu0 %v691
      %v2876 = vpop.f32.mrf.mxu0
      %v2877 = vadd.f32 0.0, %v2876
      %v2878 = vpop.f32.mrf.mxu0
      %2879 = vmatprep.mubr.f32.mxu0 0.0
      %2880 = vmatmul.mubr.f32.gmra.mxu0 %v693
      %v2881 = vpop.f32.mrf.mxu0
      %v2882 = vadd.f32 0.0, %v2881
      %v2883 = vpop.f32.mrf.mxu0
      %2884 = vmatprep.mubr.f32.mxu0 0.0
      %2885 = vmatmul.mubr.f32.gmra.mxu0 %v695
      %v2886 = vpop.f32.mrf.mxu0
      %v2887 = vadd.f32 0.0, %v2886
      %v2888 = vpop.f32.mrf.mxu0
      %2889 = vmatprep.mubr.f32.mxu0 0.0
      %2890 = vmatmul.mubr.f32.gmra.mxu0 %v697
      %v2891 = vpop.f32.mrf.mxu0
      %v2892 = vadd.f32 0.0, %v2891
      %v2893 = vpop.f32.mrf.mxu0
      %2894 = vmatprep.mubr.f32.mxu0 0.0
      %2895 = vmatmul.mubr.f32.gmra.mxu0 %v699
      %v2896 = vpop.f32.mrf.mxu0
      %v2897 = vadd.f32 0.0, %v2896
      %v2898 = vpop.f32.mrf.mxu0
      %2899 = vmatprep.mubr.f32.mxu0 0.0
      %2900 = vmatmul.mubr.f32.gmra.mxu0 %v701
      %v2901 = vpop.f32.mrf.mxu0
      %v2902 = vadd.f32 0.0, %v2901
      %v2903 = vpop.f32.mrf.mxu0
      %2904 = vmatprep.mubr.f32.mxu0 0.0
      %2905 = vmatmul.mubr.f32.gmra.mxu0 %v1894
      %v2906 = vpop.f32.mrf.mxu0
      %v2907 = vadd.f32 0.0, %v2906
      %v2908 = vpop.f32.mrf.mxu0
      %2909 = vmatprep.mubr.f32.mxu0 0.0
      %2910 = vmatmul.mubr.f32.gmra.mxu0 %v1896
      %v2911 = vpop.f32.mrf.mxu0
      %v2912 = vadd.f32 0.0, %v2911
      %v2913 = vpop.f32.mrf.mxu0
      %2914 = vmatprep.mubr.f32.mxu0 0.0
      %2915 = vmatmul.mubr.f32.gmra.mxu0 %v2696
      %v2916 = vpop.f32.mrf.mxu0
      %v2917 = vadd.f32 0.0, %v2916
      %v2918 = vpop.f32.mrf.mxu0
      %2919 = vmatprep.mubr.f32.mxu0 0.0
      %2920 = vmatmul.mubr.f32.gmra.mxu0 %v2698
      %v2921 = vpop.f32.mrf.mxu0
      %v2922 = vadd.f32 0.0, %v2921
      %v2923 = vpop.f32.mrf.mxu0
      %2924 = vdwg.mxu0
      %v2925 = vadd.f32 %v2656, %v2767
      %v2926 = vadd.f32 %v2657, %v2772
      %v2927 = vadd.f32 %v2658, %v2777
      %v2928 = vadd.f32 %v2659, %v2782
      %v2929 = vadd.f32 %v2660, %v2787
      %v2930 = vadd.f32 %v2661, %v2792
      %v2931 = vadd.f32 %v2662, %v2797
      %v2932 = vadd.f32 %v2663, %v2802
      %v2933 = vadd.f32 %v2664, %v2807
      %v2934 = vadd.f32 %v2665, %v2812
      %v2935 = vadd.f32 %v2666, %v2817
      %v2936 = vadd.f32 %v2667, %v2822
      %v2937 = vadd.f32 %v2668, %v2827
      %v2938 = vadd.f32 %v2669, %v2832
      %v2939 = vadd.f32 %v2670, %v2837
      %v2940 = vadd.f32 %v2671, %v2842
      %v2941 = vadd.f32 %v2672, %v2847
      %v2942 = vadd.f32 %v2673, %v2852
      %v2943 = vadd.f32 %v2674, %v2857
      %v2944 = vadd.f32 %v2675, %v2862
      %v2945 = vadd.f32 %v2676, %v2867
      %v2946 = vadd.f32 %v2677, %v2872
      %v2947 = vadd.f32 %v2678, %v2877
      %v2948 = vadd.f32 %v2679, %v2882
      %v2949 = vadd.f32 %v2680, %v2887
      %v2950 = vadd.f32 %v2681, %v2892
      %v2951 = vadd.f32 %v2682, %v2897
      %v2952 = vadd.f32 %v2683, %v2902
      %v2953 = vadd.f32 %v2684, %v2907
      %v2954 = vadd.f32 %v2685, %v2912
      %v2955 = vadd.f32 %v2686, %v2917
      %v2956 = vadd.f32 %v2687, %v2922
      %v2957 = vrot.slane %v395, 2
      %v2958 = vrot.slane %v396, 2
      %v2959 = vsel %vm1217, %v2957, %v2958
      %v2960 = vrot.slane %v397, 2
      %v2961 = vsel %vm1217, %v2958, %v2960
      %s2962 = scalar_lea.vmem %s3, 64
      %v2963 = vld [vmem:[%s2962] sm:$0xff]
      %v2964 = vsel %vm638, %v2959, 0
      %v2966 = vsel %vm638, %v2961, 0
      %2968 = vmatprep.subr.mxu0 0.0
      %2969 = vmatpush1.msra.mxu0 0.0
      %2970 = vmatprep.subr.mxu0 0.0
      %2971 = vmatpush1.msra.mxu0 0.0
      %2972 = vmatprep.subr.mxu0 0.0
      %2973 = vmatpush1.msra.mxu0 0.0
      %2974 = vmatprep.subr.mxu0 0.0
      %2975 = vmatpush1.msra.mxu0 0.0
      %2976 = vmatprep.subr.mxu0 0.0
      %2977 = vmatpush1.msra.mxu0 0.0
      %2978 = vmatprep.subr.mxu0 0.0
      %2979 = vmatpush1.msra.mxu0 0.0
      %2980 = vmatprep.subr.mxu0 0.0
      %2981 = vmatpush1.msra.mxu0 0.0
      %2982 = vmatprep.subr.mxu0 0.0
      %2983 = vmatpush1.msra.mxu0 0.0
      %2984 = vmatprep.subr.mxu0 0.0
      %2985 = vmatpush1.msra.mxu0 0.0
      %2986 = vmatprep.subr.mxu0 0.0
      %2987 = vmatpush1.msra.mxu0 0.0
      %2988 = vmatprep.subr.mxu0 0.0
      %2989 = vmatpush1.msra.mxu0 0.0
      %2990 = vmatprep.subr.mxu0 0.0
      %2991 = vmatpush1.msra.mxu0 0.0
      %2992 = vmatprep.subr.mxu0 0.0
      %2993 = vmatpush1.msra.mxu0 0.0
      %2994 = vmatprep.subr.mxu0 0.0
      %2995 = vmatpush1.msra.mxu0 0.0
      %2996 = vmatprep.subr.mxu0 0.0
      %2997 = vmatpush1.msra.mxu0 0.0
      %2998 = vmatprep.subr.mxu0 0.0
      %2999 = vmatpush1.msra.mxu0 %v2963
      %3000 = vmatprep.subr.mxu0 0.0
      %3001 = vmatpush2.msra.mxu0 0.0
      %3002 = vmatprep.subr.mxu0 0.0
      %3003 = vmatpush2.msra.mxu0 0.0
      %3004 = vmatprep.subr.mxu0 0.0
      %3005 = vmatpush2.msra.mxu0 0.0
      %3006 = vmatprep.subr.mxu0 0.0
      %3007 = vmatpush2.msra.mxu0 0.0
      %3008 = vmatprep.subr.mxu0 0.0
      %3009 = vmatpush2.msra.mxu0 0.0
      %3010 = vmatprep.subr.mxu0 0.0
      %3011 = vmatpush2.msra.mxu0 0.0
      %3012 = vmatprep.subr.mxu0 0.0
      %3013 = vmatpush2.msra.mxu0 0.0
      %3014 = vmatprep.subr.mxu0 0.0
      %3015 = vmatpush2.msra.mxu0 0.0
      %3016 = vmatprep.subr.mxu0 0.0
      %3017 = vmatpush2.msra.mxu0 0.0
      %3018 = vmatprep.subr.mxu0 0.0
      %3019 = vmatpush2.msra.mxu0 0.0
      %3020 = vmatprep.subr.mxu0 0.0
      %3021 = vmatpush2.msra.mxu0 0.0
      %3022 = vmatprep.subr.mxu0 0.0
      %3023 = vmatpush2.msra.mxu0 0.0
      %3024 = vmatprep.subr.mxu0 0.0
      %3025 = vmatpush2.msra.mxu0 0.0
      %3026 = vmatprep.subr.mxu0 0.0
      %3027 = vmatpush2.msra.mxu0 0.0
      %3028 = vmatprep.subr.mxu0 0.0
      %3029 = vmatpush2.msra.mxu0 0.0
      %3030 = vmatprep.subr.mxu0 0.0
      %3031 = vmatpush2.msra.mxu0 0.0
      %3032 = vmatprep.mubr.f32.mxu0 0.0
      %3033 = vmatmul.mubr.f32.gmra.mxu0 %v1308
      %v3034 = vpop.f32.mrf.mxu0
      %v3035 = vadd.f32 0.0, %v3034
      %v3036 = vpop.f32.mrf.mxu0
      %3037 = vmatprep.mubr.f32.mxu0 0.0
      %3038 = vmatmul.mubr.f32.gmra.mxu0 %v1310
      %v3039 = vpop.f32.mrf.mxu0
      %v3040 = vadd.f32 0.0, %v3039
      %v3041 = vpop.f32.mrf.mxu0
      %3042 = vmatprep.mubr.f32.mxu0 0.0
      %3043 = vmatmul.mubr.f32.gmra.mxu0 %v1312
      %v3044 = vpop.f32.mrf.mxu0
      %v3045 = vadd.f32 0.0, %v3044
      %v3046 = vpop.f32.mrf.mxu0
      %3047 = vmatprep.mubr.f32.mxu0 0.0
      %3048 = vmatmul.mubr.f32.gmra.mxu0 %v1314
      %v3049 = vpop.f32.mrf.mxu0
      %v3050 = vadd.f32 0.0, %v3049
      %v3051 = vpop.f32.mrf.mxu0
      %3052 = vmatprep.mubr.f32.mxu0 0.0
      %3053 = vmatmul.mubr.f32.gmra.mxu0 %v1316
      %v3054 = vpop.f32.mrf.mxu0
      %v3055 = vadd.f32 0.0, %v3054
      %v3056 = vpop.f32.mrf.mxu0
      %3057 = vmatprep.mubr.f32.mxu0 0.0
      %3058 = vmatmul.mubr.f32.gmra.mxu0 %v1318
      %v3059 = vpop.f32.mrf.mxu0
      %v3060 = vadd.f32 0.0, %v3059
      %v3061 = vpop.f32.mrf.mxu0
      %3062 = vmatprep.mubr.f32.mxu0 0.0
      %3063 = vmatmul.mubr.f32.gmra.mxu0 %v1320
      %v3064 = vpop.f32.mrf.mxu0
      %v3065 = vadd.f32 0.0, %v3064
      %v3066 = vpop.f32.mrf.mxu0
      %3067 = vmatprep.mubr.f32.mxu0 0.0
      %3068 = vmatmul.mubr.f32.gmra.mxu0 %v1322
      %v3069 = vpop.f32.mrf.mxu0
      %v3070 = vadd.f32 0.0, %v3069
      %v3071 = vpop.f32.mrf.mxu0
      %3072 = vmatprep.mubr.f32.mxu0 0.0
      %3073 = vmatmul.mubr.f32.gmra.mxu0 %v1324
      %v3074 = vpop.f32.mrf.mxu0
      %v3075 = vadd.f32 0.0, %v3074
      %v3076 = vpop.f32.mrf.mxu0
      %3077 = vmatprep.mubr.f32.mxu0 0.0
      %3078 = vmatmul.mubr.f32.gmra.mxu0 %v1326
      %v3079 = vpop.f32.mrf.mxu0
      %v3080 = vadd.f32 0.0, %v3079
      %v3081 = vpop.f32.mrf.mxu0
      %3082 = vmatprep.mubr.f32.mxu0 0.0
      %3083 = vmatmul.mubr.f32.gmra.mxu0 %v1328
      %v3084 = vpop.f32.mrf.mxu0
      %v3085 = vadd.f32 0.0, %v3084
      %v3086 = vpop.f32.mrf.mxu0
      %3087 = vmatprep.mubr.f32.mxu0 0.0
      %3088 = vmatmul.mubr.f32.gmra.mxu0 %v1330
      %v3089 = vpop.f32.mrf.mxu0
      %v3090 = vadd.f32 0.0, %v3089
      %v3091 = vpop.f32.mrf.mxu0
      %3092 = vmatprep.mubr.f32.mxu0 0.0
      %3093 = vmatmul.mubr.f32.gmra.mxu0 %v1332
      %v3094 = vpop.f32.mrf.mxu0
      %v3095 = vadd.f32 0.0, %v3094
      %v3096 = vpop.f32.mrf.mxu0
      %3097 = vmatprep.mubr.f32.mxu0 0.0
      %3098 = vmatmul.mubr.f32.gmra.mxu0 %v1334
      %v3099 = vpop.f32.mrf.mxu0
      %v3100 = vadd.f32 0.0, %v3099
      %v3101 = vpop.f32.mrf.mxu0
      %3102 = vmatprep.mubr.f32.mxu0 0.0
      %3103 = vmatmul.mubr.f32.gmra.mxu0 %v1336
      %v3104 = vpop.f32.mrf.mxu0
      %v3105 = vadd.f32 0.0, %v3104
      %v3106 = vpop.f32.mrf.mxu0
      %3107 = vmatprep.mubr.f32.mxu0 0.0
      %3108 = vmatmul.mubr.f32.gmra.mxu0 %v1338
      %v3109 = vpop.f32.mrf.mxu0
      %v3110 = vadd.f32 0.0, %v3109
      %v3111 = vpop.f32.mrf.mxu0
      %3112 = vmatprep.mubr.f32.mxu0 0.0
      %3113 = vmatmul.mubr.f32.gmra.mxu0 %v1340
      %v3114 = vpop.f32.mrf.mxu0
      %v3115 = vadd.f32 0.0, %v3114
      %v3116 = vpop.f32.mrf.mxu0
      %3117 = vmatprep.mubr.f32.mxu0 0.0
      %3118 = vmatmul.mubr.f32.gmra.mxu0 %v1342
      %v3119 = vpop.f32.mrf.mxu0
      %v3120 = vadd.f32 0.0, %v3119
      %v3121 = vpop.f32.mrf.mxu0
      %3122 = vmatprep.mubr.f32.mxu0 0.0
      %3123 = vmatmul.mubr.f32.gmra.mxu0 %v1344
      %v3124 = vpop.f32.mrf.mxu0
      %v3125 = vadd.f32 0.0, %v3124
      %v3126 = vpop.f32.mrf.mxu0
      %3127 = vmatprep.mubr.f32.mxu0 0.0
      %3128 = vmatmul.mubr.f32.gmra.mxu0 %v1346
      %v3129 = vpop.f32.mrf.mxu0
      %v3130 = vadd.f32 0.0, %v3129
      %v3131 = vpop.f32.mrf.mxu0
      %3132 = vmatprep.mubr.f32.mxu0 0.0
      %3133 = vmatmul.mubr.f32.gmra.mxu0 %v1348
      %v3134 = vpop.f32.mrf.mxu0
      %v3135 = vadd.f32 0.0, %v3134
      %v3136 = vpop.f32.mrf.mxu0
      %3137 = vmatprep.mubr.f32.mxu0 0.0
      %3138 = vmatmul.mubr.f32.gmra.mxu0 %v1350
      %v3139 = vpop.f32.mrf.mxu0
      %v3140 = vadd.f32 0.0, %v3139
      %v3141 = vpop.f32.mrf.mxu0
      %3142 = vmatprep.mubr.f32.mxu0 0.0
      %3143 = vmatmul.mubr.f32.gmra.mxu0 %v1352
      %v3144 = vpop.f32.mrf.mxu0
      %v3145 = vadd.f32 0.0, %v3144
      %v3146 = vpop.f32.mrf.mxu0
      %3147 = vmatprep.mubr.f32.mxu0 0.0
      %3148 = vmatmul.mubr.f32.gmra.mxu0 %v1354
      %v3149 = vpop.f32.mrf.mxu0
      %v3150 = vadd.f32 0.0, %v3149
      %v3151 = vpop.f32.mrf.mxu0
      %3152 = vmatprep.mubr.f32.mxu0 0.0
      %3153 = vmatmul.mubr.f32.gmra.mxu0 %v1356
      %v3154 = vpop.f32.mrf.mxu0
      %v3155 = vadd.f32 0.0, %v3154
      %v3156 = vpop.f32.mrf.mxu0
      %3157 = vmatprep.mubr.f32.mxu0 0.0
      %3158 = vmatmul.mubr.f32.gmra.mxu0 %v1358
      %v3159 = vpop.f32.mrf.mxu0
      %v3160 = vadd.f32 0.0, %v3159
      %v3161 = vpop.f32.mrf.mxu0
      %3162 = vmatprep.mubr.f32.mxu0 0.0
      %3163 = vmatmul.mubr.f32.gmra.mxu0 %v1360
      %v3164 = vpop.f32.mrf.mxu0
      %v3165 = vadd.f32 0.0, %v3164
      %v3166 = vpop.f32.mrf.mxu0
      %3167 = vmatprep.mubr.f32.mxu0 0.0
      %3168 = vmatmul.mubr.f32.gmra.mxu0 %v1362
      %v3169 = vpop.f32.mrf.mxu0
      %v3170 = vadd.f32 0.0, %v3169
      %v3171 = vpop.f32.mrf.mxu0
      %3172 = vmatprep.mubr.f32.mxu0 0.0
      %3173 = vmatmul.mubr.f32.gmra.mxu0 %v2162
      %v3174 = vpop.f32.mrf.mxu0
      %v3175 = vadd.f32 0.0, %v3174
      %v3176 = vpop.f32.mrf.mxu0
      %3177 = vmatprep.mubr.f32.mxu0 0.0
      %3178 = vmatmul.mubr.f32.gmra.mxu0 %v2164
      %v3179 = vpop.f32.mrf.mxu0
      %v3180 = vadd.f32 0.0, %v3179
      %v3181 = vpop.f32.mrf.mxu0
      %3182 = vmatprep.mubr.f32.mxu0 0.0
      %3183 = vmatmul.mubr.f32.gmra.mxu0 %v2964
      %v3184 = vpop.f32.mrf.mxu0
      %v3185 = vadd.f32 0.0, %v3184
      %v3186 = vpop.f32.mrf.mxu0
      %3187 = vmatprep.mubr.f32.mxu0 0.0
      %3188 = vmatmul.mubr.f32.gmra.mxu0 %v2966
      %v3189 = vpop.f32.mrf.mxu0
      %v3190 = vadd.f32 0.0, %v3189
      %v3191 = vpop.f32.mrf.mxu0
      %3192 = vdwg.mxu0
      %v3193 = vadd.f32 %v2925, %v3035
      %v3194 = vadd.f32 %v2926, %v3040
      %v3195 = vadd.f32 %v2927, %v3045
      %v3196 = vadd.f32 %v2928, %v3050
      %v3197 = vadd.f32 %v2929, %v3055
      %v3198 = vadd.f32 %v2930, %v3060
      %v3199 = vadd.f32 %v2931, %v3065
      %v3200 = vadd.f32 %v2932, %v3070
      %v3201 = vadd.f32 %v2933, %v3075
      %v3202 = vadd.f32 %v2934, %v3080
      %v3203 = vadd.f32 %v2935, %v3085
      %v3204 = vadd.f32 %v2936, %v3090
      %v3205 = vadd.f32 %v2937, %v3095
      %v3206 = vadd.f32 %v2938, %v3100
      %v3207 = vadd.f32 %v2939, %v3105
      %v3208 = vadd.f32 %v2940, %v3110
      %v3209 = vadd.f32 %v2941, %v3115
      %v3210 = vadd.f32 %v2942, %v3120
      %v3211 = vadd.f32 %v2943, %v3125
      %v3212 = vadd.f32 %v2944, %v3130
      %v3213 = vadd.f32 %v2945, %v3135
      %v3214 = vadd.f32 %v2946, %v3140
      %v3215 = vadd.f32 %v2947, %v3145
      %v3216 = vadd.f32 %v2948, %v3150
      %v3217 = vadd.f32 %v2949, %v3155
      %v3218 = vadd.f32 %v2950, %v3160
      %v3219 = vadd.f32 %v2951, %v3165
      %v3220 = vadd.f32 %v2952, %v3170
      %v3221 = vadd.f32 %v2953, %v3175
      %v3222 = vadd.f32 %v2954, %v3180
      %v3223 = vadd.f32 %v2955, %v3185
      %v3224 = vadd.f32 %v2956, %v3190
      %s3225 = scalar_lea.vmem %s3, 72
      %v3226 = vld [vmem:[%s3225] sm:$0xff]
      %v3228 = vsel %vm638, %v398, 0
      %v3231 = vsel %vm638, %v399, 0
      %v3234 = vsel %vm638, %v401, 0
      %v3237 = vsel %vm638, %v402, 0
      %v3240 = vsel %vm638, %v404, 0
      %v3243 = vsel %vm638, %v405, 0
      %v3246 = vsel %vm638, %v407, 0
      %v3249 = vsel %vm638, %v408, 0
      %v3252 = vsel %vm638, %v410, 0
      %v3255 = vsel %vm638, %v411, 0
      %v3258 = vsel %vm638, %v413, 0
      %v3261 = vsel %vm638, %v414, 0
      %v3264 = vsel %vm638, %v416, 0
      %v3267 = vsel %vm638, %v417, 0
      %v3270 = vsel %vm638, %v419, 0
      %v3273 = vsel %vm638, %v420, 0
      %v3276 = vsel %vm638, %v422, 0
      %v3279 = vsel %vm638, %v423, 0
      %v3282 = vsel %vm638, %v425, 0
      %v3285 = vsel %vm638, %v426, 0
      %v3288 = vsel %vm638, %v428, 0
      %v3291 = vsel %vm638, %v429, 0
      %v3294 = vsel %vm638, %v431, 0
      %v3297 = vsel %vm638, %v432, 0
      %v3300 = vsel %vm638, %v434, 0
      %v3303 = vsel %vm638, %v435, 0
      %v3306 = vsel %vm638, %v437, 0
      %v3309 = vsel %vm638, %v438, 0
      %v3312 = vsel %vm638, %v440, 0
      %v3315 = vsel %vm638, %v441, 0
      %v3318 = vsel %vm638, %v443, 0
      %v3321 = vsel %vm638, %v444, 0
      %3323 = vmatprep.subr.mxu0 0.0
      %3324 = vmatpush1.msra.mxu0 0.0
      %3325 = vmatprep.subr.mxu0 0.0
      %3326 = vmatpush1.msra.mxu0 0.0
      %3327 = vmatprep.subr.mxu0 0.0
      %3328 = vmatpush1.msra.mxu0 0.0
      %3329 = vmatprep.subr.mxu0 0.0
      %3330 = vmatpush1.msra.mxu0 0.0
      %3331 = vmatprep.subr.mxu0 0.0
      %3332 = vmatpush1.msra.mxu0 0.0
      %3333 = vmatprep.subr.mxu0 0.0
      %3334 = vmatpush1.msra.mxu0 0.0
      %3335 = vmatprep.subr.mxu0 0.0
      %3336 = vmatpush1.msra.mxu0 0.0
      %3337 = vmatprep.subr.mxu0 0.0
      %3338 = vmatpush1.msra.mxu0 0.0
      %3339 = vmatprep.subr.mxu0 0.0
      %3340 = vmatpush1.msra.mxu0 0.0
      %3341 = vmatprep.subr.mxu0 0.0
      %3342 = vmatpush1.msra.mxu0 0.0
      %3343 = vmatprep.subr.mxu0 0.0
      %3344 = vmatpush1.msra.mxu0 0.0
      %3345 = vmatprep.subr.mxu0 0.0
      %3346 = vmatpush1.msra.mxu0 0.0
      %3347 = vmatprep.subr.mxu0 0.0
      %3348 = vmatpush1.msra.mxu0 0.0
      %3349 = vmatprep.subr.mxu0 0.0
      %3350 = vmatpush1.msra.mxu0 0.0
      %3351 = vmatprep.subr.mxu0 0.0
      %3352 = vmatpush1.msra.mxu0 0.0
      %3353 = vmatprep.subr.mxu0 0.0
      %3354 = vmatpush1.msra.mxu0 %v3226
      %3355 = vmatprep.subr.mxu0 0.0
      %3356 = vmatpush2.msra.mxu0 0.0
      %3357 = vmatprep.subr.mxu0 0.0
      %3358 = vmatpush2.msra.mxu0 0.0
      %3359 = vmatprep.subr.mxu0 0.0
      %3360 = vmatpush2.msra.mxu0 0.0
      %3361 = vmatprep.subr.mxu0 0.0
      %3362 = vmatpush2.msra.mxu0 0.0
      %3363 = vmatprep.subr.mxu0 0.0
      %3364 = vmatpush2.msra.mxu0 0.0
      %3365 = vmatprep.subr.mxu0 0.0
      %3366 = vmatpush2.msra.mxu0 0.0
      %3367 = vmatprep.subr.mxu0 0.0
      %3368 = vmatpush2.msra.mxu0 0.0
      %3369 = vmatprep.subr.mxu0 0.0
      %3370 = vmatpush2.msra.mxu0 0.0
      %3371 = vmatprep.subr.mxu0 0.0
      %3372 = vmatpush2.msra.mxu0 0.0
      %3373 = vmatprep.subr.mxu0 0.0
      %3374 = vmatpush2.msra.mxu0 0.0
      %3375 = vmatprep.subr.mxu0 0.0
      %3376 = vmatpush2.msra.mxu0 0.0
      %3377 = vmatprep.subr.mxu0 0.0
      %3378 = vmatpush2.msra.mxu0 0.0
      %3379 = vmatprep.subr.mxu0 0.0
      %3380 = vmatpush2.msra.mxu0 0.0
      %3381 = vmatprep.subr.mxu0 0.0
      %3382 = vmatpush2.msra.mxu0 0.0
      %3383 = vmatprep.subr.mxu0 0.0
      %3384 = vmatpush2.msra.mxu0 0.0
      %3385 = vmatprep.subr.mxu0 0.0
      %3386 = vmatpush2.msra.mxu0 0.0
      %3387 = vmatprep.mubr.f32.mxu0 0.0
      %3388 = vmatmul.mubr.f32.gmra.mxu0 %v3228
      %v3389 = vpop.f32.mrf.mxu0
      %v3390 = vadd.f32 0.0, %v3389
      %v3391 = vpop.f32.mrf.mxu0
      %3392 = vmatprep.mubr.f32.mxu0 0.0
      %3393 = vmatmul.mubr.f32.gmra.mxu0 %v3231
      %v3394 = vpop.f32.mrf.mxu0
      %v3395 = vadd.f32 0.0, %v3394
      %v3396 = vpop.f32.mrf.mxu0
      %3397 = vmatprep.mubr.f32.mxu0 0.0
      %3398 = vmatmul.mubr.f32.gmra.mxu0 %v3234
      %v3399 = vpop.f32.mrf.mxu0
      %v3400 = vadd.f32 0.0, %v3399
      %v3401 = vpop.f32.mrf.mxu0
      %3402 = vmatprep.mubr.f32.mxu0 0.0
      %3403 = vmatmul.mubr.f32.gmra.mxu0 %v3237
      %v3404 = vpop.f32.mrf.mxu0
      %v3405 = vadd.f32 0.0, %v3404
      %v3406 = vpop.f32.mrf.mxu0
      %3407 = vmatprep.mubr.f32.mxu0 0.0
      %3408 = vmatmul.mubr.f32.gmra.mxu0 %v3240
      %v3409 = vpop.f32.mrf.mxu0
      %v3410 = vadd.f32 0.0, %v3409
      %v3411 = vpop.f32.mrf.mxu0
      %3412 = vmatprep.mubr.f32.mxu0 0.0
      %3413 = vmatmul.mubr.f32.gmra.mxu0 %v3243
      %v3414 = vpop.f32.mrf.mxu0
      %v3415 = vadd.f32 0.0, %v3414
      %v3416 = vpop.f32.mrf.mxu0
      %3417 = vmatprep.mubr.f32.mxu0 0.0
      %3418 = vmatmul.mubr.f32.gmra.mxu0 %v3246
      %v3419 = vpop.f32.mrf.mxu0
      %v3420 = vadd.f32 0.0, %v3419
      %v3421 = vpop.f32.mrf.mxu0
      %3422 = vmatprep.mubr.f32.mxu0 0.0
      %3423 = vmatmul.mubr.f32.gmra.mxu0 %v3249
      %v3424 = vpop.f32.mrf.mxu0
      %v3425 = vadd.f32 0.0, %v3424
      %v3426 = vpop.f32.mrf.mxu0
      %3427 = vmatprep.mubr.f32.mxu0 0.0
      %3428 = vmatmul.mubr.f32.gmra.mxu0 %v3252
      %v3429 = vpop.f32.mrf.mxu0
      %v3430 = vadd.f32 0.0, %v3429
      %v3431 = vpop.f32.mrf.mxu0
      %3432 = vmatprep.mubr.f32.mxu0 0.0
      %3433 = vmatmul.mubr.f32.gmra.mxu0 %v3255
      %v3434 = vpop.f32.mrf.mxu0
      %v3435 = vadd.f32 0.0, %v3434
      %v3436 = vpop.f32.mrf.mxu0
      %3437 = vmatprep.mubr.f32.mxu0 0.0
      %3438 = vmatmul.mubr.f32.gmra.mxu0 %v3258
      %v3439 = vpop.f32.mrf.mxu0
      %v3440 = vadd.f32 0.0, %v3439
      %v3441 = vpop.f32.mrf.mxu0
      %3442 = vmatprep.mubr.f32.mxu0 0.0
      %3443 = vmatmul.mubr.f32.gmra.mxu0 %v3261
      %v3444 = vpop.f32.mrf.mxu0
      %v3445 = vadd.f32 0.0, %v3444
      %v3446 = vpop.f32.mrf.mxu0
      %3447 = vmatprep.mubr.f32.mxu0 0.0
      %3448 = vmatmul.mubr.f32.gmra.mxu0 %v3264
      %v3449 = vpop.f32.mrf.mxu0
      %v3450 = vadd.f32 0.0, %v3449
      %v3451 = vpop.f32.mrf.mxu0
      %3452 = vmatprep.mubr.f32.mxu0 0.0
      %3453 = vmatmul.mubr.f32.gmra.mxu0 %v3267
      %v3454 = vpop.f32.mrf.mxu0
      %v3455 = vadd.f32 0.0, %v3454
      %v3456 = vpop.f32.mrf.mxu0
      %3457 = vmatprep.mubr.f32.mxu0 0.0
      %3458 = vmatmul.mubr.f32.gmra.mxu0 %v3270
      %v3459 = vpop.f32.mrf.mxu0
      %v3460 = vadd.f32 0.0, %v3459
      %v3461 = vpop.f32.mrf.mxu0
      %3462 = vmatprep.mubr.f32.mxu0 0.0
      %3463 = vmatmul.mubr.f32.gmra.mxu0 %v3273
      %v3464 = vpop.f32.mrf.mxu0
      %v3465 = vadd.f32 0.0, %v3464
      %v3466 = vpop.f32.mrf.mxu0
      %3467 = vmatprep.mubr.f32.mxu0 0.0
      %3468 = vmatmul.mubr.f32.gmra.mxu0 %v3276
      %v3469 = vpop.f32.mrf.mxu0
      %v3470 = vadd.f32 0.0, %v3469
      %v3471 = vpop.f32.mrf.mxu0
      %3472 = vmatprep.mubr.f32.mxu0 0.0
      %3473 = vmatmul.mubr.f32.gmra.mxu0 %v3279
      %v3474 = vpop.f32.mrf.mxu0
      %v3475 = vadd.f32 0.0, %v3474
      %v3476 = vpop.f32.mrf.mxu0
      %3477 = vmatprep.mubr.f32.mxu0 0.0
      %3478 = vmatmul.mubr.f32.gmra.mxu0 %v3282
      %v3479 = vpop.f32.mrf.mxu0
      %v3480 = vadd.f32 0.0, %v3479
      %v3481 = vpop.f32.mrf.mxu0
      %3482 = vmatprep.mubr.f32.mxu0 0.0
      %3483 = vmatmul.mubr.f32.gmra.mxu0 %v3285
      %v3484 = vpop.f32.mrf.mxu0
      %v3485 = vadd.f32 0.0, %v3484
      %v3486 = vpop.f32.mrf.mxu0
      %3487 = vmatprep.mubr.f32.mxu0 0.0
      %3488 = vmatmul.mubr.f32.gmra.mxu0 %v3288
      %v3489 = vpop.f32.mrf.mxu0
      %v3490 = vadd.f32 0.0, %v3489
      %v3491 = vpop.f32.mrf.mxu0
      %3492 = vmatprep.mubr.f32.mxu0 0.0
      %3493 = vmatmul.mubr.f32.gmra.mxu0 %v3291
      %v3494 = vpop.f32.mrf.mxu0
      %v3495 = vadd.f32 0.0, %v3494
      %v3496 = vpop.f32.mrf.mxu0
      %3497 = vmatprep.mubr.f32.mxu0 0.0
      %3498 = vmatmul.mubr.f32.gmra.mxu0 %v3294
      %v3499 = vpop.f32.mrf.mxu0
      %v3500 = vadd.f32 0.0, %v3499
      %v3501 = vpop.f32.mrf.mxu0
      %3502 = vmatprep.mubr.f32.mxu0 0.0
      %3503 = vmatmul.mubr.f32.gmra.mxu0 %v3297
      %v3504 = vpop.f32.mrf.mxu0
      %v3505 = vadd.f32 0.0, %v3504
      %v3506 = vpop.f32.mrf.mxu0
      %3507 = vmatprep.mubr.f32.mxu0 0.0
      %3508 = vmatmul.mubr.f32.gmra.mxu0 %v3300
      %v3509 = vpop.f32.mrf.mxu0
      %v3510 = vadd.f32 0.0, %v3509
      %v3511 = vpop.f32.mrf.mxu0
      %3512 = vmatprep.mubr.f32.mxu0 0.0
      %3513 = vmatmul.mubr.f32.gmra.mxu0 %v3303
      %v3514 = vpop.f32.mrf.mxu0
      %v3515 = vadd.f32 0.0, %v3514
      %v3516 = vpop.f32.mrf.mxu0
      %3517 = vmatprep.mubr.f32.mxu0 0.0
      %3518 = vmatmul.mubr.f32.gmra.mxu0 %v3306
      %v3519 = vpop.f32.mrf.mxu0
      %v3520 = vadd.f32 0.0, %v3519
      %v3521 = vpop.f32.mrf.mxu0
      %3522 = vmatprep.mubr.f32.mxu0 0.0
      %3523 = vmatmul.mubr.f32.gmra.mxu0 %v3309
      %v3524 = vpop.f32.mrf.mxu0
      %v3525 = vadd.f32 0.0, %v3524
      %v3526 = vpop.f32.mrf.mxu0
      %3527 = vmatprep.mubr.f32.mxu0 0.0
      %3528 = vmatmul.mubr.f32.gmra.mxu0 %v3312
      %v3529 = vpop.f32.mrf.mxu0
      %v3530 = vadd.f32 0.0, %v3529
      %v3531 = vpop.f32.mrf.mxu0
      %3532 = vmatprep.mubr.f32.mxu0 0.0
      %3533 = vmatmul.mubr.f32.gmra.mxu0 %v3315
      %v3534 = vpop.f32.mrf.mxu0
      %v3535 = vadd.f32 0.0, %v3534
      %v3536 = vpop.f32.mrf.mxu0
      %3537 = vmatprep.mubr.f32.mxu0 0.0
      %3538 = vmatmul.mubr.f32.gmra.mxu0 %v3318
      %v3539 = vpop.f32.mrf.mxu0
      %v3540 = vadd.f32 0.0, %v3539
      %v3541 = vpop.f32.mrf.mxu0
      %3542 = vmatprep.mubr.f32.mxu0 0.0
      %3543 = vmatmul.mubr.f32.gmra.mxu0 %v3321
      %v3544 = vpop.f32.mrf.mxu0
      %v3545 = vadd.f32 0.0, %v3544
      %v3546 = vpop.f32.mrf.mxu0
      %3547 = vdwg.mxu0
      %v3548 = vadd.f32 %v3193, %v3390
      %v3549 = vadd.f32 %v3194, %v3395
      %v3550 = vadd.f32 %v3195, %v3400
      %v3551 = vadd.f32 %v3196, %v3405
      %v3552 = vadd.f32 %v3197, %v3410
      %v3553 = vadd.f32 %v3198, %v3415
      %v3554 = vadd.f32 %v3199, %v3420
      %v3555 = vadd.f32 %v3200, %v3425
      %v3556 = vadd.f32 %v3201, %v3430
      %v3557 = vadd.f32 %v3202, %v3435
      %v3558 = vadd.f32 %v3203, %v3440
      %v3559 = vadd.f32 %v3204, %v3445
      %v3560 = vadd.f32 %v3205, %v3450
      %v3561 = vadd.f32 %v3206, %v3455
      %v3562 = vadd.f32 %v3207, %v3460
      %v3563 = vadd.f32 %v3208, %v3465
      %v3564 = vadd.f32 %v3209, %v3470
      %v3565 = vadd.f32 %v3210, %v3475
      %v3566 = vadd.f32 %v3211, %v3480
      %v3567 = vadd.f32 %v3212, %v3485
      %v3568 = vadd.f32 %v3213, %v3490
      %v3569 = vadd.f32 %v3214, %v3495
      %v3570 = vadd.f32 %v3215, %v3500
      %v3571 = vadd.f32 %v3216, %v3505
      %v3572 = vadd.f32 %v3217, %v3510
      %v3573 = vadd.f32 %v3218, %v3515
      %v3574 = vadd.f32 %v3219, %v3520
      %v3575 = vadd.f32 %v3220, %v3525
      %v3576 = vadd.f32 %v3221, %v3530
      %v3577 = vadd.f32 %v3222, %v3535
      %v3578 = vadd.f32 %v3223, %v3540
      %v3579 = vadd.f32 %v3224, %v3545
      %v3596 = vrot.slane %v398, 1
      %v3597 = vrot.slane %v399, 1
      %v3598 = vsel %vm555, %v3596, %v3597
      %v3599 = vrot.slane %v400, 1
      %v3600 = vsel %vm555, %v3597, %v3599
      %v3601 = vrot.slane %v401, 1
      %v3602 = vrot.slane %v402, 1
      %v3603 = vsel %vm555, %v3601, %v3602
      %v3604 = vrot.slane %v403, 1
      %v3605 = vsel %vm555, %v3602, %v3604
      %v3606 = vrot.slane %v404, 1
      %v3607 = vrot.slane %v405, 1
      %v3608 = vsel %vm555, %v3606, %v3607
      %v3609 = vrot.slane %v406, 1
      %v3610 = vsel %vm555, %v3607, %v3609
      %v3611 = vrot.slane %v407, 1
      %v3612 = vrot.slane %v408, 1
      %v3613 = vsel %vm555, %v3611, %v3612
      %v3614 = vrot.slane %v409, 1
      %v3615 = vsel %vm555, %v3612, %v3614
      %v3616 = vrot.slane %v410, 1
      %v3617 = vrot.slane %v411, 1
      %v3618 = vsel %vm555, %v3616, %v3617
      %v3619 = vrot.slane %v412, 1
      %v3620 = vsel %vm555, %v3617, %v3619
      %v3621 = vrot.slane %v413, 1
      %v3622 = vrot.slane %v414, 1
      %v3623 = vsel %vm555, %v3621, %v3622
      %v3624 = vrot.slane %v415, 1
      %v3625 = vsel %vm555, %v3622, %v3624
      %v3626 = vrot.slane %v416, 1
      %v3627 = vrot.slane %v417, 1
      %v3628 = vsel %vm555, %v3626, %v3627
      %v3629 = vrot.slane %v418, 1
      %v3630 = vsel %vm555, %v3627, %v3629
      %v3631 = vrot.slane %v419, 1
      %v3632 = vrot.slane %v420, 1
      %v3633 = vsel %vm555, %v3631, %v3632
      %v3634 = vrot.slane %v421, 1
      %v3635 = vsel %vm555, %v3632, %v3634
      %v3636 = vrot.slane %v422, 1
      %v3637 = vrot.slane %v423, 1
      %v3638 = vsel %vm555, %v3636, %v3637
      %v3639 = vrot.slane %v424, 1
      %v3640 = vsel %vm555, %v3637, %v3639
      %v3641 = vrot.slane %v425, 1
      %v3642 = vrot.slane %v426, 1
      %v3643 = vsel %vm555, %v3641, %v3642
      %v3644 = vrot.slane %v427, 1
      %v3645 = vsel %vm555, %v3642, %v3644
      %v3646 = vrot.slane %v428, 1
      %v3647 = vrot.slane %v429, 1
      %v3648 = vsel %vm555, %v3646, %v3647
      %v3649 = vrot.slane %v430, 1
      %v3650 = vsel %vm555, %v3647, %v3649
      %v3651 = vrot.slane %v431, 1
      %v3652 = vrot.slane %v432, 1
      %v3653 = vsel %vm555, %v3651, %v3652
      %v3654 = vrot.slane %v433, 1
      %v3655 = vsel %vm555, %v3652, %v3654
      %v3656 = vrot.slane %v434, 1
      %v3657 = vrot.slane %v435, 1
      %v3658 = vsel %vm555, %v3656, %v3657
      %v3659 = vrot.slane %v436, 1
      %v3660 = vsel %vm555, %v3657, %v3659
      %v3661 = vrot.slane %v437, 1
      %v3662 = vrot.slane %v438, 1
      %v3663 = vsel %vm555, %v3661, %v3662
      %v3664 = vrot.slane %v439, 1
      %v3665 = vsel %vm555, %v3662, %v3664
      %v3666 = vrot.slane %v440, 1
      %v3667 = vrot.slane %v441, 1
      %v3668 = vsel %vm555, %v3666, %v3667
      %v3669 = vrot.slane %v442, 1
      %v3670 = vsel %vm555, %v3667, %v3669
      %v3671 = vrot.slane %v443, 1
      %v3672 = vrot.slane %v444, 1
      %v3673 = vsel %vm555, %v3671, %v3672
      %v3674 = vrot.slane %v445, 1
      %v3675 = vsel %vm555, %v3672, %v3674
      %s3676 = scalar_lea.vmem %s3, 80
      %v3677 = vld [vmem:[%s3676] sm:$0xff]
      %v3678 = vsel %vm638, %v3598, 0
      %v3680 = vsel %vm638, %v3600, 0
      %v3682 = vsel %vm638, %v3603, 0
      %v3684 = vsel %vm638, %v3605, 0
      %v3686 = vsel %vm638, %v3608, 0
      %v3688 = vsel %vm638, %v3610, 0
      %v3690 = vsel %vm638, %v3613, 0
      %v3692 = vsel %vm638, %v3615, 0
      %v3694 = vsel %vm638, %v3618, 0
      %v3696 = vsel %vm638, %v3620, 0
      %v3698 = vsel %vm638, %v3623, 0
      %v3700 = vsel %vm638, %v3625, 0
      %v3702 = vsel %vm638, %v3628, 0
      %v3704 = vsel %vm638, %v3630, 0
      %v3706 = vsel %vm638, %v3633, 0
      %v3708 = vsel %vm638, %v3635, 0
      %v3710 = vsel %vm638, %v3638, 0
      %v3712 = vsel %vm638, %v3640, 0
      %v3714 = vsel %vm638, %v3643, 0
      %v3716 = vsel %vm638, %v3645, 0
      %v3718 = vsel %vm638, %v3648, 0
      %v3720 = vsel %vm638, %v3650, 0
      %v3722 = vsel %vm638, %v3653, 0
      %v3724 = vsel %vm638, %v3655, 0
      %v3726 = vsel %vm638, %v3658, 0
      %v3728 = vsel %vm638, %v3660, 0
      %v3730 = vsel %vm638, %v3663, 0
      %v3732 = vsel %vm638, %v3665, 0
      %v3734 = vsel %vm638, %v3668, 0
      %v3736 = vsel %vm638, %v3670, 0
      %v3738 = vsel %vm638, %v3673, 0
      %v3740 = vsel %vm638, %v3675, 0
      %3742 = vmatprep.subr.mxu0 0.0
      %3743 = vmatpush1.msra.mxu0 0.0
      %3744 = vmatprep.subr.mxu0 0.0
      %3745 = vmatpush1.msra.mxu0 0.0
      %3746 = vmatprep.subr.mxu0 0.0
      %3747 = vmatpush1.msra.mxu0 0.0
      %3748 = vmatprep.subr.mxu0 0.0
      %3749 = vmatpush1.msra.mxu0 0.0
      %3750 = vmatprep.subr.mxu0 0.0
      %3751 = vmatpush1.msra.mxu0 0.0
      %3752 = vmatprep.subr.mxu0 0.0
      %3753 = vmatpush1.msra.mxu0 0.0
      %3754 = vmatprep.subr.mxu0 0.0
      %3755 = vmatpush1.msra.mxu0 0.0
      %3756 = vmatprep.subr.mxu0 0.0
      %3757 = vmatpush1.msra.mxu0 0.0
      %3758 = vmatprep.subr.mxu0 0.0
      %3759 = vmatpush1.msra.mxu0 0.0
      %3760 = vmatprep.subr.mxu0 0.0
      %3761 = vmatpush1.msra.mxu0 0.0
      %3762 = vmatprep.subr.mxu0 0.0
      %3763 = vmatpush1.msra.mxu0 0.0
      %3764 = vmatprep.subr.mxu0 0.0
      %3765 = vmatpush1.msra.mxu0 0.0
      %3766 = vmatprep.subr.mxu0 0.0
      %3767 = vmatpush1.msra.mxu0 0.0
      %3768 = vmatprep.subr.mxu0 0.0
      %3769 = vmatpush1.msra.mxu0 0.0
      %3770 = vmatprep.subr.mxu0 0.0
      %3771 = vmatpush1.msra.mxu0 0.0
      %3772 = vmatprep.subr.mxu0 0.0
      %3773 = vmatpush1.msra.mxu0 %v3677
      %3774 = vmatprep.subr.mxu0 0.0
      %3775 = vmatpush2.msra.mxu0 0.0
      %3776 = vmatprep.subr.mxu0 0.0
      %3777 = vmatpush2.msra.mxu0 0.0
      %3778 = vmatprep.subr.mxu0 0.0
      %3779 = vmatpush2.msra.mxu0 0.0
      %3780 = vmatprep.subr.mxu0 0.0
      %3781 = vmatpush2.msra.mxu0 0.0
      %3782 = vmatprep.subr.mxu0 0.0
      %3783 = vmatpush2.msra.mxu0 0.0
      %3784 = vmatprep.subr.mxu0 0.0
      %3785 = vmatpush2.msra.mxu0 0.0
      %3786 = vmatprep.subr.mxu0 0.0
      %3787 = vmatpush2.msra.mxu0 0.0
      %3788 = vmatprep.subr.mxu0 0.0
      %3789 = vmatpush2.msra.mxu0 0.0
      %3790 = vmatprep.subr.mxu0 0.0
      %3791 = vmatpush2.msra.mxu0 0.0
      %3792 = vmatprep.subr.mxu0 0.0
      %3793 = vmatpush2.msra.mxu0 0.0
      %3794 = vmatprep.subr.mxu0 0.0
      %3795 = vmatpush2.msra.mxu0 0.0
      %3796 = vmatprep.subr.mxu0 0.0
      %3797 = vmatpush2.msra.mxu0 0.0
      %3798 = vmatprep.subr.mxu0 0.0
      %3799 = vmatpush2.msra.mxu0 0.0
      %3800 = vmatprep.subr.mxu0 0.0
      %3801 = vmatpush2.msra.mxu0 0.0
      %3802 = vmatprep.subr.mxu0 0.0
      %3803 = vmatpush2.msra.mxu0 0.0
      %3804 = vmatprep.subr.mxu0 0.0
      %3805 = vmatpush2.msra.mxu0 0.0
      %3806 = vmatprep.mubr.f32.mxu0 0.0
      %3807 = vmatmul.mubr.f32.gmra.mxu0 %v3678
      %v3808 = vpop.f32.mrf.mxu0
      %v3809 = vadd.f32 0.0, %v3808
      %v3810 = vpop.f32.mrf.mxu0
      %3811 = vmatprep.mubr.f32.mxu0 0.0
      %3812 = vmatmul.mubr.f32.gmra.mxu0 %v3680
      %v3813 = vpop.f32.mrf.mxu0
      %v3814 = vadd.f32 0.0, %v3813
      %v3815 = vpop.f32.mrf.mxu0
      %3816 = vmatprep.mubr.f32.mxu0 0.0
      %3817 = vmatmul.mubr.f32.gmra.mxu0 %v3682
      %v3818 = vpop.f32.mrf.mxu0
      %v3819 = vadd.f32 0.0, %v3818
      %v3820 = vpop.f32.mrf.mxu0
      %3821 = vmatprep.mubr.f32.mxu0 0.0
      %3822 = vmatmul.mubr.f32.gmra.mxu0 %v3684
      %v3823 = vpop.f32.mrf.mxu0
      %v3824 = vadd.f32 0.0, %v3823
      %v3825 = vpop.f32.mrf.mxu0
      %3826 = vmatprep.mubr.f32.mxu0 0.0
      %3827 = vmatmul.mubr.f32.gmra.mxu0 %v3686
      %v3828 = vpop.f32.mrf.mxu0
      %v3829 = vadd.f32 0.0, %v3828
      %v3830 = vpop.f32.mrf.mxu0
      %3831 = vmatprep.mubr.f32.mxu0 0.0
      %3832 = vmatmul.mubr.f32.gmra.mxu0 %v3688
      %v3833 = vpop.f32.mrf.mxu0
      %v3834 = vadd.f32 0.0, %v3833
      %v3835 = vpop.f32.mrf.mxu0
      %3836 = vmatprep.mubr.f32.mxu0 0.0
      %3837 = vmatmul.mubr.f32.gmra.mxu0 %v3690
      %v3838 = vpop.f32.mrf.mxu0
      %v3839 = vadd.f32 0.0, %v3838
      %v3840 = vpop.f32.mrf.mxu0
      %3841 = vmatprep.mubr.f32.mxu0 0.0
      %3842 = vmatmul.mubr.f32.gmra.mxu0 %v3692
      %v3843 = vpop.f32.mrf.mxu0
      %v3844 = vadd.f32 0.0, %v3843
      %v3845 = vpop.f32.mrf.mxu0
      %3846 = vmatprep.mubr.f32.mxu0 0.0
      %3847 = vmatmul.mubr.f32.gmra.mxu0 %v3694
      %v3848 = vpop.f32.mrf.mxu0
      %v3849 = vadd.f32 0.0, %v3848
      %v3850 = vpop.f32.mrf.mxu0
      %3851 = vmatprep.mubr.f32.mxu0 0.0
      %3852 = vmatmul.mubr.f32.gmra.mxu0 %v3696
      %v3853 = vpop.f32.mrf.mxu0
      %v3854 = vadd.f32 0.0, %v3853
      %v3855 = vpop.f32.mrf.mxu0
      %3856 = vmatprep.mubr.f32.mxu0 0.0
      %3857 = vmatmul.mubr.f32.gmra.mxu0 %v3698
      %v3858 = vpop.f32.mrf.mxu0
      %v3859 = vadd.f32 0.0, %v3858
      %v3860 = vpop.f32.mrf.mxu0
      %3861 = vmatprep.mubr.f32.mxu0 0.0
      %3862 = vmatmul.mubr.f32.gmra.mxu0 %v3700
      %v3863 = vpop.f32.mrf.mxu0
      %v3864 = vadd.f32 0.0, %v3863
      %v3865 = vpop.f32.mrf.mxu0
      %3866 = vmatprep.mubr.f32.mxu0 0.0
      %3867 = vmatmul.mubr.f32.gmra.mxu0 %v3702
      %v3868 = vpop.f32.mrf.mxu0
      %v3869 = vadd.f32 0.0, %v3868
      %v3870 = vpop.f32.mrf.mxu0
      %3871 = vmatprep.mubr.f32.mxu0 0.0
      %3872 = vmatmul.mubr.f32.gmra.mxu0 %v3704
      %v3873 = vpop.f32.mrf.mxu0
      %v3874 = vadd.f32 0.0, %v3873
      %v3875 = vpop.f32.mrf.mxu0
      %3876 = vmatprep.mubr.f32.mxu0 0.0
      %3877 = vmatmul.mubr.f32.gmra.mxu0 %v3706
      %v3878 = vpop.f32.mrf.mxu0
      %v3879 = vadd.f32 0.0, %v3878
      %v3880 = vpop.f32.mrf.mxu0
      %3881 = vmatprep.mubr.f32.mxu0 0.0
      %3882 = vmatmul.mubr.f32.gmra.mxu0 %v3708
      %v3883 = vpop.f32.mrf.mxu0
      %v3884 = vadd.f32 0.0, %v3883
      %v3885 = vpop.f32.mrf.mxu0
      %3886 = vmatprep.mubr.f32.mxu0 0.0
      %3887 = vmatmul.mubr.f32.gmra.mxu0 %v3710
      %v3888 = vpop.f32.mrf.mxu0
      %v3889 = vadd.f32 0.0, %v3888
      %v3890 = vpop.f32.mrf.mxu0
      %3891 = vmatprep.mubr.f32.mxu0 0.0
      %3892 = vmatmul.mubr.f32.gmra.mxu0 %v3712
      %v3893 = vpop.f32.mrf.mxu0
      %v3894 = vadd.f32 0.0, %v3893
      %v3895 = vpop.f32.mrf.mxu0
      %3896 = vmatprep.mubr.f32.mxu0 0.0
      %3897 = vmatmul.mubr.f32.gmra.mxu0 %v3714
      %v3898 = vpop.f32.mrf.mxu0
      %v3899 = vadd.f32 0.0, %v3898
      %v3900 = vpop.f32.mrf.mxu0
      %3901 = vmatprep.mubr.f32.mxu0 0.0
      %3902 = vmatmul.mubr.f32.gmra.mxu0 %v3716
      %v3903 = vpop.f32.mrf.mxu0
      %v3904 = vadd.f32 0.0, %v3903
      %v3905 = vpop.f32.mrf.mxu0
      %3906 = vmatprep.mubr.f32.mxu0 0.0
      %3907 = vmatmul.mubr.f32.gmra.mxu0 %v3718
      %v3908 = vpop.f32.mrf.mxu0
      %v3909 = vadd.f32 0.0, %v3908
      %v3910 = vpop.f32.mrf.mxu0
      %3911 = vmatprep.mubr.f32.mxu0 0.0
      %3912 = vmatmul.mubr.f32.gmra.mxu0 %v3720
      %v3913 = vpop.f32.mrf.mxu0
      %v3914 = vadd.f32 0.0, %v3913
      %v3915 = vpop.f32.mrf.mxu0
      %3916 = vmatprep.mubr.f32.mxu0 0.0
      %3917 = vmatmul.mubr.f32.gmra.mxu0 %v3722
      %v3918 = vpop.f32.mrf.mxu0
      %v3919 = vadd.f32 0.0, %v3918
      %v3920 = vpop.f32.mrf.mxu0
      %3921 = vmatprep.mubr.f32.mxu0 0.0
      %3922 = vmatmul.mubr.f32.gmra.mxu0 %v3724
      %v3923 = vpop.f32.mrf.mxu0
      %v3924 = vadd.f32 0.0, %v3923
      %v3925 = vpop.f32.mrf.mxu0
      %3926 = vmatprep.mubr.f32.mxu0 0.0
      %3927 = vmatmul.mubr.f32.gmra.mxu0 %v3726
      %v3928 = vpop.f32.mrf.mxu0
      %v3929 = vadd.f32 0.0, %v3928
      %v3930 = vpop.f32.mrf.mxu0
      %3931 = vmatprep.mubr.f32.mxu0 0.0
      %3932 = vmatmul.mubr.f32.gmra.mxu0 %v3728
      %v3933 = vpop.f32.mrf.mxu0
      %v3934 = vadd.f32 0.0, %v3933
      %v3935 = vpop.f32.mrf.mxu0
      %3936 = vmatprep.mubr.f32.mxu0 0.0
      %3937 = vmatmul.mubr.f32.gmra.mxu0 %v3730
      %v3938 = vpop.f32.mrf.mxu0
      %v3939 = vadd.f32 0.0, %v3938
      %v3940 = vpop.f32.mrf.mxu0
      %3941 = vmatprep.mubr.f32.mxu0 0.0
      %3942 = vmatmul.mubr.f32.gmra.mxu0 %v3732
      %v3943 = vpop.f32.mrf.mxu0
      %v3944 = vadd.f32 0.0, %v3943
      %v3945 = vpop.f32.mrf.mxu0
      %3946 = vmatprep.mubr.f32.mxu0 0.0
      %3947 = vmatmul.mubr.f32.gmra.mxu0 %v3734
      %v3948 = vpop.f32.mrf.mxu0
      %v3949 = vadd.f32 0.0, %v3948
      %v3950 = vpop.f32.mrf.mxu0
      %3951 = vmatprep.mubr.f32.mxu0 0.0
      %3952 = vmatmul.mubr.f32.gmra.mxu0 %v3736
      %v3953 = vpop.f32.mrf.mxu0
      %v3954 = vadd.f32 0.0, %v3953
      %v3955 = vpop.f32.mrf.mxu0
      %3956 = vmatprep.mubr.f32.mxu0 0.0
      %3957 = vmatmul.mubr.f32.gmra.mxu0 %v3738
      %v3958 = vpop.f32.mrf.mxu0
      %v3959 = vadd.f32 0.0, %v3958
      %v3960 = vpop.f32.mrf.mxu0
      %3961 = vmatprep.mubr.f32.mxu0 0.0
      %3962 = vmatmul.mubr.f32.gmra.mxu0 %v3740
      %v3963 = vpop.f32.mrf.mxu0
      %v3964 = vadd.f32 0.0, %v3963
      %v3965 = vpop.f32.mrf.mxu0
      %3966 = vdwg.mxu0
      %v3967 = vadd.f32 %v3548, %v3809
      %v3968 = vadd.f32 %v3549, %v3814
      %v3969 = vadd.f32 %v3550, %v3819
      %v3970 = vadd.f32 %v3551, %v3824
      %v3971 = vadd.f32 %v3552, %v3829
      %v3972 = vadd.f32 %v3553, %v3834
      %v3973 = vadd.f32 %v3554, %v3839
      %v3974 = vadd.f32 %v3555, %v3844
      %v3975 = vadd.f32 %v3556, %v3849
      %v3976 = vadd.f32 %v3557, %v3854
      %v3977 = vadd.f32 %v3558, %v3859
      %v3978 = vadd.f32 %v3559, %v3864
      %v3979 = vadd.f32 %v3560, %v3869
      %v3980 = vadd.f32 %v3561, %v3874
      %v3981 = vadd.f32 %v3562, %v3879
      %v3982 = vadd.f32 %v3563, %v3884
      %v3983 = vadd.f32 %v3564, %v3889
      %v3984 = vadd.f32 %v3565, %v3894
      %v3985 = vadd.f32 %v3566, %v3899
      %v3986 = vadd.f32 %v3567, %v3904
      %v3987 = vadd.f32 %v3568, %v3909
      %v3988 = vadd.f32 %v3569, %v3914
      %v3989 = vadd.f32 %v3570, %v3919
      %v3990 = vadd.f32 %v3571, %v3924
      %v3991 = vadd.f32 %v3572, %v3929
      %v3992 = vadd.f32 %v3573, %v3934
      %v3993 = vadd.f32 %v3574, %v3939
      %v3994 = vadd.f32 %v3575, %v3944
      %v3995 = vadd.f32 %v3576, %v3949
      %v3996 = vadd.f32 %v3577, %v3954
      %v3997 = vadd.f32 %v3578, %v3959
      %v3998 = vadd.f32 %v3579, %v3964
      %v3999 = vrot.slane %v398, 2
      %v4000 = vrot.slane %v399, 2
      %v4001 = vsel %vm1217, %v3999, %v4000
      %v4002 = vrot.slane %v400, 2
      %v4003 = vsel %vm1217, %v4000, %v4002
      %v4004 = vrot.slane %v401, 2
      %v4005 = vrot.slane %v402, 2
      %v4006 = vsel %vm1217, %v4004, %v4005
      %v4007 = vrot.slane %v403, 2
      %v4008 = vsel %vm1217, %v4005, %v4007
      %v4009 = vrot.slane %v404, 2
      %v4010 = vrot.slane %v405, 2
      %v4011 = vsel %vm1217, %v4009, %v4010
      %v4012 = vrot.slane %v406, 2
      %v4013 = vsel %vm1217, %v4010, %v4012
      %v4014 = vrot.slane %v407, 2
      %v4015 = vrot.slane %v408, 2
      %v4016 = vsel %vm1217, %v4014, %v4015
      %v4017 = vrot.slane %v409, 2
      %v4018 = vsel %vm1217, %v4015, %v4017
      %v4019 = vrot.slane %v410, 2
      %v4020 = vrot.slane %v411, 2
      %v4021 = vsel %vm1217, %v4019, %v4020
      %v4022 = vrot.slane %v412, 2
      %v4023 = vsel %vm1217, %v4020, %v4022
      %v4024 = vrot.slane %v413, 2
      %v4025 = vrot.slane %v414, 2
      %v4026 = vsel %vm1217, %v4024, %v4025
      %v4027 = vrot.slane %v415, 2
      %v4028 = vsel %vm1217, %v4025, %v4027
      %v4029 = vrot.slane %v416, 2
      %v4030 = vrot.slane %v417, 2
      %v4031 = vsel %vm1217, %v4029, %v4030
      %v4032 = vrot.slane %v418, 2
      %v4033 = vsel %vm1217, %v4030, %v4032
      %v4034 = vrot.slane %v419, 2
      %v4035 = vrot.slane %v420, 2
      %v4036 = vsel %vm1217, %v4034, %v4035
      %v4037 = vrot.slane %v421, 2
      %v4038 = vsel %vm1217, %v4035, %v4037
      %v4039 = vrot.slane %v422, 2
      %v4040 = vrot.slane %v423, 2
      %v4041 = vsel %vm1217, %v4039, %v4040
      %v4042 = vrot.slane %v424, 2
      %v4043 = vsel %vm1217, %v4040, %v4042
      %v4044 = vrot.slane %v425, 2
      %v4045 = vrot.slane %v426, 2
      %v4046 = vsel %vm1217, %v4044, %v4045
      %v4047 = vrot.slane %v427, 2
      %v4048 = vsel %vm1217, %v4045, %v4047
      %v4049 = vrot.slane %v428, 2
      %v4050 = vrot.slane %v429, 2
      %v4051 = vsel %vm1217, %v4049, %v4050
      %v4052 = vrot.slane %v430, 2
      %v4053 = vsel %vm1217, %v4050, %v4052
      %v4054 = vrot.slane %v431, 2
      %v4055 = vrot.slane %v432, 2
      %v4056 = vsel %vm1217, %v4054, %v4055
      %v4057 = vrot.slane %v433, 2
      %v4058 = vsel %vm1217, %v4055, %v4057
      %v4059 = vrot.slane %v434, 2
      %v4060 = vrot.slane %v435, 2
      %v4061 = vsel %vm1217, %v4059, %v4060
      %v4062 = vrot.slane %v436, 2
      %v4063 = vsel %vm1217, %v4060, %v4062
      %v4064 = vrot.slane %v437, 2
      %v4065 = vrot.slane %v438, 2
      %v4066 = vsel %vm1217, %v4064, %v4065
      %v4067 = vrot.slane %v439, 2
      %v4068 = vsel %vm1217, %v4065, %v4067
      %v4069 = vrot.slane %v440, 2
      %v4070 = vrot.slane %v441, 2
      %v4071 = vsel %vm1217, %v4069, %v4070
      %v4072 = vrot.slane %v442, 2
      %v4073 = vsel %vm1217, %v4070, %v4072
      %v4074 = vrot.slane %v443, 2
      %v4075 = vrot.slane %v444, 2
      %v4076 = vsel %vm1217, %v4074, %v4075
      %v4077 = vrot.slane %v445, 2
      %v4078 = vsel %vm1217, %v4075, %v4077
      %s4079 = scalar_lea.vmem %s3, 88
      %v4080 = vld [vmem:[%s4079] sm:$0xff]
      %v4081 = vsel %vm638, %v4001, 0
      %v4083 = vsel %vm638, %v4003, 0
      %v4085 = vsel %vm638, %v4006, 0
      %v4087 = vsel %vm638, %v4008, 0
      %v4089 = vsel %vm638, %v4011, 0
      %v4091 = vsel %vm638, %v4013, 0
      %v4093 = vsel %vm638, %v4016, 0
      %v4095 = vsel %vm638, %v4018, 0
      %v4097 = vsel %vm638, %v4021, 0
      %v4099 = vsel %vm638, %v4023, 0
      %v4101 = vsel %vm638, %v4026, 0
      %v4103 = vsel %vm638, %v4028, 0
      %v4105 = vsel %vm638, %v4031, 0
      %v4107 = vsel %vm638, %v4033, 0
      %v4109 = vsel %vm638, %v4036, 0
      %v4111 = vsel %vm638, %v4038, 0
      %v4113 = vsel %vm638, %v4041, 0
      %v4115 = vsel %vm638, %v4043, 0
      %v4117 = vsel %vm638, %v4046, 0
      %v4119 = vsel %vm638, %v4048, 0
      %v4121 = vsel %vm638, %v4051, 0
      %v4123 = vsel %vm638, %v4053, 0
      %v4125 = vsel %vm638, %v4056, 0
      %v4127 = vsel %vm638, %v4058, 0
      %v4129 = vsel %vm638, %v4061, 0
      %v4131 = vsel %vm638, %v4063, 0
      %v4133 = vsel %vm638, %v4066, 0
      %v4135 = vsel %vm638, %v4068, 0
      %v4137 = vsel %vm638, %v4071, 0
      %v4139 = vsel %vm638, %v4073, 0
      %v4141 = vsel %vm638, %v4076, 0
      %v4143 = vsel %vm638, %v4078, 0
      %4145 = vmatprep.subr.mxu0 0.0
      %4146 = vmatpush1.msra.mxu0 0.0
      %4147 = vmatprep.subr.mxu0 0.0
      %4148 = vmatpush1.msra.mxu0 0.0
      %4149 = vmatprep.subr.mxu0 0.0
      %4150 = vmatpush1.msra.mxu0 0.0
      %4151 = vmatprep.subr.mxu0 0.0
      %4152 = vmatpush1.msra.mxu0 0.0
      %4153 = vmatprep.subr.mxu0 0.0
      %4154 = vmatpush1.msra.mxu0 0.0
      %4155 = vmatprep.subr.mxu0 0.0
      %4156 = vmatpush1.msra.mxu0 0.0
      %4157 = vmatprep.subr.mxu0 0.0
      %4158 = vmatpush1.msra.mxu0 0.0
      %4159 = vmatprep.subr.mxu0 0.0
      %4160 = vmatpush1.msra.mxu0 0.0
      %4161 = vmatprep.subr.mxu0 0.0
      %4162 = vmatpush1.msra.mxu0 0.0
      %4163 = vmatprep.subr.mxu0 0.0
      %4164 = vmatpush1.msra.mxu0 0.0
      %4165 = vmatprep.subr.mxu0 0.0
      %4166 = vmatpush1.msra.mxu0 0.0
      %4167 = vmatprep.subr.mxu0 0.0
      %4168 = vmatpush1.msra.mxu0 0.0
      %4169 = vmatprep.subr.mxu0 0.0
      %4170 = vmatpush1.msra.mxu0 0.0
      %4171 = vmatprep.subr.mxu0 0.0
      %4172 = vmatpush1.msra.mxu0 0.0
      %4173 = vmatprep.subr.mxu0 0.0
      %4174 = vmatpush1.msra.mxu0 0.0
      %4175 = vmatprep.subr.mxu0 0.0
      %4176 = vmatpush1.msra.mxu0 %v4080
      %4177 = vmatprep.subr.mxu0 0.0
      %4178 = vmatpush2.msra.mxu0 0.0
      %4179 = vmatprep.subr.mxu0 0.0
      %4180 = vmatpush2.msra.mxu0 0.0
      %4181 = vmatprep.subr.mxu0 0.0
      %4182 = vmatpush2.msra.mxu0 0.0
      %4183 = vmatprep.subr.mxu0 0.0
      %4184 = vmatpush2.msra.mxu0 0.0
      %4185 = vmatprep.subr.mxu0 0.0
      %4186 = vmatpush2.msra.mxu0 0.0
      %4187 = vmatprep.subr.mxu0 0.0
      %4188 = vmatpush2.msra.mxu0 0.0
      %4189 = vmatprep.subr.mxu0 0.0
      %4190 = vmatpush2.msra.mxu0 0.0
      %4191 = vmatprep.subr.mxu0 0.0
      %4192 = vmatpush2.msra.mxu0 0.0
      %4193 = vmatprep.subr.mxu0 0.0
      %4194 = vmatpush2.msra.mxu0 0.0
      %4195 = vmatprep.subr.mxu0 0.0
      %4196 = vmatpush2.msra.mxu0 0.0
      %4197 = vmatprep.subr.mxu0 0.0
      %4198 = vmatpush2.msra.mxu0 0.0
      %4199 = vmatprep.subr.mxu0 0.0
      %4200 = vmatpush2.msra.mxu0 0.0
      %4201 = vmatprep.subr.mxu0 0.0
      %4202 = vmatpush2.msra.mxu0 0.0
      %4203 = vmatprep.subr.mxu0 0.0
      %4204 = vmatpush2.msra.mxu0 0.0
      %4205 = vmatprep.subr.mxu0 0.0
      %4206 = vmatpush2.msra.mxu0 0.0
      %4207 = vmatprep.subr.mxu0 0.0
      %4208 = vmatpush2.msra.mxu0 0.0
      %4209 = vmatprep.mubr.f32.mxu0 0.0
      %4210 = vmatmul.mubr.f32.gmra.mxu0 %v4081
      %v4211 = vpop.f32.mrf.mxu0
      %v4212 = vadd.f32 0.0, %v4211
      %v4213 = vpop.f32.mrf.mxu0
      %4214 = vmatprep.mubr.f32.mxu0 0.0
      %4215 = vmatmul.mubr.f32.gmra.mxu0 %v4083
      %v4216 = vpop.f32.mrf.mxu0
      %v4217 = vadd.f32 0.0, %v4216
      %v4218 = vpop.f32.mrf.mxu0
      %4219 = vmatprep.mubr.f32.mxu0 0.0
      %4220 = vmatmul.mubr.f32.gmra.mxu0 %v4085
      %v4221 = vpop.f32.mrf.mxu0
      %v4222 = vadd.f32 0.0, %v4221
      %v4223 = vpop.f32.mrf.mxu0
      %4224 = vmatprep.mubr.f32.mxu0 0.0
      %4225 = vmatmul.mubr.f32.gmra.mxu0 %v4087
      %v4226 = vpop.f32.mrf.mxu0
      %v4227 = vadd.f32 0.0, %v4226
      %v4228 = vpop.f32.mrf.mxu0
      %4229 = vmatprep.mubr.f32.mxu0 0.0
      %4230 = vmatmul.mubr.f32.gmra.mxu0 %v4089
      %v4231 = vpop.f32.mrf.mxu0
      %v4232 = vadd.f32 0.0, %v4231
      %v4233 = vpop.f32.mrf.mxu0
      %4234 = vmatprep.mubr.f32.mxu0 0.0
      %4235 = vmatmul.mubr.f32.gmra.mxu0 %v4091
      %v4236 = vpop.f32.mrf.mxu0
      %v4237 = vadd.f32 0.0, %v4236
      %v4238 = vpop.f32.mrf.mxu0
      %4239 = vmatprep.mubr.f32.mxu0 0.0
      %4240 = vmatmul.mubr.f32.gmra.mxu0 %v4093
      %v4241 = vpop.f32.mrf.mxu0
      %v4242 = vadd.f32 0.0, %v4241
      %v4243 = vpop.f32.mrf.mxu0
      %4244 = vmatprep.mubr.f32.mxu0 0.0
      %4245 = vmatmul.mubr.f32.gmra.mxu0 %v4095
      %v4246 = vpop.f32.mrf.mxu0
      %v4247 = vadd.f32 0.0, %v4246
      %v4248 = vpop.f32.mrf.mxu0
      %4249 = vmatprep.mubr.f32.mxu0 0.0
      %4250 = vmatmul.mubr.f32.gmra.mxu0 %v4097
      %v4251 = vpop.f32.mrf.mxu0
      %v4252 = vadd.f32 0.0, %v4251
      %v4253 = vpop.f32.mrf.mxu0
      %4254 = vmatprep.mubr.f32.mxu0 0.0
      %4255 = vmatmul.mubr.f32.gmra.mxu0 %v4099
      %v4256 = vpop.f32.mrf.mxu0
      %v4257 = vadd.f32 0.0, %v4256
      %v4258 = vpop.f32.mrf.mxu0
      %4259 = vmatprep.mubr.f32.mxu0 0.0
      %4260 = vmatmul.mubr.f32.gmra.mxu0 %v4101
      %v4261 = vpop.f32.mrf.mxu0
      %v4262 = vadd.f32 0.0, %v4261
      %v4263 = vpop.f32.mrf.mxu0
      %4264 = vmatprep.mubr.f32.mxu0 0.0
      %4265 = vmatmul.mubr.f32.gmra.mxu0 %v4103
      %v4266 = vpop.f32.mrf.mxu0
      %v4267 = vadd.f32 0.0, %v4266
      %v4268 = vpop.f32.mrf.mxu0
      %4269 = vmatprep.mubr.f32.mxu0 0.0
      %4270 = vmatmul.mubr.f32.gmra.mxu0 %v4105
      %v4271 = vpop.f32.mrf.mxu0
      %v4272 = vadd.f32 0.0, %v4271
      %v4273 = vpop.f32.mrf.mxu0
      %4274 = vmatprep.mubr.f32.mxu0 0.0
      %4275 = vmatmul.mubr.f32.gmra.mxu0 %v4107
      %v4276 = vpop.f32.mrf.mxu0
      %v4277 = vadd.f32 0.0, %v4276
      %v4278 = vpop.f32.mrf.mxu0
      %4279 = vmatprep.mubr.f32.mxu0 0.0
      %4280 = vmatmul.mubr.f32.gmra.mxu0 %v4109
      %v4281 = vpop.f32.mrf.mxu0
      %v4282 = vadd.f32 0.0, %v4281
      %v4283 = vpop.f32.mrf.mxu0
      %4284 = vmatprep.mubr.f32.mxu0 0.0
      %4285 = vmatmul.mubr.f32.gmra.mxu0 %v4111
      %v4286 = vpop.f32.mrf.mxu0
      %v4287 = vadd.f32 0.0, %v4286
      %v4288 = vpop.f32.mrf.mxu0
      %4289 = vmatprep.mubr.f32.mxu0 0.0
      %4290 = vmatmul.mubr.f32.gmra.mxu0 %v4113
      %v4291 = vpop.f32.mrf.mxu0
      %v4292 = vadd.f32 0.0, %v4291
      %v4293 = vpop.f32.mrf.mxu0
      %4294 = vmatprep.mubr.f32.mxu0 0.0
      %4295 = vmatmul.mubr.f32.gmra.mxu0 %v4115
      %v4296 = vpop.f32.mrf.mxu0
      %v4297 = vadd.f32 0.0, %v4296
      %v4298 = vpop.f32.mrf.mxu0
      %4299 = vmatprep.mubr.f32.mxu0 0.0
      %4300 = vmatmul.mubr.f32.gmra.mxu0 %v4117
      %v4301 = vpop.f32.mrf.mxu0
      %v4302 = vadd.f32 0.0, %v4301
      %v4303 = vpop.f32.mrf.mxu0
      %4304 = vmatprep.mubr.f32.mxu0 0.0
      %4305 = vmatmul.mubr.f32.gmra.mxu0 %v4119
      %v4306 = vpop.f32.mrf.mxu0
      %v4307 = vadd.f32 0.0, %v4306
      %v4308 = vpop.f32.mrf.mxu0
      %4309 = vmatprep.mubr.f32.mxu0 0.0
      %4310 = vmatmul.mubr.f32.gmra.mxu0 %v4121
      %v4311 = vpop.f32.mrf.mxu0
      %v4312 = vadd.f32 0.0, %v4311
      %v4313 = vpop.f32.mrf.mxu0
      %4314 = vmatprep.mubr.f32.mxu0 0.0
      %4315 = vmatmul.mubr.f32.gmra.mxu0 %v4123
      %v4316 = vpop.f32.mrf.mxu0
      %v4317 = vadd.f32 0.0, %v4316
      %v4318 = vpop.f32.mrf.mxu0
      %4319 = vmatprep.mubr.f32.mxu0 0.0
      %4320 = vmatmul.mubr.f32.gmra.mxu0 %v4125
      %v4321 = vpop.f32.mrf.mxu0
      %v4322 = vadd.f32 0.0, %v4321
      %v4323 = vpop.f32.mrf.mxu0
      %4324 = vmatprep.mubr.f32.mxu0 0.0
      %4325 = vmatmul.mubr.f32.gmra.mxu0 %v4127
      %v4326 = vpop.f32.mrf.mxu0
      %v4327 = vadd.f32 0.0, %v4326
      %v4328 = vpop.f32.mrf.mxu0
      %4329 = vmatprep.mubr.f32.mxu0 0.0
      %4330 = vmatmul.mubr.f32.gmra.mxu0 %v4129
      %v4331 = vpop.f32.mrf.mxu0
      %v4332 = vadd.f32 0.0, %v4331
      %v4333 = vpop.f32.mrf.mxu0
      %4334 = vmatprep.mubr.f32.mxu0 0.0
      %4335 = vmatmul.mubr.f32.gmra.mxu0 %v4131
      %v4336 = vpop.f32.mrf.mxu0
      %v4337 = vadd.f32 0.0, %v4336
      %v4338 = vpop.f32.mrf.mxu0
      %4339 = vmatprep.mubr.f32.mxu0 0.0
      %4340 = vmatmul.mubr.f32.gmra.mxu0 %v4133
      %v4341 = vpop.f32.mrf.mxu0
      %v4342 = vadd.f32 0.0, %v4341
      %v4343 = vpop.f32.mrf.mxu0
      %4344 = vmatprep.mubr.f32.mxu0 0.0
      %4345 = vmatmul.mubr.f32.gmra.mxu0 %v4135
      %v4346 = vpop.f32.mrf.mxu0
      %v4347 = vadd.f32 0.0, %v4346
      %v4348 = vpop.f32.mrf.mxu0
      %4349 = vmatprep.mubr.f32.mxu0 0.0
      %4350 = vmatmul.mubr.f32.gmra.mxu0 %v4137
      %v4351 = vpop.f32.mrf.mxu0
      %v4352 = vadd.f32 0.0, %v4351
      %v4353 = vpop.f32.mrf.mxu0
      %4354 = vmatprep.mubr.f32.mxu0 0.0
      %4355 = vmatmul.mubr.f32.gmra.mxu0 %v4139
      %v4356 = vpop.f32.mrf.mxu0
      %v4357 = vadd.f32 0.0, %v4356
      %v4358 = vpop.f32.mrf.mxu0
      %4359 = vmatprep.mubr.f32.mxu0 0.0
      %4360 = vmatmul.mubr.f32.gmra.mxu0 %v4141
      %v4361 = vpop.f32.mrf.mxu0
      %v4362 = vadd.f32 0.0, %v4361
      %v4363 = vpop.f32.mrf.mxu0
      %4364 = vmatprep.mubr.f32.mxu0 0.0
      %4365 = vmatmul.mubr.f32.gmra.mxu0 %v4143
      %v4366 = vpop.f32.mrf.mxu0
      %v4367 = vadd.f32 0.0, %v4366
      %v4368 = vpop.f32.mrf.mxu0
      %4369 = vdwg.mxu0
      %v4370 = vadd.f32 %v3967, %v4212
      %v4371 = vadd.f32 %v3968, %v4217
      %v4372 = vadd.f32 %v3969, %v4222
      %v4373 = vadd.f32 %v3970, %v4227
      %v4374 = vadd.f32 %v3971, %v4232
      %v4375 = vadd.f32 %v3972, %v4237
      %v4376 = vadd.f32 %v3973, %v4242
      %v4377 = vadd.f32 %v3974, %v4247
      %v4378 = vadd.f32 %v3975, %v4252
      %v4379 = vadd.f32 %v3976, %v4257
      %v4380 = vadd.f32 %v3977, %v4262
      %v4381 = vadd.f32 %v3978, %v4267
      %v4382 = vadd.f32 %v3979, %v4272
      %v4383 = vadd.f32 %v3980, %v4277
      %v4384 = vadd.f32 %v3981, %v4282
      %v4385 = vadd.f32 %v3982, %v4287
      %v4386 = vadd.f32 %v3983, %v4292
      %v4387 = vadd.f32 %v3984, %v4297
      %v4388 = vadd.f32 %v3985, %v4302
      %v4389 = vadd.f32 %v3986, %v4307
      %v4390 = vadd.f32 %v3987, %v4312
      %v4391 = vadd.f32 %v3988, %v4317
      %v4392 = vadd.f32 %v3989, %v4322
      %v4393 = vadd.f32 %v3990, %v4327
      %v4394 = vadd.f32 %v3991, %v4332
      %v4395 = vadd.f32 %v3992, %v4337
      %v4396 = vadd.f32 %v3993, %v4342
      %v4397 = vadd.f32 %v3994, %v4347
      %v4398 = vadd.f32 %v3995, %v4352
      %v4399 = vadd.f32 %v3996, %v4357
      %v4400 = vadd.f32 %v3997, %v4362
      %v4401 = vadd.f32 %v3998, %v4367
      %s4402 = scalar_lea.vmem %s3, 96
      %v4403 = vld [vmem:[%s4402] sm:$0xff]
      %v4405 = vsel %vm638, %v446, 0
      %v4408 = vsel %vm638, %v447, 0
      %4410 = vmatprep.subr.mxu0 0.0
      %4411 = vmatpush1.msra.mxu0 0.0
      %4412 = vmatprep.subr.mxu0 0.0
      %4413 = vmatpush1.msra.mxu0 0.0
      %4414 = vmatprep.subr.mxu0 0.0
      %4415 = vmatpush1.msra.mxu0 0.0
      %4416 = vmatprep.subr.mxu0 0.0
      %4417 = vmatpush1.msra.mxu0 0.0
      %4418 = vmatprep.subr.mxu0 0.0
      %4419 = vmatpush1.msra.mxu0 0.0
      %4420 = vmatprep.subr.mxu0 0.0
      %4421 = vmatpush1.msra.mxu0 0.0
      %4422 = vmatprep.subr.mxu0 0.0
      %4423 = vmatpush1.msra.mxu0 0.0
      %4424 = vmatprep.subr.mxu0 0.0
      %4425 = vmatpush1.msra.mxu0 0.0
      %4426 = vmatprep.subr.mxu0 0.0
      %4427 = vmatpush1.msra.mxu0 0.0
      %4428 = vmatprep.subr.mxu0 0.0
      %4429 = vmatpush1.msra.mxu0 0.0
      %4430 = vmatprep.subr.mxu0 0.0
      %4431 = vmatpush1.msra.mxu0 0.0
      %4432 = vmatprep.subr.mxu0 0.0
      %4433 = vmatpush1.msra.mxu0 0.0
      %4434 = vmatprep.subr.mxu0 0.0
      %4435 = vmatpush1.msra.mxu0 0.0
      %4436 = vmatprep.subr.mxu0 0.0
      %4437 = vmatpush1.msra.mxu0 0.0
      %4438 = vmatprep.subr.mxu0 0.0
      %4439 = vmatpush1.msra.mxu0 0.0
      %4440 = vmatprep.subr.mxu0 0.0
      %4441 = vmatpush1.msra.mxu0 %v4403
      %4442 = vmatprep.subr.mxu0 0.0
      %4443 = vmatpush2.msra.mxu0 0.0
      %4444 = vmatprep.subr.mxu0 0.0
      %4445 = vmatpush2.msra.mxu0 0.0
      %4446 = vmatprep.subr.mxu0 0.0
      %4447 = vmatpush2.msra.mxu0 0.0
      %4448 = vmatprep.subr.mxu0 0.0
      %4449 = vmatpush2.msra.mxu0 0.0
      %4450 = vmatprep.subr.mxu0 0.0
      %4451 = vmatpush2.msra.mxu0 0.0
      %4452 = vmatprep.subr.mxu0 0.0
      %4453 = vmatpush2.msra.mxu0 0.0
      %4454 = vmatprep.subr.mxu0 0.0
      %4455 = vmatpush2.msra.mxu0 0.0
      %4456 = vmatprep.subr.mxu0 0.0
      %4457 = vmatpush2.msra.mxu0 0.0
      %4458 = vmatprep.subr.mxu0 0.0
      %4459 = vmatpush2.msra.mxu0 0.0
      %4460 = vmatprep.subr.mxu0 0.0
      %4461 = vmatpush2.msra.mxu0 0.0
      %4462 = vmatprep.subr.mxu0 0.0
      %4463 = vmatpush2.msra.mxu0 0.0
      %4464 = vmatprep.subr.mxu0 0.0
      %4465 = vmatpush2.msra.mxu0 0.0
      %4466 = vmatprep.subr.mxu0 0.0
      %4467 = vmatpush2.msra.mxu0 0.0
      %4468 = vmatprep.subr.mxu0 0.0
      %4469 = vmatpush2.msra.mxu0 0.0
      %4470 = vmatprep.subr.mxu0 0.0
      %4471 = vmatpush2.msra.mxu0 0.0
      %4472 = vmatprep.subr.mxu0 0.0
      %4473 = vmatpush2.msra.mxu0 0.0
      %4474 = vmatprep.mubr.f32.mxu0 0.0
      %4475 = vmatmul.mubr.f32.gmra.mxu0 %v3234
      %v4476 = vpop.f32.mrf.mxu0
      %v4477 = vadd.f32 0.0, %v4476
      %v4478 = vpop.f32.mrf.mxu0
      %4479 = vmatprep.mubr.f32.mxu0 0.0
      %4480 = vmatmul.mubr.f32.gmra.mxu0 %v3237
      %v4481 = vpop.f32.mrf.mxu0
      %v4482 = vadd.f32 0.0, %v4481
      %v4483 = vpop.f32.mrf.mxu0
      %4484 = vmatprep.mubr.f32.mxu0 0.0
      %4485 = vmatmul.mubr.f32.gmra.mxu0 %v3240
      %v4486 = vpop.f32.mrf.mxu0
      %v4487 = vadd.f32 0.0, %v4486
      %v4488 = vpop.f32.mrf.mxu0
      %4489 = vmatprep.mubr.f32.mxu0 0.0
      %4490 = vmatmul.mubr.f32.gmra.mxu0 %v3243
      %v4491 = vpop.f32.mrf.mxu0
      %v4492 = vadd.f32 0.0, %v4491
      %v4493 = vpop.f32.mrf.mxu0
      %4494 = vmatprep.mubr.f32.mxu0 0.0
      %4495 = vmatmul.mubr.f32.gmra.mxu0 %v3246
      %v4496 = vpop.f32.mrf.mxu0
      %v4497 = vadd.f32 0.0, %v4496
      %v4498 = vpop.f32.mrf.mxu0
      %4499 = vmatprep.mubr.f32.mxu0 0.0
      %4500 = vmatmul.mubr.f32.gmra.mxu0 %v3249
      %v4501 = vpop.f32.mrf.mxu0
      %v4502 = vadd.f32 0.0, %v4501
      %v4503 = vpop.f32.mrf.mxu0
      %4504 = vmatprep.mubr.f32.mxu0 0.0
      %4505 = vmatmul.mubr.f32.gmra.mxu0 %v3252
      %v4506 = vpop.f32.mrf.mxu0
      %v4507 = vadd.f32 0.0, %v4506
      %v4508 = vpop.f32.mrf.mxu0
      %4509 = vmatprep.mubr.f32.mxu0 0.0
      %4510 = vmatmul.mubr.f32.gmra.mxu0 %v3255
      %v4511 = vpop.f32.mrf.mxu0
      %v4512 = vadd.f32 0.0, %v4511
      %v4513 = vpop.f32.mrf.mxu0
      %4514 = vmatprep.mubr.f32.mxu0 0.0
      %4515 = vmatmul.mubr.f32.gmra.mxu0 %v3258
      %v4516 = vpop.f32.mrf.mxu0
      %v4517 = vadd.f32 0.0, %v4516
      %v4518 = vpop.f32.mrf.mxu0
      %4519 = vmatprep.mubr.f32.mxu0 0.0
      %4520 = vmatmul.mubr.f32.gmra.mxu0 %v3261
      %v4521 = vpop.f32.mrf.mxu0
      %v4522 = vadd.f32 0.0, %v4521
      %v4523 = vpop.f32.mrf.mxu0
      %4524 = vmatprep.mubr.f32.mxu0 0.0
      %4525 = vmatmul.mubr.f32.gmra.mxu0 %v3264
      %v4526 = vpop.f32.mrf.mxu0
      %v4527 = vadd.f32 0.0, %v4526
      %v4528 = vpop.f32.mrf.mxu0
      %4529 = vmatprep.mubr.f32.mxu0 0.0
      %4530 = vmatmul.mubr.f32.gmra.mxu0 %v3267
      %v4531 = vpop.f32.mrf.mxu0
      %v4532 = vadd.f32 0.0, %v4531
      %v4533 = vpop.f32.mrf.mxu0
      %4534 = vmatprep.mubr.f32.mxu0 0.0
      %4535 = vmatmul.mubr.f32.gmra.mxu0 %v3270
      %v4536 = vpop.f32.mrf.mxu0
      %v4537 = vadd.f32 0.0, %v4536
      %v4538 = vpop.f32.mrf.mxu0
      %4539 = vmatprep.mubr.f32.mxu0 0.0
      %4540 = vmatmul.mubr.f32.gmra.mxu0 %v3273
      %v4541 = vpop.f32.mrf.mxu0
      %v4542 = vadd.f32 0.0, %v4541
      %v4543 = vpop.f32.mrf.mxu0
      %4544 = vmatprep.mubr.f32.mxu0 0.0
      %4545 = vmatmul.mubr.f32.gmra.mxu0 %v3276
      %v4546 = vpop.f32.mrf.mxu0
      %v4547 = vadd.f32 0.0, %v4546
      %v4548 = vpop.f32.mrf.mxu0
      %4549 = vmatprep.mubr.f32.mxu0 0.0
      %4550 = vmatmul.mubr.f32.gmra.mxu0 %v3279
      %v4551 = vpop.f32.mrf.mxu0
      %v4552 = vadd.f32 0.0, %v4551
      %v4553 = vpop.f32.mrf.mxu0
      %4554 = vmatprep.mubr.f32.mxu0 0.0
      %4555 = vmatmul.mubr.f32.gmra.mxu0 %v3282
      %v4556 = vpop.f32.mrf.mxu0
      %v4557 = vadd.f32 0.0, %v4556
      %v4558 = vpop.f32.mrf.mxu0
      %4559 = vmatprep.mubr.f32.mxu0 0.0
      %4560 = vmatmul.mubr.f32.gmra.mxu0 %v3285
      %v4561 = vpop.f32.mrf.mxu0
      %v4562 = vadd.f32 0.0, %v4561
      %v4563 = vpop.f32.mrf.mxu0
      %4564 = vmatprep.mubr.f32.mxu0 0.0
      %4565 = vmatmul.mubr.f32.gmra.mxu0 %v3288
      %v4566 = vpop.f32.mrf.mxu0
      %v4567 = vadd.f32 0.0, %v4566
      %v4568 = vpop.f32.mrf.mxu0
      %4569 = vmatprep.mubr.f32.mxu0 0.0
      %4570 = vmatmul.mubr.f32.gmra.mxu0 %v3291
      %v4571 = vpop.f32.mrf.mxu0
      %v4572 = vadd.f32 0.0, %v4571
      %v4573 = vpop.f32.mrf.mxu0
      %4574 = vmatprep.mubr.f32.mxu0 0.0
      %4575 = vmatmul.mubr.f32.gmra.mxu0 %v3294
      %v4576 = vpop.f32.mrf.mxu0
      %v4577 = vadd.f32 0.0, %v4576
      %v4578 = vpop.f32.mrf.mxu0
      %4579 = vmatprep.mubr.f32.mxu0 0.0
      %4580 = vmatmul.mubr.f32.gmra.mxu0 %v3297
      %v4581 = vpop.f32.mrf.mxu0
      %v4582 = vadd.f32 0.0, %v4581
      %v4583 = vpop.f32.mrf.mxu0
      %4584 = vmatprep.mubr.f32.mxu0 0.0
      %4585 = vmatmul.mubr.f32.gmra.mxu0 %v3300
      %v4586 = vpop.f32.mrf.mxu0
      %v4587 = vadd.f32 0.0, %v4586
      %v4588 = vpop.f32.mrf.mxu0
      %4589 = vmatprep.mubr.f32.mxu0 0.0
      %4590 = vmatmul.mubr.f32.gmra.mxu0 %v3303
      %v4591 = vpop.f32.mrf.mxu0
      %v4592 = vadd.f32 0.0, %v4591
      %v4593 = vpop.f32.mrf.mxu0
      %4594 = vmatprep.mubr.f32.mxu0 0.0
      %4595 = vmatmul.mubr.f32.gmra.mxu0 %v3306
      %v4596 = vpop.f32.mrf.mxu0
      %v4597 = vadd.f32 0.0, %v4596
      %v4598 = vpop.f32.mrf.mxu0
      %4599 = vmatprep.mubr.f32.mxu0 0.0
      %4600 = vmatmul.mubr.f32.gmra.mxu0 %v3309
      %v4601 = vpop.f32.mrf.mxu0
      %v4602 = vadd.f32 0.0, %v4601
      %v4603 = vpop.f32.mrf.mxu0
      %4604 = vmatprep.mubr.f32.mxu0 0.0
      %4605 = vmatmul.mubr.f32.gmra.mxu0 %v3312
      %v4606 = vpop.f32.mrf.mxu0
      %v4607 = vadd.f32 0.0, %v4606
      %v4608 = vpop.f32.mrf.mxu0
      %4609 = vmatprep.mubr.f32.mxu0 0.0
      %4610 = vmatmul.mubr.f32.gmra.mxu0 %v3315
      %v4611 = vpop.f32.mrf.mxu0
      %v4612 = vadd.f32 0.0, %v4611
      %v4613 = vpop.f32.mrf.mxu0
      %4614 = vmatprep.mubr.f32.mxu0 0.0
      %4615 = vmatmul.mubr.f32.gmra.mxu0 %v3318
      %v4616 = vpop.f32.mrf.mxu0
      %v4617 = vadd.f32 0.0, %v4616
      %v4618 = vpop.f32.mrf.mxu0
      %4619 = vmatprep.mubr.f32.mxu0 0.0
      %4620 = vmatmul.mubr.f32.gmra.mxu0 %v3321
      %v4621 = vpop.f32.mrf.mxu0
      %v4622 = vadd.f32 0.0, %v4621
      %v4623 = vpop.f32.mrf.mxu0
      %4624 = vmatprep.mubr.f32.mxu0 0.0
      %4625 = vmatmul.mubr.f32.gmra.mxu0 %v4405
      %v4626 = vpop.f32.mrf.mxu0
      %v4627 = vadd.f32 0.0, %v4626
      %v4628 = vpop.f32.mrf.mxu0
      %4629 = vmatprep.mubr.f32.mxu0 0.0
      %4630 = vmatmul.mubr.f32.gmra.mxu0 %v4408
      %v4631 = vpop.f32.mrf.mxu0
      %v4632 = vadd.f32 0.0, %v4631
      %v4633 = vpop.f32.mrf.mxu0
      %4634 = vdwg.mxu0
      %v4635 = vadd.f32 %v4370, %v4477
      %v4636 = vadd.f32 %v4371, %v4482
      %v4637 = vadd.f32 %v4372, %v4487
      %v4638 = vadd.f32 %v4373, %v4492
      %v4639 = vadd.f32 %v4374, %v4497
      %v4640 = vadd.f32 %v4375, %v4502
      %v4641 = vadd.f32 %v4376, %v4507
      %v4642 = vadd.f32 %v4377, %v4512
      %v4643 = vadd.f32 %v4378, %v4517
      %v4644 = vadd.f32 %v4379, %v4522
      %v4645 = vadd.f32 %v4380, %v4527
      %v4646 = vadd.f32 %v4381, %v4532
      %v4647 = vadd.f32 %v4382, %v4537
      %v4648 = vadd.f32 %v4383, %v4542
      %v4649 = vadd.f32 %v4384, %v4547
      %v4650 = vadd.f32 %v4385, %v4552
      %v4651 = vadd.f32 %v4386, %v4557
      %v4652 = vadd.f32 %v4387, %v4562
      %v4653 = vadd.f32 %v4388, %v4567
      %v4654 = vadd.f32 %v4389, %v4572
      %v4655 = vadd.f32 %v4390, %v4577
      %v4656 = vadd.f32 %v4391, %v4582
      %v4657 = vadd.f32 %v4392, %v4587
      %v4658 = vadd.f32 %v4393, %v4592
      %v4659 = vadd.f32 %v4394, %v4597
      %v4660 = vadd.f32 %v4395, %v4602
      %v4661 = vadd.f32 %v4396, %v4607
      %v4662 = vadd.f32 %v4397, %v4612
      %v4663 = vadd.f32 %v4398, %v4617
      %v4664 = vadd.f32 %v4399, %v4622
      %v4665 = vadd.f32 %v4400, %v4627
      %v4666 = vadd.f32 %v4401, %v4632
      %v4668 = vrot.slane %v446, 1
      %v4669 = vrot.slane %v447, 1
      %v4670 = vsel %vm555, %v4668, %v4669
      %v4671 = vrot.slane %v448, 1
      %v4672 = vsel %vm555, %v4669, %v4671
      %s4673 = scalar_lea.vmem %s3, 104
      %v4674 = vld [vmem:[%s4673] sm:$0xff]
      %v4675 = vsel %vm638, %v4670, 0
      %v4677 = vsel %vm638, %v4672, 0
      %4679 = vmatprep.subr.mxu0 0.0
      %4680 = vmatpush1.msra.mxu0 0.0
      %4681 = vmatprep.subr.mxu0 0.0
      %4682 = vmatpush1.msra.mxu0 0.0
      %4683 = vmatprep.subr.mxu0 0.0
      %4684 = vmatpush1.msra.mxu0 0.0
      %4685 = vmatprep.subr.mxu0 0.0
      %4686 = vmatpush1.msra.mxu0 0.0
      %4687 = vmatprep.subr.mxu0 0.0
      %4688 = vmatpush1.msra.mxu0 0.0
      %4689 = vmatprep.subr.mxu0 0.0
      %4690 = vmatpush1.msra.mxu0 0.0
      %4691 = vmatprep.subr.mxu0 0.0
      %4692 = vmatpush1.msra.mxu0 0.0
      %4693 = vmatprep.subr.mxu0 0.0
      %4694 = vmatpush1.msra.mxu0 0.0
      %4695 = vmatprep.subr.mxu0 0.0
      %4696 = vmatpush1.msra.mxu0 0.0
      %4697 = vmatprep.subr.mxu0 0.0
      %4698 = vmatpush1.msra.mxu0 0.0
      %4699 = vmatprep.subr.mxu0 0.0
      %4700 = vmatpush1.msra.mxu0 0.0
      %4701 = vmatprep.subr.mxu0 0.0
      %4702 = vmatpush1.msra.mxu0 0.0
      %4703 = vmatprep.subr.mxu0 0.0
      %4704 = vmatpush1.msra.mxu0 0.0
      %4705 = vmatprep.subr.mxu0 0.0
      %4706 = vmatpush1.msra.mxu0 0.0
      %4707 = vmatprep.subr.mxu0 0.0
      %4708 = vmatpush1.msra.mxu0 0.0
      %4709 = vmatprep.subr.mxu0 0.0
      %4710 = vmatpush1.msra.mxu0 %v4674
      %4711 = vmatprep.subr.mxu0 0.0
      %4712 = vmatpush2.msra.mxu0 0.0
      %4713 = vmatprep.subr.mxu0 0.0
      %4714 = vmatpush2.msra.mxu0 0.0
      %4715 = vmatprep.subr.mxu0 0.0
      %4716 = vmatpush2.msra.mxu0 0.0
      %4717 = vmatprep.subr.mxu0 0.0
      %4718 = vmatpush2.msra.mxu0 0.0
      %4719 = vmatprep.subr.mxu0 0.0
      %4720 = vmatpush2.msra.mxu0 0.0
      %4721 = vmatprep.subr.mxu0 0.0
      %4722 = vmatpush2.msra.mxu0 0.0
      %4723 = vmatprep.subr.mxu0 0.0
      %4724 = vmatpush2.msra.mxu0 0.0
      %4725 = vmatprep.subr.mxu0 0.0
      %4726 = vmatpush2.msra.mxu0 0.0
      %4727 = vmatprep.subr.mxu0 0.0
      %4728 = vmatpush2.msra.mxu0 0.0
      %4729 = vmatprep.subr.mxu0 0.0
      %4730 = vmatpush2.msra.mxu0 0.0
      %4731 = vmatprep.subr.mxu0 0.0
      %4732 = vmatpush2.msra.mxu0 0.0
      %4733 = vmatprep.subr.mxu0 0.0
      %4734 = vmatpush2.msra.mxu0 0.0
      %4735 = vmatprep.subr.mxu0 0.0
      %4736 = vmatpush2.msra.mxu0 0.0
      %4737 = vmatprep.subr.mxu0 0.0
      %4738 = vmatpush2.msra.mxu0 0.0
      %4739 = vmatprep.subr.mxu0 0.0
      %4740 = vmatpush2.msra.mxu0 0.0
      %4741 = vmatprep.subr.mxu0 0.0
      %4742 = vmatpush2.msra.mxu0 0.0
      %4743 = vmatprep.mubr.f32.mxu0 0.0
      %4744 = vmatmul.mubr.f32.gmra.mxu0 %v3682
      %v4745 = vpop.f32.mrf.mxu0
      %v4746 = vadd.f32 0.0, %v4745
      %v4747 = vpop.f32.mrf.mxu0
      %4748 = vmatprep.mubr.f32.mxu0 0.0
      %4749 = vmatmul.mubr.f32.gmra.mxu0 %v3684
      %v4750 = vpop.f32.mrf.mxu0
      %v4751 = vadd.f32 0.0, %v4750
      %v4752 = vpop.f32.mrf.mxu0
      %4753 = vmatprep.mubr.f32.mxu0 0.0
      %4754 = vmatmul.mubr.f32.gmra.mxu0 %v3686
      %v4755 = vpop.f32.mrf.mxu0
      %v4756 = vadd.f32 0.0, %v4755
      %v4757 = vpop.f32.mrf.mxu0
      %4758 = vmatprep.mubr.f32.mxu0 0.0
      %4759 = vmatmul.mubr.f32.gmra.mxu0 %v3688
      %v4760 = vpop.f32.mrf.mxu0
      %v4761 = vadd.f32 0.0, %v4760
      %v4762 = vpop.f32.mrf.mxu0
      %4763 = vmatprep.mubr.f32.mxu0 0.0
      %4764 = vmatmul.mubr.f32.gmra.mxu0 %v3690
      %v4765 = vpop.f32.mrf.mxu0
      %v4766 = vadd.f32 0.0, %v4765
      %v4767 = vpop.f32.mrf.mxu0
      %4768 = vmatprep.mubr.f32.mxu0 0.0
      %4769 = vmatmul.mubr.f32.gmra.mxu0 %v3692
      %v4770 = vpop.f32.mrf.mxu0
      %v4771 = vadd.f32 0.0, %v4770
      %v4772 = vpop.f32.mrf.mxu0
      %4773 = vmatprep.mubr.f32.mxu0 0.0
      %4774 = vmatmul.mubr.f32.gmra.mxu0 %v3694
      %v4775 = vpop.f32.mrf.mxu0
      %v4776 = vadd.f32 0.0, %v4775
      %v4777 = vpop.f32.mrf.mxu0
      %4778 = vmatprep.mubr.f32.mxu0 0.0
      %4779 = vmatmul.mubr.f32.gmra.mxu0 %v3696
      %v4780 = vpop.f32.mrf.mxu0
      %v4781 = vadd.f32 0.0, %v4780
      %v4782 = vpop.f32.mrf.mxu0
      %4783 = vmatprep.mubr.f32.mxu0 0.0
      %4784 = vmatmul.mubr.f32.gmra.mxu0 %v3698
      %v4785 = vpop.f32.mrf.mxu0
      %v4786 = vadd.f32 0.0, %v4785
      %v4787 = vpop.f32.mrf.mxu0
      %4788 = vmatprep.mubr.f32.mxu0 0.0
      %4789 = vmatmul.mubr.f32.gmra.mxu0 %v3700
      %v4790 = vpop.f32.mrf.mxu0
      %v4791 = vadd.f32 0.0, %v4790
      %v4792 = vpop.f32.mrf.mxu0
      %4793 = vmatprep.mubr.f32.mxu0 0.0
      %4794 = vmatmul.mubr.f32.gmra.mxu0 %v3702
      %v4795 = vpop.f32.mrf.mxu0
      %v4796 = vadd.f32 0.0, %v4795
      %v4797 = vpop.f32.mrf.mxu0
      %4798 = vmatprep.mubr.f32.mxu0 0.0
      %4799 = vmatmul.mubr.f32.gmra.mxu0 %v3704
      %v4800 = vpop.f32.mrf.mxu0
      %v4801 = vadd.f32 0.0, %v4800
      %v4802 = vpop.f32.mrf.mxu0
      %4803 = vmatprep.mubr.f32.mxu0 0.0
      %4804 = vmatmul.mubr.f32.gmra.mxu0 %v3706
      %v4805 = vpop.f32.mrf.mxu0
      %v4806 = vadd.f32 0.0, %v4805
      %v4807 = vpop.f32.mrf.mxu0
      %4808 = vmatprep.mubr.f32.mxu0 0.0
      %4809 = vmatmul.mubr.f32.gmra.mxu0 %v3708
      %v4810 = vpop.f32.mrf.mxu0
      %v4811 = vadd.f32 0.0, %v4810
      %v4812 = vpop.f32.mrf.mxu0
      %4813 = vmatprep.mubr.f32.mxu0 0.0
      %4814 = vmatmul.mubr.f32.gmra.mxu0 %v3710
      %v4815 = vpop.f32.mrf.mxu0
      %v4816 = vadd.f32 0.0, %v4815
      %v4817 = vpop.f32.mrf.mxu0
      %4818 = vmatprep.mubr.f32.mxu0 0.0
      %4819 = vmatmul.mubr.f32.gmra.mxu0 %v3712
      %v4820 = vpop.f32.mrf.mxu0
      %v4821 = vadd.f32 0.0, %v4820
      %v4822 = vpop.f32.mrf.mxu0
      %4823 = vmatprep.mubr.f32.mxu0 0.0
      %4824 = vmatmul.mubr.f32.gmra.mxu0 %v3714
      %v4825 = vpop.f32.mrf.mxu0
      %v4826 = vadd.f32 0.0, %v4825
      %v4827 = vpop.f32.mrf.mxu0
      %4828 = vmatprep.mubr.f32.mxu0 0.0
      %4829 = vmatmul.mubr.f32.gmra.mxu0 %v3716
      %v4830 = vpop.f32.mrf.mxu0
      %v4831 = vadd.f32 0.0, %v4830
      %v4832 = vpop.f32.mrf.mxu0
      %4833 = vmatprep.mubr.f32.mxu0 0.0
      %4834 = vmatmul.mubr.f32.gmra.mxu0 %v3718
      %v4835 = vpop.f32.mrf.mxu0
      %v4836 = vadd.f32 0.0, %v4835
      %v4837 = vpop.f32.mrf.mxu0
      %4838 = vmatprep.mubr.f32.mxu0 0.0
      %4839 = vmatmul.mubr.f32.gmra.mxu0 %v3720
      %v4840 = vpop.f32.mrf.mxu0
      %v4841 = vadd.f32 0.0, %v4840
      %v4842 = vpop.f32.mrf.mxu0
      %4843 = vmatprep.mubr.f32.mxu0 0.0
      %4844 = vmatmul.mubr.f32.gmra.mxu0 %v3722
      %v4845 = vpop.f32.mrf.mxu0
      %v4846 = vadd.f32 0.0, %v4845
      %v4847 = vpop.f32.mrf.mxu0
      %4848 = vmatprep.mubr.f32.mxu0 0.0
      %4849 = vmatmul.mubr.f32.gmra.mxu0 %v3724
      %v4850 = vpop.f32.mrf.mxu0
      %v4851 = vadd.f32 0.0, %v4850
      %v4852 = vpop.f32.mrf.mxu0
      %4853 = vmatprep.mubr.f32.mxu0 0.0
      %4854 = vmatmul.mubr.f32.gmra.mxu0 %v3726
      %v4855 = vpop.f32.mrf.mxu0
      %v4856 = vadd.f32 0.0, %v4855
      %v4857 = vpop.f32.mrf.mxu0
      %4858 = vmatprep.mubr.f32.mxu0 0.0
      %4859 = vmatmul.mubr.f32.gmra.mxu0 %v3728
      %v4860 = vpop.f32.mrf.mxu0
      %v4861 = vadd.f32 0.0, %v4860
      %v4862 = vpop.f32.mrf.mxu0
      %4863 = vmatprep.mubr.f32.mxu0 0.0
      %4864 = vmatmul.mubr.f32.gmra.mxu0 %v3730
      %v4865 = vpop.f32.mrf.mxu0
      %v4866 = vadd.f32 0.0, %v4865
      %v4867 = vpop.f32.mrf.mxu0
      %4868 = vmatprep.mubr.f32.mxu0 0.0
      %4869 = vmatmul.mubr.f32.gmra.mxu0 %v3732
      %v4870 = vpop.f32.mrf.mxu0
      %v4871 = vadd.f32 0.0, %v4870
      %v4872 = vpop.f32.mrf.mxu0
      %4873 = vmatprep.mubr.f32.mxu0 0.0
      %4874 = vmatmul.mubr.f32.gmra.mxu0 %v3734
      %v4875 = vpop.f32.mrf.mxu0
      %v4876 = vadd.f32 0.0, %v4875
      %v4877 = vpop.f32.mrf.mxu0
      %4878 = vmatprep.mubr.f32.mxu0 0.0
      %4879 = vmatmul.mubr.f32.gmra.mxu0 %v3736
      %v4880 = vpop.f32.mrf.mxu0
      %v4881 = vadd.f32 0.0, %v4880
      %v4882 = vpop.f32.mrf.mxu0
      %4883 = vmatprep.mubr.f32.mxu0 0.0
      %4884 = vmatmul.mubr.f32.gmra.mxu0 %v3738
      %v4885 = vpop.f32.mrf.mxu0
      %v4886 = vadd.f32 0.0, %v4885
      %v4887 = vpop.f32.mrf.mxu0
      %4888 = vmatprep.mubr.f32.mxu0 0.0
      %4889 = vmatmul.mubr.f32.gmra.mxu0 %v3740
      %v4890 = vpop.f32.mrf.mxu0
      %v4891 = vadd.f32 0.0, %v4890
      %v4892 = vpop.f32.mrf.mxu0
      %4893 = vmatprep.mubr.f32.mxu0 0.0
      %4894 = vmatmul.mubr.f32.gmra.mxu0 %v4675
      %v4895 = vpop.f32.mrf.mxu0
      %v4896 = vadd.f32 0.0, %v4895
      %v4897 = vpop.f32.mrf.mxu0
      %4898 = vmatprep.mubr.f32.mxu0 0.0
      %4899 = vmatmul.mubr.f32.gmra.mxu0 %v4677
      %v4900 = vpop.f32.mrf.mxu0
      %v4901 = vadd.f32 0.0, %v4900
      %v4902 = vpop.f32.mrf.mxu0
      %4903 = vdwg.mxu0
      %v4904 = vadd.f32 %v4635, %v4746
      %v4905 = vadd.f32 %v4636, %v4751
      %v4906 = vadd.f32 %v4637, %v4756
      %v4907 = vadd.f32 %v4638, %v4761
      %v4908 = vadd.f32 %v4639, %v4766
      %v4909 = vadd.f32 %v4640, %v4771
      %v4910 = vadd.f32 %v4641, %v4776
      %v4911 = vadd.f32 %v4642, %v4781
      %v4912 = vadd.f32 %v4643, %v4786
      %v4913 = vadd.f32 %v4644, %v4791
      %v4914 = vadd.f32 %v4645, %v4796
      %v4915 = vadd.f32 %v4646, %v4801
      %v4916 = vadd.f32 %v4647, %v4806
      %v4917 = vadd.f32 %v4648, %v4811
      %v4918 = vadd.f32 %v4649, %v4816
      %v4919 = vadd.f32 %v4650, %v4821
      %v4920 = vadd.f32 %v4651, %v4826
      %v4921 = vadd.f32 %v4652, %v4831
      %v4922 = vadd.f32 %v4653, %v4836
      %v4923 = vadd.f32 %v4654, %v4841
      %v4924 = vadd.f32 %v4655, %v4846
      %v4925 = vadd.f32 %v4656, %v4851
      %v4926 = vadd.f32 %v4657, %v4856
      %v4927 = vadd.f32 %v4658, %v4861
      %v4928 = vadd.f32 %v4659, %v4866
      %v4929 = vadd.f32 %v4660, %v4871
      %v4930 = vadd.f32 %v4661, %v4876
      %v4931 = vadd.f32 %v4662, %v4881
      %v4932 = vadd.f32 %v4663, %v4886
      %v4933 = vadd.f32 %v4664, %v4891
      %v4934 = vadd.f32 %v4665, %v4896
      %v4935 = vadd.f32 %v4666, %v4901
      %v4936 = vrot.slane %v446, 2
      %v4937 = vrot.slane %v447, 2
      %v4938 = vsel %vm1217, %v4936, %v4937
      %v4939 = vrot.slane %v448, 2
      %v4940 = vsel %vm1217, %v4937, %v4939
      %s4941 = scalar_lea.vmem %s3, 112
      %v4942 = vld [vmem:[%s4941] sm:$0xff]
      %v4943 = vsel %vm638, %v4938, 0
      %v4945 = vsel %vm638, %v4940, 0
      %4947 = vmatprep.subr.mxu0 0.0
      %4948 = vmatpush1.msra.mxu0 0.0
      %4949 = vmatprep.subr.mxu0 0.0
      %4950 = vmatpush1.msra.mxu0 0.0
      %4951 = vmatprep.subr.mxu0 0.0
      %4952 = vmatpush1.msra.mxu0 0.0
      %4953 = vmatprep.subr.mxu0 0.0
      %4954 = vmatpush1.msra.mxu0 0.0
      %4955 = vmatprep.subr.mxu0 0.0
      %4956 = vmatpush1.msra.mxu0 0.0
      %4957 = vmatprep.subr.mxu0 0.0
      %4958 = vmatpush1.msra.mxu0 0.0
      %4959 = vmatprep.subr.mxu0 0.0
      %4960 = vmatpush1.msra.mxu0 0.0
      %4961 = vmatprep.subr.mxu0 0.0
      %4962 = vmatpush1.msra.mxu0 0.0
      %4963 = vmatprep.subr.mxu0 0.0
      %4964 = vmatpush1.msra.mxu0 0.0
      %4965 = vmatprep.subr.mxu0 0.0
      %4966 = vmatpush1.msra.mxu0 0.0
      %4967 = vmatprep.subr.mxu0 0.0
      %4968 = vmatpush1.msra.mxu0 0.0
      %4969 = vmatprep.subr.mxu0 0.0
      %4970 = vmatpush1.msra.mxu0 0.0
      %4971 = vmatprep.subr.mxu0 0.0
      %4972 = vmatpush1.msra.mxu0 0.0
      %4973 = vmatprep.subr.mxu0 0.0
      %4974 = vmatpush1.msra.mxu0 0.0
      %4975 = vmatprep.subr.mxu0 0.0
      %4976 = vmatpush1.msra.mxu0 0.0
      %4977 = vmatprep.subr.mxu0 0.0
      %4978 = vmatpush1.msra.mxu0 %v4942
      %4979 = vmatprep.subr.mxu0 0.0
      %4980 = vmatpush2.msra.mxu0 0.0
      %4981 = vmatprep.subr.mxu0 0.0
      %4982 = vmatpush2.msra.mxu0 0.0
      %4983 = vmatprep.subr.mxu0 0.0
      %4984 = vmatpush2.msra.mxu0 0.0
      %4985 = vmatprep.subr.mxu0 0.0
      %4986 = vmatpush2.msra.mxu0 0.0
      %4987 = vmatprep.subr.mxu0 0.0
      %4988 = vmatpush2.msra.mxu0 0.0
      %4989 = vmatprep.subr.mxu0 0.0
      %4990 = vmatpush2.msra.mxu0 0.0
      %4991 = vmatprep.subr.mxu0 0.0
      %4992 = vmatpush2.msra.mxu0 0.0
      %4993 = vmatprep.subr.mxu0 0.0
      %4994 = vmatpush2.msra.mxu0 0.0
      %4995 = vmatprep.subr.mxu0 0.0
      %4996 = vmatpush2.msra.mxu0 0.0
      %4997 = vmatprep.subr.mxu0 0.0
      %4998 = vmatpush2.msra.mxu0 0.0
      %4999 = vmatprep.subr.mxu0 0.0
      %5000 = vmatpush2.msra.mxu0 0.0
      %5001 = vmatprep.subr.mxu0 0.0
      %5002 = vmatpush2.msra.mxu0 0.0
      %5003 = vmatprep.subr.mxu0 0.0
      %5004 = vmatpush2.msra.mxu0 0.0
      %5005 = vmatprep.subr.mxu0 0.0
      %5006 = vmatpush2.msra.mxu0 0.0
      %5007 = vmatprep.subr.mxu0 0.0
      %5008 = vmatpush2.msra.mxu0 0.0
      %5009 = vmatprep.subr.mxu0 0.0
      %5010 = vmatpush2.msra.mxu0 0.0
      %5011 = vmatprep.mubr.f32.mxu0 0.0
      %5012 = vmatmul.mubr.f32.gmra.mxu0 %v4085
      %v5013 = vpop.f32.mrf.mxu0
      %v5014 = vadd.f32 0.0, %v5013
      %v5015 = vpop.f32.mrf.mxu0
      %5016 = vmatprep.mubr.f32.mxu0 0.0
      %5017 = vmatmul.mubr.f32.gmra.mxu0 %v4087
      %v5018 = vpop.f32.mrf.mxu0
      %v5019 = vadd.f32 0.0, %v5018
      %v5020 = vpop.f32.mrf.mxu0
      %5021 = vmatprep.mubr.f32.mxu0 0.0
      %5022 = vmatmul.mubr.f32.gmra.mxu0 %v4089
      %v5023 = vpop.f32.mrf.mxu0
      %v5024 = vadd.f32 0.0, %v5023
      %v5025 = vpop.f32.mrf.mxu0
      %5026 = vmatprep.mubr.f32.mxu0 0.0
      %5027 = vmatmul.mubr.f32.gmra.mxu0 %v4091
      %v5028 = vpop.f32.mrf.mxu0
      %v5029 = vadd.f32 0.0, %v5028
      %v5030 = vpop.f32.mrf.mxu0
      %5031 = vmatprep.mubr.f32.mxu0 0.0
      %5032 = vmatmul.mubr.f32.gmra.mxu0 %v4093
      %v5033 = vpop.f32.mrf.mxu0
      %v5034 = vadd.f32 0.0, %v5033
      %v5035 = vpop.f32.mrf.mxu0
      %5036 = vmatprep.mubr.f32.mxu0 0.0
      %5037 = vmatmul.mubr.f32.gmra.mxu0 %v4095
      %v5038 = vpop.f32.mrf.mxu0
      %v5039 = vadd.f32 0.0, %v5038
      %v5040 = vpop.f32.mrf.mxu0
      %5041 = vmatprep.mubr.f32.mxu0 0.0
      %5042 = vmatmul.mubr.f32.gmra.mxu0 %v4097
      %v5043 = vpop.f32.mrf.mxu0
      %v5044 = vadd.f32 0.0, %v5043
      %v5045 = vpop.f32.mrf.mxu0
      %5046 = vmatprep.mubr.f32.mxu0 0.0
      %5047 = vmatmul.mubr.f32.gmra.mxu0 %v4099
      %v5048 = vpop.f32.mrf.mxu0
      %v5049 = vadd.f32 0.0, %v5048
      %v5050 = vpop.f32.mrf.mxu0
      %5051 = vmatprep.mubr.f32.mxu0 0.0
      %5052 = vmatmul.mubr.f32.gmra.mxu0 %v4101
      %v5053 = vpop.f32.mrf.mxu0
      %v5054 = vadd.f32 0.0, %v5053
      %v5055 = vpop.f32.mrf.mxu0
      %5056 = vmatprep.mubr.f32.mxu0 0.0
      %5057 = vmatmul.mubr.f32.gmra.mxu0 %v4103
      %v5058 = vpop.f32.mrf.mxu0
      %v5059 = vadd.f32 0.0, %v5058
      %v5060 = vpop.f32.mrf.mxu0
      %5061 = vmatprep.mubr.f32.mxu0 0.0
      %5062 = vmatmul.mubr.f32.gmra.mxu0 %v4105
      %v5063 = vpop.f32.mrf.mxu0
      %v5064 = vadd.f32 0.0, %v5063
      %v5065 = vpop.f32.mrf.mxu0
      %5066 = vmatprep.mubr.f32.mxu0 0.0
      %5067 = vmatmul.mubr.f32.gmra.mxu0 %v4107
      %v5068 = vpop.f32.mrf.mxu0
      %v5069 = vadd.f32 0.0, %v5068
      %v5070 = vpop.f32.mrf.mxu0
      %5071 = vmatprep.mubr.f32.mxu0 0.0
      %5072 = vmatmul.mubr.f32.gmra.mxu0 %v4109
      %v5073 = vpop.f32.mrf.mxu0
      %v5074 = vadd.f32 0.0, %v5073
      %v5075 = vpop.f32.mrf.mxu0
      %5076 = vmatprep.mubr.f32.mxu0 0.0
      %5077 = vmatmul.mubr.f32.gmra.mxu0 %v4111
      %v5078 = vpop.f32.mrf.mxu0
      %v5079 = vadd.f32 0.0, %v5078
      %v5080 = vpop.f32.mrf.mxu0
      %5081 = vmatprep.mubr.f32.mxu0 0.0
      %5082 = vmatmul.mubr.f32.gmra.mxu0 %v4113
      %v5083 = vpop.f32.mrf.mxu0
      %v5084 = vadd.f32 0.0, %v5083
      %v5085 = vpop.f32.mrf.mxu0
      %5086 = vmatprep.mubr.f32.mxu0 0.0
      %5087 = vmatmul.mubr.f32.gmra.mxu0 %v4115
      %v5088 = vpop.f32.mrf.mxu0
      %v5089 = vadd.f32 0.0, %v5088
      %v5090 = vpop.f32.mrf.mxu0
      %5091 = vmatprep.mubr.f32.mxu0 0.0
      %5092 = vmatmul.mubr.f32.gmra.mxu0 %v4117
      %v5093 = vpop.f32.mrf.mxu0
      %v5094 = vadd.f32 0.0, %v5093
      %v5095 = vpop.f32.mrf.mxu0
      %5096 = vmatprep.mubr.f32.mxu0 0.0
      %5097 = vmatmul.mubr.f32.gmra.mxu0 %v4119
      %v5098 = vpop.f32.mrf.mxu0
      %v5099 = vadd.f32 0.0, %v5098
      %v5100 = vpop.f32.mrf.mxu0
      %5101 = vmatprep.mubr.f32.mxu0 0.0
      %5102 = vmatmul.mubr.f32.gmra.mxu0 %v4121
      %v5103 = vpop.f32.mrf.mxu0
      %v5104 = vadd.f32 0.0, %v5103
      %v5105 = vpop.f32.mrf.mxu0
      %5106 = vmatprep.mubr.f32.mxu0 0.0
      %5107 = vmatmul.mubr.f32.gmra.mxu0 %v4123
      %v5108 = vpop.f32.mrf.mxu0
      %v5109 = vadd.f32 0.0, %v5108
      %v5110 = vpop.f32.mrf.mxu0
      %5111 = vmatprep.mubr.f32.mxu0 0.0
      %5112 = vmatmul.mubr.f32.gmra.mxu0 %v4125
      %v5113 = vpop.f32.mrf.mxu0
      %v5114 = vadd.f32 0.0, %v5113
      %v5115 = vpop.f32.mrf.mxu0
      %5116 = vmatprep.mubr.f32.mxu0 0.0
      %5117 = vmatmul.mubr.f32.gmra.mxu0 %v4127
      %v5118 = vpop.f32.mrf.mxu0
      %v5119 = vadd.f32 0.0, %v5118
      %v5120 = vpop.f32.mrf.mxu0
      %5121 = vmatprep.mubr.f32.mxu0 0.0
      %5122 = vmatmul.mubr.f32.gmra.mxu0 %v4129
      %v5123 = vpop.f32.mrf.mxu0
      %v5124 = vadd.f32 0.0, %v5123
      %v5125 = vpop.f32.mrf.mxu0
      %5126 = vmatprep.mubr.f32.mxu0 0.0
      %5127 = vmatmul.mubr.f32.gmra.mxu0 %v4131
      %v5128 = vpop.f32.mrf.mxu0
      %v5129 = vadd.f32 0.0, %v5128
      %v5130 = vpop.f32.mrf.mxu0
      %5131 = vmatprep.mubr.f32.mxu0 0.0
      %5132 = vmatmul.mubr.f32.gmra.mxu0 %v4133
      %v5133 = vpop.f32.mrf.mxu0
      %v5134 = vadd.f32 0.0, %v5133
      %v5135 = vpop.f32.mrf.mxu0
      %5136 = vmatprep.mubr.f32.mxu0 0.0
      %5137 = vmatmul.mubr.f32.gmra.mxu0 %v4135
      %v5138 = vpop.f32.mrf.mxu0
      %v5139 = vadd.f32 0.0, %v5138
      %v5140 = vpop.f32.mrf.mxu0
      %5141 = vmatprep.mubr.f32.mxu0 0.0
      %5142 = vmatmul.mubr.f32.gmra.mxu0 %v4137
      %v5143 = vpop.f32.mrf.mxu0
      %v5144 = vadd.f32 0.0, %v5143
      %v5145 = vpop.f32.mrf.mxu0
      %5146 = vmatprep.mubr.f32.mxu0 0.0
      %5147 = vmatmul.mubr.f32.gmra.mxu0 %v4139
      %v5148 = vpop.f32.mrf.mxu0
      %v5149 = vadd.f32 0.0, %v5148
      %v5150 = vpop.f32.mrf.mxu0
      %5151 = vmatprep.mubr.f32.mxu0 0.0
      %5152 = vmatmul.mubr.f32.gmra.mxu0 %v4141
      %v5153 = vpop.f32.mrf.mxu0
      %v5154 = vadd.f32 0.0, %v5153
      %v5155 = vpop.f32.mrf.mxu0
      %5156 = vmatprep.mubr.f32.mxu0 0.0
      %5157 = vmatmul.mubr.f32.gmra.mxu0 %v4143
      %v5158 = vpop.f32.mrf.mxu0
      %v5159 = vadd.f32 0.0, %v5158
      %v5160 = vpop.f32.mrf.mxu0
      %5161 = vmatprep.mubr.f32.mxu0 0.0
      %5162 = vmatmul.mubr.f32.gmra.mxu0 %v4943
      %v5163 = vpop.f32.mrf.mxu0
      %v5164 = vadd.f32 0.0, %v5163
      %v5165 = vpop.f32.mrf.mxu0
      %5166 = vmatprep.mubr.f32.mxu0 0.0
      %5167 = vmatmul.mubr.f32.gmra.mxu0 %v4945
      %v5168 = vpop.f32.mrf.mxu0
      %v5169 = vadd.f32 0.0, %v5168
      %v5170 = vpop.f32.mrf.mxu0
      %5171 = vdwg.mxu0
      %v5172 = vadd.f32 %v4904, %v5014
      %v5173 = vadd.f32 %v4905, %v5019
      %v5174 = vadd.f32 %v4906, %v5024
      %v5175 = vadd.f32 %v4907, %v5029
      %v5176 = vadd.f32 %v4908, %v5034
      %v5177 = vadd.f32 %v4909, %v5039
      %v5178 = vadd.f32 %v4910, %v5044
      %v5179 = vadd.f32 %v4911, %v5049
      %v5180 = vadd.f32 %v4912, %v5054
      %v5181 = vadd.f32 %v4913, %v5059
      %v5182 = vadd.f32 %v4914, %v5064
      %v5183 = vadd.f32 %v4915, %v5069
      %v5184 = vadd.f32 %v4916, %v5074
      %v5185 = vadd.f32 %v4917, %v5079
      %v5186 = vadd.f32 %v4918, %v5084
      %v5187 = vadd.f32 %v4919, %v5089
      %v5188 = vadd.f32 %v4920, %v5094
      %v5189 = vadd.f32 %v4921, %v5099
      %v5190 = vadd.f32 %v4922, %v5104
      %v5191 = vadd.f32 %v4923, %v5109
      %v5192 = vadd.f32 %v4924, %v5114
      %v5193 = vadd.f32 %v4925, %v5119
      %v5194 = vadd.f32 %v4926, %v5124
      %v5195 = vadd.f32 %v4927, %v5129
      %v5196 = vadd.f32 %v4928, %v5134
      %v5197 = vadd.f32 %v4929, %v5139
      %v5198 = vadd.f32 %v4930, %v5144
      %v5199 = vadd.f32 %v4931, %v5149
      %v5200 = vadd.f32 %v4932, %v5154
      %v5201 = vadd.f32 %v4933, %v5159
      %v5202 = vadd.f32 %v4934, %v5164
      %v5203 = vadd.f32 %v4935, %v5169
      %s5204 = scalar_lea.vmem %s3, 120
      %v5205 = vld [vmem:[%s5204] sm:$0xff]
      %v5207 = vsel %vm638, %v449, 0
      %v5210 = vsel %vm638, %v450, 0
      %5212 = vmatprep.subr.mxu0 0.0
      %5213 = vmatpush1.msra.mxu0 0.0
      %5214 = vmatprep.subr.mxu0 0.0
      %5215 = vmatpush1.msra.mxu0 0.0
      %5216 = vmatprep.subr.mxu0 0.0
      %5217 = vmatpush1.msra.mxu0 0.0
      %5218 = vmatprep.subr.mxu0 0.0
      %5219 = vmatpush1.msra.mxu0 0.0
      %5220 = vmatprep.subr.mxu0 0.0
      %5221 = vmatpush1.msra.mxu0 0.0
      %5222 = vmatprep.subr.mxu0 0.0
      %5223 = vmatpush1.msra.mxu0 0.0
      %5224 = vmatprep.subr.mxu0 0.0
      %5225 = vmatpush1.msra.mxu0 0.0
      %5226 = vmatprep.subr.mxu0 0.0
      %5227 = vmatpush1.msra.mxu0 0.0
      %5228 = vmatprep.subr.mxu0 0.0
      %5229 = vmatpush1.msra.mxu0 0.0
      %5230 = vmatprep.subr.mxu0 0.0
      %5231 = vmatpush1.msra.mxu0 0.0
      %5232 = vmatprep.subr.mxu0 0.0
      %5233 = vmatpush1.msra.mxu0 0.0
      %5234 = vmatprep.subr.mxu0 0.0
      %5235 = vmatpush1.msra.mxu0 0.0
      %5236 = vmatprep.subr.mxu0 0.0
      %5237 = vmatpush1.msra.mxu0 0.0
      %5238 = vmatprep.subr.mxu0 0.0
      %5239 = vmatpush1.msra.mxu0 0.0
      %5240 = vmatprep.subr.mxu0 0.0
      %5241 = vmatpush1.msra.mxu0 0.0
      %5242 = vmatprep.subr.mxu0 0.0
      %5243 = vmatpush1.msra.mxu0 %v5205
      %5244 = vmatprep.subr.mxu0 0.0
      %5245 = vmatpush2.msra.mxu0 0.0
      %5246 = vmatprep.subr.mxu0 0.0
      %5247 = vmatpush2.msra.mxu0 0.0
      %5248 = vmatprep.subr.mxu0 0.0
      %5249 = vmatpush2.msra.mxu0 0.0
      %5250 = vmatprep.subr.mxu0 0.0
      %5251 = vmatpush2.msra.mxu0 0.0
      %5252 = vmatprep.subr.mxu0 0.0
      %5253 = vmatpush2.msra.mxu0 0.0
      %5254 = vmatprep.subr.mxu0 0.0
      %5255 = vmatpush2.msra.mxu0 0.0
      %5256 = vmatprep.subr.mxu0 0.0
      %5257 = vmatpush2.msra.mxu0 0.0
      %5258 = vmatprep.subr.mxu0 0.0
      %5259 = vmatpush2.msra.mxu0 0.0
      %5260 = vmatprep.subr.mxu0 0.0
      %5261 = vmatpush2.msra.mxu0 0.0
      %5262 = vmatprep.subr.mxu0 0.0
      %5263 = vmatpush2.msra.mxu0 0.0
      %5264 = vmatprep.subr.mxu0 0.0
      %5265 = vmatpush2.msra.mxu0 0.0
      %5266 = vmatprep.subr.mxu0 0.0
      %5267 = vmatpush2.msra.mxu0 0.0
      %5268 = vmatprep.subr.mxu0 0.0
      %5269 = vmatpush2.msra.mxu0 0.0
      %5270 = vmatprep.subr.mxu0 0.0
      %5271 = vmatpush2.msra.mxu0 0.0
      %5272 = vmatprep.subr.mxu0 0.0
      %5273 = vmatpush2.msra.mxu0 0.0
      %5274 = vmatprep.subr.mxu0 0.0
      %5275 = vmatpush2.msra.mxu0 0.0
      %5276 = vmatprep.mubr.f32.mxu0 0.0
      %5277 = vmatmul.mubr.f32.gmra.mxu0 %v3240
      %v5278 = vpop.f32.mrf.mxu0
      %v5279 = vadd.f32 0.0, %v5278
      %v5280 = vpop.f32.mrf.mxu0
      %5281 = vmatprep.mubr.f32.mxu0 0.0
      %5282 = vmatmul.mubr.f32.gmra.mxu0 %v3243
      %v5283 = vpop.f32.mrf.mxu0
      %v5284 = vadd.f32 0.0, %v5283
      %v5285 = vpop.f32.mrf.mxu0
      %5286 = vmatprep.mubr.f32.mxu0 0.0
      %5287 = vmatmul.mubr.f32.gmra.mxu0 %v3246
      %v5288 = vpop.f32.mrf.mxu0
      %v5289 = vadd.f32 0.0, %v5288
      %v5290 = vpop.f32.mrf.mxu0
      %5291 = vmatprep.mubr.f32.mxu0 0.0
      %5292 = vmatmul.mubr.f32.gmra.mxu0 %v3249
      %v5293 = vpop.f32.mrf.mxu0
      %v5294 = vadd.f32 0.0, %v5293
      %v5295 = vpop.f32.mrf.mxu0
      %5296 = vmatprep.mubr.f32.mxu0 0.0
      %5297 = vmatmul.mubr.f32.gmra.mxu0 %v3252
      %v5298 = vpop.f32.mrf.mxu0
      %v5299 = vadd.f32 0.0, %v5298
      %v5300 = vpop.f32.mrf.mxu0
      %5301 = vmatprep.mubr.f32.mxu0 0.0
      %5302 = vmatmul.mubr.f32.gmra.mxu0 %v3255
      %v5303 = vpop.f32.mrf.mxu0
      %v5304 = vadd.f32 0.0, %v5303
      %v5305 = vpop.f32.mrf.mxu0
      %5306 = vmatprep.mubr.f32.mxu0 0.0
      %5307 = vmatmul.mubr.f32.gmra.mxu0 %v3258
      %v5308 = vpop.f32.mrf.mxu0
      %v5309 = vadd.f32 0.0, %v5308
      %v5310 = vpop.f32.mrf.mxu0
      %5311 = vmatprep.mubr.f32.mxu0 0.0
      %5312 = vmatmul.mubr.f32.gmra.mxu0 %v3261
      %v5313 = vpop.f32.mrf.mxu0
      %v5314 = vadd.f32 0.0, %v5313
      %v5315 = vpop.f32.mrf.mxu0
      %5316 = vmatprep.mubr.f32.mxu0 0.0
      %5317 = vmatmul.mubr.f32.gmra.mxu0 %v3264
      %v5318 = vpop.f32.mrf.mxu0
      %v5319 = vadd.f32 0.0, %v5318
      %v5320 = vpop.f32.mrf.mxu0
      %5321 = vmatprep.mubr.f32.mxu0 0.0
      %5322 = vmatmul.mubr.f32.gmra.mxu0 %v3267
      %v5323 = vpop.f32.mrf.mxu0
      %v5324 = vadd.f32 0.0, %v5323
      %v5325 = vpop.f32.mrf.mxu0
      %5326 = vmatprep.mubr.f32.mxu0 0.0
      %5327 = vmatmul.mubr.f32.gmra.mxu0 %v3270
      %v5328 = vpop.f32.mrf.mxu0
      %v5329 = vadd.f32 0.0, %v5328
      %v5330 = vpop.f32.mrf.mxu0
      %5331 = vmatprep.mubr.f32.mxu0 0.0
      %5332 = vmatmul.mubr.f32.gmra.mxu0 %v3273
      %v5333 = vpop.f32.mrf.mxu0
      %v5334 = vadd.f32 0.0, %v5333
      %v5335 = vpop.f32.mrf.mxu0
      %5336 = vmatprep.mubr.f32.mxu0 0.0
      %5337 = vmatmul.mubr.f32.gmra.mxu0 %v3276
      %v5338 = vpop.f32.mrf.mxu0
      %v5339 = vadd.f32 0.0, %v5338
      %v5340 = vpop.f32.mrf.mxu0
      %5341 = vmatprep.mubr.f32.mxu0 0.0
      %5342 = vmatmul.mubr.f32.gmra.mxu0 %v3279
      %v5343 = vpop.f32.mrf.mxu0
      %v5344 = vadd.f32 0.0, %v5343
      %v5345 = vpop.f32.mrf.mxu0
      %5346 = vmatprep.mubr.f32.mxu0 0.0
      %5347 = vmatmul.mubr.f32.gmra.mxu0 %v3282
      %v5348 = vpop.f32.mrf.mxu0
      %v5349 = vadd.f32 0.0, %v5348
      %v5350 = vpop.f32.mrf.mxu0
      %5351 = vmatprep.mubr.f32.mxu0 0.0
      %5352 = vmatmul.mubr.f32.gmra.mxu0 %v3285
      %v5353 = vpop.f32.mrf.mxu0
      %v5354 = vadd.f32 0.0, %v5353
      %v5355 = vpop.f32.mrf.mxu0
      %5356 = vmatprep.mubr.f32.mxu0 0.0
      %5357 = vmatmul.mubr.f32.gmra.mxu0 %v3288
      %v5358 = vpop.f32.mrf.mxu0
      %v5359 = vadd.f32 0.0, %v5358
      %v5360 = vpop.f32.mrf.mxu0
      %5361 = vmatprep.mubr.f32.mxu0 0.0
      %5362 = vmatmul.mubr.f32.gmra.mxu0 %v3291
      %v5363 = vpop.f32.mrf.mxu0
      %v5364 = vadd.f32 0.0, %v5363
      %v5365 = vpop.f32.mrf.mxu0
      %5366 = vmatprep.mubr.f32.mxu0 0.0
      %5367 = vmatmul.mubr.f32.gmra.mxu0 %v3294
      %v5368 = vpop.f32.mrf.mxu0
      %v5369 = vadd.f32 0.0, %v5368
      %v5370 = vpop.f32.mrf.mxu0
      %5371 = vmatprep.mubr.f32.mxu0 0.0
      %5372 = vmatmul.mubr.f32.gmra.mxu0 %v3297
      %v5373 = vpop.f32.mrf.mxu0
      %v5374 = vadd.f32 0.0, %v5373
      %v5375 = vpop.f32.mrf.mxu0
      %5376 = vmatprep.mubr.f32.mxu0 0.0
      %5377 = vmatmul.mubr.f32.gmra.mxu0 %v3300
      %v5378 = vpop.f32.mrf.mxu0
      %v5379 = vadd.f32 0.0, %v5378
      %v5380 = vpop.f32.mrf.mxu0
      %5381 = vmatprep.mubr.f32.mxu0 0.0
      %5382 = vmatmul.mubr.f32.gmra.mxu0 %v3303
      %v5383 = vpop.f32.mrf.mxu0
      %v5384 = vadd.f32 0.0, %v5383
      %v5385 = vpop.f32.mrf.mxu0
      %5386 = vmatprep.mubr.f32.mxu0 0.0
      %5387 = vmatmul.mubr.f32.gmra.mxu0 %v3306
      %v5388 = vpop.f32.mrf.mxu0
      %v5389 = vadd.f32 0.0, %v5388
      %v5390 = vpop.f32.mrf.mxu0
      %5391 = vmatprep.mubr.f32.mxu0 0.0
      %5392 = vmatmul.mubr.f32.gmra.mxu0 %v3309
      %v5393 = vpop.f32.mrf.mxu0
      %v5394 = vadd.f32 0.0, %v5393
      %v5395 = vpop.f32.mrf.mxu0
      %5396 = vmatprep.mubr.f32.mxu0 0.0
      %5397 = vmatmul.mubr.f32.gmra.mxu0 %v3312
      %v5398 = vpop.f32.mrf.mxu0
      %v5399 = vadd.f32 0.0, %v5398
      %v5400 = vpop.f32.mrf.mxu0
      %5401 = vmatprep.mubr.f32.mxu0 0.0
      %5402 = vmatmul.mubr.f32.gmra.mxu0 %v3315
      %v5403 = vpop.f32.mrf.mxu0
      %v5404 = vadd.f32 0.0, %v5403
      %v5405 = vpop.f32.mrf.mxu0
      %5406 = vmatprep.mubr.f32.mxu0 0.0
      %5407 = vmatmul.mubr.f32.gmra.mxu0 %v3318
      %v5408 = vpop.f32.mrf.mxu0
      %v5409 = vadd.f32 0.0, %v5408
      %v5410 = vpop.f32.mrf.mxu0
      %5411 = vmatprep.mubr.f32.mxu0 0.0
      %5412 = vmatmul.mubr.f32.gmra.mxu0 %v3321
      %v5413 = vpop.f32.mrf.mxu0
      %v5414 = vadd.f32 0.0, %v5413
      %v5415 = vpop.f32.mrf.mxu0
      %5416 = vmatprep.mubr.f32.mxu0 0.0
      %5417 = vmatmul.mubr.f32.gmra.mxu0 %v4405
      %v5418 = vpop.f32.mrf.mxu0
      %v5419 = vadd.f32 0.0, %v5418
      %v5420 = vpop.f32.mrf.mxu0
      %5421 = vmatprep.mubr.f32.mxu0 0.0
      %5422 = vmatmul.mubr.f32.gmra.mxu0 %v4408
      %v5423 = vpop.f32.mrf.mxu0
      %v5424 = vadd.f32 0.0, %v5423
      %v5425 = vpop.f32.mrf.mxu0
      %5426 = vmatprep.mubr.f32.mxu0 0.0
      %5427 = vmatmul.mubr.f32.gmra.mxu0 %v5207
      %v5428 = vpop.f32.mrf.mxu0
      %v5429 = vadd.f32 0.0, %v5428
      %v5430 = vpop.f32.mrf.mxu0
      %5431 = vmatprep.mubr.f32.mxu0 0.0
      %5432 = vmatmul.mubr.f32.gmra.mxu0 %v5210
      %v5433 = vpop.f32.mrf.mxu0
      %v5434 = vadd.f32 0.0, %v5433
      %v5435 = vpop.f32.mrf.mxu0
      %5436 = vdwg.mxu0
      %v5437 = vadd.f32 %v5172, %v5279
      %v5438 = vadd.f32 %v5173, %v5284
      %v5439 = vadd.f32 %v5174, %v5289
      %v5440 = vadd.f32 %v5175, %v5294
      %v5441 = vadd.f32 %v5176, %v5299
      %v5442 = vadd.f32 %v5177, %v5304
      %v5443 = vadd.f32 %v5178, %v5309
      %v5444 = vadd.f32 %v5179, %v5314
      %v5445 = vadd.f32 %v5180, %v5319
      %v5446 = vadd.f32 %v5181, %v5324
      %v5447 = vadd.f32 %v5182, %v5329
      %v5448 = vadd.f32 %v5183, %v5334
      %v5449 = vadd.f32 %v5184, %v5339
      %v5450 = vadd.f32 %v5185, %v5344
      %v5451 = vadd.f32 %v5186, %v5349
      %v5452 = vadd.f32 %v5187, %v5354
      %v5453 = vadd.f32 %v5188, %v5359
      %v5454 = vadd.f32 %v5189, %v5364
      %v5455 = vadd.f32 %v5190, %v5369
      %v5456 = vadd.f32 %v5191, %v5374
      %v5457 = vadd.f32 %v5192, %v5379
      %v5458 = vadd.f32 %v5193, %v5384
      %v5459 = vadd.f32 %v5194, %v5389
      %v5460 = vadd.f32 %v5195, %v5394
      %v5461 = vadd.f32 %v5196, %v5399
      %v5462 = vadd.f32 %v5197, %v5404
      %v5463 = vadd.f32 %v5198, %v5409
      %v5464 = vadd.f32 %v5199, %v5414
      %v5465 = vadd.f32 %v5200, %v5419
      %v5466 = vadd.f32 %v5201, %v5424
      %v5467 = vadd.f32 %v5202, %v5429
      %v5468 = vadd.f32 %v5203, %v5434
      %v5470 = vrot.slane %v449, 1
      %v5471 = vrot.slane %v450, 1
      %v5472 = vsel %vm555, %v5470, %v5471
      %v5473 = vrot.slane %v451, 1
      %v5474 = vsel %vm555, %v5471, %v5473
      %s5475 = scalar_lea.vmem %s3, 128
      %v5476 = vld [vmem:[%s5475] sm:$0xff]
      %v5477 = vsel %vm638, %v5472, 0
      %v5479 = vsel %vm638, %v5474, 0
      %5481 = vmatprep.subr.mxu0 0.0
      %5482 = vmatpush1.msra.mxu0 0.0
      %5483 = vmatprep.subr.mxu0 0.0
      %5484 = vmatpush1.msra.mxu0 0.0
      %5485 = vmatprep.subr.mxu0 0.0
      %5486 = vmatpush1.msra.mxu0 0.0
      %5487 = vmatprep.subr.mxu0 0.0
      %5488 = vmatpush1.msra.mxu0 0.0
      %5489 = vmatprep.subr.mxu0 0.0
      %5490 = vmatpush1.msra.mxu0 0.0
      %5491 = vmatprep.subr.mxu0 0.0
      %5492 = vmatpush1.msra.mxu0 0.0
      %5493 = vmatprep.subr.mxu0 0.0
      %5494 = vmatpush1.msra.mxu0 0.0
      %5495 = vmatprep.subr.mxu0 0.0
      %5496 = vmatpush1.msra.mxu0 0.0
      %5497 = vmatprep.subr.mxu0 0.0
      %5498 = vmatpush1.msra.mxu0 0.0
      %5499 = vmatprep.subr.mxu0 0.0
      %5500 = vmatpush1.msra.mxu0 0.0
      %5501 = vmatprep.subr.mxu0 0.0
      %5502 = vmatpush1.msra.mxu0 0.0
      %5503 = vmatprep.subr.mxu0 0.0
      %5504 = vmatpush1.msra.mxu0 0.0
      %5505 = vmatprep.subr.mxu0 0.0
      %5506 = vmatpush1.msra.mxu0 0.0
      %5507 = vmatprep.subr.mxu0 0.0
      %5508 = vmatpush1.msra.mxu0 0.0
      %5509 = vmatprep.subr.mxu0 0.0
      %5510 = vmatpush1.msra.mxu0 0.0
      %5511 = vmatprep.subr.mxu0 0.0
      %5512 = vmatpush1.msra.mxu0 %v5476
      %5513 = vmatprep.subr.mxu0 0.0
      %5514 = vmatpush2.msra.mxu0 0.0
      %5515 = vmatprep.subr.mxu0 0.0
      %5516 = vmatpush2.msra.mxu0 0.0
      %5517 = vmatprep.subr.mxu0 0.0
      %5518 = vmatpush2.msra.mxu0 0.0
      %5519 = vmatprep.subr.mxu0 0.0
      %5520 = vmatpush2.msra.mxu0 0.0
      %5521 = vmatprep.subr.mxu0 0.0
      %5522 = vmatpush2.msra.mxu0 0.0
      %5523 = vmatprep.subr.mxu0 0.0
      %5524 = vmatpush2.msra.mxu0 0.0
      %5525 = vmatprep.subr.mxu0 0.0
      %5526 = vmatpush2.msra.mxu0 0.0
      %5527 = vmatprep.subr.mxu0 0.0
      %5528 = vmatpush2.msra.mxu0 0.0
      %5529 = vmatprep.subr.mxu0 0.0
      %5530 = vmatpush2.msra.mxu0 0.0
      %5531 = vmatprep.subr.mxu0 0.0
      %5532 = vmatpush2.msra.mxu0 0.0
      %5533 = vmatprep.subr.mxu0 0.0
      %5534 = vmatpush2.msra.mxu0 0.0
      %5535 = vmatprep.subr.mxu0 0.0
      %5536 = vmatpush2.msra.mxu0 0.0
      %5537 = vmatprep.subr.mxu0 0.0
      %5538 = vmatpush2.msra.mxu0 0.0
      %5539 = vmatprep.subr.mxu0 0.0
      %5540 = vmatpush2.msra.mxu0 0.0
      %5541 = vmatprep.subr.mxu0 0.0
      %5542 = vmatpush2.msra.mxu0 0.0
      %5543 = vmatprep.subr.mxu0 0.0
      %5544 = vmatpush2.msra.mxu0 0.0
      %5545 = vmatprep.mubr.f32.mxu0 0.0
      %5546 = vmatmul.mubr.f32.gmra.mxu0 %v3686
      %v5547 = vpop.f32.mrf.mxu0
      %v5548 = vadd.f32 0.0, %v5547
      %v5549 = vpop.f32.mrf.mxu0
      %5550 = vmatprep.mubr.f32.mxu0 0.0
      %5551 = vmatmul.mubr.f32.gmra.mxu0 %v3688
      %v5552 = vpop.f32.mrf.mxu0
      %v5553 = vadd.f32 0.0, %v5552
      %v5554 = vpop.f32.mrf.mxu0
      %5555 = vmatprep.mubr.f32.mxu0 0.0
      %5556 = vmatmul.mubr.f32.gmra.mxu0 %v3690
      %v5557 = vpop.f32.mrf.mxu0
      %v5558 = vadd.f32 0.0, %v5557
      %v5559 = vpop.f32.mrf.mxu0
      %5560 = vmatprep.mubr.f32.mxu0 0.0
      %5561 = vmatmul.mubr.f32.gmra.mxu0 %v3692
      %v5562 = vpop.f32.mrf.mxu0
      %v5563 = vadd.f32 0.0, %v5562
      %v5564 = vpop.f32.mrf.mxu0
      %5565 = vmatprep.mubr.f32.mxu0 0.0
      %5566 = vmatmul.mubr.f32.gmra.mxu0 %v3694
      %v5567 = vpop.f32.mrf.mxu0
      %v5568 = vadd.f32 0.0, %v5567
      %v5569 = vpop.f32.mrf.mxu0
      %5570 = vmatprep.mubr.f32.mxu0 0.0
      %5571 = vmatmul.mubr.f32.gmra.mxu0 %v3696
      %v5572 = vpop.f32.mrf.mxu0
      %v5573 = vadd.f32 0.0, %v5572
      %v5574 = vpop.f32.mrf.mxu0
      %5575 = vmatprep.mubr.f32.mxu0 0.0
      %5576 = vmatmul.mubr.f32.gmra.mxu0 %v3698
      %v5577 = vpop.f32.mrf.mxu0
      %v5578 = vadd.f32 0.0, %v5577
      %v5579 = vpop.f32.mrf.mxu0
      %5580 = vmatprep.mubr.f32.mxu0 0.0
      %5581 = vmatmul.mubr.f32.gmra.mxu0 %v3700
      %v5582 = vpop.f32.mrf.mxu0
      %v5583 = vadd.f32 0.0, %v5582
      %v5584 = vpop.f32.mrf.mxu0
      %5585 = vmatprep.mubr.f32.mxu0 0.0
      %5586 = vmatmul.mubr.f32.gmra.mxu0 %v3702
      %v5587 = vpop.f32.mrf.mxu0
      %v5588 = vadd.f32 0.0, %v5587
      %v5589 = vpop.f32.mrf.mxu0
      %5590 = vmatprep.mubr.f32.mxu0 0.0
      %5591 = vmatmul.mubr.f32.gmra.mxu0 %v3704
      %v5592 = vpop.f32.mrf.mxu0
      %v5593 = vadd.f32 0.0, %v5592
      %v5594 = vpop.f32.mrf.mxu0
      %5595 = vmatprep.mubr.f32.mxu0 0.0
      %5596 = vmatmul.mubr.f32.gmra.mxu0 %v3706
      %v5597 = vpop.f32.mrf.mxu0
      %v5598 = vadd.f32 0.0, %v5597
      %v5599 = vpop.f32.mrf.mxu0
      %5600 = vmatprep.mubr.f32.mxu0 0.0
      %5601 = vmatmul.mubr.f32.gmra.mxu0 %v3708
      %v5602 = vpop.f32.mrf.mxu0
      %v5603 = vadd.f32 0.0, %v5602
      %v5604 = vpop.f32.mrf.mxu0
      %5605 = vmatprep.mubr.f32.mxu0 0.0
      %5606 = vmatmul.mubr.f32.gmra.mxu0 %v3710
      %v5607 = vpop.f32.mrf.mxu0
      %v5608 = vadd.f32 0.0, %v5607
      %v5609 = vpop.f32.mrf.mxu0
      %5610 = vmatprep.mubr.f32.mxu0 0.0
      %5611 = vmatmul.mubr.f32.gmra.mxu0 %v3712
      %v5612 = vpop.f32.mrf.mxu0
      %v5613 = vadd.f32 0.0, %v5612
      %v5614 = vpop.f32.mrf.mxu0
      %5615 = vmatprep.mubr.f32.mxu0 0.0
      %5616 = vmatmul.mubr.f32.gmra.mxu0 %v3714
      %v5617 = vpop.f32.mrf.mxu0
      %v5618 = vadd.f32 0.0, %v5617
      %v5619 = vpop.f32.mrf.mxu0
      %5620 = vmatprep.mubr.f32.mxu0 0.0
      %5621 = vmatmul.mubr.f32.gmra.mxu0 %v3716
      %v5622 = vpop.f32.mrf.mxu0
      %v5623 = vadd.f32 0.0, %v5622
      %v5624 = vpop.f32.mrf.mxu0
      %5625 = vmatprep.mubr.f32.mxu0 0.0
      %5626 = vmatmul.mubr.f32.gmra.mxu0 %v3718
      %v5627 = vpop.f32.mrf.mxu0
      %v5628 = vadd.f32 0.0, %v5627
      %v5629 = vpop.f32.mrf.mxu0
      %5630 = vmatprep.mubr.f32.mxu0 0.0
      %5631 = vmatmul.mubr.f32.gmra.mxu0 %v3720
      %v5632 = vpop.f32.mrf.mxu0
      %v5633 = vadd.f32 0.0, %v5632
      %v5634 = vpop.f32.mrf.mxu0
      %5635 = vmatprep.mubr.f32.mxu0 0.0
      %5636 = vmatmul.mubr.f32.gmra.mxu0 %v3722
      %v5637 = vpop.f32.mrf.mxu0
      %v5638 = vadd.f32 0.0, %v5637
      %v5639 = vpop.f32.mrf.mxu0
      %5640 = vmatprep.mubr.f32.mxu0 0.0
      %5641 = vmatmul.mubr.f32.gmra.mxu0 %v3724
      %v5642 = vpop.f32.mrf.mxu0
      %v5643 = vadd.f32 0.0, %v5642
      %v5644 = vpop.f32.mrf.mxu0
      %5645 = vmatprep.mubr.f32.mxu0 0.0
      %5646 = vmatmul.mubr.f32.gmra.mxu0 %v3726
      %v5647 = vpop.f32.mrf.mxu0
      %v5648 = vadd.f32 0.0, %v5647
      %v5649 = vpop.f32.mrf.mxu0
      %5650 = vmatprep.mubr.f32.mxu0 0.0
      %5651 = vmatmul.mubr.f32.gmra.mxu0 %v3728
      %v5652 = vpop.f32.mrf.mxu0
      %v5653 = vadd.f32 0.0, %v5652
      %v5654 = vpop.f32.mrf.mxu0
      %5655 = vmatprep.mubr.f32.mxu0 0.0
      %5656 = vmatmul.mubr.f32.gmra.mxu0 %v3730
      %v5657 = vpop.f32.mrf.mxu0
      %v5658 = vadd.f32 0.0, %v5657
      %v5659 = vpop.f32.mrf.mxu0
      %5660 = vmatprep.mubr.f32.mxu0 0.0
      %5661 = vmatmul.mubr.f32.gmra.mxu0 %v3732
      %v5662 = vpop.f32.mrf.mxu0
      %v5663 = vadd.f32 0.0, %v5662
      %v5664 = vpop.f32.mrf.mxu0
      %5665 = vmatprep.mubr.f32.mxu0 0.0
      %5666 = vmatmul.mubr.f32.gmra.mxu0 %v3734
      %v5667 = vpop.f32.mrf.mxu0
      %v5668 = vadd.f32 0.0, %v5667
      %v5669 = vpop.f32.mrf.mxu0
      %5670 = vmatprep.mubr.f32.mxu0 0.0
      %5671 = vmatmul.mubr.f32.gmra.mxu0 %v3736
      %v5672 = vpop.f32.mrf.mxu0
      %v5673 = vadd.f32 0.0, %v5672
      %v5674 = vpop.f32.mrf.mxu0
      %5675 = vmatprep.mubr.f32.mxu0 0.0
      %5676 = vmatmul.mubr.f32.gmra.mxu0 %v3738
      %v5677 = vpop.f32.mrf.mxu0
      %v5678 = vadd.f32 0.0, %v5677
      %v5679 = vpop.f32.mrf.mxu0
      %5680 = vmatprep.mubr.f32.mxu0 0.0
      %5681 = vmatmul.mubr.f32.gmra.mxu0 %v3740
      %v5682 = vpop.f32.mrf.mxu0
      %v5683 = vadd.f32 0.0, %v5682
      %v5684 = vpop.f32.mrf.mxu0
      %5685 = vmatprep.mubr.f32.mxu0 0.0
      %5686 = vmatmul.mubr.f32.gmra.mxu0 %v4675
      %v5687 = vpop.f32.mrf.mxu0
      %v5688 = vadd.f32 0.0, %v5687
      %v5689 = vpop.f32.mrf.mxu0
      %5690 = vmatprep.mubr.f32.mxu0 0.0
      %5691 = vmatmul.mubr.f32.gmra.mxu0 %v4677
      %v5692 = vpop.f32.mrf.mxu0
      %v5693 = vadd.f32 0.0, %v5692
      %v5694 = vpop.f32.mrf.mxu0
      %5695 = vmatprep.mubr.f32.mxu0 0.0
      %5696 = vmatmul.mubr.f32.gmra.mxu0 %v5477
      %v5697 = vpop.f32.mrf.mxu0
      %v5698 = vadd.f32 0.0, %v5697
      %v5699 = vpop.f32.mrf.mxu0
      %5700 = vmatprep.mubr.f32.mxu0 0.0
      %5701 = vmatmul.mubr.f32.gmra.mxu0 %v5479
      %v5702 = vpop.f32.mrf.mxu0
      %v5703 = vadd.f32 0.0, %v5702
      %v5704 = vpop.f32.mrf.mxu0
      %5705 = vdwg.mxu0
      %v5706 = vadd.f32 %v5437, %v5548
      %v5707 = vadd.f32 %v5438, %v5553
      %v5708 = vadd.f32 %v5439, %v5558
      %v5709 = vadd.f32 %v5440, %v5563
      %v5710 = vadd.f32 %v5441, %v5568
      %v5711 = vadd.f32 %v5442, %v5573
      %v5712 = vadd.f32 %v5443, %v5578
      %v5713 = vadd.f32 %v5444, %v5583
      %v5714 = vadd.f32 %v5445, %v5588
      %v5715 = vadd.f32 %v5446, %v5593
      %v5716 = vadd.f32 %v5447, %v5598
      %v5717 = vadd.f32 %v5448, %v5603
      %v5718 = vadd.f32 %v5449, %v5608
      %v5719 = vadd.f32 %v5450, %v5613
      %v5720 = vadd.f32 %v5451, %v5618
      %v5721 = vadd.f32 %v5452, %v5623
      %v5722 = vadd.f32 %v5453, %v5628
      %v5723 = vadd.f32 %v5454, %v5633
      %v5724 = vadd.f32 %v5455, %v5638
      %v5725 = vadd.f32 %v5456, %v5643
      %v5726 = vadd.f32 %v5457, %v5648
      %v5727 = vadd.f32 %v5458, %v5653
      %v5728 = vadd.f32 %v5459, %v5658
      %v5729 = vadd.f32 %v5460, %v5663
      %v5730 = vadd.f32 %v5461, %v5668
      %v5731 = vadd.f32 %v5462, %v5673
      %v5732 = vadd.f32 %v5463, %v5678
      %v5733 = vadd.f32 %v5464, %v5683
      %v5734 = vadd.f32 %v5465, %v5688
      %v5735 = vadd.f32 %v5466, %v5693
      %v5736 = vadd.f32 %v5467, %v5698
      %v5737 = vadd.f32 %v5468, %v5703
      %v5738 = vrot.slane %v449, 2
      %v5739 = vrot.slane %v450, 2
      %v5740 = vsel %vm1217, %v5738, %v5739
      %v5741 = vrot.slane %v451, 2
      %v5742 = vsel %vm1217, %v5739, %v5741
      %s5743 = scalar_lea.vmem %s3, 136
      %v5744 = vld [vmem:[%s5743] sm:$0xff]
      %v5745 = vsel %vm638, %v5740, 0
      %v5747 = vsel %vm638, %v5742, 0
      %5749 = vmatprep.subr.mxu0 0.0
      %5750 = vmatpush1.msra.mxu0 0.0
      %5751 = vmatprep.subr.mxu0 0.0
      %5752 = vmatpush1.msra.mxu0 0.0
      %5753 = vmatprep.subr.mxu0 0.0
      %5754 = vmatpush1.msra.mxu0 0.0
      %5755 = vmatprep.subr.mxu0 0.0
      %5756 = vmatpush1.msra.mxu0 0.0
      %5757 = vmatprep.subr.mxu0 0.0
      %5758 = vmatpush1.msra.mxu0 0.0
      %5759 = vmatprep.subr.mxu0 0.0
      %5760 = vmatpush1.msra.mxu0 0.0
      %5761 = vmatprep.subr.mxu0 0.0
      %5762 = vmatpush1.msra.mxu0 0.0
      %5763 = vmatprep.subr.mxu0 0.0
      %5764 = vmatpush1.msra.mxu0 0.0
      %5765 = vmatprep.subr.mxu0 0.0
      %5766 = vmatpush1.msra.mxu0 0.0
      %5767 = vmatprep.subr.mxu0 0.0
      %5768 = vmatpush1.msra.mxu0 0.0
      %5769 = vmatprep.subr.mxu0 0.0
      %5770 = vmatpush1.msra.mxu0 0.0
      %5771 = vmatprep.subr.mxu0 0.0
      %5772 = vmatpush1.msra.mxu0 0.0
      %5773 = vmatprep.subr.mxu0 0.0
      %5774 = vmatpush1.msra.mxu0 0.0
      %5775 = vmatprep.subr.mxu0 0.0
      %5776 = vmatpush1.msra.mxu0 0.0
      %5777 = vmatprep.subr.mxu0 0.0
      %5778 = vmatpush1.msra.mxu0 0.0
      %5779 = vmatprep.subr.mxu0 0.0
      %5780 = vmatpush1.msra.mxu0 %v5744
      %5781 = vmatprep.subr.mxu0 0.0
      %5782 = vmatpush2.msra.mxu0 0.0
      %5783 = vmatprep.subr.mxu0 0.0
      %5784 = vmatpush2.msra.mxu0 0.0
      %5785 = vmatprep.subr.mxu0 0.0
      %5786 = vmatpush2.msra.mxu0 0.0
      %5787 = vmatprep.subr.mxu0 0.0
      %5788 = vmatpush2.msra.mxu0 0.0
      %5789 = vmatprep.subr.mxu0 0.0
      %5790 = vmatpush2.msra.mxu0 0.0
      %5791 = vmatprep.subr.mxu0 0.0
      %5792 = vmatpush2.msra.mxu0 0.0
      %5793 = vmatprep.subr.mxu0 0.0
      %5794 = vmatpush2.msra.mxu0 0.0
      %5795 = vmatprep.subr.mxu0 0.0
      %5796 = vmatpush2.msra.mxu0 0.0
      %5797 = vmatprep.subr.mxu0 0.0
      %5798 = vmatpush2.msra.mxu0 0.0
      %5799 = vmatprep.subr.mxu0 0.0
      %5800 = vmatpush2.msra.mxu0 0.0
      %5801 = vmatprep.subr.mxu0 0.0
      %5802 = vmatpush2.msra.mxu0 0.0
      %5803 = vmatprep.subr.mxu0 0.0
      %5804 = vmatpush2.msra.mxu0 0.0
      %5805 = vmatprep.subr.mxu0 0.0
      %5806 = vmatpush2.msra.mxu0 0.0
      %5807 = vmatprep.subr.mxu0 0.0
      %5808 = vmatpush2.msra.mxu0 0.0
      %5809 = vmatprep.subr.mxu0 0.0
      %5810 = vmatpush2.msra.mxu0 0.0
      %5811 = vmatprep.subr.mxu0 0.0
      %5812 = vmatpush2.msra.mxu0 0.0
      %5813 = vmatprep.mubr.f32.mxu0 0.0
      %5814 = vmatmul.mubr.f32.gmra.mxu0 %v4089
      %v5815 = vpop.f32.mrf.mxu0
      %v5816 = vadd.f32 0.0, %v5815
      %v5817 = vpop.f32.mrf.mxu0
      %5818 = vmatprep.mubr.f32.mxu0 0.0
      %5819 = vmatmul.mubr.f32.gmra.mxu0 %v4091
      %v5820 = vpop.f32.mrf.mxu0
      %v5821 = vadd.f32 0.0, %v5820
      %v5822 = vpop.f32.mrf.mxu0
      %5823 = vmatprep.mubr.f32.mxu0 0.0
      %5824 = vmatmul.mubr.f32.gmra.mxu0 %v4093
      %v5825 = vpop.f32.mrf.mxu0
      %v5826 = vadd.f32 0.0, %v5825
      %v5827 = vpop.f32.mrf.mxu0
      %5828 = vmatprep.mubr.f32.mxu0 0.0
      %5829 = vmatmul.mubr.f32.gmra.mxu0 %v4095
      %v5830 = vpop.f32.mrf.mxu0
      %v5831 = vadd.f32 0.0, %v5830
      %v5832 = vpop.f32.mrf.mxu0
      %5833 = vmatprep.mubr.f32.mxu0 0.0
      %5834 = vmatmul.mubr.f32.gmra.mxu0 %v4097
      %v5835 = vpop.f32.mrf.mxu0
      %v5836 = vadd.f32 0.0, %v5835
      %v5837 = vpop.f32.mrf.mxu0
      %5838 = vmatprep.mubr.f32.mxu0 0.0
      %5839 = vmatmul.mubr.f32.gmra.mxu0 %v4099
      %v5840 = vpop.f32.mrf.mxu0
      %v5841 = vadd.f32 0.0, %v5840
      %v5842 = vpop.f32.mrf.mxu0
      %5843 = vmatprep.mubr.f32.mxu0 0.0
      %5844 = vmatmul.mubr.f32.gmra.mxu0 %v4101
      %v5845 = vpop.f32.mrf.mxu0
      %v5846 = vadd.f32 0.0, %v5845
      %v5847 = vpop.f32.mrf.mxu0
      %5848 = vmatprep.mubr.f32.mxu0 0.0
      %5849 = vmatmul.mubr.f32.gmra.mxu0 %v4103
      %v5850 = vpop.f32.mrf.mxu0
      %v5851 = vadd.f32 0.0, %v5850
      %v5852 = vpop.f32.mrf.mxu0
      %5853 = vmatprep.mubr.f32.mxu0 0.0
      %5854 = vmatmul.mubr.f32.gmra.mxu0 %v4105
      %v5855 = vpop.f32.mrf.mxu0
      %v5856 = vadd.f32 0.0, %v5855
      %v5857 = vpop.f32.mrf.mxu0
      %5858 = vmatprep.mubr.f32.mxu0 0.0
      %5859 = vmatmul.mubr.f32.gmra.mxu0 %v4107
      %v5860 = vpop.f32.mrf.mxu0
      %v5861 = vadd.f32 0.0, %v5860
      %v5862 = vpop.f32.mrf.mxu0
      %5863 = vmatprep.mubr.f32.mxu0 0.0
      %5864 = vmatmul.mubr.f32.gmra.mxu0 %v4109
      %v5865 = vpop.f32.mrf.mxu0
      %v5866 = vadd.f32 0.0, %v5865
      %v5867 = vpop.f32.mrf.mxu0
      %5868 = vmatprep.mubr.f32.mxu0 0.0
      %5869 = vmatmul.mubr.f32.gmra.mxu0 %v4111
      %v5870 = vpop.f32.mrf.mxu0
      %v5871 = vadd.f32 0.0, %v5870
      %v5872 = vpop.f32.mrf.mxu0
      %5873 = vmatprep.mubr.f32.mxu0 0.0
      %5874 = vmatmul.mubr.f32.gmra.mxu0 %v4113
      %v5875 = vpop.f32.mrf.mxu0
      %v5876 = vadd.f32 0.0, %v5875
      %v5877 = vpop.f32.mrf.mxu0
      %5878 = vmatprep.mubr.f32.mxu0 0.0
      %5879 = vmatmul.mubr.f32.gmra.mxu0 %v4115
      %v5880 = vpop.f32.mrf.mxu0
      %v5881 = vadd.f32 0.0, %v5880
      %v5882 = vpop.f32.mrf.mxu0
      %5883 = vmatprep.mubr.f32.mxu0 0.0
      %5884 = vmatmul.mubr.f32.gmra.mxu0 %v4117
      %v5885 = vpop.f32.mrf.mxu0
      %v5886 = vadd.f32 0.0, %v5885
      %v5887 = vpop.f32.mrf.mxu0
      %5888 = vmatprep.mubr.f32.mxu0 0.0
      %5889 = vmatmul.mubr.f32.gmra.mxu0 %v4119
      %v5890 = vpop.f32.mrf.mxu0
      %v5891 = vadd.f32 0.0, %v5890
      %v5892 = vpop.f32.mrf.mxu0
      %5893 = vmatprep.mubr.f32.mxu0 0.0
      %5894 = vmatmul.mubr.f32.gmra.mxu0 %v4121
      %v5895 = vpop.f32.mrf.mxu0
      %v5896 = vadd.f32 0.0, %v5895
      %v5897 = vpop.f32.mrf.mxu0
      %5898 = vmatprep.mubr.f32.mxu0 0.0
      %5899 = vmatmul.mubr.f32.gmra.mxu0 %v4123
      %v5900 = vpop.f32.mrf.mxu0
      %v5901 = vadd.f32 0.0, %v5900
      %v5902 = vpop.f32.mrf.mxu0
      %5903 = vmatprep.mubr.f32.mxu0 0.0
      %5904 = vmatmul.mubr.f32.gmra.mxu0 %v4125
      %v5905 = vpop.f32.mrf.mxu0
      %v5906 = vadd.f32 0.0, %v5905
      %v5907 = vpop.f32.mrf.mxu0
      %5908 = vmatprep.mubr.f32.mxu0 0.0
      %5909 = vmatmul.mubr.f32.gmra.mxu0 %v4127
      %v5910 = vpop.f32.mrf.mxu0
      %v5911 = vadd.f32 0.0, %v5910
      %v5912 = vpop.f32.mrf.mxu0
      %5913 = vmatprep.mubr.f32.mxu0 0.0
      %5914 = vmatmul.mubr.f32.gmra.mxu0 %v4129
      %v5915 = vpop.f32.mrf.mxu0
      %v5916 = vadd.f32 0.0, %v5915
      %v5917 = vpop.f32.mrf.mxu0
      %5918 = vmatprep.mubr.f32.mxu0 0.0
      %5919 = vmatmul.mubr.f32.gmra.mxu0 %v4131
      %v5920 = vpop.f32.mrf.mxu0
      %v5921 = vadd.f32 0.0, %v5920
      %v5922 = vpop.f32.mrf.mxu0
      %5923 = vmatprep.mubr.f32.mxu0 0.0
      %5924 = vmatmul.mubr.f32.gmra.mxu0 %v4133
      %v5925 = vpop.f32.mrf.mxu0
      %v5926 = vadd.f32 0.0, %v5925
      %v5927 = vpop.f32.mrf.mxu0
      %5928 = vmatprep.mubr.f32.mxu0 0.0
      %5929 = vmatmul.mubr.f32.gmra.mxu0 %v4135
      %v5930 = vpop.f32.mrf.mxu0
      %v5931 = vadd.f32 0.0, %v5930
      %v5932 = vpop.f32.mrf.mxu0
      %5933 = vmatprep.mubr.f32.mxu0 0.0
      %5934 = vmatmul.mubr.f32.gmra.mxu0 %v4137
      %v5935 = vpop.f32.mrf.mxu0
      %v5936 = vadd.f32 0.0, %v5935
      %v5937 = vpop.f32.mrf.mxu0
      %5938 = vmatprep.mubr.f32.mxu0 0.0
      %5939 = vmatmul.mubr.f32.gmra.mxu0 %v4139
      %v5940 = vpop.f32.mrf.mxu0
      %v5941 = vadd.f32 0.0, %v5940
      %v5942 = vpop.f32.mrf.mxu0
      %5943 = vmatprep.mubr.f32.mxu0 0.0
      %5944 = vmatmul.mubr.f32.gmra.mxu0 %v4141
      %v5945 = vpop.f32.mrf.mxu0
      %v5946 = vadd.f32 0.0, %v5945
      %v5947 = vpop.f32.mrf.mxu0
      %5948 = vmatprep.mubr.f32.mxu0 0.0
      %5949 = vmatmul.mubr.f32.gmra.mxu0 %v4143
      %v5950 = vpop.f32.mrf.mxu0
      %v5951 = vadd.f32 0.0, %v5950
      %v5952 = vpop.f32.mrf.mxu0
      %5953 = vmatprep.mubr.f32.mxu0 0.0
      %5954 = vmatmul.mubr.f32.gmra.mxu0 %v4943
      %v5955 = vpop.f32.mrf.mxu0
      %v5956 = vadd.f32 0.0, %v5955
      %v5957 = vpop.f32.mrf.mxu0
      %5958 = vmatprep.mubr.f32.mxu0 0.0
      %5959 = vmatmul.mubr.f32.gmra.mxu0 %v4945
      %v5960 = vpop.f32.mrf.mxu0
      %v5961 = vadd.f32 0.0, %v5960
      %v5962 = vpop.f32.mrf.mxu0
      %5963 = vmatprep.mubr.f32.mxu0 0.0
      %5964 = vmatmul.mubr.f32.gmra.mxu0 %v5745
      %v5965 = vpop.f32.mrf.mxu0
      %v5966 = vadd.f32 0.0, %v5965
      %v5967 = vpop.f32.mrf.mxu0
      %5968 = vmatprep.mubr.f32.mxu0 0.0
      %5969 = vmatmul.mubr.f32.gmra.mxu0 %v5747
      %v5970 = vpop.f32.mrf.mxu0
      %v5971 = vadd.f32 0.0, %v5970
      %v5972 = vpop.f32.mrf.mxu0
      %5973 = vdwg.mxu0
      %v5974 = vadd.f32 %v5706, %v5816
      %v5975 = vadd.f32 %v5707, %v5821
      %v5976 = vadd.f32 %v5708, %v5826
      %v5977 = vadd.f32 %v5709, %v5831
      %v5978 = vadd.f32 %v5710, %v5836
      %v5979 = vadd.f32 %v5711, %v5841
      %v5980 = vadd.f32 %v5712, %v5846
      %v5981 = vadd.f32 %v5713, %v5851
      %v5982 = vadd.f32 %v5714, %v5856
      %v5983 = vadd.f32 %v5715, %v5861
      %v5984 = vadd.f32 %v5716, %v5866
      %v5985 = vadd.f32 %v5717, %v5871
      %v5986 = vadd.f32 %v5718, %v5876
      %v5987 = vadd.f32 %v5719, %v5881
      %v5988 = vadd.f32 %v5720, %v5886
      %v5989 = vadd.f32 %v5721, %v5891
      %v5990 = vadd.f32 %v5722, %v5896
      %v5991 = vadd.f32 %v5723, %v5901
      %v5992 = vadd.f32 %v5724, %v5906
      %v5993 = vadd.f32 %v5725, %v5911
      %v5994 = vadd.f32 %v5726, %v5916
      %v5995 = vadd.f32 %v5727, %v5921
      %v5996 = vadd.f32 %v5728, %v5926
      %v5997 = vadd.f32 %v5729, %v5931
      %v5998 = vadd.f32 %v5730, %v5936
      %v5999 = vadd.f32 %v5731, %v5941
      %v6000 = vadd.f32 %v5732, %v5946
      %v6001 = vadd.f32 %v5733, %v5951
      %v6002 = vadd.f32 %v5734, %v5956
      %v6003 = vadd.f32 %v5735, %v5961
      %v6004 = vadd.f32 %v5736, %v5966
      %v6005 = vadd.f32 %v5737, %v5971
      %s6006 = scalar_lea.vmem %s3, 144
      %v6007 = vld [vmem:[%s6006] sm:$0xff]
      %v6009 = vsel %vm638, %v452, 0
      %v6012 = vsel %vm638, %v453, 0
      %v6015 = vsel %vm638, %v455, 0
      %v6018 = vsel %vm638, %v456, 0
      %v6021 = vsel %vm638, %v458, 0
      %v6024 = vsel %vm638, %v459, 0
      %v6027 = vsel %vm638, %v461, 0
      %v6030 = vsel %vm638, %v462, 0
      %v6033 = vsel %vm638, %v464, 0
      %v6036 = vsel %vm638, %v465, 0
      %v6039 = vsel %vm638, %v467, 0
      %v6042 = vsel %vm638, %v468, 0
      %v6045 = vsel %vm638, %v470, 0
      %v6048 = vsel %vm638, %v471, 0
      %v6051 = vsel %vm638, %v473, 0
      %v6054 = vsel %vm638, %v474, 0
      %v6057 = vsel %vm638, %v476, 0
      %v6060 = vsel %vm638, %v477, 0
      %v6063 = vsel %vm638, %v479, 0
      %v6066 = vsel %vm638, %v480, 0
      %v6069 = vsel %vm638, %v482, 0
      %v6072 = vsel %vm638, %v483, 0
      %v6075 = vsel %vm638, %v485, 0
      %v6078 = vsel %vm638, %v486, 0
      %v6081 = vsel %vm638, %v488, 0
      %v6084 = vsel %vm638, %v489, 0
      %v6087 = vsel %vm638, %v491, 0
      %v6090 = vsel %vm638, %v492, 0
      %v6093 = vsel %vm638, %v494, 0
      %v6096 = vsel %vm638, %v495, 0
      %v6099 = vsel %vm638, %v497, 0
      %v6102 = vsel %vm638, %v498, 0
      %6104 = vmatprep.subr.mxu0 0.0
      %6105 = vmatpush1.msra.mxu0 0.0
      %6106 = vmatprep.subr.mxu0 0.0
      %6107 = vmatpush1.msra.mxu0 0.0
      %6108 = vmatprep.subr.mxu0 0.0
      %6109 = vmatpush1.msra.mxu0 0.0
      %6110 = vmatprep.subr.mxu0 0.0
      %6111 = vmatpush1.msra.mxu0 0.0
      %6112 = vmatprep.subr.mxu0 0.0
      %6113 = vmatpush1.msra.mxu0 0.0
      %6114 = vmatprep.subr.mxu0 0.0
      %6115 = vmatpush1.msra.mxu0 0.0
      %6116 = vmatprep.subr.mxu0 0.0
      %6117 = vmatpush1.msra.mxu0 0.0
      %6118 = vmatprep.subr.mxu0 0.0
      %6119 = vmatpush1.msra.mxu0 0.0
      %6120 = vmatprep.subr.mxu0 0.0
      %6121 = vmatpush1.msra.mxu0 0.0
      %6122 = vmatprep.subr.mxu0 0.0
      %6123 = vmatpush1.msra.mxu0 0.0
      %6124 = vmatprep.subr.mxu0 0.0
      %6125 = vmatpush1.msra.mxu0 0.0
      %6126 = vmatprep.subr.mxu0 0.0
      %6127 = vmatpush1.msra.mxu0 0.0
      %6128 = vmatprep.subr.mxu0 0.0
      %6129 = vmatpush1.msra.mxu0 0.0
      %6130 = vmatprep.subr.mxu0 0.0
      %6131 = vmatpush1.msra.mxu0 0.0
      %6132 = vmatprep.subr.mxu0 0.0
      %6133 = vmatpush1.msra.mxu0 0.0
      %6134 = vmatprep.subr.mxu0 0.0
      %6135 = vmatpush1.msra.mxu0 %v6007
      %6136 = vmatprep.subr.mxu0 0.0
      %6137 = vmatpush2.msra.mxu0 0.0
      %6138 = vmatprep.subr.mxu0 0.0
      %6139 = vmatpush2.msra.mxu0 0.0
      %6140 = vmatprep.subr.mxu0 0.0
      %6141 = vmatpush2.msra.mxu0 0.0
      %6142 = vmatprep.subr.mxu0 0.0
      %6143 = vmatpush2.msra.mxu0 0.0
      %6144 = vmatprep.subr.mxu0 0.0
      %6145 = vmatpush2.msra.mxu0 0.0
      %6146 = vmatprep.subr.mxu0 0.0
      %6147 = vmatpush2.msra.mxu0 0.0
      %6148 = vmatprep.subr.mxu0 0.0
      %6149 = vmatpush2.msra.mxu0 0.0
      %6150 = vmatprep.subr.mxu0 0.0
      %6151 = vmatpush2.msra.mxu0 0.0
      %6152 = vmatprep.subr.mxu0 0.0
      %6153 = vmatpush2.msra.mxu0 0.0
      %6154 = vmatprep.subr.mxu0 0.0
      %6155 = vmatpush2.msra.mxu0 0.0
      %6156 = vmatprep.subr.mxu0 0.0
      %6157 = vmatpush2.msra.mxu0 0.0
      %6158 = vmatprep.subr.mxu0 0.0
      %6159 = vmatpush2.msra.mxu0 0.0
      %6160 = vmatprep.subr.mxu0 0.0
      %6161 = vmatpush2.msra.mxu0 0.0
      %6162 = vmatprep.subr.mxu0 0.0
      %6163 = vmatpush2.msra.mxu0 0.0
      %6164 = vmatprep.subr.mxu0 0.0
      %6165 = vmatpush2.msra.mxu0 0.0
      %6166 = vmatprep.subr.mxu0 0.0
      %6167 = vmatpush2.msra.mxu0 0.0
      %6168 = vmatprep.mubr.f32.mxu0 0.0
      %6169 = vmatmul.mubr.f32.gmra.mxu0 %v6009
      %v6170 = vpop.f32.mrf.mxu0
      %v6171 = vadd.f32 0.0, %v6170
      %v6172 = vpop.f32.mrf.mxu0
      %6173 = vmatprep.mubr.f32.mxu0 0.0
      %6174 = vmatmul.mubr.f32.gmra.mxu0 %v6012
      %v6175 = vpop.f32.mrf.mxu0
      %v6176 = vadd.f32 0.0, %v6175
      %v6177 = vpop.f32.mrf.mxu0
      %6178 = vmatprep.mubr.f32.mxu0 0.0
      %6179 = vmatmul.mubr.f32.gmra.mxu0 %v6015
      %v6180 = vpop.f32.mrf.mxu0
      %v6181 = vadd.f32 0.0, %v6180
      %v6182 = vpop.f32.mrf.mxu0
      %6183 = vmatprep.mubr.f32.mxu0 0.0
      %6184 = vmatmul.mubr.f32.gmra.mxu0 %v6018
      %v6185 = vpop.f32.mrf.mxu0
      %v6186 = vadd.f32 0.0, %v6185
      %v6187 = vpop.f32.mrf.mxu0
      %6188 = vmatprep.mubr.f32.mxu0 0.0
      %6189 = vmatmul.mubr.f32.gmra.mxu0 %v6021
      %v6190 = vpop.f32.mrf.mxu0
      %v6191 = vadd.f32 0.0, %v6190
      %v6192 = vpop.f32.mrf.mxu0
      %6193 = vmatprep.mubr.f32.mxu0 0.0
      %6194 = vmatmul.mubr.f32.gmra.mxu0 %v6024
      %v6195 = vpop.f32.mrf.mxu0
      %v6196 = vadd.f32 0.0, %v6195
      %v6197 = vpop.f32.mrf.mxu0
      %6198 = vmatprep.mubr.f32.mxu0 0.0
      %6199 = vmatmul.mubr.f32.gmra.mxu0 %v6027
      %v6200 = vpop.f32.mrf.mxu0
      %v6201 = vadd.f32 0.0, %v6200
      %v6202 = vpop.f32.mrf.mxu0
      %6203 = vmatprep.mubr.f32.mxu0 0.0
      %6204 = vmatmul.mubr.f32.gmra.mxu0 %v6030
      %v6205 = vpop.f32.mrf.mxu0
      %v6206 = vadd.f32 0.0, %v6205
      %v6207 = vpop.f32.mrf.mxu0
      %6208 = vmatprep.mubr.f32.mxu0 0.0
      %6209 = vmatmul.mubr.f32.gmra.mxu0 %v6033
      %v6210 = vpop.f32.mrf.mxu0
      %v6211 = vadd.f32 0.0, %v6210
      %v6212 = vpop.f32.mrf.mxu0
      %6213 = vmatprep.mubr.f32.mxu0 0.0
      %6214 = vmatmul.mubr.f32.gmra.mxu0 %v6036
      %v6215 = vpop.f32.mrf.mxu0
      %v6216 = vadd.f32 0.0, %v6215
      %v6217 = vpop.f32.mrf.mxu0
      %6218 = vmatprep.mubr.f32.mxu0 0.0
      %6219 = vmatmul.mubr.f32.gmra.mxu0 %v6039
      %v6220 = vpop.f32.mrf.mxu0
      %v6221 = vadd.f32 0.0, %v6220
      %v6222 = vpop.f32.mrf.mxu0
      %6223 = vmatprep.mubr.f32.mxu0 0.0
      %6224 = vmatmul.mubr.f32.gmra.mxu0 %v6042
      %v6225 = vpop.f32.mrf.mxu0
      %v6226 = vadd.f32 0.0, %v6225
      %v6227 = vpop.f32.mrf.mxu0
      %6228 = vmatprep.mubr.f32.mxu0 0.0
      %6229 = vmatmul.mubr.f32.gmra.mxu0 %v6045
      %v6230 = vpop.f32.mrf.mxu0
      %v6231 = vadd.f32 0.0, %v6230
      %v6232 = vpop.f32.mrf.mxu0
      %6233 = vmatprep.mubr.f32.mxu0 0.0
      %6234 = vmatmul.mubr.f32.gmra.mxu0 %v6048
      %v6235 = vpop.f32.mrf.mxu0
      %v6236 = vadd.f32 0.0, %v6235
      %v6237 = vpop.f32.mrf.mxu0
      %6238 = vmatprep.mubr.f32.mxu0 0.0
      %6239 = vmatmul.mubr.f32.gmra.mxu0 %v6051
      %v6240 = vpop.f32.mrf.mxu0
      %v6241 = vadd.f32 0.0, %v6240
      %v6242 = vpop.f32.mrf.mxu0
      %6243 = vmatprep.mubr.f32.mxu0 0.0
      %6244 = vmatmul.mubr.f32.gmra.mxu0 %v6054
      %v6245 = vpop.f32.mrf.mxu0
      %v6246 = vadd.f32 0.0, %v6245
      %v6247 = vpop.f32.mrf.mxu0
      %6248 = vmatprep.mubr.f32.mxu0 0.0
      %6249 = vmatmul.mubr.f32.gmra.mxu0 %v6057
      %v6250 = vpop.f32.mrf.mxu0
      %v6251 = vadd.f32 0.0, %v6250
      %v6252 = vpop.f32.mrf.mxu0
      %6253 = vmatprep.mubr.f32.mxu0 0.0
      %6254 = vmatmul.mubr.f32.gmra.mxu0 %v6060
      %v6255 = vpop.f32.mrf.mxu0
      %v6256 = vadd.f32 0.0, %v6255
      %v6257 = vpop.f32.mrf.mxu0
      %6258 = vmatprep.mubr.f32.mxu0 0.0
      %6259 = vmatmul.mubr.f32.gmra.mxu0 %v6063
      %v6260 = vpop.f32.mrf.mxu0
      %v6261 = vadd.f32 0.0, %v6260
      %v6262 = vpop.f32.mrf.mxu0
      %6263 = vmatprep.mubr.f32.mxu0 0.0
      %6264 = vmatmul.mubr.f32.gmra.mxu0 %v6066
      %v6265 = vpop.f32.mrf.mxu0
      %v6266 = vadd.f32 0.0, %v6265
      %v6267 = vpop.f32.mrf.mxu0
      %6268 = vmatprep.mubr.f32.mxu0 0.0
      %6269 = vmatmul.mubr.f32.gmra.mxu0 %v6069
      %v6270 = vpop.f32.mrf.mxu0
      %v6271 = vadd.f32 0.0, %v6270
      %v6272 = vpop.f32.mrf.mxu0
      %6273 = vmatprep.mubr.f32.mxu0 0.0
      %6274 = vmatmul.mubr.f32.gmra.mxu0 %v6072
      %v6275 = vpop.f32.mrf.mxu0
      %v6276 = vadd.f32 0.0, %v6275
      %v6277 = vpop.f32.mrf.mxu0
      %6278 = vmatprep.mubr.f32.mxu0 0.0
      %6279 = vmatmul.mubr.f32.gmra.mxu0 %v6075
      %v6280 = vpop.f32.mrf.mxu0
      %v6281 = vadd.f32 0.0, %v6280
      %v6282 = vpop.f32.mrf.mxu0
      %6283 = vmatprep.mubr.f32.mxu0 0.0
      %6284 = vmatmul.mubr.f32.gmra.mxu0 %v6078
      %v6285 = vpop.f32.mrf.mxu0
      %v6286 = vadd.f32 0.0, %v6285
      %v6287 = vpop.f32.mrf.mxu0
      %6288 = vmatprep.mubr.f32.mxu0 0.0
      %6289 = vmatmul.mubr.f32.gmra.mxu0 %v6081
      %v6290 = vpop.f32.mrf.mxu0
      %v6291 = vadd.f32 0.0, %v6290
      %v6292 = vpop.f32.mrf.mxu0
      %6293 = vmatprep.mubr.f32.mxu0 0.0
      %6294 = vmatmul.mubr.f32.gmra.mxu0 %v6084
      %v6295 = vpop.f32.mrf.mxu0
      %v6296 = vadd.f32 0.0, %v6295
      %v6297 = vpop.f32.mrf.mxu0
      %6298 = vmatprep.mubr.f32.mxu0 0.0
      %6299 = vmatmul.mubr.f32.gmra.mxu0 %v6087
      %v6300 = vpop.f32.mrf.mxu0
      %v6301 = vadd.f32 0.0, %v6300
      %v6302 = vpop.f32.mrf.mxu0
      %6303 = vmatprep.mubr.f32.mxu0 0.0
      %6304 = vmatmul.mubr.f32.gmra.mxu0 %v6090
      %v6305 = vpop.f32.mrf.mxu0
      %v6306 = vadd.f32 0.0, %v6305
      %v6307 = vpop.f32.mrf.mxu0
      %6308 = vmatprep.mubr.f32.mxu0 0.0
      %6309 = vmatmul.mubr.f32.gmra.mxu0 %v6093
      %v6310 = vpop.f32.mrf.mxu0
      %v6311 = vadd.f32 0.0, %v6310
      %v6312 = vpop.f32.mrf.mxu0
      %6313 = vmatprep.mubr.f32.mxu0 0.0
      %6314 = vmatmul.mubr.f32.gmra.mxu0 %v6096
      %v6315 = vpop.f32.mrf.mxu0
      %v6316 = vadd.f32 0.0, %v6315
      %v6317 = vpop.f32.mrf.mxu0
      %6318 = vmatprep.mubr.f32.mxu0 0.0
      %6319 = vmatmul.mubr.f32.gmra.mxu0 %v6099
      %v6320 = vpop.f32.mrf.mxu0
      %v6321 = vadd.f32 0.0, %v6320
      %v6322 = vpop.f32.mrf.mxu0
      %6323 = vmatprep.mubr.f32.mxu0 0.0
      %6324 = vmatmul.mubr.f32.gmra.mxu0 %v6102
      %v6325 = vpop.f32.mrf.mxu0
      %v6326 = vadd.f32 0.0, %v6325
      %v6327 = vpop.f32.mrf.mxu0
      %6328 = vdwg.mxu0
      %v6329 = vadd.f32 %v5974, %v6171
      %v6330 = vadd.f32 %v5975, %v6176
      %v6331 = vadd.f32 %v5976, %v6181
      %v6332 = vadd.f32 %v5977, %v6186
      %v6333 = vadd.f32 %v5978, %v6191
      %v6334 = vadd.f32 %v5979, %v6196
      %v6335 = vadd.f32 %v5980, %v6201
      %v6336 = vadd.f32 %v5981, %v6206
      %v6337 = vadd.f32 %v5982, %v6211
      %v6338 = vadd.f32 %v5983, %v6216
      %v6339 = vadd.f32 %v5984, %v6221
      %v6340 = vadd.f32 %v5985, %v6226
      %v6341 = vadd.f32 %v5986, %v6231
      %v6342 = vadd.f32 %v5987, %v6236
      %v6343 = vadd.f32 %v5988, %v6241
      %v6344 = vadd.f32 %v5989, %v6246
      %v6345 = vadd.f32 %v5990, %v6251
      %v6346 = vadd.f32 %v5991, %v6256
      %v6347 = vadd.f32 %v5992, %v6261
      %v6348 = vadd.f32 %v5993, %v6266
      %v6349 = vadd.f32 %v5994, %v6271
      %v6350 = vadd.f32 %v5995, %v6276
      %v6351 = vadd.f32 %v5996, %v6281
      %v6352 = vadd.f32 %v5997, %v6286
      %v6353 = vadd.f32 %v5998, %v6291
      %v6354 = vadd.f32 %v5999, %v6296
      %v6355 = vadd.f32 %v6000, %v6301
      %v6356 = vadd.f32 %v6001, %v6306
      %v6357 = vadd.f32 %v6002, %v6311
      %v6358 = vadd.f32 %v6003, %v6316
      %v6359 = vadd.f32 %v6004, %v6321
      %v6360 = vadd.f32 %v6005, %v6326
      %v6377 = vrot.slane %v452, 1
      %v6378 = vrot.slane %v453, 1
      %v6379 = vsel %vm555, %v6377, %v6378
      %v6380 = vrot.slane %v454, 1
      %v6381 = vsel %vm555, %v6378, %v6380
      %v6382 = vrot.slane %v455, 1
      %v6383 = vrot.slane %v456, 1
      %v6384 = vsel %vm555, %v6382, %v6383
      %v6385 = vrot.slane %v457, 1
      %v6386 = vsel %vm555, %v6383, %v6385
      %v6387 = vrot.slane %v458, 1
      %v6388 = vrot.slane %v459, 1
      %v6389 = vsel %vm555, %v6387, %v6388
      %v6390 = vrot.slane %v460, 1
      %v6391 = vsel %vm555, %v6388, %v6390
      %v6392 = vrot.slane %v461, 1
      %v6393 = vrot.slane %v462, 1
      %v6394 = vsel %vm555, %v6392, %v6393
      %v6395 = vrot.slane %v463, 1
      %v6396 = vsel %vm555, %v6393, %v6395
      %v6397 = vrot.slane %v464, 1
      %v6398 = vrot.slane %v465, 1
      %v6399 = vsel %vm555, %v6397, %v6398
      %v6400 = vrot.slane %v466, 1
      %v6401 = vsel %vm555, %v6398, %v6400
      %v6402 = vrot.slane %v467, 1
      %v6403 = vrot.slane %v468, 1
      %v6404 = vsel %vm555, %v6402, %v6403
      %v6405 = vrot.slane %v469, 1
      %v6406 = vsel %vm555, %v6403, %v6405
      %v6407 = vrot.slane %v470, 1
      %v6408 = vrot.slane %v471, 1
      %v6409 = vsel %vm555, %v6407, %v6408
      %v6410 = vrot.slane %v472, 1
      %v6411 = vsel %vm555, %v6408, %v6410
      %v6412 = vrot.slane %v473, 1
      %v6413 = vrot.slane %v474, 1
      %v6414 = vsel %vm555, %v6412, %v6413
      %v6415 = vrot.slane %v475, 1
      %v6416 = vsel %vm555, %v6413, %v6415
      %v6417 = vrot.slane %v476, 1
      %v6418 = vrot.slane %v477, 1
      %v6419 = vsel %vm555, %v6417, %v6418
      %v6420 = vrot.slane %v478, 1
      %v6421 = vsel %vm555, %v6418, %v6420
      %v6422 = vrot.slane %v479, 1
      %v6423 = vrot.slane %v480, 1
      %v6424 = vsel %vm555, %v6422, %v6423
      %v6425 = vrot.slane %v481, 1
      %v6426 = vsel %vm555, %v6423, %v6425
      %v6427 = vrot.slane %v482, 1
      %v6428 = vrot.slane %v483, 1
      %v6429 = vsel %vm555, %v6427, %v6428
      %v6430 = vrot.slane %v484, 1
      %v6431 = vsel %vm555, %v6428, %v6430
      %v6432 = vrot.slane %v485, 1
      %v6433 = vrot.slane %v486, 1
      %v6434 = vsel %vm555, %v6432, %v6433
      %v6435 = vrot.slane %v487, 1
      %v6436 = vsel %vm555, %v6433, %v6435
      %v6437 = vrot.slane %v488, 1
      %v6438 = vrot.slane %v489, 1
      %v6439 = vsel %vm555, %v6437, %v6438
      %v6440 = vrot.slane %v490, 1
      %v6441 = vsel %vm555, %v6438, %v6440
      %v6442 = vrot.slane %v491, 1
      %v6443 = vrot.slane %v492, 1
      %v6444 = vsel %vm555, %v6442, %v6443
      %v6445 = vrot.slane %v493, 1
      %v6446 = vsel %vm555, %v6443, %v6445
      %v6447 = vrot.slane %v494, 1
      %v6448 = vrot.slane %v495, 1
      %v6449 = vsel %vm555, %v6447, %v6448
      %v6450 = vrot.slane %v496, 1
      %v6451 = vsel %vm555, %v6448, %v6450
      %v6452 = vrot.slane %v497, 1
      %v6453 = vrot.slane %v498, 1
      %v6454 = vsel %vm555, %v6452, %v6453
      %v6455 = vrot.slane %v499, 1
      %v6456 = vsel %vm555, %v6453, %v6455
      %s6457 = scalar_lea.vmem %s3, 152
      %v6458 = vld [vmem:[%s6457] sm:$0xff]
      %v6459 = vsel %vm638, %v6379, 0
      %v6461 = vsel %vm638, %v6381, 0
      %v6463 = vsel %vm638, %v6384, 0
      %v6465 = vsel %vm638, %v6386, 0
      %v6467 = vsel %vm638, %v6389, 0
      %v6469 = vsel %vm638, %v6391, 0
      %v6471 = vsel %vm638, %v6394, 0
      %v6473 = vsel %vm638, %v6396, 0
      %v6475 = vsel %vm638, %v6399, 0
      %v6477 = vsel %vm638, %v6401, 0
      %v6479 = vsel %vm638, %v6404, 0
      %v6481 = vsel %vm638, %v6406, 0
      %v6483 = vsel %vm638, %v6409, 0
      %v6485 = vsel %vm638, %v6411, 0
      %v6487 = vsel %vm638, %v6414, 0
      %v6489 = vsel %vm638, %v6416, 0
      %v6491 = vsel %vm638, %v6419, 0
      %v6493 = vsel %vm638, %v6421, 0
      %v6495 = vsel %vm638, %v6424, 0
      %v6497 = vsel %vm638, %v6426, 0
      %v6499 = vsel %vm638, %v6429, 0
      %v6501 = vsel %vm638, %v6431, 0
      %v6503 = vsel %vm638, %v6434, 0
      %v6505 = vsel %vm638, %v6436, 0
      %v6507 = vsel %vm638, %v6439, 0
      %v6509 = vsel %vm638, %v6441, 0
      %v6511 = vsel %vm638, %v6444, 0
      %v6513 = vsel %vm638, %v6446, 0
      %v6515 = vsel %vm638, %v6449, 0
      %v6517 = vsel %vm638, %v6451, 0
      %v6519 = vsel %vm638, %v6454, 0
      %v6521 = vsel %vm638, %v6456, 0
      %6523 = vmatprep.subr.mxu0 0.0
      %6524 = vmatpush1.msra.mxu0 0.0
      %6525 = vmatprep.subr.mxu0 0.0
      %6526 = vmatpush1.msra.mxu0 0.0
      %6527 = vmatprep.subr.mxu0 0.0
      %6528 = vmatpush1.msra.mxu0 0.0
      %6529 = vmatprep.subr.mxu0 0.0
      %6530 = vmatpush1.msra.mxu0 0.0
      %6531 = vmatprep.subr.mxu0 0.0
      %6532 = vmatpush1.msra.mxu0 0.0
      %6533 = vmatprep.subr.mxu0 0.0
      %6534 = vmatpush1.msra.mxu0 0.0
      %6535 = vmatprep.subr.mxu0 0.0
      %6536 = vmatpush1.msra.mxu0 0.0
      %6537 = vmatprep.subr.mxu0 0.0
      %6538 = vmatpush1.msra.mxu0 0.0
      %6539 = vmatprep.subr.mxu0 0.0
      %6540 = vmatpush1.msra.mxu0 0.0
      %6541 = vmatprep.subr.mxu0 0.0
      %6542 = vmatpush1.msra.mxu0 0.0
      %6543 = vmatprep.subr.mxu0 0.0
      %6544 = vmatpush1.msra.mxu0 0.0
      %6545 = vmatprep.subr.mxu0 0.0
      %6546 = vmatpush1.msra.mxu0 0.0
      %6547 = vmatprep.subr.mxu0 0.0
      %6548 = vmatpush1.msra.mxu0 0.0
      %6549 = vmatprep.subr.mxu0 0.0
      %6550 = vmatpush1.msra.mxu0 0.0
      %6551 = vmatprep.subr.mxu0 0.0
      %6552 = vmatpush1.msra.mxu0 0.0
      %6553 = vmatprep.subr.mxu0 0.0
      %6554 = vmatpush1.msra.mxu0 %v6458
      %6555 = vmatprep.subr.mxu0 0.0
      %6556 = vmatpush2.msra.mxu0 0.0
      %6557 = vmatprep.subr.mxu0 0.0
      %6558 = vmatpush2.msra.mxu0 0.0
      %6559 = vmatprep.subr.mxu0 0.0
      %6560 = vmatpush2.msra.mxu0 0.0
      %6561 = vmatprep.subr.mxu0 0.0
      %6562 = vmatpush2.msra.mxu0 0.0
      %6563 = vmatprep.subr.mxu0 0.0
      %6564 = vmatpush2.msra.mxu0 0.0
      %6565 = vmatprep.subr.mxu0 0.0
      %6566 = vmatpush2.msra.mxu0 0.0
      %6567 = vmatprep.subr.mxu0 0.0
      %6568 = vmatpush2.msra.mxu0 0.0
      %6569 = vmatprep.subr.mxu0 0.0
      %6570 = vmatpush2.msra.mxu0 0.0
      %6571 = vmatprep.subr.mxu0 0.0
      %6572 = vmatpush2.msra.mxu0 0.0
      %6573 = vmatprep.subr.mxu0 0.0
      %6574 = vmatpush2.msra.mxu0 0.0
      %6575 = vmatprep.subr.mxu0 0.0
      %6576 = vmatpush2.msra.mxu0 0.0
      %6577 = vmatprep.subr.mxu0 0.0
      %6578 = vmatpush2.msra.mxu0 0.0
      %6579 = vmatprep.subr.mxu0 0.0
      %6580 = vmatpush2.msra.mxu0 0.0
      %6581 = vmatprep.subr.mxu0 0.0
      %6582 = vmatpush2.msra.mxu0 0.0
      %6583 = vmatprep.subr.mxu0 0.0
      %6584 = vmatpush2.msra.mxu0 0.0
      %6585 = vmatprep.subr.mxu0 0.0
      %6586 = vmatpush2.msra.mxu0 0.0
      %6587 = vmatprep.mubr.f32.mxu0 0.0
      %6588 = vmatmul.mubr.f32.gmra.mxu0 %v6459
      %v6589 = vpop.f32.mrf.mxu0
      %v6590 = vadd.f32 0.0, %v6589
      %v6591 = vpop.f32.mrf.mxu0
      %6592 = vmatprep.mubr.f32.mxu0 0.0
      %6593 = vmatmul.mubr.f32.gmra.mxu0 %v6461
      %v6594 = vpop.f32.mrf.mxu0
      %v6595 = vadd.f32 0.0, %v6594
      %v6596 = vpop.f32.mrf.mxu0
      %6597 = vmatprep.mubr.f32.mxu0 0.0
      %6598 = vmatmul.mubr.f32.gmra.mxu0 %v6463
      %v6599 = vpop.f32.mrf.mxu0
      %v6600 = vadd.f32 0.0, %v6599
      %v6601 = vpop.f32.mrf.mxu0
      %6602 = vmatprep.mubr.f32.mxu0 0.0
      %6603 = vmatmul.mubr.f32.gmra.mxu0 %v6465
      %v6604 = vpop.f32.mrf.mxu0
      %v6605 = vadd.f32 0.0, %v6604
      %v6606 = vpop.f32.mrf.mxu0
      %6607 = vmatprep.mubr.f32.mxu0 0.0
      %6608 = vmatmul.mubr.f32.gmra.mxu0 %v6467
      %v6609 = vpop.f32.mrf.mxu0
      %v6610 = vadd.f32 0.0, %v6609
      %v6611 = vpop.f32.mrf.mxu0
      %6612 = vmatprep.mubr.f32.mxu0 0.0
      %6613 = vmatmul.mubr.f32.gmra.mxu0 %v6469
      %v6614 = vpop.f32.mrf.mxu0
      %v6615 = vadd.f32 0.0, %v6614
      %v6616 = vpop.f32.mrf.mxu0
      %6617 = vmatprep.mubr.f32.mxu0 0.0
      %6618 = vmatmul.mubr.f32.gmra.mxu0 %v6471
      %v6619 = vpop.f32.mrf.mxu0
      %v6620 = vadd.f32 0.0, %v6619
      %v6621 = vpop.f32.mrf.mxu0
      %6622 = vmatprep.mubr.f32.mxu0 0.0
      %6623 = vmatmul.mubr.f32.gmra.mxu0 %v6473
      %v6624 = vpop.f32.mrf.mxu0
      %v6625 = vadd.f32 0.0, %v6624
      %v6626 = vpop.f32.mrf.mxu0
      %6627 = vmatprep.mubr.f32.mxu0 0.0
      %6628 = vmatmul.mubr.f32.gmra.mxu0 %v6475
      %v6629 = vpop.f32.mrf.mxu0
      %v6630 = vadd.f32 0.0, %v6629
      %v6631 = vpop.f32.mrf.mxu0
      %6632 = vmatprep.mubr.f32.mxu0 0.0
      %6633 = vmatmul.mubr.f32.gmra.mxu0 %v6477
      %v6634 = vpop.f32.mrf.mxu0
      %v6635 = vadd.f32 0.0, %v6634
      %v6636 = vpop.f32.mrf.mxu0
      %6637 = vmatprep.mubr.f32.mxu0 0.0
      %6638 = vmatmul.mubr.f32.gmra.mxu0 %v6479
      %v6639 = vpop.f32.mrf.mxu0
      %v6640 = vadd.f32 0.0, %v6639
      %v6641 = vpop.f32.mrf.mxu0
      %6642 = vmatprep.mubr.f32.mxu0 0.0
      %6643 = vmatmul.mubr.f32.gmra.mxu0 %v6481
      %v6644 = vpop.f32.mrf.mxu0
      %v6645 = vadd.f32 0.0, %v6644
      %v6646 = vpop.f32.mrf.mxu0
      %6647 = vmatprep.mubr.f32.mxu0 0.0
      %6648 = vmatmul.mubr.f32.gmra.mxu0 %v6483
      %v6649 = vpop.f32.mrf.mxu0
      %v6650 = vadd.f32 0.0, %v6649
      %v6651 = vpop.f32.mrf.mxu0
      %6652 = vmatprep.mubr.f32.mxu0 0.0
      %6653 = vmatmul.mubr.f32.gmra.mxu0 %v6485
      %v6654 = vpop.f32.mrf.mxu0
      %v6655 = vadd.f32 0.0, %v6654
      %v6656 = vpop.f32.mrf.mxu0
      %6657 = vmatprep.mubr.f32.mxu0 0.0
      %6658 = vmatmul.mubr.f32.gmra.mxu0 %v6487
      %v6659 = vpop.f32.mrf.mxu0
      %v6660 = vadd.f32 0.0, %v6659
      %v6661 = vpop.f32.mrf.mxu0
      %6662 = vmatprep.mubr.f32.mxu0 0.0
      %6663 = vmatmul.mubr.f32.gmra.mxu0 %v6489
      %v6664 = vpop.f32.mrf.mxu0
      %v6665 = vadd.f32 0.0, %v6664
      %v6666 = vpop.f32.mrf.mxu0
      %6667 = vmatprep.mubr.f32.mxu0 0.0
      %6668 = vmatmul.mubr.f32.gmra.mxu0 %v6491
      %v6669 = vpop.f32.mrf.mxu0
      %v6670 = vadd.f32 0.0, %v6669
      %v6671 = vpop.f32.mrf.mxu0
      %6672 = vmatprep.mubr.f32.mxu0 0.0
      %6673 = vmatmul.mubr.f32.gmra.mxu0 %v6493
      %v6674 = vpop.f32.mrf.mxu0
      %v6675 = vadd.f32 0.0, %v6674
      %v6676 = vpop.f32.mrf.mxu0
      %6677 = vmatprep.mubr.f32.mxu0 0.0
      %6678 = vmatmul.mubr.f32.gmra.mxu0 %v6495
      %v6679 = vpop.f32.mrf.mxu0
      %v6680 = vadd.f32 0.0, %v6679
      %v6681 = vpop.f32.mrf.mxu0
      %6682 = vmatprep.mubr.f32.mxu0 0.0
      %6683 = vmatmul.mubr.f32.gmra.mxu0 %v6497
      %v6684 = vpop.f32.mrf.mxu0
      %v6685 = vadd.f32 0.0, %v6684
      %v6686 = vpop.f32.mrf.mxu0
      %6687 = vmatprep.mubr.f32.mxu0 0.0
      %6688 = vmatmul.mubr.f32.gmra.mxu0 %v6499
      %v6689 = vpop.f32.mrf.mxu0
      %v6690 = vadd.f32 0.0, %v6689
      %v6691 = vpop.f32.mrf.mxu0
      %6692 = vmatprep.mubr.f32.mxu0 0.0
      %6693 = vmatmul.mubr.f32.gmra.mxu0 %v6501
      %v6694 = vpop.f32.mrf.mxu0
      %v6695 = vadd.f32 0.0, %v6694
      %v6696 = vpop.f32.mrf.mxu0
      %6697 = vmatprep.mubr.f32.mxu0 0.0
      %6698 = vmatmul.mubr.f32.gmra.mxu0 %v6503
      %v6699 = vpop.f32.mrf.mxu0
      %v6700 = vadd.f32 0.0, %v6699
      %v6701 = vpop.f32.mrf.mxu0
      %6702 = vmatprep.mubr.f32.mxu0 0.0
      %6703 = vmatmul.mubr.f32.gmra.mxu0 %v6505
      %v6704 = vpop.f32.mrf.mxu0
      %v6705 = vadd.f32 0.0, %v6704
      %v6706 = vpop.f32.mrf.mxu0
      %6707 = vmatprep.mubr.f32.mxu0 0.0
      %6708 = vmatmul.mubr.f32.gmra.mxu0 %v6507
      %v6709 = vpop.f32.mrf.mxu0
      %v6710 = vadd.f32 0.0, %v6709
      %v6711 = vpop.f32.mrf.mxu0
      %6712 = vmatprep.mubr.f32.mxu0 0.0
      %6713 = vmatmul.mubr.f32.gmra.mxu0 %v6509
      %v6714 = vpop.f32.mrf.mxu0
      %v6715 = vadd.f32 0.0, %v6714
      %v6716 = vpop.f32.mrf.mxu0
      %6717 = vmatprep.mubr.f32.mxu0 0.0
      %6718 = vmatmul.mubr.f32.gmra.mxu0 %v6511
      %v6719 = vpop.f32.mrf.mxu0
      %v6720 = vadd.f32 0.0, %v6719
      %v6721 = vpop.f32.mrf.mxu0
      %6722 = vmatprep.mubr.f32.mxu0 0.0
      %6723 = vmatmul.mubr.f32.gmra.mxu0 %v6513
      %v6724 = vpop.f32.mrf.mxu0
      %v6725 = vadd.f32 0.0, %v6724
      %v6726 = vpop.f32.mrf.mxu0
      %6727 = vmatprep.mubr.f32.mxu0 0.0
      %6728 = vmatmul.mubr.f32.gmra.mxu0 %v6515
      %v6729 = vpop.f32.mrf.mxu0
      %v6730 = vadd.f32 0.0, %v6729
      %v6731 = vpop.f32.mrf.mxu0
      %6732 = vmatprep.mubr.f32.mxu0 0.0
      %6733 = vmatmul.mubr.f32.gmra.mxu0 %v6517
      %v6734 = vpop.f32.mrf.mxu0
      %v6735 = vadd.f32 0.0, %v6734
      %v6736 = vpop.f32.mrf.mxu0
      %6737 = vmatprep.mubr.f32.mxu0 0.0
      %6738 = vmatmul.mubr.f32.gmra.mxu0 %v6519
      %v6739 = vpop.f32.mrf.mxu0
      %v6740 = vadd.f32 0.0, %v6739
      %v6741 = vpop.f32.mrf.mxu0
      %6742 = vmatprep.mubr.f32.mxu0 0.0
      %6743 = vmatmul.mubr.f32.gmra.mxu0 %v6521
      %v6744 = vpop.f32.mrf.mxu0
      %v6745 = vadd.f32 0.0, %v6744
      %v6746 = vpop.f32.mrf.mxu0
      %6747 = vdwg.mxu0
      %v6748 = vadd.f32 %v6329, %v6590
      %v6749 = vadd.f32 %v6330, %v6595
      %v6750 = vadd.f32 %v6331, %v6600
      %v6751 = vadd.f32 %v6332, %v6605
      %v6752 = vadd.f32 %v6333, %v6610
      %v6753 = vadd.f32 %v6334, %v6615
      %v6754 = vadd.f32 %v6335, %v6620
      %v6755 = vadd.f32 %v6336, %v6625
      %v6756 = vadd.f32 %v6337, %v6630
      %v6757 = vadd.f32 %v6338, %v6635
      %v6758 = vadd.f32 %v6339, %v6640
      %v6759 = vadd.f32 %v6340, %v6645
      %v6760 = vadd.f32 %v6341, %v6650
      %v6761 = vadd.f32 %v6342, %v6655
      %v6762 = vadd.f32 %v6343, %v6660
      %v6763 = vadd.f32 %v6344, %v6665
      %v6764 = vadd.f32 %v6345, %v6670
      %v6765 = vadd.f32 %v6346, %v6675
      %v6766 = vadd.f32 %v6347, %v6680
      %v6767 = vadd.f32 %v6348, %v6685
      %v6768 = vadd.f32 %v6349, %v6690
      %v6769 = vadd.f32 %v6350, %v6695
      %v6770 = vadd.f32 %v6351, %v6700
      %v6771 = vadd.f32 %v6352, %v6705
      %v6772 = vadd.f32 %v6353, %v6710
      %v6773 = vadd.f32 %v6354, %v6715
      %v6774 = vadd.f32 %v6355, %v6720
      %v6775 = vadd.f32 %v6356, %v6725
      %v6776 = vadd.f32 %v6357, %v6730
      %v6777 = vadd.f32 %v6358, %v6735
      %v6778 = vadd.f32 %v6359, %v6740
      %v6779 = vadd.f32 %v6360, %v6745
      %v6780 = vrot.slane %v452, 2
      %v6781 = vrot.slane %v453, 2
      %v6782 = vsel %vm1217, %v6780, %v6781
      %v6783 = vrot.slane %v454, 2
      %v6784 = vsel %vm1217, %v6781, %v6783
      %v6785 = vrot.slane %v455, 2
      %v6786 = vrot.slane %v456, 2
      %v6787 = vsel %vm1217, %v6785, %v6786
      %v6788 = vrot.slane %v457, 2
      %v6789 = vsel %vm1217, %v6786, %v6788
      %v6790 = vrot.slane %v458, 2
      %v6791 = vrot.slane %v459, 2
      %v6792 = vsel %vm1217, %v6790, %v6791
      %v6793 = vrot.slane %v460, 2
      %v6794 = vsel %vm1217, %v6791, %v6793
      %v6795 = vrot.slane %v461, 2
      %v6796 = vrot.slane %v462, 2
      %v6797 = vsel %vm1217, %v6795, %v6796
      %v6798 = vrot.slane %v463, 2
      %v6799 = vsel %vm1217, %v6796, %v6798
      %v6800 = vrot.slane %v464, 2
      %v6801 = vrot.slane %v465, 2
      %v6802 = vsel %vm1217, %v6800, %v6801
      %v6803 = vrot.slane %v466, 2
      %v6804 = vsel %vm1217, %v6801, %v6803
      %v6805 = vrot.slane %v467, 2
      %v6806 = vrot.slane %v468, 2
      %v6807 = vsel %vm1217, %v6805, %v6806
      %v6808 = vrot.slane %v469, 2
      %v6809 = vsel %vm1217, %v6806, %v6808
      %v6810 = vrot.slane %v470, 2
      %v6811 = vrot.slane %v471, 2
      %v6812 = vsel %vm1217, %v6810, %v6811
      %v6813 = vrot.slane %v472, 2
      %v6814 = vsel %vm1217, %v6811, %v6813
      %v6815 = vrot.slane %v473, 2
      %v6816 = vrot.slane %v474, 2
      %v6817 = vsel %vm1217, %v6815, %v6816
      %v6818 = vrot.slane %v475, 2
      %v6819 = vsel %vm1217, %v6816, %v6818
      %v6820 = vrot.slane %v476, 2
      %v6821 = vrot.slane %v477, 2
      %v6822 = vsel %vm1217, %v6820, %v6821
      %v6823 = vrot.slane %v478, 2
      %v6824 = vsel %vm1217, %v6821, %v6823
      %v6825 = vrot.slane %v479, 2
      %v6826 = vrot.slane %v480, 2
      %v6827 = vsel %vm1217, %v6825, %v6826
      %v6828 = vrot.slane %v481, 2
      %v6829 = vsel %vm1217, %v6826, %v6828
      %v6830 = vrot.slane %v482, 2
      %v6831 = vrot.slane %v483, 2
      %v6832 = vsel %vm1217, %v6830, %v6831
      %v6833 = vrot.slane %v484, 2
      %v6834 = vsel %vm1217, %v6831, %v6833
      %v6835 = vrot.slane %v485, 2
      %v6836 = vrot.slane %v486, 2
      %v6837 = vsel %vm1217, %v6835, %v6836
      %v6838 = vrot.slane %v487, 2
      %v6839 = vsel %vm1217, %v6836, %v6838
      %v6840 = vrot.slane %v488, 2
      %v6841 = vrot.slane %v489, 2
      %v6842 = vsel %vm1217, %v6840, %v6841
      %v6843 = vrot.slane %v490, 2
      %v6844 = vsel %vm1217, %v6841, %v6843
      %v6845 = vrot.slane %v491, 2
      %v6846 = vrot.slane %v492, 2
      %v6847 = vsel %vm1217, %v6845, %v6846
      %v6848 = vrot.slane %v493, 2
      %v6849 = vsel %vm1217, %v6846, %v6848
      %v6850 = vrot.slane %v494, 2
      %v6851 = vrot.slane %v495, 2
      %v6852 = vsel %vm1217, %v6850, %v6851
      %v6853 = vrot.slane %v496, 2
      %v6854 = vsel %vm1217, %v6851, %v6853
      %v6855 = vrot.slane %v497, 2
      %v6856 = vrot.slane %v498, 2
      %v6857 = vsel %vm1217, %v6855, %v6856
      %v6858 = vrot.slane %v499, 2
      %v6859 = vsel %vm1217, %v6856, %v6858
      %s6860 = scalar_lea.vmem %s3, 160
      %v6861 = vld [vmem:[%s6860] sm:$0xff]
      %v6862 = vsel %vm638, %v6782, 0
      %v6864 = vsel %vm638, %v6784, 0
      %v6866 = vsel %vm638, %v6787, 0
      %v6868 = vsel %vm638, %v6789, 0
      %v6870 = vsel %vm638, %v6792, 0
      %v6872 = vsel %vm638, %v6794, 0
      %v6874 = vsel %vm638, %v6797, 0
      %v6876 = vsel %vm638, %v6799, 0
      %v6878 = vsel %vm638, %v6802, 0
      %v6880 = vsel %vm638, %v6804, 0
      %v6882 = vsel %vm638, %v6807, 0
      %v6884 = vsel %vm638, %v6809, 0
      %v6886 = vsel %vm638, %v6812, 0
      %v6888 = vsel %vm638, %v6814, 0
      %v6890 = vsel %vm638, %v6817, 0
      %v6892 = vsel %vm638, %v6819, 0
      %v6894 = vsel %vm638, %v6822, 0
      %v6896 = vsel %vm638, %v6824, 0
      %v6898 = vsel %vm638, %v6827, 0
      %v6900 = vsel %vm638, %v6829, 0
      %v6902 = vsel %vm638, %v6832, 0
      %v6904 = vsel %vm638, %v6834, 0
      %v6906 = vsel %vm638, %v6837, 0
      %v6908 = vsel %vm638, %v6839, 0
      %v6910 = vsel %vm638, %v6842, 0
      %v6912 = vsel %vm638, %v6844, 0
      %v6914 = vsel %vm638, %v6847, 0
      %v6916 = vsel %vm638, %v6849, 0
      %v6918 = vsel %vm638, %v6852, 0
      %v6920 = vsel %vm638, %v6854, 0
      %v6922 = vsel %vm638, %v6857, 0
      %v6924 = vsel %vm638, %v6859, 0
      %6926 = vmatprep.subr.mxu0 0.0
      %6927 = vmatpush1.msra.mxu0 0.0
      %6928 = vmatprep.subr.mxu0 0.0
      %6929 = vmatpush1.msra.mxu0 0.0
      %6930 = vmatprep.subr.mxu0 0.0
      %6931 = vmatpush1.msra.mxu0 0.0
      %6932 = vmatprep.subr.mxu0 0.0
      %6933 = vmatpush1.msra.mxu0 0.0
      %6934 = vmatprep.subr.mxu0 0.0
      %6935 = vmatpush1.msra.mxu0 0.0
      %6936 = vmatprep.subr.mxu0 0.0
      %6937 = vmatpush1.msra.mxu0 0.0
      %6938 = vmatprep.subr.mxu0 0.0
      %6939 = vmatpush1.msra.mxu0 0.0
      %6940 = vmatprep.subr.mxu0 0.0
      %6941 = vmatpush1.msra.mxu0 0.0
      %6942 = vmatprep.subr.mxu0 0.0
      %6943 = vmatpush1.msra.mxu0 0.0
      %6944 = vmatprep.subr.mxu0 0.0
      %6945 = vmatpush1.msra.mxu0 0.0
      %6946 = vmatprep.subr.mxu0 0.0
      %6947 = vmatpush1.msra.mxu0 0.0
      %6948 = vmatprep.subr.mxu0 0.0
      %6949 = vmatpush1.msra.mxu0 0.0
      %6950 = vmatprep.subr.mxu0 0.0
      %6951 = vmatpush1.msra.mxu0 0.0
      %6952 = vmatprep.subr.mxu0 0.0
      %6953 = vmatpush1.msra.mxu0 0.0
      %6954 = vmatprep.subr.mxu0 0.0
      %6955 = vmatpush1.msra.mxu0 0.0
      %6956 = vmatprep.subr.mxu0 0.0
      %6957 = vmatpush1.msra.mxu0 %v6861
      %6958 = vmatprep.subr.mxu0 0.0
      %6959 = vmatpush2.msra.mxu0 0.0
      %6960 = vmatprep.subr.mxu0 0.0
      %6961 = vmatpush2.msra.mxu0 0.0
      %6962 = vmatprep.subr.mxu0 0.0
      %6963 = vmatpush2.msra.mxu0 0.0
      %6964 = vmatprep.subr.mxu0 0.0
      %6965 = vmatpush2.msra.mxu0 0.0
      %6966 = vmatprep.subr.mxu0 0.0
      %6967 = vmatpush2.msra.mxu0 0.0
      %6968 = vmatprep.subr.mxu0 0.0
      %6969 = vmatpush2.msra.mxu0 0.0
      %6970 = vmatprep.subr.mxu0 0.0
      %6971 = vmatpush2.msra.mxu0 0.0
      %6972 = vmatprep.subr.mxu0 0.0
      %6973 = vmatpush2.msra.mxu0 0.0
      %6974 = vmatprep.subr.mxu0 0.0
      %6975 = vmatpush2.msra.mxu0 0.0
      %6976 = vmatprep.subr.mxu0 0.0
      %6977 = vmatpush2.msra.mxu0 0.0
      %6978 = vmatprep.subr.mxu0 0.0
      %6979 = vmatpush2.msra.mxu0 0.0
      %6980 = vmatprep.subr.mxu0 0.0
      %6981 = vmatpush2.msra.mxu0 0.0
      %6982 = vmatprep.subr.mxu0 0.0
      %6983 = vmatpush2.msra.mxu0 0.0
      %6984 = vmatprep.subr.mxu0 0.0
      %6985 = vmatpush2.msra.mxu0 0.0
      %6986 = vmatprep.subr.mxu0 0.0
      %6987 = vmatpush2.msra.mxu0 0.0
      %6988 = vmatprep.subr.mxu0 0.0
      %6989 = vmatpush2.msra.mxu0 0.0
      %6990 = vmatprep.mubr.f32.mxu0 0.0
      %6991 = vmatmul.mubr.f32.gmra.mxu0 %v6862
      %v6992 = vpop.f32.mrf.mxu0
      %v6993 = vadd.f32 0.0, %v6992
      %v6994 = vpop.f32.mrf.mxu0
      %6995 = vmatprep.mubr.f32.mxu0 0.0
      %6996 = vmatmul.mubr.f32.gmra.mxu0 %v6864
      %v6997 = vpop.f32.mrf.mxu0
      %v6998 = vadd.f32 0.0, %v6997
      %v6999 = vpop.f32.mrf.mxu0
      %7000 = vmatprep.mubr.f32.mxu0 0.0
      %7001 = vmatmul.mubr.f32.gmra.mxu0 %v6866
      %v7002 = vpop.f32.mrf.mxu0
      %v7003 = vadd.f32 0.0, %v7002
      %v7004 = vpop.f32.mrf.mxu0
      %7005 = vmatprep.mubr.f32.mxu0 0.0
      %7006 = vmatmul.mubr.f32.gmra.mxu0 %v6868
      %v7007 = vpop.f32.mrf.mxu0
      %v7008 = vadd.f32 0.0, %v7007
      %v7009 = vpop.f32.mrf.mxu0
      %7010 = vmatprep.mubr.f32.mxu0 0.0
      %7011 = vmatmul.mubr.f32.gmra.mxu0 %v6870
      %v7012 = vpop.f32.mrf.mxu0
      %v7013 = vadd.f32 0.0, %v7012
      %v7014 = vpop.f32.mrf.mxu0
      %7015 = vmatprep.mubr.f32.mxu0 0.0
      %7016 = vmatmul.mubr.f32.gmra.mxu0 %v6872
      %v7017 = vpop.f32.mrf.mxu0
      %v7018 = vadd.f32 0.0, %v7017
      %v7019 = vpop.f32.mrf.mxu0
      %7020 = vmatprep.mubr.f32.mxu0 0.0
      %7021 = vmatmul.mubr.f32.gmra.mxu0 %v6874
      %v7022 = vpop.f32.mrf.mxu0
      %v7023 = vadd.f32 0.0, %v7022
      %v7024 = vpop.f32.mrf.mxu0
      %7025 = vmatprep.mubr.f32.mxu0 0.0
      %7026 = vmatmul.mubr.f32.gmra.mxu0 %v6876
      %v7027 = vpop.f32.mrf.mxu0
      %v7028 = vadd.f32 0.0, %v7027
      %v7029 = vpop.f32.mrf.mxu0
      %7030 = vmatprep.mubr.f32.mxu0 0.0
      %7031 = vmatmul.mubr.f32.gmra.mxu0 %v6878
      %v7032 = vpop.f32.mrf.mxu0
      %v7033 = vadd.f32 0.0, %v7032
      %v7034 = vpop.f32.mrf.mxu0
      %7035 = vmatprep.mubr.f32.mxu0 0.0
      %7036 = vmatmul.mubr.f32.gmra.mxu0 %v6880
      %v7037 = vpop.f32.mrf.mxu0
      %v7038 = vadd.f32 0.0, %v7037
      %v7039 = vpop.f32.mrf.mxu0
      %7040 = vmatprep.mubr.f32.mxu0 0.0
      %7041 = vmatmul.mubr.f32.gmra.mxu0 %v6882
      %v7042 = vpop.f32.mrf.mxu0
      %v7043 = vadd.f32 0.0, %v7042
      %v7044 = vpop.f32.mrf.mxu0
      %7045 = vmatprep.mubr.f32.mxu0 0.0
      %7046 = vmatmul.mubr.f32.gmra.mxu0 %v6884
      %v7047 = vpop.f32.mrf.mxu0
      %v7048 = vadd.f32 0.0, %v7047
      %v7049 = vpop.f32.mrf.mxu0
      %7050 = vmatprep.mubr.f32.mxu0 0.0
      %7051 = vmatmul.mubr.f32.gmra.mxu0 %v6886
      %v7052 = vpop.f32.mrf.mxu0
      %v7053 = vadd.f32 0.0, %v7052
      %v7054 = vpop.f32.mrf.mxu0
      %7055 = vmatprep.mubr.f32.mxu0 0.0
      %7056 = vmatmul.mubr.f32.gmra.mxu0 %v6888
      %v7057 = vpop.f32.mrf.mxu0
      %v7058 = vadd.f32 0.0, %v7057
      %v7059 = vpop.f32.mrf.mxu0
      %7060 = vmatprep.mubr.f32.mxu0 0.0
      %7061 = vmatmul.mubr.f32.gmra.mxu0 %v6890
      %v7062 = vpop.f32.mrf.mxu0
      %v7063 = vadd.f32 0.0, %v7062
      %v7064 = vpop.f32.mrf.mxu0
      %7065 = vmatprep.mubr.f32.mxu0 0.0
      %7066 = vmatmul.mubr.f32.gmra.mxu0 %v6892
      %v7067 = vpop.f32.mrf.mxu0
      %v7068 = vadd.f32 0.0, %v7067
      %v7069 = vpop.f32.mrf.mxu0
      %7070 = vmatprep.mubr.f32.mxu0 0.0
      %7071 = vmatmul.mubr.f32.gmra.mxu0 %v6894
      %v7072 = vpop.f32.mrf.mxu0
      %v7073 = vadd.f32 0.0, %v7072
      %v7074 = vpop.f32.mrf.mxu0
      %7075 = vmatprep.mubr.f32.mxu0 0.0
      %7076 = vmatmul.mubr.f32.gmra.mxu0 %v6896
      %v7077 = vpop.f32.mrf.mxu0
      %v7078 = vadd.f32 0.0, %v7077
      %v7079 = vpop.f32.mrf.mxu0
      %7080 = vmatprep.mubr.f32.mxu0 0.0
      %7081 = vmatmul.mubr.f32.gmra.mxu0 %v6898
      %v7082 = vpop.f32.mrf.mxu0
      %v7083 = vadd.f32 0.0, %v7082
      %v7084 = vpop.f32.mrf.mxu0
      %7085 = vmatprep.mubr.f32.mxu0 0.0
      %7086 = vmatmul.mubr.f32.gmra.mxu0 %v6900
      %v7087 = vpop.f32.mrf.mxu0
      %v7088 = vadd.f32 0.0, %v7087
      %v7089 = vpop.f32.mrf.mxu0
      %7090 = vmatprep.mubr.f32.mxu0 0.0
      %7091 = vmatmul.mubr.f32.gmra.mxu0 %v6902
      %v7092 = vpop.f32.mrf.mxu0
      %v7093 = vadd.f32 0.0, %v7092
      %v7094 = vpop.f32.mrf.mxu0
      %7095 = vmatprep.mubr.f32.mxu0 0.0
      %7096 = vmatmul.mubr.f32.gmra.mxu0 %v6904
      %v7097 = vpop.f32.mrf.mxu0
      %v7098 = vadd.f32 0.0, %v7097
      %v7099 = vpop.f32.mrf.mxu0
      %7100 = vmatprep.mubr.f32.mxu0 0.0
      %7101 = vmatmul.mubr.f32.gmra.mxu0 %v6906
      %v7102 = vpop.f32.mrf.mxu0
      %v7103 = vadd.f32 0.0, %v7102
      %v7104 = vpop.f32.mrf.mxu0
      %7105 = vmatprep.mubr.f32.mxu0 0.0
      %7106 = vmatmul.mubr.f32.gmra.mxu0 %v6908
      %v7107 = vpop.f32.mrf.mxu0
      %v7108 = vadd.f32 0.0, %v7107
      %v7109 = vpop.f32.mrf.mxu0
      %7110 = vmatprep.mubr.f32.mxu0 0.0
      %7111 = vmatmul.mubr.f32.gmra.mxu0 %v6910
      %v7112 = vpop.f32.mrf.mxu0
      %v7113 = vadd.f32 0.0, %v7112
      %v7114 = vpop.f32.mrf.mxu0
      %7115 = vmatprep.mubr.f32.mxu0 0.0
      %7116 = vmatmul.mubr.f32.gmra.mxu0 %v6912
      %v7117 = vpop.f32.mrf.mxu0
      %v7118 = vadd.f32 0.0, %v7117
      %v7119 = vpop.f32.mrf.mxu0
      %7120 = vmatprep.mubr.f32.mxu0 0.0
      %7121 = vmatmul.mubr.f32.gmra.mxu0 %v6914
      %v7122 = vpop.f32.mrf.mxu0
      %v7123 = vadd.f32 0.0, %v7122
      %v7124 = vpop.f32.mrf.mxu0
      %7125 = vmatprep.mubr.f32.mxu0 0.0
      %7126 = vmatmul.mubr.f32.gmra.mxu0 %v6916
      %v7127 = vpop.f32.mrf.mxu0
      %v7128 = vadd.f32 0.0, %v7127
      %v7129 = vpop.f32.mrf.mxu0
      %7130 = vmatprep.mubr.f32.mxu0 0.0
      %7131 = vmatmul.mubr.f32.gmra.mxu0 %v6918
      %v7132 = vpop.f32.mrf.mxu0
      %v7133 = vadd.f32 0.0, %v7132
      %v7134 = vpop.f32.mrf.mxu0
      %7135 = vmatprep.mubr.f32.mxu0 0.0
      %7136 = vmatmul.mubr.f32.gmra.mxu0 %v6920
      %v7137 = vpop.f32.mrf.mxu0
      %v7138 = vadd.f32 0.0, %v7137
      %v7139 = vpop.f32.mrf.mxu0
      %7140 = vmatprep.mubr.f32.mxu0 0.0
      %7141 = vmatmul.mubr.f32.gmra.mxu0 %v6922
      %v7142 = vpop.f32.mrf.mxu0
      %v7143 = vadd.f32 0.0, %v7142
      %v7144 = vpop.f32.mrf.mxu0
      %7145 = vmatprep.mubr.f32.mxu0 0.0
      %7146 = vmatmul.mubr.f32.gmra.mxu0 %v6924
      %v7147 = vpop.f32.mrf.mxu0
      %v7148 = vadd.f32 0.0, %v7147
      %v7149 = vpop.f32.mrf.mxu0
      %7150 = vdwg.mxu0
      %v7151 = vadd.f32 %v6748, %v6993
      %v7152 = vadd.f32 %v6749, %v6998
      %v7153 = vadd.f32 %v6750, %v7003
      %v7154 = vadd.f32 %v6751, %v7008
      %v7155 = vadd.f32 %v6752, %v7013
      %v7156 = vadd.f32 %v6753, %v7018
      %v7157 = vadd.f32 %v6754, %v7023
      %v7158 = vadd.f32 %v6755, %v7028
      %v7159 = vadd.f32 %v6756, %v7033
      %v7160 = vadd.f32 %v6757, %v7038
      %v7161 = vadd.f32 %v6758, %v7043
      %v7162 = vadd.f32 %v6759, %v7048
      %v7163 = vadd.f32 %v6760, %v7053
      %v7164 = vadd.f32 %v6761, %v7058
      %v7165 = vadd.f32 %v6762, %v7063
      %v7166 = vadd.f32 %v6763, %v7068
      %v7167 = vadd.f32 %v6764, %v7073
      %v7168 = vadd.f32 %v6765, %v7078
      %v7169 = vadd.f32 %v6766, %v7083
      %v7170 = vadd.f32 %v6767, %v7088
      %v7171 = vadd.f32 %v6768, %v7093
      %v7172 = vadd.f32 %v6769, %v7098
      %v7173 = vadd.f32 %v6770, %v7103
      %v7174 = vadd.f32 %v6771, %v7108
      %v7175 = vadd.f32 %v6772, %v7113
      %v7176 = vadd.f32 %v6773, %v7118
      %v7177 = vadd.f32 %v6774, %v7123
      %v7178 = vadd.f32 %v6775, %v7128
      %v7179 = vadd.f32 %v6776, %v7133
      %v7180 = vadd.f32 %v6777, %v7138
      %v7181 = vadd.f32 %v6778, %v7143
      %v7182 = vadd.f32 %v6779, %v7148
      %s7183 = scalar_lea.vmem %s3, 168
      %v7184 = vld [vmem:[%s7183] sm:$0xff]
      %v7186 = vsel %vm638, %v500, 0
      %v7189 = vsel %vm638, %v501, 0
      %7191 = vmatprep.subr.mxu0 0.0
      %7192 = vmatpush1.msra.mxu0 0.0
      %7193 = vmatprep.subr.mxu0 0.0
      %7194 = vmatpush1.msra.mxu0 0.0
      %7195 = vmatprep.subr.mxu0 0.0
      %7196 = vmatpush1.msra.mxu0 0.0
      %7197 = vmatprep.subr.mxu0 0.0
      %7198 = vmatpush1.msra.mxu0 0.0
      %7199 = vmatprep.subr.mxu0 0.0
      %7200 = vmatpush1.msra.mxu0 0.0
      %7201 = vmatprep.subr.mxu0 0.0
      %7202 = vmatpush1.msra.mxu0 0.0
      %7203 = vmatprep.subr.mxu0 0.0
      %7204 = vmatpush1.msra.mxu0 0.0
      %7205 = vmatprep.subr.mxu0 0.0
      %7206 = vmatpush1.msra.mxu0 0.0
      %7207 = vmatprep.subr.mxu0 0.0
      %7208 = vmatpush1.msra.mxu0 0.0
      %7209 = vmatprep.subr.mxu0 0.0
      %7210 = vmatpush1.msra.mxu0 0.0
      %7211 = vmatprep.subr.mxu0 0.0
      %7212 = vmatpush1.msra.mxu0 0.0
      %7213 = vmatprep.subr.mxu0 0.0
      %7214 = vmatpush1.msra.mxu0 0.0
      %7215 = vmatprep.subr.mxu0 0.0
      %7216 = vmatpush1.msra.mxu0 0.0
      %7217 = vmatprep.subr.mxu0 0.0
      %7218 = vmatpush1.msra.mxu0 0.0
      %7219 = vmatprep.subr.mxu0 0.0
      %7220 = vmatpush1.msra.mxu0 0.0
      %7221 = vmatprep.subr.mxu0 0.0
      %7222 = vmatpush1.msra.mxu0 %v7184
      %7223 = vmatprep.subr.mxu0 0.0
      %7224 = vmatpush2.msra.mxu0 0.0
      %7225 = vmatprep.subr.mxu0 0.0
      %7226 = vmatpush2.msra.mxu0 0.0
      %7227 = vmatprep.subr.mxu0 0.0
      %7228 = vmatpush2.msra.mxu0 0.0
      %7229 = vmatprep.subr.mxu0 0.0
      %7230 = vmatpush2.msra.mxu0 0.0
      %7231 = vmatprep.subr.mxu0 0.0
      %7232 = vmatpush2.msra.mxu0 0.0
      %7233 = vmatprep.subr.mxu0 0.0
      %7234 = vmatpush2.msra.mxu0 0.0
      %7235 = vmatprep.subr.mxu0 0.0
      %7236 = vmatpush2.msra.mxu0 0.0
      %7237 = vmatprep.subr.mxu0 0.0
      %7238 = vmatpush2.msra.mxu0 0.0
      %7239 = vmatprep.subr.mxu0 0.0
      %7240 = vmatpush2.msra.mxu0 0.0
      %7241 = vmatprep.subr.mxu0 0.0
      %7242 = vmatpush2.msra.mxu0 0.0
      %7243 = vmatprep.subr.mxu0 0.0
      %7244 = vmatpush2.msra.mxu0 0.0
      %7245 = vmatprep.subr.mxu0 0.0
      %7246 = vmatpush2.msra.mxu0 0.0
      %7247 = vmatprep.subr.mxu0 0.0
      %7248 = vmatpush2.msra.mxu0 0.0
      %7249 = vmatprep.subr.mxu0 0.0
      %7250 = vmatpush2.msra.mxu0 0.0
      %7251 = vmatprep.subr.mxu0 0.0
      %7252 = vmatpush2.msra.mxu0 0.0
      %7253 = vmatprep.subr.mxu0 0.0
      %7254 = vmatpush2.msra.mxu0 0.0
      %7255 = vmatprep.mubr.f32.mxu0 0.0
      %7256 = vmatmul.mubr.f32.gmra.mxu0 %v6015
      %v7257 = vpop.f32.mrf.mxu0
      %v7258 = vadd.f32 0.0, %v7257
      %v7259 = vpop.f32.mrf.mxu0
      %7260 = vmatprep.mubr.f32.mxu0 0.0
      %7261 = vmatmul.mubr.f32.gmra.mxu0 %v6018
      %v7262 = vpop.f32.mrf.mxu0
      %v7263 = vadd.f32 0.0, %v7262
      %v7264 = vpop.f32.mrf.mxu0
      %7265 = vmatprep.mubr.f32.mxu0 0.0
      %7266 = vmatmul.mubr.f32.gmra.mxu0 %v6021
      %v7267 = vpop.f32.mrf.mxu0
      %v7268 = vadd.f32 0.0, %v7267
      %v7269 = vpop.f32.mrf.mxu0
      %7270 = vmatprep.mubr.f32.mxu0 0.0
      %7271 = vmatmul.mubr.f32.gmra.mxu0 %v6024
      %v7272 = vpop.f32.mrf.mxu0
      %v7273 = vadd.f32 0.0, %v7272
      %v7274 = vpop.f32.mrf.mxu0
      %7275 = vmatprep.mubr.f32.mxu0 0.0
      %7276 = vmatmul.mubr.f32.gmra.mxu0 %v6027
      %v7277 = vpop.f32.mrf.mxu0
      %v7278 = vadd.f32 0.0, %v7277
      %v7279 = vpop.f32.mrf.mxu0
      %7280 = vmatprep.mubr.f32.mxu0 0.0
      %7281 = vmatmul.mubr.f32.gmra.mxu0 %v6030
      %v7282 = vpop.f32.mrf.mxu0
      %v7283 = vadd.f32 0.0, %v7282
      %v7284 = vpop.f32.mrf.mxu0
      %7285 = vmatprep.mubr.f32.mxu0 0.0
      %7286 = vmatmul.mubr.f32.gmra.mxu0 %v6033
      %v7287 = vpop.f32.mrf.mxu0
      %v7288 = vadd.f32 0.0, %v7287
      %v7289 = vpop.f32.mrf.mxu0
      %7290 = vmatprep.mubr.f32.mxu0 0.0
      %7291 = vmatmul.mubr.f32.gmra.mxu0 %v6036
      %v7292 = vpop.f32.mrf.mxu0
      %v7293 = vadd.f32 0.0, %v7292
      %v7294 = vpop.f32.mrf.mxu0
      %7295 = vmatprep.mubr.f32.mxu0 0.0
      %7296 = vmatmul.mubr.f32.gmra.mxu0 %v6039
      %v7297 = vpop.f32.mrf.mxu0
      %v7298 = vadd.f32 0.0, %v7297
      %v7299 = vpop.f32.mrf.mxu0
      %7300 = vmatprep.mubr.f32.mxu0 0.0
      %7301 = vmatmul.mubr.f32.gmra.mxu0 %v6042
      %v7302 = vpop.f32.mrf.mxu0
      %v7303 = vadd.f32 0.0, %v7302
      %v7304 = vpop.f32.mrf.mxu0
      %7305 = vmatprep.mubr.f32.mxu0 0.0
      %7306 = vmatmul.mubr.f32.gmra.mxu0 %v6045
      %v7307 = vpop.f32.mrf.mxu0
      %v7308 = vadd.f32 0.0, %v7307
      %v7309 = vpop.f32.mrf.mxu0
      %7310 = vmatprep.mubr.f32.mxu0 0.0
      %7311 = vmatmul.mubr.f32.gmra.mxu0 %v6048
      %v7312 = vpop.f32.mrf.mxu0
      %v7313 = vadd.f32 0.0, %v7312
      %v7314 = vpop.f32.mrf.mxu0
      %7315 = vmatprep.mubr.f32.mxu0 0.0
      %7316 = vmatmul.mubr.f32.gmra.mxu0 %v6051
      %v7317 = vpop.f32.mrf.mxu0
      %v7318 = vadd.f32 0.0, %v7317
      %v7319 = vpop.f32.mrf.mxu0
      %7320 = vmatprep.mubr.f32.mxu0 0.0
      %7321 = vmatmul.mubr.f32.gmra.mxu0 %v6054
      %v7322 = vpop.f32.mrf.mxu0
      %v7323 = vadd.f32 0.0, %v7322
      %v7324 = vpop.f32.mrf.mxu0
      %7325 = vmatprep.mubr.f32.mxu0 0.0
      %7326 = vmatmul.mubr.f32.gmra.mxu0 %v6057
      %v7327 = vpop.f32.mrf.mxu0
      %v7328 = vadd.f32 0.0, %v7327
      %v7329 = vpop.f32.mrf.mxu0
      %7330 = vmatprep.mubr.f32.mxu0 0.0
      %7331 = vmatmul.mubr.f32.gmra.mxu0 %v6060
      %v7332 = vpop.f32.mrf.mxu0
      %v7333 = vadd.f32 0.0, %v7332
      %v7334 = vpop.f32.mrf.mxu0
      %7335 = vmatprep.mubr.f32.mxu0 0.0
      %7336 = vmatmul.mubr.f32.gmra.mxu0 %v6063
      %v7337 = vpop.f32.mrf.mxu0
      %v7338 = vadd.f32 0.0, %v7337
      %v7339 = vpop.f32.mrf.mxu0
      %7340 = vmatprep.mubr.f32.mxu0 0.0
      %7341 = vmatmul.mubr.f32.gmra.mxu0 %v6066
      %v7342 = vpop.f32.mrf.mxu0
      %v7343 = vadd.f32 0.0, %v7342
      %v7344 = vpop.f32.mrf.mxu0
      %7345 = vmatprep.mubr.f32.mxu0 0.0
      %7346 = vmatmul.mubr.f32.gmra.mxu0 %v6069
      %v7347 = vpop.f32.mrf.mxu0
      %v7348 = vadd.f32 0.0, %v7347
      %v7349 = vpop.f32.mrf.mxu0
      %7350 = vmatprep.mubr.f32.mxu0 0.0
      %7351 = vmatmul.mubr.f32.gmra.mxu0 %v6072
      %v7352 = vpop.f32.mrf.mxu0
      %v7353 = vadd.f32 0.0, %v7352
      %v7354 = vpop.f32.mrf.mxu0
      %7355 = vmatprep.mubr.f32.mxu0 0.0
      %7356 = vmatmul.mubr.f32.gmra.mxu0 %v6075
      %v7357 = vpop.f32.mrf.mxu0
      %v7358 = vadd.f32 0.0, %v7357
      %v7359 = vpop.f32.mrf.mxu0
      %7360 = vmatprep.mubr.f32.mxu0 0.0
      %7361 = vmatmul.mubr.f32.gmra.mxu0 %v6078
      %v7362 = vpop.f32.mrf.mxu0
      %v7363 = vadd.f32 0.0, %v7362
      %v7364 = vpop.f32.mrf.mxu0
      %7365 = vmatprep.mubr.f32.mxu0 0.0
      %7366 = vmatmul.mubr.f32.gmra.mxu0 %v6081
      %v7367 = vpop.f32.mrf.mxu0
      %v7368 = vadd.f32 0.0, %v7367
      %v7369 = vpop.f32.mrf.mxu0
      %7370 = vmatprep.mubr.f32.mxu0 0.0
      %7371 = vmatmul.mubr.f32.gmra.mxu0 %v6084
      %v7372 = vpop.f32.mrf.mxu0
      %v7373 = vadd.f32 0.0, %v7372
      %v7374 = vpop.f32.mrf.mxu0
      %7375 = vmatprep.mubr.f32.mxu0 0.0
      %7376 = vmatmul.mubr.f32.gmra.mxu0 %v6087
      %v7377 = vpop.f32.mrf.mxu0
      %v7378 = vadd.f32 0.0, %v7377
      %v7379 = vpop.f32.mrf.mxu0
      %7380 = vmatprep.mubr.f32.mxu0 0.0
      %7381 = vmatmul.mubr.f32.gmra.mxu0 %v6090
      %v7382 = vpop.f32.mrf.mxu0
      %v7383 = vadd.f32 0.0, %v7382
      %v7384 = vpop.f32.mrf.mxu0
      %7385 = vmatprep.mubr.f32.mxu0 0.0
      %7386 = vmatmul.mubr.f32.gmra.mxu0 %v6093
      %v7387 = vpop.f32.mrf.mxu0
      %v7388 = vadd.f32 0.0, %v7387
      %v7389 = vpop.f32.mrf.mxu0
      %7390 = vmatprep.mubr.f32.mxu0 0.0
      %7391 = vmatmul.mubr.f32.gmra.mxu0 %v6096
      %v7392 = vpop.f32.mrf.mxu0
      %v7393 = vadd.f32 0.0, %v7392
      %v7394 = vpop.f32.mrf.mxu0
      %7395 = vmatprep.mubr.f32.mxu0 0.0
      %7396 = vmatmul.mubr.f32.gmra.mxu0 %v6099
      %v7397 = vpop.f32.mrf.mxu0
      %v7398 = vadd.f32 0.0, %v7397
      %v7399 = vpop.f32.mrf.mxu0
      %7400 = vmatprep.mubr.f32.mxu0 0.0
      %7401 = vmatmul.mubr.f32.gmra.mxu0 %v6102
      %v7402 = vpop.f32.mrf.mxu0
      %v7403 = vadd.f32 0.0, %v7402
      %v7404 = vpop.f32.mrf.mxu0
      %7405 = vmatprep.mubr.f32.mxu0 0.0
      %7406 = vmatmul.mubr.f32.gmra.mxu0 %v7186
      %v7407 = vpop.f32.mrf.mxu0
      %v7408 = vadd.f32 0.0, %v7407
      %v7409 = vpop.f32.mrf.mxu0
      %7410 = vmatprep.mubr.f32.mxu0 0.0
      %7411 = vmatmul.mubr.f32.gmra.mxu0 %v7189
      %v7412 = vpop.f32.mrf.mxu0
      %v7413 = vadd.f32 0.0, %v7412
      %v7414 = vpop.f32.mrf.mxu0
      %7415 = vdwg.mxu0
      %v7416 = vadd.f32 %v7151, %v7258
      %v7417 = vadd.f32 %v7152, %v7263
      %v7418 = vadd.f32 %v7153, %v7268
      %v7419 = vadd.f32 %v7154, %v7273
      %v7420 = vadd.f32 %v7155, %v7278
      %v7421 = vadd.f32 %v7156, %v7283
      %v7422 = vadd.f32 %v7157, %v7288
      %v7423 = vadd.f32 %v7158, %v7293
      %v7424 = vadd.f32 %v7159, %v7298
      %v7425 = vadd.f32 %v7160, %v7303
      %v7426 = vadd.f32 %v7161, %v7308
      %v7427 = vadd.f32 %v7162, %v7313
      %v7428 = vadd.f32 %v7163, %v7318
      %v7429 = vadd.f32 %v7164, %v7323
      %v7430 = vadd.f32 %v7165, %v7328
      %v7431 = vadd.f32 %v7166, %v7333
      %v7432 = vadd.f32 %v7167, %v7338
      %v7433 = vadd.f32 %v7168, %v7343
      %v7434 = vadd.f32 %v7169, %v7348
      %v7435 = vadd.f32 %v7170, %v7353
      %v7436 = vadd.f32 %v7171, %v7358
      %v7437 = vadd.f32 %v7172, %v7363
      %v7438 = vadd.f32 %v7173, %v7368
      %v7439 = vadd.f32 %v7174, %v7373
      %v7440 = vadd.f32 %v7175, %v7378
      %v7441 = vadd.f32 %v7176, %v7383
      %v7442 = vadd.f32 %v7177, %v7388
      %v7443 = vadd.f32 %v7178, %v7393
      %v7444 = vadd.f32 %v7179, %v7398
      %v7445 = vadd.f32 %v7180, %v7403
      %v7446 = vadd.f32 %v7181, %v7408
      %v7447 = vadd.f32 %v7182, %v7413
      %v7449 = vrot.slane %v500, 1
      %v7450 = vrot.slane %v501, 1
      %v7451 = vsel %vm555, %v7449, %v7450
      %v7452 = vrot.slane %v502, 1
      %v7453 = vsel %vm555, %v7450, %v7452
      %s7454 = scalar_lea.vmem %s3, 176
      %v7455 = vld [vmem:[%s7454] sm:$0xff]
      %v7456 = vsel %vm638, %v7451, 0
      %v7458 = vsel %vm638, %v7453, 0
      %7460 = vmatprep.subr.mxu0 0.0
      %7461 = vmatpush1.msra.mxu0 0.0
      %7462 = vmatprep.subr.mxu0 0.0
      %7463 = vmatpush1.msra.mxu0 0.0
      %7464 = vmatprep.subr.mxu0 0.0
      %7465 = vmatpush1.msra.mxu0 0.0
      %7466 = vmatprep.subr.mxu0 0.0
      %7467 = vmatpush1.msra.mxu0 0.0
      %7468 = vmatprep.subr.mxu0 0.0
      %7469 = vmatpush1.msra.mxu0 0.0
      %7470 = vmatprep.subr.mxu0 0.0
      %7471 = vmatpush1.msra.mxu0 0.0
      %7472 = vmatprep.subr.mxu0 0.0
      %7473 = vmatpush1.msra.mxu0 0.0
      %7474 = vmatprep.subr.mxu0 0.0
      %7475 = vmatpush1.msra.mxu0 0.0
      %7476 = vmatprep.subr.mxu0 0.0
      %7477 = vmatpush1.msra.mxu0 0.0
      %7478 = vmatprep.subr.mxu0 0.0
      %7479 = vmatpush1.msra.mxu0 0.0
      %7480 = vmatprep.subr.mxu0 0.0
      %7481 = vmatpush1.msra.mxu0 0.0
      %7482 = vmatprep.subr.mxu0 0.0
      %7483 = vmatpush1.msra.mxu0 0.0
      %7484 = vmatprep.subr.mxu0 0.0
      %7485 = vmatpush1.msra.mxu0 0.0
      %7486 = vmatprep.subr.mxu0 0.0
      %7487 = vmatpush1.msra.mxu0 0.0
      %7488 = vmatprep.subr.mxu0 0.0
      %7489 = vmatpush1.msra.mxu0 0.0
      %7490 = vmatprep.subr.mxu0 0.0
      %7491 = vmatpush1.msra.mxu0 %v7455
      %7492 = vmatprep.subr.mxu0 0.0
      %7493 = vmatpush2.msra.mxu0 0.0
      %7494 = vmatprep.subr.mxu0 0.0
      %7495 = vmatpush2.msra.mxu0 0.0
      %7496 = vmatprep.subr.mxu0 0.0
      %7497 = vmatpush2.msra.mxu0 0.0
      %7498 = vmatprep.subr.mxu0 0.0
      %7499 = vmatpush2.msra.mxu0 0.0
      %7500 = vmatprep.subr.mxu0 0.0
      %7501 = vmatpush2.msra.mxu0 0.0
      %7502 = vmatprep.subr.mxu0 0.0
      %7503 = vmatpush2.msra.mxu0 0.0
      %7504 = vmatprep.subr.mxu0 0.0
      %7505 = vmatpush2.msra.mxu0 0.0
      %7506 = vmatprep.subr.mxu0 0.0
      %7507 = vmatpush2.msra.mxu0 0.0
      %7508 = vmatprep.subr.mxu0 0.0
      %7509 = vmatpush2.msra.mxu0 0.0
      %7510 = vmatprep.subr.mxu0 0.0
      %7511 = vmatpush2.msra.mxu0 0.0
      %7512 = vmatprep.subr.mxu0 0.0
      %7513 = vmatpush2.msra.mxu0 0.0
      %7514 = vmatprep.subr.mxu0 0.0
      %7515 = vmatpush2.msra.mxu0 0.0
      %7516 = vmatprep.subr.mxu0 0.0
      %7517 = vmatpush2.msra.mxu0 0.0
      %7518 = vmatprep.subr.mxu0 0.0
      %7519 = vmatpush2.msra.mxu0 0.0
      %7520 = vmatprep.subr.mxu0 0.0
      %7521 = vmatpush2.msra.mxu0 0.0
      %7522 = vmatprep.subr.mxu0 0.0
      %7523 = vmatpush2.msra.mxu0 0.0
      %7524 = vmatprep.mubr.f32.mxu0 0.0
      %7525 = vmatmul.mubr.f32.gmra.mxu0 %v6463
      %v7526 = vpop.f32.mrf.mxu0
      %v7527 = vadd.f32 0.0, %v7526
      %v7528 = vpop.f32.mrf.mxu0
      %7529 = vmatprep.mubr.f32.mxu0 0.0
      %7530 = vmatmul.mubr.f32.gmra.mxu0 %v6465
      %v7531 = vpop.f32.mrf.mxu0
      %v7532 = vadd.f32 0.0, %v7531
      %v7533 = vpop.f32.mrf.mxu0
      %7534 = vmatprep.mubr.f32.mxu0 0.0
      %7535 = vmatmul.mubr.f32.gmra.mxu0 %v6467
      %v7536 = vpop.f32.mrf.mxu0
      %v7537 = vadd.f32 0.0, %v7536
      %v7538 = vpop.f32.mrf.mxu0
      %7539 = vmatprep.mubr.f32.mxu0 0.0
      %7540 = vmatmul.mubr.f32.gmra.mxu0 %v6469
      %v7541 = vpop.f32.mrf.mxu0
      %v7542 = vadd.f32 0.0, %v7541
      %v7543 = vpop.f32.mrf.mxu0
      %7544 = vmatprep.mubr.f32.mxu0 0.0
      %7545 = vmatmul.mubr.f32.gmra.mxu0 %v6471
      %v7546 = vpop.f32.mrf.mxu0
      %v7547 = vadd.f32 0.0, %v7546
      %v7548 = vpop.f32.mrf.mxu0
      %7549 = vmatprep.mubr.f32.mxu0 0.0
      %7550 = vmatmul.mubr.f32.gmra.mxu0 %v6473
      %v7551 = vpop.f32.mrf.mxu0
      %v7552 = vadd.f32 0.0, %v7551
      %v7553 = vpop.f32.mrf.mxu0
      %7554 = vmatprep.mubr.f32.mxu0 0.0
      %7555 = vmatmul.mubr.f32.gmra.mxu0 %v6475
      %v7556 = vpop.f32.mrf.mxu0
      %v7557 = vadd.f32 0.0, %v7556
      %v7558 = vpop.f32.mrf.mxu0
      %7559 = vmatprep.mubr.f32.mxu0 0.0
      %7560 = vmatmul.mubr.f32.gmra.mxu0 %v6477
      %v7561 = vpop.f32.mrf.mxu0
      %v7562 = vadd.f32 0.0, %v7561
      %v7563 = vpop.f32.mrf.mxu0
      %7564 = vmatprep.mubr.f32.mxu0 0.0
      %7565 = vmatmul.mubr.f32.gmra.mxu0 %v6479
      %v7566 = vpop.f32.mrf.mxu0
      %v7567 = vadd.f32 0.0, %v7566
      %v7568 = vpop.f32.mrf.mxu0
      %7569 = vmatprep.mubr.f32.mxu0 0.0
      %7570 = vmatmul.mubr.f32.gmra.mxu0 %v6481
      %v7571 = vpop.f32.mrf.mxu0
      %v7572 = vadd.f32 0.0, %v7571
      %v7573 = vpop.f32.mrf.mxu0
      %7574 = vmatprep.mubr.f32.mxu0 0.0
      %7575 = vmatmul.mubr.f32.gmra.mxu0 %v6483
      %v7576 = vpop.f32.mrf.mxu0
      %v7577 = vadd.f32 0.0, %v7576
      %v7578 = vpop.f32.mrf.mxu0
      %7579 = vmatprep.mubr.f32.mxu0 0.0
      %7580 = vmatmul.mubr.f32.gmra.mxu0 %v6485
      %v7581 = vpop.f32.mrf.mxu0
      %v7582 = vadd.f32 0.0, %v7581
      %v7583 = vpop.f32.mrf.mxu0
      %7584 = vmatprep.mubr.f32.mxu0 0.0
      %7585 = vmatmul.mubr.f32.gmra.mxu0 %v6487
      %v7586 = vpop.f32.mrf.mxu0
      %v7587 = vadd.f32 0.0, %v7586
      %v7588 = vpop.f32.mrf.mxu0
      %7589 = vmatprep.mubr.f32.mxu0 0.0
      %7590 = vmatmul.mubr.f32.gmra.mxu0 %v6489
      %v7591 = vpop.f32.mrf.mxu0
      %v7592 = vadd.f32 0.0, %v7591
      %v7593 = vpop.f32.mrf.mxu0
      %7594 = vmatprep.mubr.f32.mxu0 0.0
      %7595 = vmatmul.mubr.f32.gmra.mxu0 %v6491
      %v7596 = vpop.f32.mrf.mxu0
      %v7597 = vadd.f32 0.0, %v7596
      %v7598 = vpop.f32.mrf.mxu0
      %7599 = vmatprep.mubr.f32.mxu0 0.0
      %7600 = vmatmul.mubr.f32.gmra.mxu0 %v6493
      %v7601 = vpop.f32.mrf.mxu0
      %v7602 = vadd.f32 0.0, %v7601
      %v7603 = vpop.f32.mrf.mxu0
      %7604 = vmatprep.mubr.f32.mxu0 0.0
      %7605 = vmatmul.mubr.f32.gmra.mxu0 %v6495
      %v7606 = vpop.f32.mrf.mxu0
      %v7607 = vadd.f32 0.0, %v7606
      %v7608 = vpop.f32.mrf.mxu0
      %7609 = vmatprep.mubr.f32.mxu0 0.0
      %7610 = vmatmul.mubr.f32.gmra.mxu0 %v6497
      %v7611 = vpop.f32.mrf.mxu0
      %v7612 = vadd.f32 0.0, %v7611
      %v7613 = vpop.f32.mrf.mxu0
      %7614 = vmatprep.mubr.f32.mxu0 0.0
      %7615 = vmatmul.mubr.f32.gmra.mxu0 %v6499
      %v7616 = vpop.f32.mrf.mxu0
      %v7617 = vadd.f32 0.0, %v7616
      %v7618 = vpop.f32.mrf.mxu0
      %7619 = vmatprep.mubr.f32.mxu0 0.0
      %7620 = vmatmul.mubr.f32.gmra.mxu0 %v6501
      %v7621 = vpop.f32.mrf.mxu0
      %v7622 = vadd.f32 0.0, %v7621
      %v7623 = vpop.f32.mrf.mxu0
      %7624 = vmatprep.mubr.f32.mxu0 0.0
      %7625 = vmatmul.mubr.f32.gmra.mxu0 %v6503
      %v7626 = vpop.f32.mrf.mxu0
      %v7627 = vadd.f32 0.0, %v7626
      %v7628 = vpop.f32.mrf.mxu0
      %7629 = vmatprep.mubr.f32.mxu0 0.0
      %7630 = vmatmul.mubr.f32.gmra.mxu0 %v6505
      %v7631 = vpop.f32.mrf.mxu0
      %v7632 = vadd.f32 0.0, %v7631
      %v7633 = vpop.f32.mrf.mxu0
      %7634 = vmatprep.mubr.f32.mxu0 0.0
      %7635 = vmatmul.mubr.f32.gmra.mxu0 %v6507
      %v7636 = vpop.f32.mrf.mxu0
      %v7637 = vadd.f32 0.0, %v7636
      %v7638 = vpop.f32.mrf.mxu0
      %7639 = vmatprep.mubr.f32.mxu0 0.0
      %7640 = vmatmul.mubr.f32.gmra.mxu0 %v6509
      %v7641 = vpop.f32.mrf.mxu0
      %v7642 = vadd.f32 0.0, %v7641
      %v7643 = vpop.f32.mrf.mxu0
      %7644 = vmatprep.mubr.f32.mxu0 0.0
      %7645 = vmatmul.mubr.f32.gmra.mxu0 %v6511
      %v7646 = vpop.f32.mrf.mxu0
      %v7647 = vadd.f32 0.0, %v7646
      %v7648 = vpop.f32.mrf.mxu0
      %7649 = vmatprep.mubr.f32.mxu0 0.0
      %7650 = vmatmul.mubr.f32.gmra.mxu0 %v6513
      %v7651 = vpop.f32.mrf.mxu0
      %v7652 = vadd.f32 0.0, %v7651
      %v7653 = vpop.f32.mrf.mxu0
      %7654 = vmatprep.mubr.f32.mxu0 0.0
      %7655 = vmatmul.mubr.f32.gmra.mxu0 %v6515
      %v7656 = vpop.f32.mrf.mxu0
      %v7657 = vadd.f32 0.0, %v7656
      %v7658 = vpop.f32.mrf.mxu0
      %7659 = vmatprep.mubr.f32.mxu0 0.0
      %7660 = vmatmul.mubr.f32.gmra.mxu0 %v6517
      %v7661 = vpop.f32.mrf.mxu0
      %v7662 = vadd.f32 0.0, %v7661
      %v7663 = vpop.f32.mrf.mxu0
      %7664 = vmatprep.mubr.f32.mxu0 0.0
      %7665 = vmatmul.mubr.f32.gmra.mxu0 %v6519
      %v7666 = vpop.f32.mrf.mxu0
      %v7667 = vadd.f32 0.0, %v7666
      %v7668 = vpop.f32.mrf.mxu0
      %7669 = vmatprep.mubr.f32.mxu0 0.0
      %7670 = vmatmul.mubr.f32.gmra.mxu0 %v6521
      %v7671 = vpop.f32.mrf.mxu0
      %v7672 = vadd.f32 0.0, %v7671
      %v7673 = vpop.f32.mrf.mxu0
      %7674 = vmatprep.mubr.f32.mxu0 0.0
      %7675 = vmatmul.mubr.f32.gmra.mxu0 %v7456
      %v7676 = vpop.f32.mrf.mxu0
      %v7677 = vadd.f32 0.0, %v7676
      %v7678 = vpop.f32.mrf.mxu0
      %7679 = vmatprep.mubr.f32.mxu0 0.0
      %7680 = vmatmul.mubr.f32.gmra.mxu0 %v7458
      %v7681 = vpop.f32.mrf.mxu0
      %v7682 = vadd.f32 0.0, %v7681
      %v7683 = vpop.f32.mrf.mxu0
      %7684 = vdwg.mxu0
      %v7685 = vadd.f32 %v7416, %v7527
      %v7686 = vadd.f32 %v7417, %v7532
      %v7687 = vadd.f32 %v7418, %v7537
      %v7688 = vadd.f32 %v7419, %v7542
      %v7689 = vadd.f32 %v7420, %v7547
      %v7690 = vadd.f32 %v7421, %v7552
      %v7691 = vadd.f32 %v7422, %v7557
      %v7692 = vadd.f32 %v7423, %v7562
      %v7693 = vadd.f32 %v7424, %v7567
      %v7694 = vadd.f32 %v7425, %v7572
      %v7695 = vadd.f32 %v7426, %v7577
      %v7696 = vadd.f32 %v7427, %v7582
      %v7697 = vadd.f32 %v7428, %v7587
      %v7698 = vadd.f32 %v7429, %v7592
      %v7699 = vadd.f32 %v7430, %v7597
      %v7700 = vadd.f32 %v7431, %v7602
      %v7701 = vadd.f32 %v7432, %v7607
      %v7702 = vadd.f32 %v7433, %v7612
      %v7703 = vadd.f32 %v7434, %v7617
      %v7704 = vadd.f32 %v7435, %v7622
      %v7705 = vadd.f32 %v7436, %v7627
      %v7706 = vadd.f32 %v7437, %v7632
      %v7707 = vadd.f32 %v7438, %v7637
      %v7708 = vadd.f32 %v7439, %v7642
      %v7709 = vadd.f32 %v7440, %v7647
      %v7710 = vadd.f32 %v7441, %v7652
      %v7711 = vadd.f32 %v7442, %v7657
      %v7712 = vadd.f32 %v7443, %v7662
      %v7713 = vadd.f32 %v7444, %v7667
      %v7714 = vadd.f32 %v7445, %v7672
      %v7715 = vadd.f32 %v7446, %v7677
      %v7716 = vadd.f32 %v7447, %v7682
      %v7717 = vrot.slane %v500, 2
      %v7718 = vrot.slane %v501, 2
      %v7719 = vsel %vm1217, %v7717, %v7718
      %v7720 = vrot.slane %v502, 2
      %v7721 = vsel %vm1217, %v7718, %v7720
      %s7722 = scalar_lea.vmem %s3, 184
      %v7723 = vld [vmem:[%s7722] sm:$0xff]
      %v7724 = vsel %vm638, %v7719, 0
      %v7726 = vsel %vm638, %v7721, 0
      %7728 = vmatprep.subr.mxu0 0.0
      %7729 = vmatpush1.msra.mxu0 0.0
      %7730 = vmatprep.subr.mxu0 0.0
      %7731 = vmatpush1.msra.mxu0 0.0
      %7732 = vmatprep.subr.mxu0 0.0
      %7733 = vmatpush1.msra.mxu0 0.0
      %7734 = vmatprep.subr.mxu0 0.0
      %7735 = vmatpush1.msra.mxu0 0.0
      %7736 = vmatprep.subr.mxu0 0.0
      %7737 = vmatpush1.msra.mxu0 0.0
      %7738 = vmatprep.subr.mxu0 0.0
      %7739 = vmatpush1.msra.mxu0 0.0
      %7740 = vmatprep.subr.mxu0 0.0
      %7741 = vmatpush1.msra.mxu0 0.0
      %7742 = vmatprep.subr.mxu0 0.0
      %7743 = vmatpush1.msra.mxu0 0.0
      %7744 = vmatprep.subr.mxu0 0.0
      %7745 = vmatpush1.msra.mxu0 0.0
      %7746 = vmatprep.subr.mxu0 0.0
      %7747 = vmatpush1.msra.mxu0 0.0
      %7748 = vmatprep.subr.mxu0 0.0
      %7749 = vmatpush1.msra.mxu0 0.0
      %7750 = vmatprep.subr.mxu0 0.0
      %7751 = vmatpush1.msra.mxu0 0.0
      %7752 = vmatprep.subr.mxu0 0.0
      %7753 = vmatpush1.msra.mxu0 0.0
      %7754 = vmatprep.subr.mxu0 0.0
      %7755 = vmatpush1.msra.mxu0 0.0
      %7756 = vmatprep.subr.mxu0 0.0
      %7757 = vmatpush1.msra.mxu0 0.0
      %7758 = vmatprep.subr.mxu0 0.0
      %7759 = vmatpush1.msra.mxu0 %v7723
      %7760 = vmatprep.subr.mxu0 0.0
      %7761 = vmatpush2.msra.mxu0 0.0
      %7762 = vmatprep.subr.mxu0 0.0
      %7763 = vmatpush2.msra.mxu0 0.0
      %7764 = vmatprep.subr.mxu0 0.0
      %7765 = vmatpush2.msra.mxu0 0.0
      %7766 = vmatprep.subr.mxu0 0.0
      %7767 = vmatpush2.msra.mxu0 0.0
      %7768 = vmatprep.subr.mxu0 0.0
      %7769 = vmatpush2.msra.mxu0 0.0
      %7770 = vmatprep.subr.mxu0 0.0
      %7771 = vmatpush2.msra.mxu0 0.0
      %7772 = vmatprep.subr.mxu0 0.0
      %7773 = vmatpush2.msra.mxu0 0.0
      %7774 = vmatprep.subr.mxu0 0.0
      %7775 = vmatpush2.msra.mxu0 0.0
      %7776 = vmatprep.subr.mxu0 0.0
      %7777 = vmatpush2.msra.mxu0 0.0
      %7778 = vmatprep.subr.mxu0 0.0
      %7779 = vmatpush2.msra.mxu0 0.0
      %7780 = vmatprep.subr.mxu0 0.0
      %7781 = vmatpush2.msra.mxu0 0.0
      %7782 = vmatprep.subr.mxu0 0.0
      %7783 = vmatpush2.msra.mxu0 0.0
      %7784 = vmatprep.subr.mxu0 0.0
      %7785 = vmatpush2.msra.mxu0 0.0
      %7786 = vmatprep.subr.mxu0 0.0
      %7787 = vmatpush2.msra.mxu0 0.0
      %7788 = vmatprep.subr.mxu0 0.0
      %7789 = vmatpush2.msra.mxu0 0.0
      %7790 = vmatprep.subr.mxu0 0.0
      %7791 = vmatpush2.msra.mxu0 0.0
      %7792 = vmatprep.mubr.f32.mxu0 0.0
      %7793 = vmatmul.mubr.f32.gmra.mxu0 %v6866
      %v7794 = vpop.f32.mrf.mxu0
      %v7795 = vadd.f32 0.0, %v7794
      %v7796 = vpop.f32.mrf.mxu0
      %7797 = vmatprep.mubr.f32.mxu0 0.0
      %7798 = vmatmul.mubr.f32.gmra.mxu0 %v6868
      %v7799 = vpop.f32.mrf.mxu0
      %v7800 = vadd.f32 0.0, %v7799
      %v7801 = vpop.f32.mrf.mxu0
      %7802 = vmatprep.mubr.f32.mxu0 0.0
      %7803 = vmatmul.mubr.f32.gmra.mxu0 %v6870
      %v7804 = vpop.f32.mrf.mxu0
      %v7805 = vadd.f32 0.0, %v7804
      %v7806 = vpop.f32.mrf.mxu0
      %7807 = vmatprep.mubr.f32.mxu0 0.0
      %7808 = vmatmul.mubr.f32.gmra.mxu0 %v6872
      %v7809 = vpop.f32.mrf.mxu0
      %v7810 = vadd.f32 0.0, %v7809
      %v7811 = vpop.f32.mrf.mxu0
      %7812 = vmatprep.mubr.f32.mxu0 0.0
      %7813 = vmatmul.mubr.f32.gmra.mxu0 %v6874
      %v7814 = vpop.f32.mrf.mxu0
      %v7815 = vadd.f32 0.0, %v7814
      %v7816 = vpop.f32.mrf.mxu0
      %7817 = vmatprep.mubr.f32.mxu0 0.0
      %7818 = vmatmul.mubr.f32.gmra.mxu0 %v6876
      %v7819 = vpop.f32.mrf.mxu0
      %v7820 = vadd.f32 0.0, %v7819
      %v7821 = vpop.f32.mrf.mxu0
      %7822 = vmatprep.mubr.f32.mxu0 0.0
      %7823 = vmatmul.mubr.f32.gmra.mxu0 %v6878
      %v7824 = vpop.f32.mrf.mxu0
      %v7825 = vadd.f32 0.0, %v7824
      %v7826 = vpop.f32.mrf.mxu0
      %7827 = vmatprep.mubr.f32.mxu0 0.0
      %7828 = vmatmul.mubr.f32.gmra.mxu0 %v6880
      %v7829 = vpop.f32.mrf.mxu0
      %v7830 = vadd.f32 0.0, %v7829
      %v7831 = vpop.f32.mrf.mxu0
      %7832 = vmatprep.mubr.f32.mxu0 0.0
      %7833 = vmatmul.mubr.f32.gmra.mxu0 %v6882
      %v7834 = vpop.f32.mrf.mxu0
      %v7835 = vadd.f32 0.0, %v7834
      %v7836 = vpop.f32.mrf.mxu0
      %7837 = vmatprep.mubr.f32.mxu0 0.0
      %7838 = vmatmul.mubr.f32.gmra.mxu0 %v6884
      %v7839 = vpop.f32.mrf.mxu0
      %v7840 = vadd.f32 0.0, %v7839
      %v7841 = vpop.f32.mrf.mxu0
      %7842 = vmatprep.mubr.f32.mxu0 0.0
      %7843 = vmatmul.mubr.f32.gmra.mxu0 %v6886
      %v7844 = vpop.f32.mrf.mxu0
      %v7845 = vadd.f32 0.0, %v7844
      %v7846 = vpop.f32.mrf.mxu0
      %7847 = vmatprep.mubr.f32.mxu0 0.0
      %7848 = vmatmul.mubr.f32.gmra.mxu0 %v6888
      %v7849 = vpop.f32.mrf.mxu0
      %v7850 = vadd.f32 0.0, %v7849
      %v7851 = vpop.f32.mrf.mxu0
      %7852 = vmatprep.mubr.f32.mxu0 0.0
      %7853 = vmatmul.mubr.f32.gmra.mxu0 %v6890
      %v7854 = vpop.f32.mrf.mxu0
      %v7855 = vadd.f32 0.0, %v7854
      %v7856 = vpop.f32.mrf.mxu0
      %7857 = vmatprep.mubr.f32.mxu0 0.0
      %7858 = vmatmul.mubr.f32.gmra.mxu0 %v6892
      %v7859 = vpop.f32.mrf.mxu0
      %v7860 = vadd.f32 0.0, %v7859
      %v7861 = vpop.f32.mrf.mxu0
      %7862 = vmatprep.mubr.f32.mxu0 0.0
      %7863 = vmatmul.mubr.f32.gmra.mxu0 %v6894
      %v7864 = vpop.f32.mrf.mxu0
      %v7865 = vadd.f32 0.0, %v7864
      %v7866 = vpop.f32.mrf.mxu0
      %7867 = vmatprep.mubr.f32.mxu0 0.0
      %7868 = vmatmul.mubr.f32.gmra.mxu0 %v6896
      %v7869 = vpop.f32.mrf.mxu0
      %v7870 = vadd.f32 0.0, %v7869
      %v7871 = vpop.f32.mrf.mxu0
      %7872 = vmatprep.mubr.f32.mxu0 0.0
      %7873 = vmatmul.mubr.f32.gmra.mxu0 %v6898
      %v7874 = vpop.f32.mrf.mxu0
      %v7875 = vadd.f32 0.0, %v7874
      %v7876 = vpop.f32.mrf.mxu0
      %7877 = vmatprep.mubr.f32.mxu0 0.0
      %7878 = vmatmul.mubr.f32.gmra.mxu0 %v6900
      %v7879 = vpop.f32.mrf.mxu0
      %v7880 = vadd.f32 0.0, %v7879
      %v7881 = vpop.f32.mrf.mxu0
      %7882 = vmatprep.mubr.f32.mxu0 0.0
      %7883 = vmatmul.mubr.f32.gmra.mxu0 %v6902
      %v7884 = vpop.f32.mrf.mxu0
      %v7885 = vadd.f32 0.0, %v7884
      %v7886 = vpop.f32.mrf.mxu0
      %7887 = vmatprep.mubr.f32.mxu0 0.0
      %7888 = vmatmul.mubr.f32.gmra.mxu0 %v6904
      %v7889 = vpop.f32.mrf.mxu0
      %v7890 = vadd.f32 0.0, %v7889
      %v7891 = vpop.f32.mrf.mxu0
      %7892 = vmatprep.mubr.f32.mxu0 0.0
      %7893 = vmatmul.mubr.f32.gmra.mxu0 %v6906
      %v7894 = vpop.f32.mrf.mxu0
      %v7895 = vadd.f32 0.0, %v7894
      %v7896 = vpop.f32.mrf.mxu0
      %7897 = vmatprep.mubr.f32.mxu0 0.0
      %7898 = vmatmul.mubr.f32.gmra.mxu0 %v6908
      %v7899 = vpop.f32.mrf.mxu0
      %v7900 = vadd.f32 0.0, %v7899
      %v7901 = vpop.f32.mrf.mxu0
      %7902 = vmatprep.mubr.f32.mxu0 0.0
      %7903 = vmatmul.mubr.f32.gmra.mxu0 %v6910
      %v7904 = vpop.f32.mrf.mxu0
      %v7905 = vadd.f32 0.0, %v7904
      %v7906 = vpop.f32.mrf.mxu0
      %7907 = vmatprep.mubr.f32.mxu0 0.0
      %7908 = vmatmul.mubr.f32.gmra.mxu0 %v6912
      %v7909 = vpop.f32.mrf.mxu0
      %v7910 = vadd.f32 0.0, %v7909
      %v7911 = vpop.f32.mrf.mxu0
      %7912 = vmatprep.mubr.f32.mxu0 0.0
      %7913 = vmatmul.mubr.f32.gmra.mxu0 %v6914
      %v7914 = vpop.f32.mrf.mxu0
      %v7915 = vadd.f32 0.0, %v7914
      %v7916 = vpop.f32.mrf.mxu0
      %7917 = vmatprep.mubr.f32.mxu0 0.0
      %7918 = vmatmul.mubr.f32.gmra.mxu0 %v6916
      %v7919 = vpop.f32.mrf.mxu0
      %v7920 = vadd.f32 0.0, %v7919
      %v7921 = vpop.f32.mrf.mxu0
      %7922 = vmatprep.mubr.f32.mxu0 0.0
      %7923 = vmatmul.mubr.f32.gmra.mxu0 %v6918
      %v7924 = vpop.f32.mrf.mxu0
      %v7925 = vadd.f32 0.0, %v7924
      %v7926 = vpop.f32.mrf.mxu0
      %7927 = vmatprep.mubr.f32.mxu0 0.0
      %7928 = vmatmul.mubr.f32.gmra.mxu0 %v6920
      %v7929 = vpop.f32.mrf.mxu0
      %v7930 = vadd.f32 0.0, %v7929
      %v7931 = vpop.f32.mrf.mxu0
      %7932 = vmatprep.mubr.f32.mxu0 0.0
      %7933 = vmatmul.mubr.f32.gmra.mxu0 %v6922
      %v7934 = vpop.f32.mrf.mxu0
      %v7935 = vadd.f32 0.0, %v7934
      %v7936 = vpop.f32.mrf.mxu0
      %7937 = vmatprep.mubr.f32.mxu0 0.0
      %7938 = vmatmul.mubr.f32.gmra.mxu0 %v6924
      %v7939 = vpop.f32.mrf.mxu0
      %v7940 = vadd.f32 0.0, %v7939
      %v7941 = vpop.f32.mrf.mxu0
      %7942 = vmatprep.mubr.f32.mxu0 0.0
      %7943 = vmatmul.mubr.f32.gmra.mxu0 %v7724
      %v7944 = vpop.f32.mrf.mxu0
      %v7945 = vadd.f32 0.0, %v7944
      %v7946 = vpop.f32.mrf.mxu0
      %7947 = vmatprep.mubr.f32.mxu0 0.0
      %7948 = vmatmul.mubr.f32.gmra.mxu0 %v7726
      %v7949 = vpop.f32.mrf.mxu0
      %v7950 = vadd.f32 0.0, %v7949
      %v7951 = vpop.f32.mrf.mxu0
      %7952 = vdwg.mxu0
      %v7953 = vadd.f32 %v7685, %v7795
      %v7954 = vadd.f32 %v7686, %v7800
      %v7955 = vadd.f32 %v7687, %v7805
      %v7956 = vadd.f32 %v7688, %v7810
      %v7957 = vadd.f32 %v7689, %v7815
      %v7958 = vadd.f32 %v7690, %v7820
      %v7959 = vadd.f32 %v7691, %v7825
      %v7960 = vadd.f32 %v7692, %v7830
      %v7961 = vadd.f32 %v7693, %v7835
      %v7962 = vadd.f32 %v7694, %v7840
      %v7963 = vadd.f32 %v7695, %v7845
      %v7964 = vadd.f32 %v7696, %v7850
      %v7965 = vadd.f32 %v7697, %v7855
      %v7966 = vadd.f32 %v7698, %v7860
      %v7967 = vadd.f32 %v7699, %v7865
      %v7968 = vadd.f32 %v7700, %v7870
      %v7969 = vadd.f32 %v7701, %v7875
      %v7970 = vadd.f32 %v7702, %v7880
      %v7971 = vadd.f32 %v7703, %v7885
      %v7972 = vadd.f32 %v7704, %v7890
      %v7973 = vadd.f32 %v7705, %v7895
      %v7974 = vadd.f32 %v7706, %v7900
      %v7975 = vadd.f32 %v7707, %v7905
      %v7976 = vadd.f32 %v7708, %v7910
      %v7977 = vadd.f32 %v7709, %v7915
      %v7978 = vadd.f32 %v7710, %v7920
      %v7979 = vadd.f32 %v7711, %v7925
      %v7980 = vadd.f32 %v7712, %v7930
      %v7981 = vadd.f32 %v7713, %v7935
      %v7982 = vadd.f32 %v7714, %v7940
      %v7983 = vadd.f32 %v7715, %v7945
      %v7984 = vadd.f32 %v7716, %v7950
      %s7985 = scalar_lea.vmem %s3, 192
      %v7986 = vld [vmem:[%s7985] sm:$0xff]
      %v7988 = vsel %vm638, %v503, 0
      %v7991 = vsel %vm638, %v504, 0
      %7993 = vmatprep.subr.mxu0 0.0
      %7994 = vmatpush1.msra.mxu0 0.0
      %7995 = vmatprep.subr.mxu0 0.0
      %7996 = vmatpush1.msra.mxu0 0.0
      %7997 = vmatprep.subr.mxu0 0.0
      %7998 = vmatpush1.msra.mxu0 0.0
      %7999 = vmatprep.subr.mxu0 0.0
      %8000 = vmatpush1.msra.mxu0 0.0
      %8001 = vmatprep.subr.mxu0 0.0
      %8002 = vmatpush1.msra.mxu0 0.0
      %8003 = vmatprep.subr.mxu0 0.0
      %8004 = vmatpush1.msra.mxu0 0.0
      %8005 = vmatprep.subr.mxu0 0.0
      %8006 = vmatpush1.msra.mxu0 0.0
      %8007 = vmatprep.subr.mxu0 0.0
      %8008 = vmatpush1.msra.mxu0 0.0
      %8009 = vmatprep.subr.mxu0 0.0
      %8010 = vmatpush1.msra.mxu0 0.0
      %8011 = vmatprep.subr.mxu0 0.0
      %8012 = vmatpush1.msra.mxu0 0.0
      %8013 = vmatprep.subr.mxu0 0.0
      %8014 = vmatpush1.msra.mxu0 0.0
      %8015 = vmatprep.subr.mxu0 0.0
      %8016 = vmatpush1.msra.mxu0 0.0
      %8017 = vmatprep.subr.mxu0 0.0
      %8018 = vmatpush1.msra.mxu0 0.0
      %8019 = vmatprep.subr.mxu0 0.0
      %8020 = vmatpush1.msra.mxu0 0.0
      %8021 = vmatprep.subr.mxu0 0.0
      %8022 = vmatpush1.msra.mxu0 0.0
      %8023 = vmatprep.subr.mxu0 0.0
      %8024 = vmatpush1.msra.mxu0 %v7986
      %8025 = vmatprep.subr.mxu0 0.0
      %8026 = vmatpush2.msra.mxu0 0.0
      %8027 = vmatprep.subr.mxu0 0.0
      %8028 = vmatpush2.msra.mxu0 0.0
      %8029 = vmatprep.subr.mxu0 0.0
      %8030 = vmatpush2.msra.mxu0 0.0
      %8031 = vmatprep.subr.mxu0 0.0
      %8032 = vmatpush2.msra.mxu0 0.0
      %8033 = vmatprep.subr.mxu0 0.0
      %8034 = vmatpush2.msra.mxu0 0.0
      %8035 = vmatprep.subr.mxu0 0.0
      %8036 = vmatpush2.msra.mxu0 0.0
      %8037 = vmatprep.subr.mxu0 0.0
      %8038 = vmatpush2.msra.mxu0 0.0
      %8039 = vmatprep.subr.mxu0 0.0
      %8040 = vmatpush2.msra.mxu0 0.0
      %8041 = vmatprep.subr.mxu0 0.0
      %8042 = vmatpush2.msra.mxu0 0.0
      %8043 = vmatprep.subr.mxu0 0.0
      %8044 = vmatpush2.msra.mxu0 0.0
      %8045 = vmatprep.subr.mxu0 0.0
      %8046 = vmatpush2.msra.mxu0 0.0
      %8047 = vmatprep.subr.mxu0 0.0
      %8048 = vmatpush2.msra.mxu0 0.0
      %8049 = vmatprep.subr.mxu0 0.0
      %8050 = vmatpush2.msra.mxu0 0.0
      %8051 = vmatprep.subr.mxu0 0.0
      %8052 = vmatpush2.msra.mxu0 0.0
      %8053 = vmatprep.subr.mxu0 0.0
      %8054 = vmatpush2.msra.mxu0 0.0
      %8055 = vmatprep.subr.mxu0 0.0
      %8056 = vmatpush2.msra.mxu0 0.0
      %8057 = vmatprep.mubr.f32.mxu0 0.0
      %8058 = vmatmul.mubr.f32.gmra.mxu0 %v6021
      %v8059 = vpop.f32.mrf.mxu0
      %v8060 = vadd.f32 0.0, %v8059
      %v8061 = vpop.f32.mrf.mxu0
      %8062 = vmatprep.mubr.f32.mxu0 0.0
      %8063 = vmatmul.mubr.f32.gmra.mxu0 %v6024
      %v8064 = vpop.f32.mrf.mxu0
      %v8065 = vadd.f32 0.0, %v8064
      %v8066 = vpop.f32.mrf.mxu0
      %8067 = vmatprep.mubr.f32.mxu0 0.0
      %8068 = vmatmul.mubr.f32.gmra.mxu0 %v6027
      %v8069 = vpop.f32.mrf.mxu0
      %v8070 = vadd.f32 0.0, %v8069
      %v8071 = vpop.f32.mrf.mxu0
      %8072 = vmatprep.mubr.f32.mxu0 0.0
      %8073 = vmatmul.mubr.f32.gmra.mxu0 %v6030
      %v8074 = vpop.f32.mrf.mxu0
      %v8075 = vadd.f32 0.0, %v8074
      %v8076 = vpop.f32.mrf.mxu0
      %8077 = vmatprep.mubr.f32.mxu0 0.0
      %8078 = vmatmul.mubr.f32.gmra.mxu0 %v6033
      %v8079 = vpop.f32.mrf.mxu0
      %v8080 = vadd.f32 0.0, %v8079
      %v8081 = vpop.f32.mrf.mxu0
      %8082 = vmatprep.mubr.f32.mxu0 0.0
      %8083 = vmatmul.mubr.f32.gmra.mxu0 %v6036
      %v8084 = vpop.f32.mrf.mxu0
      %v8085 = vadd.f32 0.0, %v8084
      %v8086 = vpop.f32.mrf.mxu0
      %8087 = vmatprep.mubr.f32.mxu0 0.0
      %8088 = vmatmul.mubr.f32.gmra.mxu0 %v6039
      %v8089 = vpop.f32.mrf.mxu0
      %v8090 = vadd.f32 0.0, %v8089
      %v8091 = vpop.f32.mrf.mxu0
      %8092 = vmatprep.mubr.f32.mxu0 0.0
      %8093 = vmatmul.mubr.f32.gmra.mxu0 %v6042
      %v8094 = vpop.f32.mrf.mxu0
      %v8095 = vadd.f32 0.0, %v8094
      %v8096 = vpop.f32.mrf.mxu0
      %8097 = vmatprep.mubr.f32.mxu0 0.0
      %8098 = vmatmul.mubr.f32.gmra.mxu0 %v6045
      %v8099 = vpop.f32.mrf.mxu0
      %v8100 = vadd.f32 0.0, %v8099
      %v8101 = vpop.f32.mrf.mxu0
      %8102 = vmatprep.mubr.f32.mxu0 0.0
      %8103 = vmatmul.mubr.f32.gmra.mxu0 %v6048
      %v8104 = vpop.f32.mrf.mxu0
      %v8105 = vadd.f32 0.0, %v8104
      %v8106 = vpop.f32.mrf.mxu0
      %8107 = vmatprep.mubr.f32.mxu0 0.0
      %8108 = vmatmul.mubr.f32.gmra.mxu0 %v6051
      %v8109 = vpop.f32.mrf.mxu0
      %v8110 = vadd.f32 0.0, %v8109
      %v8111 = vpop.f32.mrf.mxu0
      %8112 = vmatprep.mubr.f32.mxu0 0.0
      %8113 = vmatmul.mubr.f32.gmra.mxu0 %v6054
      %v8114 = vpop.f32.mrf.mxu0
      %v8115 = vadd.f32 0.0, %v8114
      %v8116 = vpop.f32.mrf.mxu0
      %8117 = vmatprep.mubr.f32.mxu0 0.0
      %8118 = vmatmul.mubr.f32.gmra.mxu0 %v6057
      %v8119 = vpop.f32.mrf.mxu0
      %v8120 = vadd.f32 0.0, %v8119
      %v8121 = vpop.f32.mrf.mxu0
      %8122 = vmatprep.mubr.f32.mxu0 0.0
      %8123 = vmatmul.mubr.f32.gmra.mxu0 %v6060
      %v8124 = vpop.f32.mrf.mxu0
      %v8125 = vadd.f32 0.0, %v8124
      %v8126 = vpop.f32.mrf.mxu0
      %8127 = vmatprep.mubr.f32.mxu0 0.0
      %8128 = vmatmul.mubr.f32.gmra.mxu0 %v6063
      %v8129 = vpop.f32.mrf.mxu0
      %v8130 = vadd.f32 0.0, %v8129
      %v8131 = vpop.f32.mrf.mxu0
      %8132 = vmatprep.mubr.f32.mxu0 0.0
      %8133 = vmatmul.mubr.f32.gmra.mxu0 %v6066
      %v8134 = vpop.f32.mrf.mxu0
      %v8135 = vadd.f32 0.0, %v8134
      %v8136 = vpop.f32.mrf.mxu0
      %8137 = vmatprep.mubr.f32.mxu0 0.0
      %8138 = vmatmul.mubr.f32.gmra.mxu0 %v6069
      %v8139 = vpop.f32.mrf.mxu0
      %v8140 = vadd.f32 0.0, %v8139
      %v8141 = vpop.f32.mrf.mxu0
      %8142 = vmatprep.mubr.f32.mxu0 0.0
      %8143 = vmatmul.mubr.f32.gmra.mxu0 %v6072
      %v8144 = vpop.f32.mrf.mxu0
      %v8145 = vadd.f32 0.0, %v8144
      %v8146 = vpop.f32.mrf.mxu0
      %8147 = vmatprep.mubr.f32.mxu0 0.0
      %8148 = vmatmul.mubr.f32.gmra.mxu0 %v6075
      %v8149 = vpop.f32.mrf.mxu0
      %v8150 = vadd.f32 0.0, %v8149
      %v8151 = vpop.f32.mrf.mxu0
      %8152 = vmatprep.mubr.f32.mxu0 0.0
      %8153 = vmatmul.mubr.f32.gmra.mxu0 %v6078
      %v8154 = vpop.f32.mrf.mxu0
      %v8155 = vadd.f32 0.0, %v8154
      %v8156 = vpop.f32.mrf.mxu0
      %8157 = vmatprep.mubr.f32.mxu0 0.0
      %8158 = vmatmul.mubr.f32.gmra.mxu0 %v6081
      %v8159 = vpop.f32.mrf.mxu0
      %v8160 = vadd.f32 0.0, %v8159
      %v8161 = vpop.f32.mrf.mxu0
      %8162 = vmatprep.mubr.f32.mxu0 0.0
      %8163 = vmatmul.mubr.f32.gmra.mxu0 %v6084
      %v8164 = vpop.f32.mrf.mxu0
      %v8165 = vadd.f32 0.0, %v8164
      %v8166 = vpop.f32.mrf.mxu0
      %8167 = vmatprep.mubr.f32.mxu0 0.0
      %8168 = vmatmul.mubr.f32.gmra.mxu0 %v6087
      %v8169 = vpop.f32.mrf.mxu0
      %v8170 = vadd.f32 0.0, %v8169
      %v8171 = vpop.f32.mrf.mxu0
      %8172 = vmatprep.mubr.f32.mxu0 0.0
      %8173 = vmatmul.mubr.f32.gmra.mxu0 %v6090
      %v8174 = vpop.f32.mrf.mxu0
      %v8175 = vadd.f32 0.0, %v8174
      %v8176 = vpop.f32.mrf.mxu0
      %8177 = vmatprep.mubr.f32.mxu0 0.0
      %8178 = vmatmul.mubr.f32.gmra.mxu0 %v6093
      %v8179 = vpop.f32.mrf.mxu0
      %v8180 = vadd.f32 0.0, %v8179
      %v8181 = vpop.f32.mrf.mxu0
      %8182 = vmatprep.mubr.f32.mxu0 0.0
      %8183 = vmatmul.mubr.f32.gmra.mxu0 %v6096
      %v8184 = vpop.f32.mrf.mxu0
      %v8185 = vadd.f32 0.0, %v8184
      %v8186 = vpop.f32.mrf.mxu0
      %8187 = vmatprep.mubr.f32.mxu0 0.0
      %8188 = vmatmul.mubr.f32.gmra.mxu0 %v6099
      %v8189 = vpop.f32.mrf.mxu0
      %v8190 = vadd.f32 0.0, %v8189
      %v8191 = vpop.f32.mrf.mxu0
      %8192 = vmatprep.mubr.f32.mxu0 0.0
      %8193 = vmatmul.mubr.f32.gmra.mxu0 %v6102
      %v8194 = vpop.f32.mrf.mxu0
      %v8195 = vadd.f32 0.0, %v8194
      %v8196 = vpop.f32.mrf.mxu0
      %8197 = vmatprep.mubr.f32.mxu0 0.0
      %8198 = vmatmul.mubr.f32.gmra.mxu0 %v7186
      %v8199 = vpop.f32.mrf.mxu0
      %v8200 = vadd.f32 0.0, %v8199
      %v8201 = vpop.f32.mrf.mxu0
      %8202 = vmatprep.mubr.f32.mxu0 0.0
      %8203 = vmatmul.mubr.f32.gmra.mxu0 %v7189
      %v8204 = vpop.f32.mrf.mxu0
      %v8205 = vadd.f32 0.0, %v8204
      %v8206 = vpop.f32.mrf.mxu0
      %8207 = vmatprep.mubr.f32.mxu0 0.0
      %8208 = vmatmul.mubr.f32.gmra.mxu0 %v7988
      %v8209 = vpop.f32.mrf.mxu0
      %v8210 = vadd.f32 0.0, %v8209
      %v8211 = vpop.f32.mrf.mxu0
      %8212 = vmatprep.mubr.f32.mxu0 0.0
      %8213 = vmatmul.mubr.f32.gmra.mxu0 %v7991
      %v8214 = vpop.f32.mrf.mxu0
      %v8215 = vadd.f32 0.0, %v8214
      %v8216 = vpop.f32.mrf.mxu0
      %8217 = vdwg.mxu0
      %v8218 = vadd.f32 %v7953, %v8060
      %v8219 = vadd.f32 %v7954, %v8065
      %v8220 = vadd.f32 %v7955, %v8070
      %v8221 = vadd.f32 %v7956, %v8075
      %v8222 = vadd.f32 %v7957, %v8080
      %v8223 = vadd.f32 %v7958, %v8085
      %v8224 = vadd.f32 %v7959, %v8090
      %v8225 = vadd.f32 %v7960, %v8095
      %v8226 = vadd.f32 %v7961, %v8100
      %v8227 = vadd.f32 %v7962, %v8105
      %v8228 = vadd.f32 %v7963, %v8110
      %v8229 = vadd.f32 %v7964, %v8115
      %v8230 = vadd.f32 %v7965, %v8120
      %v8231 = vadd.f32 %v7966, %v8125
      %v8232 = vadd.f32 %v7967, %v8130
      %v8233 = vadd.f32 %v7968, %v8135
      %v8234 = vadd.f32 %v7969, %v8140
      %v8235 = vadd.f32 %v7970, %v8145
      %v8236 = vadd.f32 %v7971, %v8150
      %v8237 = vadd.f32 %v7972, %v8155
      %v8238 = vadd.f32 %v7973, %v8160
      %v8239 = vadd.f32 %v7974, %v8165
      %v8240 = vadd.f32 %v7975, %v8170
      %v8241 = vadd.f32 %v7976, %v8175
      %v8242 = vadd.f32 %v7977, %v8180
      %v8243 = vadd.f32 %v7978, %v8185
      %v8244 = vadd.f32 %v7979, %v8190
      %v8245 = vadd.f32 %v7980, %v8195
      %v8246 = vadd.f32 %v7981, %v8200
      %v8247 = vadd.f32 %v7982, %v8205
      %v8248 = vadd.f32 %v7983, %v8210
      %v8249 = vadd.f32 %v7984, %v8215
      %v8251 = vrot.slane %v503, 1
      %v8252 = vrot.slane %v504, 1
      %v8253 = vsel %vm555, %v8251, %v8252
      %v8254 = vrot.slane %v505, 1
      %v8255 = vsel %vm555, %v8252, %v8254
      %s8256 = scalar_lea.vmem %s3, 200
      %v8257 = vld [vmem:[%s8256] sm:$0xff]
      %v8258 = vsel %vm638, %v8253, 0
      %v8260 = vsel %vm638, %v8255, 0
      %8262 = vmatprep.subr.mxu0 0.0
      %8263 = vmatpush1.msra.mxu0 0.0
      %8264 = vmatprep.subr.mxu0 0.0
      %8265 = vmatpush1.msra.mxu0 0.0
      %8266 = vmatprep.subr.mxu0 0.0
      %8267 = vmatpush1.msra.mxu0 0.0
      %8268 = vmatprep.subr.mxu0 0.0
      %8269 = vmatpush1.msra.mxu0 0.0
      %8270 = vmatprep.subr.mxu0 0.0
      %8271 = vmatpush1.msra.mxu0 0.0
      %8272 = vmatprep.subr.mxu0 0.0
      %8273 = vmatpush1.msra.mxu0 0.0
      %8274 = vmatprep.subr.mxu0 0.0
      %8275 = vmatpush1.msra.mxu0 0.0
      %8276 = vmatprep.subr.mxu0 0.0
      %8277 = vmatpush1.msra.mxu0 0.0
      %8278 = vmatprep.subr.mxu0 0.0
      %8279 = vmatpush1.msra.mxu0 0.0
      %8280 = vmatprep.subr.mxu0 0.0
      %8281 = vmatpush1.msra.mxu0 0.0
      %8282 = vmatprep.subr.mxu0 0.0
      %8283 = vmatpush1.msra.mxu0 0.0
      %8284 = vmatprep.subr.mxu0 0.0
      %8285 = vmatpush1.msra.mxu0 0.0
      %8286 = vmatprep.subr.mxu0 0.0
      %8287 = vmatpush1.msra.mxu0 0.0
      %8288 = vmatprep.subr.mxu0 0.0
      %8289 = vmatpush1.msra.mxu0 0.0
      %8290 = vmatprep.subr.mxu0 0.0
      %8291 = vmatpush1.msra.mxu0 0.0
      %8292 = vmatprep.subr.mxu0 0.0
      %8293 = vmatpush1.msra.mxu0 %v8257
      %8294 = vmatprep.subr.mxu0 0.0
      %8295 = vmatpush2.msra.mxu0 0.0
      %8296 = vmatprep.subr.mxu0 0.0
      %8297 = vmatpush2.msra.mxu0 0.0
      %8298 = vmatprep.subr.mxu0 0.0
      %8299 = vmatpush2.msra.mxu0 0.0
      %8300 = vmatprep.subr.mxu0 0.0
      %8301 = vmatpush2.msra.mxu0 0.0
      %8302 = vmatprep.subr.mxu0 0.0
      %8303 = vmatpush2.msra.mxu0 0.0
      %8304 = vmatprep.subr.mxu0 0.0
      %8305 = vmatpush2.msra.mxu0 0.0
      %8306 = vmatprep.subr.mxu0 0.0
      %8307 = vmatpush2.msra.mxu0 0.0
      %8308 = vmatprep.subr.mxu0 0.0
      %8309 = vmatpush2.msra.mxu0 0.0
      %8310 = vmatprep.subr.mxu0 0.0
      %8311 = vmatpush2.msra.mxu0 0.0
      %8312 = vmatprep.subr.mxu0 0.0
      %8313 = vmatpush2.msra.mxu0 0.0
      %8314 = vmatprep.subr.mxu0 0.0
      %8315 = vmatpush2.msra.mxu0 0.0
      %8316 = vmatprep.subr.mxu0 0.0
      %8317 = vmatpush2.msra.mxu0 0.0
      %8318 = vmatprep.subr.mxu0 0.0
      %8319 = vmatpush2.msra.mxu0 0.0
      %8320 = vmatprep.subr.mxu0 0.0
      %8321 = vmatpush2.msra.mxu0 0.0
      %8322 = vmatprep.subr.mxu0 0.0
      %8323 = vmatpush2.msra.mxu0 0.0
      %8324 = vmatprep.subr.mxu0 0.0
      %8325 = vmatpush2.msra.mxu0 0.0
      %8326 = vmatprep.mubr.f32.mxu0 0.0
      %8327 = vmatmul.mubr.f32.gmra.mxu0 %v6467
      %v8328 = vpop.f32.mrf.mxu0
      %v8329 = vadd.f32 0.0, %v8328
      %v8330 = vpop.f32.mrf.mxu0
      %8331 = vmatprep.mubr.f32.mxu0 0.0
      %8332 = vmatmul.mubr.f32.gmra.mxu0 %v6469
      %v8333 = vpop.f32.mrf.mxu0
      %v8334 = vadd.f32 0.0, %v8333
      %v8335 = vpop.f32.mrf.mxu0
      %8336 = vmatprep.mubr.f32.mxu0 0.0
      %8337 = vmatmul.mubr.f32.gmra.mxu0 %v6471
      %v8338 = vpop.f32.mrf.mxu0
      %v8339 = vadd.f32 0.0, %v8338
      %v8340 = vpop.f32.mrf.mxu0
      %8341 = vmatprep.mubr.f32.mxu0 0.0
      %8342 = vmatmul.mubr.f32.gmra.mxu0 %v6473
      %v8343 = vpop.f32.mrf.mxu0
      %v8344 = vadd.f32 0.0, %v8343
      %v8345 = vpop.f32.mrf.mxu0
      %8346 = vmatprep.mubr.f32.mxu0 0.0
      %8347 = vmatmul.mubr.f32.gmra.mxu0 %v6475
      %v8348 = vpop.f32.mrf.mxu0
      %v8349 = vadd.f32 0.0, %v8348
      %v8350 = vpop.f32.mrf.mxu0
      %8351 = vmatprep.mubr.f32.mxu0 0.0
      %8352 = vmatmul.mubr.f32.gmra.mxu0 %v6477
      %v8353 = vpop.f32.mrf.mxu0
      %v8354 = vadd.f32 0.0, %v8353
      %v8355 = vpop.f32.mrf.mxu0
      %8356 = vmatprep.mubr.f32.mxu0 0.0
      %8357 = vmatmul.mubr.f32.gmra.mxu0 %v6479
      %v8358 = vpop.f32.mrf.mxu0
      %v8359 = vadd.f32 0.0, %v8358
      %v8360 = vpop.f32.mrf.mxu0
      %8361 = vmatprep.mubr.f32.mxu0 0.0
      %8362 = vmatmul.mubr.f32.gmra.mxu0 %v6481
      %v8363 = vpop.f32.mrf.mxu0
      %v8364 = vadd.f32 0.0, %v8363
      %v8365 = vpop.f32.mrf.mxu0
      %8366 = vmatprep.mubr.f32.mxu0 0.0
      %8367 = vmatmul.mubr.f32.gmra.mxu0 %v6483
      %v8368 = vpop.f32.mrf.mxu0
      %v8369 = vadd.f32 0.0, %v8368
      %v8370 = vpop.f32.mrf.mxu0
      %8371 = vmatprep.mubr.f32.mxu0 0.0
      %8372 = vmatmul.mubr.f32.gmra.mxu0 %v6485
      %v8373 = vpop.f32.mrf.mxu0
      %v8374 = vadd.f32 0.0, %v8373
      %v8375 = vpop.f32.mrf.mxu0
      %8376 = vmatprep.mubr.f32.mxu0 0.0
      %8377 = vmatmul.mubr.f32.gmra.mxu0 %v6487
      %v8378 = vpop.f32.mrf.mxu0
      %v8379 = vadd.f32 0.0, %v8378
      %v8380 = vpop.f32.mrf.mxu0
      %8381 = vmatprep.mubr.f32.mxu0 0.0
      %8382 = vmatmul.mubr.f32.gmra.mxu0 %v6489
      %v8383 = vpop.f32.mrf.mxu0
      %v8384 = vadd.f32 0.0, %v8383
      %v8385 = vpop.f32.mrf.mxu0
      %8386 = vmatprep.mubr.f32.mxu0 0.0
      %8387 = vmatmul.mubr.f32.gmra.mxu0 %v6491
      %v8388 = vpop.f32.mrf.mxu0
      %v8389 = vadd.f32 0.0, %v8388
      %v8390 = vpop.f32.mrf.mxu0
      %8391 = vmatprep.mubr.f32.mxu0 0.0
      %8392 = vmatmul.mubr.f32.gmra.mxu0 %v6493
      %v8393 = vpop.f32.mrf.mxu0
      %v8394 = vadd.f32 0.0, %v8393
      %v8395 = vpop.f32.mrf.mxu0
      %8396 = vmatprep.mubr.f32.mxu0 0.0
      %8397 = vmatmul.mubr.f32.gmra.mxu0 %v6495
      %v8398 = vpop.f32.mrf.mxu0
      %v8399 = vadd.f32 0.0, %v8398
      %v8400 = vpop.f32.mrf.mxu0
      %8401 = vmatprep.mubr.f32.mxu0 0.0
      %8402 = vmatmul.mubr.f32.gmra.mxu0 %v6497
      %v8403 = vpop.f32.mrf.mxu0
      %v8404 = vadd.f32 0.0, %v8403
      %v8405 = vpop.f32.mrf.mxu0
      %8406 = vmatprep.mubr.f32.mxu0 0.0
      %8407 = vmatmul.mubr.f32.gmra.mxu0 %v6499
      %v8408 = vpop.f32.mrf.mxu0
      %v8409 = vadd.f32 0.0, %v8408
      %v8410 = vpop.f32.mrf.mxu0
      %8411 = vmatprep.mubr.f32.mxu0 0.0
      %8412 = vmatmul.mubr.f32.gmra.mxu0 %v6501
      %v8413 = vpop.f32.mrf.mxu0
      %v8414 = vadd.f32 0.0, %v8413
      %v8415 = vpop.f32.mrf.mxu0
      %8416 = vmatprep.mubr.f32.mxu0 0.0
      %8417 = vmatmul.mubr.f32.gmra.mxu0 %v6503
      %v8418 = vpop.f32.mrf.mxu0
      %v8419 = vadd.f32 0.0, %v8418
      %v8420 = vpop.f32.mrf.mxu0
      %8421 = vmatprep.mubr.f32.mxu0 0.0
      %8422 = vmatmul.mubr.f32.gmra.mxu0 %v6505
      %v8423 = vpop.f32.mrf.mxu0
      %v8424 = vadd.f32 0.0, %v8423
      %v8425 = vpop.f32.mrf.mxu0
      %8426 = vmatprep.mubr.f32.mxu0 0.0
      %8427 = vmatmul.mubr.f32.gmra.mxu0 %v6507
      %v8428 = vpop.f32.mrf.mxu0
      %v8429 = vadd.f32 0.0, %v8428
      %v8430 = vpop.f32.mrf.mxu0
      %8431 = vmatprep.mubr.f32.mxu0 0.0
      %8432 = vmatmul.mubr.f32.gmra.mxu0 %v6509
      %v8433 = vpop.f32.mrf.mxu0
      %v8434 = vadd.f32 0.0, %v8433
      %v8435 = vpop.f32.mrf.mxu0
      %8436 = vmatprep.mubr.f32.mxu0 0.0
      %8437 = vmatmul.mubr.f32.gmra.mxu0 %v6511
      %v8438 = vpop.f32.mrf.mxu0
      %v8439 = vadd.f32 0.0, %v8438
      %v8440 = vpop.f32.mrf.mxu0
      %8441 = vmatprep.mubr.f32.mxu0 0.0
      %8442 = vmatmul.mubr.f32.gmra.mxu0 %v6513
      %v8443 = vpop.f32.mrf.mxu0
      %v8444 = vadd.f32 0.0, %v8443
      %v8445 = vpop.f32.mrf.mxu0
      %8446 = vmatprep.mubr.f32.mxu0 0.0
      %8447 = vmatmul.mubr.f32.gmra.mxu0 %v6515
      %v8448 = vpop.f32.mrf.mxu0
      %v8449 = vadd.f32 0.0, %v8448
      %v8450 = vpop.f32.mrf.mxu0
      %8451 = vmatprep.mubr.f32.mxu0 0.0
      %8452 = vmatmul.mubr.f32.gmra.mxu0 %v6517
      %v8453 = vpop.f32.mrf.mxu0
      %v8454 = vadd.f32 0.0, %v8453
      %v8455 = vpop.f32.mrf.mxu0
      %8456 = vmatprep.mubr.f32.mxu0 0.0
      %8457 = vmatmul.mubr.f32.gmra.mxu0 %v6519
      %v8458 = vpop.f32.mrf.mxu0
      %v8459 = vadd.f32 0.0, %v8458
      %v8460 = vpop.f32.mrf.mxu0
      %8461 = vmatprep.mubr.f32.mxu0 0.0
      %8462 = vmatmul.mubr.f32.gmra.mxu0 %v6521
      %v8463 = vpop.f32.mrf.mxu0
      %v8464 = vadd.f32 0.0, %v8463
      %v8465 = vpop.f32.mrf.mxu0
      %8466 = vmatprep.mubr.f32.mxu0 0.0
      %8467 = vmatmul.mubr.f32.gmra.mxu0 %v7456
      %v8468 = vpop.f32.mrf.mxu0
      %v8469 = vadd.f32 0.0, %v8468
      %v8470 = vpop.f32.mrf.mxu0
      %8471 = vmatprep.mubr.f32.mxu0 0.0
      %8472 = vmatmul.mubr.f32.gmra.mxu0 %v7458
      %v8473 = vpop.f32.mrf.mxu0
      %v8474 = vadd.f32 0.0, %v8473
      %v8475 = vpop.f32.mrf.mxu0
      %8476 = vmatprep.mubr.f32.mxu0 0.0
      %8477 = vmatmul.mubr.f32.gmra.mxu0 %v8258
      %v8478 = vpop.f32.mrf.mxu0
      %v8479 = vadd.f32 0.0, %v8478
      %v8480 = vpop.f32.mrf.mxu0
      %8481 = vmatprep.mubr.f32.mxu0 0.0
      %8482 = vmatmul.mubr.f32.gmra.mxu0 %v8260
      %v8483 = vpop.f32.mrf.mxu0
      %v8484 = vadd.f32 0.0, %v8483
      %v8485 = vpop.f32.mrf.mxu0
      %8486 = vdwg.mxu0
      %v8487 = vadd.f32 %v8218, %v8329
      %v8488 = vadd.f32 %v8219, %v8334
      %v8489 = vadd.f32 %v8220, %v8339
      %v8490 = vadd.f32 %v8221, %v8344
      %v8491 = vadd.f32 %v8222, %v8349
      %v8492 = vadd.f32 %v8223, %v8354
      %v8493 = vadd.f32 %v8224, %v8359
      %v8494 = vadd.f32 %v8225, %v8364
      %v8495 = vadd.f32 %v8226, %v8369
      %v8496 = vadd.f32 %v8227, %v8374
      %v8497 = vadd.f32 %v8228, %v8379
      %v8498 = vadd.f32 %v8229, %v8384
      %v8499 = vadd.f32 %v8230, %v8389
      %v8500 = vadd.f32 %v8231, %v8394
      %v8501 = vadd.f32 %v8232, %v8399
      %v8502 = vadd.f32 %v8233, %v8404
      %v8503 = vadd.f32 %v8234, %v8409
      %v8504 = vadd.f32 %v8235, %v8414
      %v8505 = vadd.f32 %v8236, %v8419
      %v8506 = vadd.f32 %v8237, %v8424
      %v8507 = vadd.f32 %v8238, %v8429
      %v8508 = vadd.f32 %v8239, %v8434
      %v8509 = vadd.f32 %v8240, %v8439
      %v8510 = vadd.f32 %v8241, %v8444
      %v8511 = vadd.f32 %v8242, %v8449
      %v8512 = vadd.f32 %v8243, %v8454
      %v8513 = vadd.f32 %v8244, %v8459
      %v8514 = vadd.f32 %v8245, %v8464
      %v8515 = vadd.f32 %v8246, %v8469
      %v8516 = vadd.f32 %v8247, %v8474
      %v8517 = vadd.f32 %v8248, %v8479
      %v8518 = vadd.f32 %v8249, %v8484
      %v8519 = vrot.slane %v503, 2
      %v8520 = vrot.slane %v504, 2
      %v8521 = vsel %vm1217, %v8519, %v8520
      %v8522 = vrot.slane %v505, 2
      %v8523 = vsel %vm1217, %v8520, %v8522
      %s8524 = scalar_lea.vmem %s3, 208
      %v8525 = vld [vmem:[%s8524] sm:$0xff]
      %v8526 = vsel %vm638, %v8521, 0
      %v8528 = vsel %vm638, %v8523, 0
      %8530 = vmatprep.subr.mxu0 0.0
      %8531 = vmatpush1.msra.mxu0 0.0
      %8532 = vmatprep.subr.mxu0 0.0
      %8533 = vmatpush1.msra.mxu0 0.0
      %8534 = vmatprep.subr.mxu0 0.0
      %8535 = vmatpush1.msra.mxu0 0.0
      %8536 = vmatprep.subr.mxu0 0.0
      %8537 = vmatpush1.msra.mxu0 0.0
      %8538 = vmatprep.subr.mxu0 0.0
      %8539 = vmatpush1.msra.mxu0 0.0
      %8540 = vmatprep.subr.mxu0 0.0
      %8541 = vmatpush1.msra.mxu0 0.0
      %8542 = vmatprep.subr.mxu0 0.0
      %8543 = vmatpush1.msra.mxu0 0.0
      %8544 = vmatprep.subr.mxu0 0.0
      %8545 = vmatpush1.msra.mxu0 0.0
      %8546 = vmatprep.subr.mxu0 0.0
      %8547 = vmatpush1.msra.mxu0 0.0
      %8548 = vmatprep.subr.mxu0 0.0
      %8549 = vmatpush1.msra.mxu0 0.0
      %8550 = vmatprep.subr.mxu0 0.0
      %8551 = vmatpush1.msra.mxu0 0.0
      %8552 = vmatprep.subr.mxu0 0.0
      %8553 = vmatpush1.msra.mxu0 0.0
      %8554 = vmatprep.subr.mxu0 0.0
      %8555 = vmatpush1.msra.mxu0 0.0
      %8556 = vmatprep.subr.mxu0 0.0
      %8557 = vmatpush1.msra.mxu0 0.0
      %8558 = vmatprep.subr.mxu0 0.0
      %8559 = vmatpush1.msra.mxu0 0.0
      %8560 = vmatprep.subr.mxu0 0.0
      %8561 = vmatpush1.msra.mxu0 %v8525
      %8562 = vmatprep.subr.mxu0 0.0
      %8563 = vmatpush2.msra.mxu0 0.0
      %8564 = vmatprep.subr.mxu0 0.0
      %8565 = vmatpush2.msra.mxu0 0.0
      %8566 = vmatprep.subr.mxu0 0.0
      %8567 = vmatpush2.msra.mxu0 0.0
      %8568 = vmatprep.subr.mxu0 0.0
      %8569 = vmatpush2.msra.mxu0 0.0
      %8570 = vmatprep.subr.mxu0 0.0
      %8571 = vmatpush2.msra.mxu0 0.0
      %8572 = vmatprep.subr.mxu0 0.0
      %8573 = vmatpush2.msra.mxu0 0.0
      %8574 = vmatprep.subr.mxu0 0.0
      %8575 = vmatpush2.msra.mxu0 0.0
      %8576 = vmatprep.subr.mxu0 0.0
      %8577 = vmatpush2.msra.mxu0 0.0
      %8578 = vmatprep.subr.mxu0 0.0
      %8579 = vmatpush2.msra.mxu0 0.0
      %8580 = vmatprep.subr.mxu0 0.0
      %8581 = vmatpush2.msra.mxu0 0.0
      %8582 = vmatprep.subr.mxu0 0.0
      %8583 = vmatpush2.msra.mxu0 0.0
      %8584 = vmatprep.subr.mxu0 0.0
      %8585 = vmatpush2.msra.mxu0 0.0
      %8586 = vmatprep.subr.mxu0 0.0
      %8587 = vmatpush2.msra.mxu0 0.0
      %8588 = vmatprep.subr.mxu0 0.0
      %8589 = vmatpush2.msra.mxu0 0.0
      %8590 = vmatprep.subr.mxu0 0.0
      %8591 = vmatpush2.msra.mxu0 0.0
      %8592 = vmatprep.subr.mxu0 0.0
      %8593 = vmatpush2.msra.mxu0 0.0
      %8594 = vmatprep.mubr.f32.mxu0 0.0
      %8595 = vmatmul.mubr.f32.gmra.mxu0 %v6870
      %v8596 = vpop.f32.mrf.mxu0
      %v8597 = vadd.f32 0.0, %v8596
      %v8598 = vpop.f32.mrf.mxu0
      %8599 = vmatprep.mubr.f32.mxu0 0.0
      %8600 = vmatmul.mubr.f32.gmra.mxu0 %v6872
      %v8601 = vpop.f32.mrf.mxu0
      %v8602 = vadd.f32 0.0, %v8601
      %v8603 = vpop.f32.mrf.mxu0
      %8604 = vmatprep.mubr.f32.mxu0 0.0
      %8605 = vmatmul.mubr.f32.gmra.mxu0 %v6874
      %v8606 = vpop.f32.mrf.mxu0
      %v8607 = vadd.f32 0.0, %v8606
      %v8608 = vpop.f32.mrf.mxu0
      %8609 = vmatprep.mubr.f32.mxu0 0.0
      %8610 = vmatmul.mubr.f32.gmra.mxu0 %v6876
      %v8611 = vpop.f32.mrf.mxu0
      %v8612 = vadd.f32 0.0, %v8611
      %v8613 = vpop.f32.mrf.mxu0
      %8614 = vmatprep.mubr.f32.mxu0 0.0
      %8615 = vmatmul.mubr.f32.gmra.mxu0 %v6878
      %v8616 = vpop.f32.mrf.mxu0
      %v8617 = vadd.f32 0.0, %v8616
      %v8618 = vpop.f32.mrf.mxu0
      %8619 = vmatprep.mubr.f32.mxu0 0.0
      %8620 = vmatmul.mubr.f32.gmra.mxu0 %v6880
      %v8621 = vpop.f32.mrf.mxu0
      %v8622 = vadd.f32 0.0, %v8621
      %v8623 = vpop.f32.mrf.mxu0
      %8624 = vmatprep.mubr.f32.mxu0 0.0
      %8625 = vmatmul.mubr.f32.gmra.mxu0 %v6882
      %v8626 = vpop.f32.mrf.mxu0
      %v8627 = vadd.f32 0.0, %v8626
      %v8628 = vpop.f32.mrf.mxu0
      %8629 = vmatprep.mubr.f32.mxu0 0.0
      %8630 = vmatmul.mubr.f32.gmra.mxu0 %v6884
      %v8631 = vpop.f32.mrf.mxu0
      %v8632 = vadd.f32 0.0, %v8631
      %v8633 = vpop.f32.mrf.mxu0
      %8634 = vmatprep.mubr.f32.mxu0 0.0
      %8635 = vmatmul.mubr.f32.gmra.mxu0 %v6886
      %v8636 = vpop.f32.mrf.mxu0
      %v8637 = vadd.f32 0.0, %v8636
      %v8638 = vpop.f32.mrf.mxu0
      %8639 = vmatprep.mubr.f32.mxu0 0.0
      %8640 = vmatmul.mubr.f32.gmra.mxu0 %v6888
      %v8641 = vpop.f32.mrf.mxu0
      %v8642 = vadd.f32 0.0, %v8641
      %v8643 = vpop.f32.mrf.mxu0
      %8644 = vmatprep.mubr.f32.mxu0 0.0
      %8645 = vmatmul.mubr.f32.gmra.mxu0 %v6890
      %v8646 = vpop.f32.mrf.mxu0
      %v8647 = vadd.f32 0.0, %v8646
      %v8648 = vpop.f32.mrf.mxu0
      %8649 = vmatprep.mubr.f32.mxu0 0.0
      %8650 = vmatmul.mubr.f32.gmra.mxu0 %v6892
      %v8651 = vpop.f32.mrf.mxu0
      %v8652 = vadd.f32 0.0, %v8651
      %v8653 = vpop.f32.mrf.mxu0
      %8654 = vmatprep.mubr.f32.mxu0 0.0
      %8655 = vmatmul.mubr.f32.gmra.mxu0 %v6894
      %v8656 = vpop.f32.mrf.mxu0
      %v8657 = vadd.f32 0.0, %v8656
      %v8658 = vpop.f32.mrf.mxu0
      %8659 = vmatprep.mubr.f32.mxu0 0.0
      %8660 = vmatmul.mubr.f32.gmra.mxu0 %v6896
      %v8661 = vpop.f32.mrf.mxu0
      %v8662 = vadd.f32 0.0, %v8661
      %v8663 = vpop.f32.mrf.mxu0
      %8664 = vmatprep.mubr.f32.mxu0 0.0
      %8665 = vmatmul.mubr.f32.gmra.mxu0 %v6898
      %v8666 = vpop.f32.mrf.mxu0
      %v8667 = vadd.f32 0.0, %v8666
      %v8668 = vpop.f32.mrf.mxu0
      %8669 = vmatprep.mubr.f32.mxu0 0.0
      %8670 = vmatmul.mubr.f32.gmra.mxu0 %v6900
      %v8671 = vpop.f32.mrf.mxu0
      %v8672 = vadd.f32 0.0, %v8671
      %v8673 = vpop.f32.mrf.mxu0
      %8674 = vmatprep.mubr.f32.mxu0 0.0
      %8675 = vmatmul.mubr.f32.gmra.mxu0 %v6902
      %v8676 = vpop.f32.mrf.mxu0
      %v8677 = vadd.f32 0.0, %v8676
      %v8678 = vpop.f32.mrf.mxu0
      %8679 = vmatprep.mubr.f32.mxu0 0.0
      %8680 = vmatmul.mubr.f32.gmra.mxu0 %v6904
      %v8681 = vpop.f32.mrf.mxu0
      %v8682 = vadd.f32 0.0, %v8681
      %v8683 = vpop.f32.mrf.mxu0
      %8684 = vmatprep.mubr.f32.mxu0 0.0
      %8685 = vmatmul.mubr.f32.gmra.mxu0 %v6906
      %v8686 = vpop.f32.mrf.mxu0
      %v8687 = vadd.f32 0.0, %v8686
      %v8688 = vpop.f32.mrf.mxu0
      %8689 = vmatprep.mubr.f32.mxu0 0.0
      %8690 = vmatmul.mubr.f32.gmra.mxu0 %v6908
      %v8691 = vpop.f32.mrf.mxu0
      %v8692 = vadd.f32 0.0, %v8691
      %v8693 = vpop.f32.mrf.mxu0
      %8694 = vmatprep.mubr.f32.mxu0 0.0
      %8695 = vmatmul.mubr.f32.gmra.mxu0 %v6910
      %v8696 = vpop.f32.mrf.mxu0
      %v8697 = vadd.f32 0.0, %v8696
      %v8698 = vpop.f32.mrf.mxu0
      %8699 = vmatprep.mubr.f32.mxu0 0.0
      %8700 = vmatmul.mubr.f32.gmra.mxu0 %v6912
      %v8701 = vpop.f32.mrf.mxu0
      %v8702 = vadd.f32 0.0, %v8701
      %v8703 = vpop.f32.mrf.mxu0
      %8704 = vmatprep.mubr.f32.mxu0 0.0
      %8705 = vmatmul.mubr.f32.gmra.mxu0 %v6914
      %v8706 = vpop.f32.mrf.mxu0
      %v8707 = vadd.f32 0.0, %v8706
      %v8708 = vpop.f32.mrf.mxu0
      %8709 = vmatprep.mubr.f32.mxu0 0.0
      %8710 = vmatmul.mubr.f32.gmra.mxu0 %v6916
      %v8711 = vpop.f32.mrf.mxu0
      %v8712 = vadd.f32 0.0, %v8711
      %v8713 = vpop.f32.mrf.mxu0
      %8714 = vmatprep.mubr.f32.mxu0 0.0
      %8715 = vmatmul.mubr.f32.gmra.mxu0 %v6918
      %v8716 = vpop.f32.mrf.mxu0
      %v8717 = vadd.f32 0.0, %v8716
      %v8718 = vpop.f32.mrf.mxu0
      %8719 = vmatprep.mubr.f32.mxu0 0.0
      %8720 = vmatmul.mubr.f32.gmra.mxu0 %v6920
      %v8721 = vpop.f32.mrf.mxu0
      %v8722 = vadd.f32 0.0, %v8721
      %v8723 = vpop.f32.mrf.mxu0
      %8724 = vmatprep.mubr.f32.mxu0 0.0
      %8725 = vmatmul.mubr.f32.gmra.mxu0 %v6922
      %v8726 = vpop.f32.mrf.mxu0
      %v8727 = vadd.f32 0.0, %v8726
      %v8728 = vpop.f32.mrf.mxu0
      %8729 = vmatprep.mubr.f32.mxu0 0.0
      %8730 = vmatmul.mubr.f32.gmra.mxu0 %v6924
      %v8731 = vpop.f32.mrf.mxu0
      %v8732 = vadd.f32 0.0, %v8731
      %v8733 = vpop.f32.mrf.mxu0
      %8734 = vmatprep.mubr.f32.mxu0 0.0
      %8735 = vmatmul.mubr.f32.gmra.mxu0 %v7724
      %v8736 = vpop.f32.mrf.mxu0
      %v8737 = vadd.f32 0.0, %v8736
      %v8738 = vpop.f32.mrf.mxu0
      %8739 = vmatprep.mubr.f32.mxu0 0.0
      %8740 = vmatmul.mubr.f32.gmra.mxu0 %v7726
      %v8741 = vpop.f32.mrf.mxu0
      %v8742 = vadd.f32 0.0, %v8741
      %v8743 = vpop.f32.mrf.mxu0
      %8744 = vmatprep.mubr.f32.mxu0 0.0
      %8745 = vmatmul.mubr.f32.gmra.mxu0 %v8526
      %v8746 = vpop.f32.mrf.mxu0
      %v8747 = vadd.f32 0.0, %v8746
      %v8748 = vpop.f32.mrf.mxu0
      %8749 = vmatprep.mubr.f32.mxu0 0.0
      %8750 = vmatmul.mubr.f32.gmra.mxu0 %v8528
      %v8751 = vpop.f32.mrf.mxu0
      %v8752 = vadd.f32 0.0, %v8751
      %v8753 = vpop.f32.mrf.mxu0
      %8754 = vdwg.mxu0
      %v8755 = vadd.f32 %v8487, %v8597
      %v8756 = vadd.f32 %v8488, %v8602
      %v8757 = vadd.f32 %v8489, %v8607
      %v8758 = vadd.f32 %v8490, %v8612
      %v8759 = vadd.f32 %v8491, %v8617
      %v8760 = vadd.f32 %v8492, %v8622
      %v8761 = vadd.f32 %v8493, %v8627
      %v8762 = vadd.f32 %v8494, %v8632
      %v8763 = vadd.f32 %v8495, %v8637
      %v8764 = vadd.f32 %v8496, %v8642
      %v8765 = vadd.f32 %v8497, %v8647
      %v8766 = vadd.f32 %v8498, %v8652
      %v8767 = vadd.f32 %v8499, %v8657
      %v8768 = vadd.f32 %v8500, %v8662
      %v8769 = vadd.f32 %v8501, %v8667
      %v8770 = vadd.f32 %v8502, %v8672
      %v8771 = vadd.f32 %v8503, %v8677
      %v8772 = vadd.f32 %v8504, %v8682
      %v8773 = vadd.f32 %v8505, %v8687
      %v8774 = vadd.f32 %v8506, %v8692
      %v8775 = vadd.f32 %v8507, %v8697
      %v8776 = vadd.f32 %v8508, %v8702
      %v8777 = vadd.f32 %v8509, %v8707
      %v8778 = vadd.f32 %v8510, %v8712
      %v8779 = vadd.f32 %v8511, %v8717
      %v8780 = vadd.f32 %v8512, %v8722
      %v8781 = vadd.f32 %v8513, %v8727
      %v8782 = vadd.f32 %v8514, %v8732
      %v8783 = vadd.f32 %v8515, %v8737
      %v8784 = vadd.f32 %v8516, %v8742
      %v8785 = vadd.f32 %v8517, %v8747
      %v8786 = vadd.f32 %v8518, %v8752
      %8787 = vxpose.xlu0.b32.start [1/16] %v8755, 128
      %8788 = vxpose.xlu0.b32.cont [2/16] %v8756, 128
      %8789 = vxpose.xlu0.b32.cont [3/16] %v8757, 128
      %8790 = vxpose.xlu0.b32.cont [4/16] %v8758, 128
      %8791 = vxpose.xlu0.b32.cont [5/16] %v8759, 128
      %8792 = vxpose.xlu0.b32.cont [6/16] %v8760, 128
      %8793 = vxpose.xlu0.b32.cont [7/16] %v8761, 128
      %8794 = vxpose.xlu0.b32.cont [8/16] %v8762, 128
      %8795 = vxpose.xlu0.b32.cont [9/16] %v8763, 128
      %8796 = vxpose.xlu0.b32.cont [10/16] %v8764, 128
      %8797 = vxpose.xlu0.b32.cont [11/16] %v8765, 128
      %8798 = vxpose.xlu0.b32.cont [12/16] %v8766, 128
      %8799 = vxpose.xlu0.b32.cont [13/16] %v8767, 128
      %8800 = vxpose.xlu0.b32.cont [14/16] %v8768, 128
      %8801 = vxpose.xlu0.b32.cont [15/16] %v8769, 128
      %8802 = vxpose.xlu0.b32.end [16/16] %v8770, 128
      %v8803 = vpop.trf.xlu0
      %v8804 = vpop.trf.xlu0
      %v8805 = vpop.trf.xlu0
      %v8806 = vpop.trf.xlu0
      %v8807 = vpop.trf.xlu0
      %v8808 = vpop.trf.xlu0
      %v8809 = vpop.trf.xlu0
      %v8810 = vpop.trf.xlu0
      %v8811 = vpop.trf.xlu0
      %v8812 = vpop.trf.xlu0
      %v8813 = vpop.trf.xlu0
      %v8814 = vpop.trf.xlu0
      %v8815 = vpop.trf.xlu0
      %v8816 = vpop.trf.xlu0
      %v8817 = vpop.trf.xlu0
      %v8818 = vpop.trf.xlu0
      %8819 = vxpose.xlu0.b32.start [1/16] %v8771, 128
      %8820 = vxpose.xlu0.b32.cont [2/16] %v8772, 128
      %8821 = vxpose.xlu0.b32.cont [3/16] %v8773, 128
      %8822 = vxpose.xlu0.b32.cont [4/16] %v8774, 128
      %8823 = vxpose.xlu0.b32.cont [5/16] %v8775, 128
      %8824 = vxpose.xlu0.b32.cont [6/16] %v8776, 128
      %8825 = vxpose.xlu0.b32.cont [7/16] %v8777, 128
      %8826 = vxpose.xlu0.b32.cont [8/16] %v8778, 128
      %8827 = vxpose.xlu0.b32.cont [9/16] %v8779, 128
      %8828 = vxpose.xlu0.b32.cont [10/16] %v8780, 128
      %8829 = vxpose.xlu0.b32.cont [11/16] %v8781, 128
      %8830 = vxpose.xlu0.b32.cont [12/16] %v8782, 128
      %8831 = vxpose.xlu0.b32.cont [13/16] %v8783, 128
      %8832 = vxpose.xlu0.b32.cont [14/16] %v8784, 128
      %8833 = vxpose.xlu0.b32.cont [15/16] %v8785, 128
      %8834 = vxpose.xlu0.b32.end [16/16] %v8786, 128
      %v8835 = vpop.trf.xlu0
      %v8836 = vpop.trf.xlu0
      %v8837 = vpop.trf.xlu0
      %v8838 = vpop.trf.xlu0
      %v8839 = vpop.trf.xlu0
      %v8840 = vpop.trf.xlu0
      %v8841 = vpop.trf.xlu0
      %v8842 = vpop.trf.xlu0
      %v8843 = vpop.trf.xlu0
      %v8844 = vpop.trf.xlu0
      %v8845 = vpop.trf.xlu0
      %v8846 = vpop.trf.xlu0
      %v8847 = vpop.trf.xlu0
      %v8848 = vpop.trf.xlu0
      %v8849 = vpop.trf.xlu0
      %v8850 = vpop.trf.xlu0
      %v8851 = vld [vmem:[%s4] sm:$0xf]
      %8853 = vset.pattern.permute.xlu0 0
      %8854 = vperm.xlu0 %8853, %v8851
      %v8855 = vpop.permute.xlu0 %8854
      %v8857 = vadd.f32 %v8803, %v8855
      %v8858 = vadd.f32 %v8835, %v8855
      %v8861 = vcombine.low %v8857, %v8858
      %8863 = vst [vmem:[%s342] sm:$0xff] %v8861
      %s8864 = smul.u32 2, %s21
      %p8865 = scmp.lt.s32.totalorder %s20, 1
      %s8866 = scalar_select %p8865, %s20, 1
      %p8867 = scmp.lt.s32.totalorder %s8864, 15
      %s8868 = scalar_select %p8867, %s8864, 15
      %s8869 = smul.addr %s8866, 16
      %s8870 = sadd.s32 %s8868, %s8869
      %s8871 = smul.addr %s8870, 4
      %s8872 = scalar_lea.vmem %s5, %s8871
      // Predicated region
      $region41: #{out_conv.1} parent=39 // pred_check
        %p8873 = pneg %p178
      $region42: #{out_conv.1} parent=39 // pred_check_branch
        %8875 = sbr.rel (%p8873) target = $region44
      $region43: #{out_conv.1} parent=39 // pred_region
        %s8876 = smul.u32 2, %s21
      $region44: #{out_conv.1} parent=39 // pred_fallthru
        _
    $region40: #{out_conv.1} parent=5 // pred_fallthru
      _
    %p8877 = scmp.le.s32.totalorder 2, %s11
    // Predicated region
    $region45: #{out_conv.1} parent=5 // pred_check
      %p8878 = pneg %p8877
    $region46: #{out_conv.1} parent=5 // pred_check_branch
      %8880 = sbr.rel (%p8878) target = $region48
    $region47: #{out_conv.1} parent=5 // pred_region
      %s8881 = ssub.s32 %s11, 2
      // Predicated region
      $region49: #{out_conv.1} parent=47 // pred_check
        %p8882 = pneg %p184
      $region50: #{out_conv.1} parent=47 // pred_check_branch
        %8884 = sbr.rel (%p8882) target = $region52
      $region51: #{out_conv.1} parent=47 // pred_region
        %s8885 = smul.u32 2, %s23
        %p8886 = scmp.lt.s32.totalorder %s22, 1
        %s8887 = scalar_select %p8886, %s22, 1
        %p8888 = scmp.lt.s32.totalorder %s8885, 15
        %s8889 = scalar_select %p8888, %s8885, 15
        %s8890 = smul.addr %s8887, 16
        %s8891 = sadd.s32 %s8889, %s8890
        %s8892 = smul.addr %s8891, 4
        %s8893 = scalar_lea.vmem %s5, %s8892
      $region52: #{out_conv.1} parent=47 // pred_fallthru
        _
    $region48: #{out_conv.1} parent=5 // pred_fallthru
      _
  $region6: #{out_conv.1} parent=0 // loop_footer
    %s15 = sadd.s32 1, %s11
  $region7: #{out_conv.1} parent=0 // loop_footer_branch
    %10 = sbr.rel target = $region3
  $region8: #{out_conv.1} parent=0 // loop_exit
    _

</llo_original>
